<compile_context>
chip_gen: v7x
topology: tpu7x:2x2x1
jax: 0.10.0
libtpu: 0.0.40
codegen_flags: <defaults>
</compile_context>

<pallas_src>
import functools

import jax
import jax.numpy as jnp
from jax.experimental import pallas as pl
from jax.experimental.pallas import tpu as pltpu

_VMEM_LIMIT = 48 * 1024 * 1024   # scoped VMEM per pallas_call (< v7x 64 MiB physical)
_WPAD_SLAB = 16                  # in-kernel spatial padding slab width along W:
                                 # multiple of both the f32 (8) and bf16 (16) sublane tiles


@functools.lru_cache(maxsize=None)
def _lane_multiple():
    """Channel padding granularity: 256 fills the 2x256x256 MXU on v6e/v7x, 128 elsewhere."""
    try:
        kind = jax.devices()[0].device_kind.lower()
    except Exception:
        return 128
    if any(tag in kind for tag in ("v6", "v7", "7x", "6e")):
        return 256
    return 128


def _round_up(x, m):
    return pl.cdiv(x, m) * m


# ----------------------------------------------------------------------------
# Pallas kernels
# ----------------------------------------------------------------------------
def _fused_1x1_kernel(x_ref, w_ref, b_ref, o1_ref, o2_ref, o3_ref):
    """One (TM, Cin) @ (Cin, c1p+c2p+c3p) matmul + bias + ReLU, split into three
    lane-aligned outputs (the three 1x1 branch heads share the same input)."""
    acc = jnp.dot(x_ref[...], w_ref[...], preferred_element_type=jnp.float32)
    out = jnp.maximum(acc + b_ref[...], 0.0)
    c1 = o1_ref.shape[-1]
    c2 = o2_ref.shape[-1]
    o1_ref[...] = out[:, :c1].astype(o1_ref.dtype)
    o2_ref[...] = out[:, c1:c1 + c2].astype(o2_ref.dtype)
    o3_ref[...] = out[:, c1 + c2:].astype(o3_ref.dtype)


def _conv_kxk_relu_kernel(x_ref, w_ref, b_ref, o_ref, *, k, pad):
    """KxK same-padding conv + bias + ReLU for one image via ONE big-K matmul.

    x_ref: (H, W, Cin) unpadded block.  The zero border is built in VMEM with
    aligned concats; the k*k taps are concatenated along the contraction axis
    (ordering (kh, kw, cin) matching w_ref) and fed to the MXU once:
    (H*W, k*k*Cin) @ (k*k*Cin, Cout_pad).
    """
    h, w, cin = x_ref.shape
    cout = o_ref.shape[-1]
    # Tap relayouts in f32 (lossless for bf16 inputs); cast right before the MXU.
    x = x_ref[...].astype(jnp.float32)
    zw = jnp.zeros((h, _WPAD_SLAB, cin), jnp.float32)
    xp = jnp.concatenate([zw, x, zw], axis=1)                    # (h, w+2*SLAB, cin)
    zh = jnp.zeros((pad, w + 2 * _WPAD_SLAB, cin), jnp.float32)
    xp = jnp.concatenate([zh, xp, zh], axis=0)                   # (h+2p, w+2*SLAB, cin)
    w0 = _WPAD_SLAB - pad
    taps = [xp[dh:dh + h, w0 + dw:w0 + dw + w, :]
            for dh in range(k) for dw in range(k)]
    slab = jnp.concatenate(taps, axis=-1).reshape(h * w, k * k * cin)
    acc = jnp.dot(slab.astype(w_ref.dtype), w_ref[...],
                  preferred_element_type=jnp.float32)
    out = jnp.maximum(acc + b_ref[...], 0.0)
    o_ref[...] = out.reshape(h, w, cout).astype(o_ref.dtype)


def _maxpool3x3_conv1x1_relu_kernel(x_ref, w_ref, b_ref, o_ref):
    """MaxPool2d(3, stride=1, pad=1) fused with the branch-4 1x1 conv + ReLU.

    Separable max (vertical then horizontal): 4 VPU max ops instead of 8; the
    pool output never round-trips to HBM.
    """
    h, w, cin = x_ref.shape
    cout = o_ref.shape[-1]
    x = x_ref[...].astype(jnp.float32)
    neg = jnp.finfo(jnp.float32).min
    fw = jnp.full((h, _WPAD_SLAB, cin), neg, jnp.float32)
    xp = jnp.concatenate([fw, x, fw], axis=1)                    # (h, w+2*SLAB, cin)
    fh = jnp.full((1, w + 2 * _WPAD_SLAB, cin), neg, jnp.float32)
    xp = jnp.concatenate([fh, xp, fh], axis=0)                   # (h+2, w+2*SLAB, cin)
    w0 = _WPAD_SLAB - 1
    # vertical 3-tap max, then horizontal 3-tap max over the valid window
    v = jnp.maximum(jnp.maximum(xp[0:h], xp[1:h + 1]), xp[2:h + 2])
    m = jnp.maximum(jnp.maximum(v[:, w0:w0 + w], v[:, w0 + 1:w0 + 1 + w]),
                    v[:, w0 + 2:w0 + 2 + w])
    pooled = m.reshape(h * w, cin)
    acc = jnp.dot(pooled.astype(w_ref.dtype), w_ref[...],
                  preferred_element_type=jnp.float32)
    out = jnp.maximum(acc + b_ref[...], 0.0)
    o_ref[...] = out.reshape(h, w, cout).astype(o_ref.dtype)


# ----------------------------------------------------------------------------
# Wrappers around pallas_call
# ----------------------------------------------------------------------------
def fused_conv1x1_relu(x_nhwc, w_list, b_list, *, lane, act_dtype):
    """Three 1x1 convs (shared input) + ReLU as one lane-dense matmul kernel
    with three separately lane-padded outputs."""
    n, h, w, cin = x_nhwc.shape
    m = n * h * w
    cpads = [_round_up(int(wi.shape[0]), lane) for wi in w_list]
    w_parts, b_parts = [], []
    for wi, bi, cp in zip(w_list, b_list, cpads):
        co = int(wi.shape[0])
        w_parts.append(jnp.pad(wi.reshape(co, cin).T, ((0, 0), (0, cp - co))))
        b_parts.append(jnp.pad(bi, (0, cp - co)))
    wcat = jnp.concatenate(w_parts, axis=1).astype(act_dtype)      # (Cin, ctot)
    bcat = jnp.concatenate(b_parts).reshape(1, -1).astype(jnp.float32)
    ctot = sum(cpads)

    tm = min(1024, _round_up(m, 8))         # large M tiles amortize per-step overhead
    m_pad = _round_up(m, tm)
    x_flat = x_nhwc.reshape(m, cin).astype(act_dtype)
    if m_pad != m:
        x_flat = jnp.pad(x_flat, ((0, m_pad - m), (0, 0)))

    itm = jnp.dtype(act_dtype).itemsize
    outs = pl.pallas_call(
        _fused_1x1_kernel,
        out_shape=tuple(jax.ShapeDtypeStruct((m_pad, cp), act_dtype) for cp in cpads),
        grid=(m_pad // tm,),
        in_specs=[
            pl.BlockSpec((tm, cin), lambda i: (i, 0)),
            pl.BlockSpec((cin, ctot), lambda i: (0, 0)),       # VMEM-resident weights
            pl.BlockSpec((1, ctot), lambda i: (0, 0)),
        ],
        out_specs=tuple(pl.BlockSpec((tm, cp), lambda i: (i, 0)) for cp in cpads),
        compiler_params=pltpu.CompilerParams(
            dimension_semantics=("parallel",),
            vmem_limit_bytes=_VMEM_LIMIT),
        cost_estimate=pl.CostEstimate(
            flops=2 * m_pad * cin * ctot,
            transcendentals=0,
            bytes_accessed=itm * (m_pad * cin + cin * ctot + m_pad * ctot) + 4 * ctot),
    )(x_flat, wcat, bcat)

    def to_nhwc(o, cp):
        if m_pad != m:
            o = o[:m]
        return o.reshape(n, h, w, cp)

    return tuple(to_nhwc(o, cp) for o, cp in zip(outs, cpads))


def conv_kxk_relu(x_nhwc, w_oihw, b, *, padding, lane, act_dtype):
    """BasicConv2d(k, padding=(k-1)//2) + ReLU.  Input channels may be lane-padded
    with zeros; the weight gets matching zero rows so no de-pad slice is needed."""
    n, h, w, cin = x_nhwc.shape
    cout, cin_real, k = int(w_oihw.shape[0]), int(w_oihw.shape[1]), int(w_oihw.shape[2])
    assert 2 * padding == k - 1, "same-padding conv expected"
    cpad = _round_up(cout, lane)
    wt = jnp.transpose(w_oihw, (2, 3, 1, 0))                      # (k, k, cin_real, cout)
    wt = jnp.pad(wt, ((0, 0), (0, 0), (0, cin - cin_real), (0, cpad - cout)))
    w2 = wt.reshape(k * k * cin, cpad).astype(act_dtype)
    b2 = jnp.pad(b, (0, cpad - cout)).reshape(1, cpad).astype(jnp.float32)

    kern = functools.partial(_conv_kxk_relu_kernel, k=k, pad=padding)
    itm = jnp.dtype(act_dtype).itemsize
    return pl.pallas_call(
        kern,
        out_shape=jax.ShapeDtypeStruct((n, h, w, cpad), act_dtype),
        grid=(n,),
        in_specs=[
            pl.BlockSpec((None, h, w, cin), lambda i: (i, 0, 0, 0)),
            pl.BlockSpec((k * k * cin, cpad), lambda i: (0, 0)),   # VMEM-resident
            pl.BlockSpec((1, cpad), lambda i: (0, 0)),
        ],
        out_specs=pl.BlockSpec((None, h, w, cpad), lambda i: (i, 0, 0, 0)),
        compiler_params=pltpu.CompilerParams(
            dimension_semantics=("parallel",),
            vmem_limit_bytes=_VMEM_LIMIT),
        cost_estimate=pl.CostEstimate(
            flops=2 * n * h * w * k * k * cin * cpad,
            transcendentals=0,
            bytes_accessed=itm * (n * h * w * cin + k * k * cin * cpad
                                  + n * h * w * cpad) + 4 * cpad),
    )(x_nhwc.astype(act_dtype), w2, b2)


def maxpool3x3_conv1x1_relu(x_nhwc, w_oihw, b, *, lane, act_dtype):
    """MaxPool2d(3, stride=1, padding=1) fused with a 1x1 conv + ReLU."""
    n, h, w, cin = x_nhwc.shape
    cout = int(w_oihw.shape[0])
    cpad = _round_up(cout, lane)
    w2 = jnp.pad(w_oihw.reshape(cout, cin).T,
                 ((0, 0), (0, cpad - cout))).astype(act_dtype)
    b2 = jnp.pad(b, (0, cpad - cout)).reshape(1, cpad).astype(jnp.float32)

    itm = jnp.dtype(act_dtype).itemsize
    return pl.pallas_call(
        _maxpool3x3_conv1x1_relu_kernel,
        out_shape=jax.ShapeDtypeStruct((n, h, w, cpad), act_dtype),
        grid=(n,),
        in_specs=[
            pl.BlockSpec((None, h, w, cin), lambda i: (i, 0, 0, 0)),
            pl.BlockSpec((cin, cpad), lambda i: (0, 0)),
            pl.BlockSpec((1, cpad), lambda i: (0, 0)),
        ],
        out_specs=pl.BlockSpec((None, h, w, cpad), lambda i: (i, 0, 0, 0)),
        compiler_params=pltpu.CompilerParams(
            dimension_semantics=("parallel",),
            vmem_limit_bytes=_VMEM_LIMIT),
        cost_estimate=pl.CostEstimate(
            flops=2 * n * h * w * cin * cpad + 4 * n * h * w * cin,
            transcendentals=0,
            bytes_accessed=itm * (n * h * w * cin + cin * cpad + n * h * w * cpad)
                           + 4 * cpad),
    )(x_nhwc.astype(act_dtype), w2, b2)


# ----------------------------------------------------------------------------
# InceptionV1 module (parameters + forward)
# ----------------------------------------------------------------------------
def init_inception_params(key, in_dim, hid_1_1, hid_2_1, hid_2_3,
                          hid_3_1, out_3_5, out_4_1):
    """Deterministic synthetic parameters.  Conv weights use torch OIHW layout."""
    def conv_params(k, cout, cin, ksize):
        kw_, kb_ = jax.random.split(k)
        scale = 1.0 / jnp.sqrt(jnp.float32(cin * ksize * ksize))
        w = jax.random.normal(kw_, (cout, cin, ksize, ksize), jnp.float32) * scale
        b = jax.random.normal(kb_, (cout,), jnp.float32) * 0.01
        return {"w": w, "b": b}        # kernel size comes from w.shape (static)

    keys = jax.random.split(key, 6)
    return {
        "b1_1x1": conv_params(keys[0], hid_1_1, in_dim, 1),
        "b2_1x1": conv_params(keys[1], hid_2_1, in_dim, 1),
        "b2_3x3": conv_params(keys[2], hid_2_3, hid_2_1, 3),
        "b3_1x1": conv_params(keys[3], hid_3_1, in_dim, 1),
        "b3_5x5": conv_params(keys[4], out_3_5, hid_3_1, 5),
        "b4_1x1": conv_params(keys[5], out_4_1, in_dim, 1),
    }


def inception_v1_forward(x_nchw, params, act_dtype=jnp.float32):
    """Forward pass.  Input/output are NCHW to match the PyTorch module."""
    lane = _lane_multiple()
    x = jnp.transpose(x_nchw, (0, 2, 3, 1)).astype(act_dtype)    # NCHW -> NHWC

    c1 = int(params["b1_1x1"]["w"].shape[0])
    c23 = int(params["b2_3x3"]["w"].shape[0])
    c35 = int(params["b3_5x5"]["w"].shape[0])
    c41 = int(params["b4_1x1"]["w"].shape[0])

    # branches 1, 2-head, 3-head: one fused lane-dense 1x1 matmul; the three
    # outputs are separately lane-padded so downstream convs stay lane-dense.
    y1p, y2p, y3p = fused_conv1x1_relu(
        x,
        [params["b1_1x1"]["w"], params["b2_1x1"]["w"], params["b3_1x1"]["w"]],
        [params["b1_1x1"]["b"], params["b2_1x1"]["b"], params["b3_1x1"]["b"]],
        lane=lane, act_dtype=act_dtype)

    x1 = y1p[..., :c1]
    x2 = conv_kxk_relu(y2p, params["b2_3x3"]["w"], params["b2_3x3"]["b"],
                       padding=1, lane=lane, act_dtype=act_dtype)[..., :c23]
    x3 = conv_kxk_relu(y3p, params["b3_5x5"]["w"], params["b3_5x5"]["b"],
                       padding=2, lane=lane, act_dtype=act_dtype)[..., :c35]
    x4 = maxpool3x3_conv1x1_relu(x, params["b4_1x1"]["w"], params["b4_1x1"]["b"],
                                 lane=lane, act_dtype=act_dtype)[..., :c41]

    out = jnp.concatenate([x1, x2, x3, x4], axis=-1)              # channel concat
    return jnp.transpose(out, (0, 3, 1, 2)).astype(x_nchw.dtype)  # NHWC -> NCHW


# ----------------------------------------------------------------------------
# Pure-JAX reference (lightweight self-check)
# ----------------------------------------------------------------------------
def _ref_conv_relu(x_nchw, w, b, pad):
    y = jax.lax.conv_general_dilated(
        x_nchw, w, window_strides=(1, 1), padding=[(pad, pad), (pad, pad)],
        dimension_numbers=("NCHW", "OIHW", "NCHW"),
        precision=jax.lax.Precision.HIGHEST)
    return jnp.maximum(y + b[None, :, None, None], 0.0)


def _ref_forward(x_nchw, params):
    p = params["b1_1x1"]; x1 = _ref_conv_relu(x_nchw, p["w"], p["b"], 0)
    p = params["b2_1x1"]; x2 = _ref_conv_relu(x_nchw, p["w"], p["b"], 0)
    p = params["b2_3x3"]; x2 = _ref_conv_relu(x2, p["w"], p["b"], 1)
    p = params["b3_1x1"]; x3 = _ref_conv_relu(x_nchw, p["w"], p["b"], 0)
    p = params["b3_5x5"]; x3 = _ref_conv_relu(x3, p["w"], p["b"], 2)
    neg_inf = jnp.finfo(x_nchw.dtype).min
    x4 = jax.lax.reduce_window(x_nchw, neg_inf, jax.lax.max,
                               (1, 1, 3, 3), (1, 1, 1, 1),
                               [(0, 0), (0, 0), (1, 1), (1, 1)])
    p = params["b4_1x1"]; x4 = _ref_conv_relu(x4, p["w"], p["b"], 0)
    return jnp.concatenate([x1, x2, x3, x4], axis=1)


# ----------------------------------------------------------------------------
if __name__ == "__main__":
    # small shapes: batch=2, in_dim=4, 16x16 spatial
    N, C, H, W = 2, 4, 16, 16
    hid_1_1, hid_2_1, hid_2_3, hid_3_1, out_3_5, out_4_1 = 8, 6, 8, 4, 8, 8

    key = jax.random.PRNGKey(0)
    k_x, k_p = jax.random.split(key)
    x = jax.random.normal(k_x, (N, C, H, W), jnp.float32)
    params = init_inception_params(k_p, C, hid_1_1, hid_2_1, hid_2_3,
                                   hid_3_1, out_3_5, out_4_1)

    expected_c = hid_1_1 + hid_2_3 + out_3_5 + out_4_1
    ref = _ref_forward(x, params)

    # f32 activations: strict check against the XLA reference.
    fwd_f32 = jax.jit(functools.partial(inception_v1_forward,
                                        act_dtype=jnp.float32))
    out_f32 = jax.block_until_ready(fwd_f32(x, params))
    assert out_f32.shape == (N, expected_c, H, W), out_f32.shape
    err_f32 = float(jnp.max(jnp.abs(out_f32 - ref)))
    assert jnp.allclose(out_f32, ref, atol=1e-3, rtol=1e-3), err_f32

    # bf16 activations (halved HBM traffic, native bf16 MXU rate on v6e/v7x):
    # checked at a loose tolerance against the f32 reference.
    fwd_bf16 = jax.jit(functools.partial(inception_v1_forward,
                                         act_dtype=jnp.bfloat16))
    out_bf16 = jax.block_until_ready(fwd_bf16(x, params)).astype(jnp.float32)
    err_bf16 = float(jnp.max(jnp.abs(out_bf16 - ref)))
    assert jnp.allclose(out_bf16, ref, atol=1e-1, rtol=1e-1), err_bf16

    print("KERNEL_OK")
</pallas_src>

<mosaic_0001>
module attributes {stable_mosaic.version = 11 : i64} {
  func.func @_maxpool3x3_conv1x1_relu_kernel(%arg0: i32, %arg1: memref<1x16x16x4xf32, #tpu.memory_space<vmem>>, %arg2: memref<4x128xf32, #tpu.memory_space<vmem>>, %arg3: memref<1x128xf32, #tpu.memory_space<vmem>>, %arg4: memref<1x16x16x128xf32, #tpu.memory_space<vmem>>) attributes {dimension_semantics = [#tpu.dimension_semantics<parallel>], iteration_bounds = array<i64: 2>, scalar_prefetch = 0 : i64, scratch_operands = 0 : i64, tpu.core_type = #tpu.core_type<tc>, window_params = [{transform_indices = @transform_0, window_bounds = array<i64: 1, 16, 16, 4>}, {pipeline_mode = #tpu.pipeline_mode<synchronous>, transform_indices = @transform_1, window_bounds = array<i64: 4, 128>}, {pipeline_mode = #tpu.pipeline_mode<synchronous>, transform_indices = @transform_2, window_bounds = array<i64: 1, 128>}, {transform_indices = @transform_3, window_bounds = array<i64: 1, 16, 16, 128>}]} {
    %c0 = arith.constant 0 : index
    %c0_0 = arith.constant 0 : index
    %c0_1 = arith.constant 0 : index
    %c0_2 = arith.constant 0 : index
    %0 = vector.load %arg1[%c0, %c0_0, %c0_1, %c0_2] : memref<1x16x16x4xf32, #tpu.memory_space<vmem>>, vector<1x16x16x4xf32>
    %1 = vector.shape_cast %0 : vector<1x16x16x4xf32> to vector<16x16x4xf32>
    %cst = arith.constant -3.40282347E+38 : f32
    %2 = vector.broadcast %cst : f32 to vector<16x16x4xf32>
    %3 = tpu.concatenate %2, %1, %2 in 1 : vector<16x16x4xf32>, vector<16x16x4xf32>, vector<16x16x4xf32> -> vector<16x48x4xf32>
    %cst_3 = arith.constant -3.40282347E+38 : f32
    %4 = vector.broadcast %cst_3 : f32 to vector<1x48x4xf32>
    %5 = tpu.concatenate %4, %3, %4 in 0 : vector<1x48x4xf32>, vector<16x48x4xf32>, vector<1x48x4xf32> -> vector<18x48x4xf32>
    %6 = vector.extract_strided_slice %5 {offsets = [0, 0, 0], sizes = [16, 48, 4], strides = [1, 1, 1]} : vector<18x48x4xf32> to vector<16x48x4xf32>
    %7 = vector.extract_strided_slice %5 {offsets = [1, 0, 0], sizes = [16, 48, 4], strides = [1, 1, 1]} : vector<18x48x4xf32> to vector<16x48x4xf32>
    %8 = arith.maximumf %6, %7 : vector<16x48x4xf32>
    %9 = vector.extract_strided_slice %5 {offsets = [2, 0, 0], sizes = [16, 48, 4], strides = [1, 1, 1]} : vector<18x48x4xf32> to vector<16x48x4xf32>
    %10 = arith.maximumf %8, %9 : vector<16x48x4xf32>
    %11 = vector.extract_strided_slice %10 {offsets = [0, 15, 0], sizes = [16, 16, 4], strides = [1, 1, 1]} : vector<16x48x4xf32> to vector<16x16x4xf32>
    %12 = vector.extract_strided_slice %10 {offsets = [0, 16, 0], sizes = [16, 16, 4], strides = [1, 1, 1]} : vector<16x48x4xf32> to vector<16x16x4xf32>
    %13 = arith.maximumf %11, %12 : vector<16x16x4xf32>
    %14 = vector.extract_strided_slice %10 {offsets = [0, 17, 0], sizes = [16, 16, 4], strides = [1, 1, 1]} : vector<16x48x4xf32> to vector<16x16x4xf32>
    %15 = arith.maximumf %13, %14 : vector<16x16x4xf32>
    %16 = vector.shape_cast %15 : vector<16x16x4xf32> to vector<256x4xf32>
    %c0_4 = arith.constant 0 : index
    %c0_5 = arith.constant 0 : index
    %17 = vector.load %arg2[%c0_4, %c0_5] : memref<4x128xf32, #tpu.memory_space<vmem>>, vector<4x128xf32>
    %cst_6 = arith.constant dense<0.000000e+00> : vector<256x128xf32>
    %18 = tpu.matmul %16, %17, %cst_6 {dimension_numbers = #tpu.dot_dimension_numbers<[1], [0], [0], [1], [0, 0, 1, 1], [], []>} : vector<256x4xf32>, vector<4x128xf32>, vector<256x128xf32> -> vector<256x128xf32>
    %c0_7 = arith.constant 0 : index
    %c0_8 = arith.constant 0 : index
    %19 = vector.load %arg3[%c0_7, %c0_8] : memref<1x128xf32, #tpu.memory_space<vmem>>, vector<1x128xf32>
    %20 = vector.broadcast %19 : vector<1x128xf32> to vector<256x128xf32>
    %21 = arith.addf %18, %20 : vector<256x128xf32>
    %cst_9 = arith.constant 0.000000e+00 : f32
    %22 = vector.broadcast %cst_9 : f32 to vector<256x128xf32>
    %23 = arith.maximumf %21, %22 : vector<256x128xf32>
    %24 = vector.shape_cast %23 : vector<256x128xf32> to vector<16x16x128xf32>
    %c0_10 = arith.constant 0 : index
    %c0_11 = arith.constant 0 : index
    %c0_12 = arith.constant 0 : index
    %c0_13 = arith.constant 0 : index
    %25 = vector.load %arg4[%c0_10, %c0_11, %c0_12, %c0_13] : memref<1x16x16x128xf32, #tpu.memory_space<vmem>>, vector<1x16x16x128xf32>
    %26 = vector.shape_cast %25 : vector<1x16x16x128xf32> to vector<16x16x128xf32>
    %27 = vector.shape_cast %24 : vector<16x16x128xf32> to vector<1x16x16x128xf32>
    tpu.vector_store %arg4[%c0_10, %c0_11, %c0_12, %c0_13], %27 {strides = array<i32>} : memref<1x16x16x128xf32, #tpu.memory_space<vmem>>, vector<1x16x16x128xf32>,
    return
  }
  func.func @transform_0(%arg0: i32) -> (i32, i32, i32, i32) {
    %c0_i32 = arith.constant 0 : i32
    %c0_i32_0 = arith.constant 0 : i32
    %c0_i32_1 = arith.constant 0 : i32
    %c0_i32_2 = arith.constant 0 : i32
    return %arg0, %c0_i32, %c0_i32_0, %c0_i32_1 : i32, i32, i32, i32
  }
  func.func @transform_1(%arg0: i32) -> (i32, i32) {
    %c0_i32 = arith.constant 0 : i32
    %c0_i32_0 = arith.constant 0 : i32
    %c0_i32_1 = arith.constant 0 : i32
    return %c0_i32, %c0_i32_0 : i32, i32
  }
  func.func @transform_2(%arg0: i32) -> (i32, i32) {
    %c0_i32 = arith.constant 0 : i32
    %c0_i32_0 = arith.constant 0 : i32
    %c0_i32_1 = arith.constant 0 : i32
    return %c0_i32, %c0_i32_0 : i32, i32
  }
  func.func @transform_3(%arg0: i32) -> (i32, i32, i32, i32) {
    %c0_i32 = arith.constant 0 : i32
    %c0_i32_0 = arith.constant 0 : i32
    %c0_i32_1 = arith.constant 0 : i32
    %c0_i32_2 = arith.constant 0 : i32
    return %arg0, %c0_i32, %c0_i32_0, %c0_i32_1 : i32, i32, i32, i32
  }
}

module attributes {stable_mosaic.version = 11 : i64} {
  func.func @_fused_1x1_kernel(%arg0: i32, %arg1: memref<512x4xf32, #tpu.memory_space<vmem>>, %arg2: memref<4x384xf32, #tpu.memory_space<vmem>>, %arg3: memref<1x384xf32, #tpu.memory_space<vmem>>, %arg4: memref<512x128xf32, #tpu.memory_space<vmem>>, %arg5: memref<512x128xf32, #tpu.memory_space<vmem>>, %arg6: memref<512x128xf32, #tpu.memory_space<vmem>>) attributes {dimension_semantics = [#tpu.dimension_semantics<parallel>], iteration_bounds = array<i64: 1>, scalar_prefetch = 0 : i64, scratch_operands = 0 : i64, tpu.core_type = #tpu.core_type<tc>, window_params = [{transform_indices = @transform_0, window_bounds = array<i64: 512, 4>}, {pipeline_mode = #tpu.pipeline_mode<synchronous>, transform_indices = @transform_1, window_bounds = array<i64: 4, 384>}, {pipeline_mode = #tpu.pipeline_mode<synchronous>, transform_indices = @transform_2, window_bounds = array<i64: 1, 384>}, {transform_indices = @transform_3, window_bounds = array<i64: 512, 128>}, {transform_indices = @transform_4, window_bounds = array<i64: 512, 128>}, {transform_indices = @transform_5, window_bounds = array<i64: 512, 128>}]} {
    %c0 = arith.constant 0 : index
    %c0_0 = arith.constant 0 : index
    %0 = vector.load %arg1[%c0, %c0_0] : memref<512x4xf32, #tpu.memory_space<vmem>>, vector<512x4xf32>
    %c0_1 = arith.constant 0 : index
    %c0_2 = arith.constant 0 : index
    %1 = vector.load %arg2[%c0_1, %c0_2] : memref<4x384xf32, #tpu.memory_space<vmem>>, vector<4x384xf32>
    %cst = arith.constant dense<0.000000e+00> : vector<512x384xf32>
    %2 = tpu.matmul %0, %1, %cst {dimension_numbers = #tpu.dot_dimension_numbers<[1], [0], [0], [1], [0, 0, 1, 1], [], []>} : vector<512x4xf32>, vector<4x384xf32>, vector<512x384xf32> -> vector<512x384xf32>
    %c0_3 = arith.constant 0 : index
    %c0_4 = arith.constant 0 : index
    %3 = vector.load %arg3[%c0_3, %c0_4] : memref<1x384xf32, #tpu.memory_space<vmem>>, vector<1x384xf32>
    %4 = vector.broadcast %3 : vector<1x384xf32> to vector<512x384xf32>
    %5 = arith.addf %2, %4 : vector<512x384xf32>
    %cst_5 = arith.constant 0.000000e+00 : f32
    %6 = vector.broadcast %cst_5 : f32 to vector<512x384xf32>
    %7 = arith.maximumf %5, %6 : vector<512x384xf32>
    %8 = vector.extract_strided_slice %7 {offsets = [0, 0], sizes = [512, 128], strides = [1, 1]} : vector<512x384xf32> to vector<512x128xf32>
    %c0_6 = arith.constant 0 : index
    %c0_7 = arith.constant 0 : index
    %9 = vector.load %arg4[%c0_6, %c0_7] : memref<512x128xf32, #tpu.memory_space<vmem>>, vector<512x128xf32>
    tpu.vector_store %arg4[%c0_6, %c0_7], %8 {strides = array<i32>} : memref<512x128xf32, #tpu.memory_space<vmem>>, vector<512x128xf32>,
    %10 = vector.extract_strided_slice %7 {offsets = [0, 128], sizes = [512, 128], strides = [1, 1]} : vector<512x384xf32> to vector<512x128xf32>
    %c0_8 = arith.constant 0 : index
    %c0_9 = arith.constant 0 : index
    %11 = vector.load %arg5[%c0_8, %c0_9] : memref<512x128xf32, #tpu.memory_space<vmem>>, vector<512x128xf32>
    tpu.vector_store %arg5[%c0_8, %c0_9], %10 {strides = array<i32>} : memref<512x128xf32, #tpu.memory_space<vmem>>, vector<512x128xf32>,
    %12 = vector.extract_strided_slice %7 {offsets = [0, 256], sizes = [512, 128], strides = [1, 1]} : vector<512x384xf32> to vector<512x128xf32>
    %c0_10 = arith.constant 0 : index
    %c0_11 = arith.constant 0 : index
    %13 = vector.load %arg6[%c0_10, %c0_11] : memref<512x128xf32, #tpu.memory_space<vmem>>, vector<512x128xf32>
    tpu.vector_store %arg6[%c0_10, %c0_11], %12 {strides = array<i32>} : memref<512x128xf32, #tpu.memory_space<vmem>>, vector<512x128xf32>,
    return
  }
  func.func @transform_0(%arg0: i32) -> (i32, i32) {
    %c0_i32 = arith.constant 0 : i32
    %c0_i32_0 = arith.constant 0 : i32
    return %arg0, %c0_i32 : i32, i32
  }
  func.func @transform_1(%arg0: i32) -> (i32, i32) {
    %c0_i32 = arith.constant 0 : i32
    %c0_i32_0 = arith.constant 0 : i32
    %c0_i32_1 = arith.constant 0 : i32
    return %c0_i32, %c0_i32_0 : i32, i32
  }
  func.func @transform_2(%arg0: i32) -> (i32, i32) {
    %c0_i32 = arith.constant 0 : i32
    %c0_i32_0 = arith.constant 0 : i32
    %c0_i32_1 = arith.constant 0 : i32
    return %c0_i32, %c0_i32_0 : i32, i32
  }
  func.func @transform_3(%arg0: i32) -> (i32, i32) {
    %c0_i32 = arith.constant 0 : i32
    %c0_i32_0 = arith.constant 0 : i32
    return %arg0, %c0_i32 : i32, i32
  }
  func.func @transform_4(%arg0: i32) -> (i32, i32) {
    %c0_i32 = arith.constant 0 : i32
    %c0_i32_0 = arith.constant 0 : i32
    return %arg0, %c0_i32 : i32, i32
  }
  func.func @transform_5(%arg0: i32) -> (i32, i32) {
    %c0_i32 = arith.constant 0 : i32
    %c0_i32_0 = arith.constant 0 : i32
    return %arg0, %c0_i32 : i32, i32
  }
}

module attributes {stable_mosaic.version = 11 : i64} {
  func.func @_conv_kxk_relu_kernel(%arg0: i32, %arg1: memref<1x16x16x128xf32, #tpu.memory_space<vmem>>, %arg2: memref<1152x128xf32, #tpu.memory_space<vmem>>, %arg3: memref<1x128xf32, #tpu.memory_space<vmem>>, %arg4: memref<1x16x16x128xf32, #tpu.memory_space<vmem>>) attributes {dimension_semantics = [#tpu.dimension_semantics<parallel>], iteration_bounds = array<i64: 2>, scalar_prefetch = 0 : i64, scratch_operands = 0 : i64, tpu.core_type = #tpu.core_type<tc>, window_params = [{transform_indices = @transform_0, window_bounds = array<i64: 1, 16, 16, 128>}, {pipeline_mode = #tpu.pipeline_mode<synchronous>, transform_indices = @transform_1, window_bounds = array<i64: 1152, 128>}, {pipeline_mode = #tpu.pipeline_mode<synchronous>, transform_indices = @transform_2, window_bounds = array<i64: 1, 128>}, {transform_indices = @transform_3, window_bounds = array<i64: 1, 16, 16, 128>}]} {
    %c0 = arith.constant 0 : index
    %c0_0 = arith.constant 0 : index
    %c0_1 = arith.constant 0 : index
    %c0_2 = arith.constant 0 : index
    %0 = vector.load %arg1[%c0, %c0_0, %c0_1, %c0_2] : memref<1x16x16x128xf32, #tpu.memory_space<vmem>>, vector<1x16x16x128xf32>
    %1 = vector.shape_cast %0 : vector<1x16x16x128xf32> to vector<16x16x128xf32>
    %cst = arith.constant 0.000000e+00 : f32
    %2 = vector.broadcast %cst : f32 to vector<16x16x128xf32>
    %3 = tpu.concatenate %2, %1, %2 in 1 : vector<16x16x128xf32>, vector<16x16x128xf32>, vector<16x16x128xf32> -> vector<16x48x128xf32>
    %cst_3 = arith.constant 0.000000e+00 : f32
    %4 = vector.broadcast %cst_3 : f32 to vector<1x48x128xf32>
    %5 = tpu.concatenate %4, %3, %4 in 0 : vector<1x48x128xf32>, vector<16x48x128xf32>, vector<1x48x128xf32> -> vector<18x48x128xf32>
    %6 = vector.extract_strided_slice %5 {offsets = [0, 15, 0], sizes = [16, 16, 128], strides = [1, 1, 1]} : vector<18x48x128xf32> to vector<16x16x128xf32>
    %7 = vector.extract_strided_slice %5 {offsets = [0, 16, 0], sizes = [16, 16, 128], strides = [1, 1, 1]} : vector<18x48x128xf32> to vector<16x16x128xf32>
    %8 = vector.extract_strided_slice %5 {offsets = [0, 17, 0], sizes = [16, 16, 128], strides = [1, 1, 1]} : vector<18x48x128xf32> to vector<16x16x128xf32>
    %9 = vector.extract_strided_slice %5 {offsets = [1, 15, 0], sizes = [16, 16, 128], strides = [1, 1, 1]} : vector<18x48x128xf32> to vector<16x16x128xf32>
    %10 = vector.extract_strided_slice %5 {offsets = [1, 16, 0], sizes = [16, 16, 128], strides = [1, 1, 1]} : vector<18x48x128xf32> to vector<16x16x128xf32>
    %11 = vector.extract_strided_slice %5 {offsets = [1, 17, 0], sizes = [16, 16, 128], strides = [1, 1, 1]} : vector<18x48x128xf32> to vector<16x16x128xf32>
    %12 = vector.extract_strided_slice %5 {offsets = [2, 15, 0], sizes = [16, 16, 128], strides = [1, 1, 1]} : vector<18x48x128xf32> to vector<16x16x128xf32>
    %13 = vector.extract_strided_slice %5 {offsets = [2, 16, 0], sizes = [16, 16, 128], strides = [1, 1, 1]} : vector<18x48x128xf32> to vector<16x16x128xf32>
    %14 = vector.extract_strided_slice %5 {offsets = [2, 17, 0], sizes = [16, 16, 128], strides = [1, 1, 1]} : vector<18x48x128xf32> to vector<16x16x128xf32>
    %15 = tpu.concatenate %6, %7, %8, %9, %10, %11, %12, %13, %14 in 2 : vector<16x16x128xf32>, vector<16x16x128xf32>, vector<16x16x128xf32>, vector<16x16x128xf32>, vector<16x16x128xf32>, vector<16x16x128xf32>, vector<16x16x128xf32>, vector<16x16x128xf32>, vector<16x16x128xf32> -> vector<16x16x1152xf32>
    %16 = vector.shape_cast %15 : vector<16x16x1152xf32> to vector<256x1152xf32>
    %c0_4 = arith.constant 0 : index
    %c0_5 = arith.constant 0 : index
    %17 = vector.load %arg2[%c0_4, %c0_5] : memref<1152x128xf32, #tpu.memory_space<vmem>>, vector<1152x128xf32>
    %cst_6 = arith.constant dense<0.000000e+00> : vector<256x128xf32>
    %18 = tpu.matmul %16, %17, %cst_6 {dimension_numbers = #tpu.dot_dimension_numbers<[1], [0], [0], [1], [0, 0, 1, 1], [], []>} : vector<256x1152xf32>, vector<1152x128xf32>, vector<256x128xf32> -> vector<256x128xf32>
    %c0_7 = arith.constant 0 : index
    %c0_8 = arith.constant 0 : index
    %19 = vector.load %arg3[%c0_7, %c0_8] : memref<1x128xf32, #tpu.memory_space<vmem>>, vector<1x128xf32>
    %20 = vector.broadcast %19 : vector<1x128xf32> to vector<256x128xf32>
    %21 = arith.addf %18, %20 : vector<256x128xf32>
    %cst_9 = arith.constant 0.000000e+00 : f32
    %22 = vector.broadcast %cst_9 : f32 to vector<256x128xf32>
    %23 = arith.maximumf %21, %22 : vector<256x128xf32>
    %24 = vector.shape_cast %23 : vector<256x128xf32> to vector<16x16x128xf32>
    %c0_10 = arith.constant 0 : index
    %c0_11 = arith.constant 0 : index
    %c0_12 = arith.constant 0 : index
    %c0_13 = arith.constant 0 : index
    %25 = vector.load %arg4[%c0_10, %c0_11, %c0_12, %c0_13] : memref<1x16x16x128xf32, #tpu.memory_space<vmem>>, vector<1x16x16x128xf32>
    %26 = vector.shape_cast %25 : vector<1x16x16x128xf32> to vector<16x16x128xf32>
    %27 = vector.shape_cast %24 : vector<16x16x128xf32> to vector<1x16x16x128xf32>
    tpu.vector_store %arg4[%c0_10, %c0_11, %c0_12, %c0_13], %27 {strides = array<i32>} : memref<1x16x16x128xf32, #tpu.memory_space<vmem>>, vector<1x16x16x128xf32>,
    return
  }
  func.func @transform_0(%arg0: i32) -> (i32, i32, i32, i32) {
    %c0_i32 = arith.constant 0 : i32
    %c0_i32_0 = arith.constant 0 : i32
    %c0_i32_1 = arith.constant 0 : i32
    %c0_i32_2 = arith.constant 0 : i32
    return %arg0, %c0_i32, %c0_i32_0, %c0_i32_1 : i32, i32, i32, i32
  }
  func.func @transform_1(%arg0: i32) -> (i32, i32) {
    %c0_i32 = arith.constant 0 : i32
    %c0_i32_0 = arith.constant 0 : i32
    %c0_i32_1 = arith.constant 0 : i32
    return %c0_i32, %c0_i32_0 : i32, i32
  }
  func.func @transform_2(%arg0: i32) -> (i32, i32) {
    %c0_i32 = arith.constant 0 : i32
    %c0_i32_0 = arith.constant 0 : i32
    %c0_i32_1 = arith.constant 0 : i32
    return %c0_i32, %c0_i32_0 : i32, i32
  }
  func.func @transform_3(%arg0: i32) -> (i32, i32, i32, i32) {
    %c0_i32 = arith.constant 0 : i32
    %c0_i32_0 = arith.constant 0 : i32
    %c0_i32_1 = arith.constant 0 : i32
    %c0_i32_2 = arith.constant 0 : i32
    return %arg0, %c0_i32, %c0_i32_0, %c0_i32_1 : i32, i32, i32, i32
  }
}

module attributes {stable_mosaic.version = 11 : i64} {
  func.func @_conv_kxk_relu_kernel(%arg0: i32, %arg1: memref<1x16x16x128xf32, #tpu.memory_space<vmem>>, %arg2: memref<3200x128xf32, #tpu.memory_space<vmem>>, %arg3: memref<1x128xf32, #tpu.memory_space<vmem>>, %arg4: memref<1x16x16x128xf32, #tpu.memory_space<vmem>>) attributes {dimension_semantics = [#tpu.dimension_semantics<parallel>], iteration_bounds = array<i64: 2>, scalar_prefetch = 0 : i64, scratch_operands = 0 : i64, tpu.core_type = #tpu.core_type<tc>, window_params = [{transform_indices = @transform_0, window_bounds = array<i64: 1, 16, 16, 128>}, {pipeline_mode = #tpu.pipeline_mode<synchronous>, transform_indices = @transform_1, window_bounds = array<i64: 3200, 128>}, {pipeline_mode = #tpu.pipeline_mode<synchronous>, transform_indices = @transform_2, window_bounds = array<i64: 1, 128>}, {transform_indices = @transform_3, window_bounds = array<i64: 1, 16, 16, 128>}]} {
    %c0 = arith.constant 0 : index
    %c0_0 = arith.constant 0 : index
    %c0_1 = arith.constant 0 : index
    %c0_2 = arith.constant 0 : index
    %0 = vector.load %arg1[%c0, %c0_0, %c0_1, %c0_2] : memref<1x16x16x128xf32, #tpu.memory_space<vmem>>, vector<1x16x16x128xf32>
    %1 = vector.shape_cast %0 : vector<1x16x16x128xf32> to vector<16x16x128xf32>
    %cst = arith.constant 0.000000e+00 : f32
    %2 = vector.broadcast %cst : f32 to vector<16x16x128xf32>
    %3 = tpu.concatenate %2, %1, %2 in 1 : vector<16x16x128xf32>, vector<16x16x128xf32>, vector<16x16x128xf32> -> vector<16x48x128xf32>
    %cst_3 = arith.constant 0.000000e+00 : f32
    %4 = vector.broadcast %cst_3 : f32 to vector<2x48x128xf32>
    %5 = tpu.concatenate %4, %3, %4 in 0 : vector<2x48x128xf32>, vector<16x48x128xf32>, vector<2x48x128xf32> -> vector<20x48x128xf32>
    %6 = vector.extract_strided_slice %5 {offsets = [0, 14, 0], sizes = [16, 16, 128], strides = [1, 1, 1]} : vector<20x48x128xf32> to vector<16x16x128xf32>
    %7 = vector.extract_strided_slice %5 {offsets = [0, 15, 0], sizes = [16, 16, 128], strides = [1, 1, 1]} : vector<20x48x128xf32> to vector<16x16x128xf32>
    %8 = vector.extract_strided_slice %5 {offsets = [0, 16, 0], sizes = [16, 16, 128], strides = [1, 1, 1]} : vector<20x48x128xf32> to vector<16x16x128xf32>
    %9 = vector.extract_strided_slice %5 {offsets = [0, 17, 0], sizes = [16, 16, 128], strides = [1, 1, 1]} : vector<20x48x128xf32> to vector<16x16x128xf32>
    %10 = vector.extract_strided_slice %5 {offsets = [0, 18, 0], sizes = [16, 16, 128], strides = [1, 1, 1]} : vector<20x48x128xf32> to vector<16x16x128xf32>
    %11 = vector.extract_strided_slice %5 {offsets = [1, 14, 0], sizes = [16, 16, 128], strides = [1, 1, 1]} : vector<20x48x128xf32> to vector<16x16x128xf32>
    %12 = vector.extract_strided_slice %5 {offsets = [1, 15, 0], sizes = [16, 16, 128], strides = [1, 1, 1]} : vector<20x48x128xf32> to vector<16x16x128xf32>
    %13 = vector.extract_strided_slice %5 {offsets = [1, 16, 0], sizes = [16, 16, 128], strides = [1, 1, 1]} : vector<20x48x128xf32> to vector<16x16x128xf32>
    %14 = vector.extract_strided_slice %5 {offsets = [1, 17, 0], sizes = [16, 16, 128], strides = [1, 1, 1]} : vector<20x48x128xf32> to vector<16x16x128xf32>
    %15 = vector.extract_strided_slice %5 {offsets = [1, 18, 0], sizes = [16, 16, 128], strides = [1, 1, 1]} : vector<20x48x128xf32> to vector<16x16x128xf32>
    %16 = vector.extract_strided_slice %5 {offsets = [2, 14, 0], sizes = [16, 16, 128], strides = [1, 1, 1]} : vector<20x48x128xf32> to vector<16x16x128xf32>
    %17 = vector.extract_strided_slice %5 {offsets = [2, 15, 0], sizes = [16, 16, 128], strides = [1, 1, 1]} : vector<20x48x128xf32> to vector<16x16x128xf32>
    %18 = vector.extract_strided_slice %5 {offsets = [2, 16, 0], sizes = [16, 16, 128], strides = [1, 1, 1]} : vector<20x48x128xf32> to vector<16x16x128xf32>
    %19 = vector.extract_strided_slice %5 {offsets = [2, 17, 0], sizes = [16, 16, 128], strides = [1, 1, 1]} : vector<20x48x128xf32> to vector<16x16x128xf32>
    %20 = vector.extract_strided_slice %5 {offsets = [2, 18, 0], sizes = [16, 16, 128], strides = [1, 1, 1]} : vector<20x48x128xf32> to vector<16x16x128xf32>
    %21 = vector.extract_strided_slice %5 {offsets = [3, 14, 0], sizes = [16, 16, 128], strides = [1, 1, 1]} : vector<20x48x128xf32> to vector<16x16x128xf32>
    %22 = vector.extract_strided_slice %5 {offsets = [3, 15, 0], sizes = [16, 16, 128], strides = [1, 1, 1]} : vector<20x48x128xf32> to vector<16x16x128xf32>
    %23 = vector.extract_strided_slice %5 {offsets = [3, 16, 0], sizes = [16, 16, 128], strides = [1, 1, 1]} : vector<20x48x128xf32> to vector<16x16x128xf32>
    %24 = vector.extract_strided_slice %5 {offsets = [3, 17, 0], sizes = [16, 16, 128], strides = [1, 1, 1]} : vector<20x48x128xf32> to vector<16x16x128xf32>
    %25 = vector.extract_strided_slice %5 {offsets = [3, 18, 0], sizes = [16, 16, 128], strides = [1, 1, 1]} : vector<20x48x128xf32> to vector<16x16x128xf32>
    %26 = vector.extract_strided_slice %5 {offsets = [4, 14, 0], sizes = [16, 16, 128], strides = [1, 1, 1]} : vector<20x48x128xf32> to vector<16x16x128xf32>
    %27 = vector.extract_strided_slice %5 {offsets = [4, 15, 0], sizes = [16, 16, 128], strides = [1, 1, 1]} : vector<20x48x128xf32> to vector<16x16x128xf32>
    %28 = vector.extract_strided_slice %5 {offsets = [4, 16, 0], sizes = [16, 16, 128], strides = [1, 1, 1]} : vector<20x48x128xf32> to vector<16x16x128xf32>
    %29 = vector.extract_strided_slice %5 {offsets = [4, 17, 0], sizes = [16, 16, 128], strides = [1, 1, 1]} : vector<20x48x128xf32> to vector<16x16x128xf32>
    %30 = vector.extract_strided_slice %5 {offsets = [4, 18, 0], sizes = [16, 16, 128], strides = [1, 1, 1]} : vector<20x48x128xf32> to vector<16x16x128xf32>
    %31 = tpu.concatenate %6, %7, %8, %9, %10, %11, %12, %13, %14, %15, %16, %17, %18, %19, %20, %21 in 2 : vector<16x16x128xf32>, vector<16x16x128xf32>, vector<16x16x128xf32>, vector<16x16x128xf32>, vector<16x16x128xf32>, vector<16x16x128xf32>, vector<16x16x128xf32>, vector<16x16x128xf32>, vector<16x16x128xf32>, vector<16x16x128xf32>, vector<16x16x128xf32>, vector<16x16x128xf32>, vector<16x16x128xf32>, vector<16x16x128xf32>, vector<16x16x128xf32>, vector<16x16x128xf32> -> vector<16x16x2048xf32>
    %32 = tpu.concatenate %22, %23, %24, %25, %26, %27, %28, %29, %30 in 2 : vector<16x16x128xf32>, vector<16x16x128xf32>, vector<16x16x128xf32>, vector<16x16x128xf32>, vector<16x16x128xf32>, vector<16x16x128xf32>, vector<16x16x128xf32>, vector<16x16x128xf32>, vector<16x16x128xf32> -> vector<16x16x1152xf32>
    %33 = tpu.concatenate %31, %32 in 2 : vector<16x16x2048xf32>, vector<16x16x1152xf32> -> vector<16x16x3200xf32>
    %34 = vector.shape_cast %33 : vector<16x16x3200xf32> to vector<256x3200xf32>
    %c0_4 = arith.constant 0 : index
    %c0_5 = arith.constant 0 : index
    %35 = vector.load %arg2[%c0_4, %c0_5] : memref<3200x128xf32, #tpu.memory_space<vmem>>, vector<3200x128xf32>
    %cst_6 = arith.constant dense<0.000000e+00> : vector<256x128xf32>
    %36 = tpu.matmul %34, %35, %cst_6 {dimension_numbers = #tpu.dot_dimension_numbers<[1], [0], [0], [1], [0, 0, 1, 1], [], []>} : vector<256x3200xf32>, vector<3200x128xf32>, vector<256x128xf32> -> vector<256x128xf32>
    %c0_7 = arith.constant 0 : index
    %c0_8 = arith.constant 0 : index
    %37 = vector.load %arg3[%c0_7, %c0_8] : memref<1x128xf32, #tpu.memory_space<vmem>>, vector<1x128xf32>
    %38 = vector.broadcast %37 : vector<1x128xf32> to vector<256x128xf32>
    %39 = arith.addf %36, %38 : vector<256x128xf32>
    %cst_9 = arith.constant 0.000000e+00 : f32
    %40 = vector.broadcast %cst_9 : f32 to vector<256x128xf32>
    %41 = arith.maximumf %39, %40 : vector<256x128xf32>
    %42 = vector.shape_cast %41 : vector<256x128xf32> to vector<16x16x128xf32>
    %c0_10 = arith.constant 0 : index
    %c0_11 = arith.constant 0 : index
    %c0_12 = arith.constant 0 : index
    %c0_13 = arith.constant 0 : index
    %43 = vector.load %arg4[%c0_10, %c0_11, %c0_12, %c0_13] : memref<1x16x16x128xf32, #tpu.memory_space<vmem>>, vector<1x16x16x128xf32>
    %44 = vector.shape_cast %43 : vector<1x16x16x128xf32> to vector<16x16x128xf32>
    %45 = vector.shape_cast %42 : vector<16x16x128xf32> to vector<1x16x16x128xf32>
    tpu.vector_store %arg4[%c0_10, %c0_11, %c0_12, %c0_13], %45 {strides = array<i32>} : memref<1x16x16x128xf32, #tpu.memory_space<vmem>>, vector<1x16x16x128xf32>,
    return
  }
  func.func @transform_0(%arg0: i32) -> (i32, i32, i32, i32) {
    %c0_i32 = arith.constant 0 : i32
    %c0_i32_0 = arith.constant 0 : i32
    %c0_i32_1 = arith.constant 0 : i32
    %c0_i32_2 = arith.constant 0 : i32
    return %arg0, %c0_i32, %c0_i32_0, %c0_i32_1 : i32, i32, i32, i32
  }
  func.func @transform_1(%arg0: i32) -> (i32, i32) {
    %c0_i32 = arith.constant 0 : i32
    %c0_i32_0 = arith.constant 0 : i32
    %c0_i32_1 = arith.constant 0 : i32
    return %c0_i32, %c0_i32_0 : i32, i32
  }
  func.func @transform_2(%arg0: i32) -> (i32, i32) {
    %c0_i32 = arith.constant 0 : i32
    %c0_i32_0 = arith.constant 0 : i32
    %c0_i32_1 = arith.constant 0 : i32
    return %c0_i32, %c0_i32_0 : i32, i32
  }
  func.func @transform_3(%arg0: i32) -> (i32, i32, i32, i32) {
    %c0_i32 = arith.constant 0 : i32
    %c0_i32_0 = arith.constant 0 : i32
    %c0_i32_1 = arith.constant 0 : i32
    %c0_i32_2 = arith.constant 0 : i32
    return %arg0, %c0_i32, %c0_i32_0, %c0_i32_1 : i32, i32, i32, i32
  }
}

</mosaic_0001>

<llo_original>
// kernel: inception_v1_forward.7
$region0: #{inception_v1_forward.7}
  #allocation0 [shape = 'u32[]', space=smem, size = 0x4, offset = 0x4, fixed_abs, tag = 'smem constant byte address 0x4 - core index']
  #allocation1 [shape = 'u32[144,128]{1,0:T(1,128)}', space=vmem, size = 0x12000, scoped, tag = 'internal scratch']
  %s0 = inlined_call_operand.vmem [shape: f32[2,16,16,4], index: 0, kind: input, shape index: {}]
  %s1 = inlined_call_operand.vmem [shape: f32[4,128], index: 1, kind: input, shape index: {}]
  %s2 = inlined_call_operand.vmem [shape: f32[1,128], index: 2, kind: input, shape index: {}]
  %s3 = inlined_call_operand.vmem [shape: f32[2,16,16,128], index: 3, kind: output, shape index: {}]
  %s4 = sld [smem:[#allocation0]]
  $region45: #{inception_v1_forward.7} parent=0
    _
  %s6 = ssub.s32 1, %s4
  %s7 = scalar_select 0, %s6, %s4
  loop: start=0, step=1, limit=4
  $region2: #{inception_v1_forward.7} parent=0 // loop_pre_header
    _
  $region3: #{inception_v1_forward.7} parent=0 // loop_header
    %s9 = sphi 0, %s13
    %p10 = scmp.ge.s32.totalorder %s9, 4
    %s19 = sphi 0, %s21
    %s22 = sphi 0, %s19
    %s23 = sphi 0, %s22
    %s39 = sphi 0, %s23
    %s43 = sphi 0, %s43
    %s45 = sphi 0, %s43
    %s46 = sphi 0, %s45
    %s60 = sphi 0, %s46
    %s64 = sphi 0, %s64
    %s66 = sphi 0, %s64
    %s67 = sphi 0, %s66
    %s81 = sphi 0, %s67
    %s87 = sphi 0, %s89
    %s90 = sphi 0, %s87
    %s91 = sphi 0, %s90
    %s107 = sphi 0, %s91
  $region4: #{inception_v1_forward.7} parent=0 // loop_header_branch
    %12 = sbr.rel (%p10) target = $region8
  $region5: #{inception_v1_forward.7} parent=0 // loop_body
    %s14 = ssub.s32 %s9, 1
    %s15 = ssub.s32 %s9, 2
    %s16 = sadd.s32 %s9, 1
    %s17 = ssub.s32 %s9, %s16
    %p18 = scmp.eq.s32.totalorder %s17, 0
    %s20 = sadd.s32 %s19, 1
    %s21 = scalar_select %p18, %s19, %s20
    %p24 = pneg %p18
    %p25 = scmp.eq.s32.totalorder %s9, 1
    %p26 = por %p24, %p25
    %p27 = scmp.ne.s32.totalorder %s19, %s22
    %p28 = scmp.eq.s32.totalorder %s9, 0
    %p29 = por %p27, %p28
    %p30 = scmp.ne.s32.totalorder %s19, %s22
    %p31 = scmp.eq.s32.totalorder %s14, 1
    %p32 = por %p30, %p31
    %p33 = scmp.ne.s32.totalorder %s22, %s23
    %p34 = scmp.eq.s32.totalorder %s14, 0
    %p35 = por %p33, %p34
    %p36 = scmp.ne.s32.totalorder %s22, %s23
    %p37 = scmp.eq.s32.totalorder %s15, 1
    %p38 = por %p36, %p37
    %p40 = scmp.ne.s32.totalorder %s23, %s39
    %p41 = scmp.eq.s32.totalorder %s15, 0
    %p42 = por %p40, %p41
    %s44 = sadd.s32 %s43, 1
    %p47 = scmp.eq.s32.totalorder %s9, 1
    %p48 = scmp.ne.s32.totalorder %s43, %s45
    %p49 = scmp.eq.s32.totalorder %s9, 0
    %p50 = por %p48, %p49
    %p51 = scmp.ne.s32.totalorder %s43, %s45
    %p52 = scmp.eq.s32.totalorder %s14, 1
    %p53 = por %p51, %p52
    %p54 = scmp.ne.s32.totalorder %s45, %s46
    %p55 = scmp.eq.s32.totalorder %s14, 0
    %p56 = por %p54, %p55
    %p57 = scmp.ne.s32.totalorder %s45, %s46
    %p58 = scmp.eq.s32.totalorder %s15, 1
    %p59 = por %p57, %p58
    %p61 = scmp.ne.s32.totalorder %s46, %s60
    %p62 = scmp.eq.s32.totalorder %s15, 0
    %p63 = por %p61, %p62
    %s65 = sadd.s32 %s64, 1
    %p68 = scmp.eq.s32.totalorder %s9, 1
    %p69 = scmp.ne.s32.totalorder %s64, %s66
    %p70 = scmp.eq.s32.totalorder %s9, 0
    %p71 = por %p69, %p70
    %p72 = scmp.ne.s32.totalorder %s64, %s66
    %p73 = scmp.eq.s32.totalorder %s14, 1
    %p74 = por %p72, %p73
    %p75 = scmp.ne.s32.totalorder %s66, %s67
    %p76 = scmp.eq.s32.totalorder %s14, 0
    %p77 = por %p75, %p76
    %p78 = scmp.ne.s32.totalorder %s66, %s67
    %p79 = scmp.eq.s32.totalorder %s15, 1
    %p80 = por %p78, %p79
    %p82 = scmp.ne.s32.totalorder %s67, %s81
    %p83 = scmp.eq.s32.totalorder %s15, 0
    %p84 = por %p82, %p83
    %s85 = ssub.s32 %s9, %s16
    %p86 = scmp.eq.s32.totalorder %s85, 0
    %s88 = sadd.s32 %s87, 1
    %s89 = scalar_select %p86, %s87, %s88
    %p92 = pneg %p86
    %p93 = scmp.eq.s32.totalorder %s9, 1
    %p94 = por %p92, %p93
    %p95 = scmp.ne.s32.totalorder %s87, %s90
    %p96 = scmp.eq.s32.totalorder %s9, 0
    %p97 = por %p95, %p96
    %p98 = scmp.ne.s32.totalorder %s87, %s90
    %p99 = scmp.eq.s32.totalorder %s14, 1
    %p100 = por %p98, %p99
    %p101 = scmp.ne.s32.totalorder %s90, %s91
    %p102 = scmp.eq.s32.totalorder %s14, 0
    %p103 = por %p101, %p102
    %p104 = scmp.ne.s32.totalorder %s90, %s91
    %p105 = scmp.eq.s32.totalorder %s15, 1
    %p106 = por %p104, %p105
    %p108 = scmp.ne.s32.totalorder %s91, %s107
    %p109 = scmp.eq.s32.totalorder %s15, 0
    %p110 = por %p108, %p109
    %p111 = scmp.le.s32.totalorder 1, %s9
    %p112 = scmp.lt.s32.totalorder %s9, 3
    %p113 = pnand %p111, %p112
    %p114 = pneg %p113
    // Predicated region
    $region9: #{inception_v1_forward.7} parent=5 // pred_check
      _
    $region10: #{inception_v1_forward.7} parent=5 // pred_check_branch
      %116 = sbr.rel (%p113) target = $region12
    $region11: #{inception_v1_forward.7} parent=5 // pred_region
      %s117 = ssub.s32 %s9, 1
      // Predicated region
      $region13: #{inception_v1_forward.7} parent=11 // pred_check
        %p118 = pneg %p56
      $region14: #{inception_v1_forward.7} parent=11 // pred_check_branch
        %120 = sbr.rel (%p118) target = $region16
      $region15: #{inception_v1_forward.7} parent=11 // pred_region
        _
      $region16: #{inception_v1_forward.7} parent=11 // pred_fallthru
        _
      // Predicated region
      $region17: #{inception_v1_forward.7} parent=11 // pred_check
        %p121 = pneg %p77
      $region18: #{inception_v1_forward.7} parent=11 // pred_check_branch
        %123 = sbr.rel (%p121) target = $region20
      $region19: #{inception_v1_forward.7} parent=11 // pred_region
        _
      $region20: #{inception_v1_forward.7} parent=11 // pred_fallthru
        _
    $region12: #{inception_v1_forward.7} parent=5 // pred_fallthru
      _
    %p124 = scmp.lt.s32.totalorder %s9, 2
    // Predicated region
    $region21: #{inception_v1_forward.7} parent=5 // pred_check
      %p125 = pneg %p124
    $region22: #{inception_v1_forward.7} parent=5 // pred_check_branch
      %127 = sbr.rel (%p125) target = $region24
    $region23: #{inception_v1_forward.7} parent=5 // pred_region
      // Predicated region
      $region25: #{inception_v1_forward.7} parent=23 // pred_check
        %p128 = pneg %p29
      $region26: #{inception_v1_forward.7} parent=23 // pred_check_branch
        %130 = sbr.rel (%p128) target = $region28
      $region27: #{inception_v1_forward.7} parent=23 // pred_region
        %p131 = scmp.lt.s32.totalorder %s9, 1
        %s132 = scalar_select %p131, %s9, 1
        %s133 = smul.addr %s132, 32
        %s134 = smul.addr %s133, 8
        %s135 = scalar_lea.vmem %s0, %s134
      $region28: #{inception_v1_forward.7} parent=23 // pred_fallthru
        _
    $region24: #{inception_v1_forward.7} parent=5 // pred_fallthru
      _
    %p136 = scmp.le.s32.totalorder 1, %s9
    %p137 = scmp.lt.s32.totalorder %s9, 3
    %p138 = pnand %p136, %p137
    %p139 = pneg %p138
    // Predicated region
    $region29: #{inception_v1_forward.7} parent=5 // pred_check
      _
    $region30: #{inception_v1_forward.7} parent=5 // pred_check_branch
      %141 = sbr.rel (%p138) target = $region32
    $region31: #{inception_v1_forward.7} parent=5 // pred_region
      %s142 = ssub.s32 %s9, 1
      %p143 = scmp.lt.s32.totalorder %s14, 1
      %s144 = scalar_select %p143, %s14, 1
      %s145 = smul.addr %s144, 32
      %s146 = smul.addr %s145, 8
      %s147 = scalar_lea.vmem %s0, %s146
      %p148 = pneg %p35
      %p149 = pneg %p32
      %p150 = pneg %p56
      %p151 = pneg %p53
      %p152 = pneg %p77
      %p153 = pneg %p74
      %p154 = pneg %p103
      %p155 = pneg %p100
      %p156 = scmp.lt.s32.totalorder %s14, 1
      %s157 = scalar_select %p156, %s14, 1
      %s158 = smul.addr %s157, 32
      %s159 = smul.addr %s158, 8
      %s160 = scalar_lea.vmem %s3, %s159
      %p161 = scmp.lt.s32.totalorder %s14, 1
      %s162 = scalar_select %p161, %s14, 1
      %s163 = smul.addr %s162, 32
      %s164 = smul.addr %s163, 8
      %s165 = scalar_lea.vmem %s0, %s164
      %p166 = scmp.lt.s32.totalorder %s14, 1
      %s167 = scalar_select %p166, %s14, 1
      %s168 = smul.addr %s167, 32
      %s169 = smul.addr %s168, 8
      %s170 = scalar_lea.vmem %s3, %s169
      %v171 = vld [vmem:[%s165] sm:$0xff]
      %v172 = vld [vmem:[%s165 + $0x8] sm:$0xff]
      %v173 = vld [vmem:[%s165 + $0x10] sm:$0xff]
      %v174 = vld [vmem:[%s165 + $0x18] sm:$0xff]
      %v175 = vld [vmem:[%s165 + $0x20] sm:$0xff]
      %v176 = vld [vmem:[%s165 + $0x28] sm:$0xff]
      %v177 = vld [vmem:[%s165 + $0x30] sm:$0xff]
      %v178 = vld [vmem:[%s165 + $0x38] sm:$0xff]
      %v179 = vld [vmem:[%s165 + $0x40] sm:$0xff]
      %v180 = vld [vmem:[%s165 + $0x48] sm:$0xff]
      %v181 = vld [vmem:[%s165 + $0x50] sm:$0xff]
      %v182 = vld [vmem:[%s165 + $0x58] sm:$0xff]
      %v183 = vld [vmem:[%s165 + $0x60] sm:$0xff]
      %v184 = vld [vmem:[%s165 + $0x68] sm:$0xff]
      %v185 = vld [vmem:[%s165 + $0x70] sm:$0xff]
      %v186 = vld [vmem:[%s165 + $0x78] sm:$0xff]
      %v187 = vld [vmem:[%s165 + $0x80] sm:$0xff]
      %v188 = vld [vmem:[%s165 + $0x88] sm:$0xff]
      %v189 = vld [vmem:[%s165 + $0x90] sm:$0xff]
      %v190 = vld [vmem:[%s165 + $0x98] sm:$0xff]
      %v191 = vld [vmem:[%s165 + $0xa0] sm:$0xff]
      %v192 = vld [vmem:[%s165 + $0xa8] sm:$0xff]
      %v193 = vld [vmem:[%s165 + $0xb0] sm:$0xff]
      %v194 = vld [vmem:[%s165 + $0xb8] sm:$0xff]
      %v195 = vld [vmem:[%s165 + $0xc0] sm:$0xff]
      %v196 = vld [vmem:[%s165 + $0xc8] sm:$0xff]
      %v197 = vld [vmem:[%s165 + $0xd0] sm:$0xff]
      %v198 = vld [vmem:[%s165 + $0xd8] sm:$0xff]
      %v199 = vld [vmem:[%s165 + $0xe0] sm:$0xff]
      %v200 = vld [vmem:[%s165 + $0xe8] sm:$0xff]
      %v201 = vld [vmem:[%s165 + $0xf0] sm:$0xff]
      %v202 = vld [vmem:[%s165 + $0xf8] sm:$0xff]
      %v203 = vmax.f32 %v171, -3.4028235e+38
      %v204 = vmax.f32 %v172, -3.4028235e+38
      %v205 = vmax.f32 %v171, %v173
      %v206 = vmax.f32 %v172, %v174
      %v207 = vmax.f32 %v173, %v175
      %v208 = vmax.f32 %v174, %v176
      %v209 = vmax.f32 %v175, %v177
      %v210 = vmax.f32 %v176, %v178
      %v211 = vmax.f32 %v177, %v179
      %v212 = vmax.f32 %v178, %v180
      %v213 = vmax.f32 %v179, %v181
      %v214 = vmax.f32 %v180, %v182
      %v215 = vmax.f32 %v181, %v183
      %v216 = vmax.f32 %v182, %v184
      %v217 = vmax.f32 %v183, %v185
      %v218 = vmax.f32 %v184, %v186
      %v219 = vmax.f32 %v185, %v187
      %v220 = vmax.f32 %v186, %v188
      %v221 = vmax.f32 %v187, %v189
      %v222 = vmax.f32 %v188, %v190
      %v223 = vmax.f32 %v189, %v191
      %v224 = vmax.f32 %v190, %v192
      %v225 = vmax.f32 %v191, %v193
      %v226 = vmax.f32 %v192, %v194
      %v227 = vmax.f32 %v193, %v195
      %v228 = vmax.f32 %v194, %v196
      %v229 = vmax.f32 %v195, %v197
      %v230 = vmax.f32 %v196, %v198
      %v231 = vmax.f32 %v197, %v199
      %v232 = vmax.f32 %v198, %v200
      %v233 = vmax.f32 %v199, %v201
      %v234 = vmax.f32 %v200, %v202
      %v235 = vmax.f32 %v203, %v173
      %v236 = vmax.f32 %v204, %v174
      %v237 = vmax.f32 %v205, %v175
      %v238 = vmax.f32 %v206, %v176
      %v239 = vmax.f32 %v207, %v177
      %v240 = vmax.f32 %v208, %v178
      %v241 = vmax.f32 %v209, %v179
      %v242 = vmax.f32 %v210, %v180
      %v243 = vmax.f32 %v211, %v181
      %v244 = vmax.f32 %v212, %v182
      %v245 = vmax.f32 %v213, %v183
      %v246 = vmax.f32 %v214, %v184
      %v247 = vmax.f32 %v215, %v185
      %v248 = vmax.f32 %v216, %v186
      %v249 = vmax.f32 %v217, %v187
      %v250 = vmax.f32 %v218, %v188
      %v251 = vmax.f32 %v219, %v189
      %v252 = vmax.f32 %v220, %v190
      %v253 = vmax.f32 %v221, %v191
      %v254 = vmax.f32 %v222, %v192
      %v255 = vmax.f32 %v223, %v193
      %v256 = vmax.f32 %v224, %v194
      %v257 = vmax.f32 %v225, %v195
      %v258 = vmax.f32 %v226, %v196
      %v259 = vmax.f32 %v227, %v197
      %v260 = vmax.f32 %v228, %v198
      %v261 = vmax.f32 %v229, %v199
      %v262 = vmax.f32 %v230, %v200
      %v263 = vmax.f32 %v231, %v201
      %v264 = vmax.f32 %v232, %v202
      %v265 = vmax.f32 %v233, -3.4028235e+38
      %v266 = vmax.f32 %v234, -3.4028235e+38
      %vm299 = vcmask 1046528
      %v300 = vrot.slane %v235, 1
      %v301 = vrot.slane %v236, 1
      %v302 = vsel %vm299, %v300, %v301
      %v303 = vrot.slane %v237, 1
      %v304 = vrot.slane %v238, 1
      %v305 = vsel %vm299, %v303, %v304
      %v306 = vrot.slane %v239, 1
      %v307 = vrot.slane %v240, 1
      %v308 = vsel %vm299, %v306, %v307
      %v309 = vrot.slane %v241, 1
      %v310 = vrot.slane %v242, 1
      %v311 = vsel %vm299, %v309, %v310
      %v312 = vrot.slane %v243, 1
      %v313 = vrot.slane %v244, 1
      %v314 = vsel %vm299, %v312, %v313
      %v315 = vrot.slane %v245, 1
      %v316 = vrot.slane %v246, 1
      %v317 = vsel %vm299, %v315, %v316
      %v318 = vrot.slane %v247, 1
      %v319 = vrot.slane %v248, 1
      %v320 = vsel %vm299, %v318, %v319
      %v321 = vrot.slane %v249, 1
      %v322 = vrot.slane %v250, 1
      %v323 = vsel %vm299, %v321, %v322
      %v324 = vrot.slane %v251, 1
      %v325 = vrot.slane %v252, 1
      %v326 = vsel %vm299, %v324, %v325
      %v327 = vrot.slane %v253, 1
      %v328 = vrot.slane %v254, 1
      %v329 = vsel %vm299, %v327, %v328
      %v330 = vrot.slane %v255, 1
      %v331 = vrot.slane %v256, 1
      %v332 = vsel %vm299, %v330, %v331
      %v333 = vrot.slane %v257, 1
      %v334 = vrot.slane %v258, 1
      %v335 = vsel %vm299, %v333, %v334
      %v336 = vrot.slane %v259, 1
      %v337 = vrot.slane %v260, 1
      %v338 = vsel %vm299, %v336, %v337
      %v339 = vrot.slane %v261, 1
      %v340 = vrot.slane %v262, 1
      %v341 = vsel %vm299, %v339, %v340
      %v342 = vrot.slane %v263, 1
      %v343 = vrot.slane %v264, 1
      %v344 = vsel %vm299, %v342, %v343
      %v345 = vrot.slane %v265, 1
      %v346 = vrot.slane %v266, 1
      %v347 = vsel %vm299, %v345, %v346
      %v396 = vmax.f32 %v300, -3.4028235e+38
      %v397 = vmax.f32 %v235, %v302
      %v398 = vmax.f32 %v236, %v301
      %v399 = vmax.f32 %v303, -3.4028235e+38
      %v400 = vmax.f32 %v237, %v305
      %v401 = vmax.f32 %v238, %v304
      %v402 = vmax.f32 %v306, -3.4028235e+38
      %v403 = vmax.f32 %v239, %v308
      %v404 = vmax.f32 %v240, %v307
      %v405 = vmax.f32 %v309, -3.4028235e+38
      %v406 = vmax.f32 %v241, %v311
      %v407 = vmax.f32 %v242, %v310
      %v408 = vmax.f32 %v312, -3.4028235e+38
      %v409 = vmax.f32 %v243, %v314
      %v410 = vmax.f32 %v244, %v313
      %v411 = vmax.f32 %v315, -3.4028235e+38
      %v412 = vmax.f32 %v245, %v317
      %v413 = vmax.f32 %v246, %v316
      %v414 = vmax.f32 %v318, -3.4028235e+38
      %v415 = vmax.f32 %v247, %v320
      %v416 = vmax.f32 %v248, %v319
      %v417 = vmax.f32 %v321, -3.4028235e+38
      %v418 = vmax.f32 %v249, %v323
      %v419 = vmax.f32 %v250, %v322
      %v420 = vmax.f32 %v324, -3.4028235e+38
      %v421 = vmax.f32 %v251, %v326
      %v422 = vmax.f32 %v252, %v325
      %v423 = vmax.f32 %v327, -3.4028235e+38
      %v424 = vmax.f32 %v253, %v329
      %v425 = vmax.f32 %v254, %v328
      %v426 = vmax.f32 %v330, -3.4028235e+38
      %v427 = vmax.f32 %v255, %v332
      %v428 = vmax.f32 %v256, %v331
      %v429 = vmax.f32 %v333, -3.4028235e+38
      %v430 = vmax.f32 %v257, %v335
      %v431 = vmax.f32 %v258, %v334
      %v432 = vmax.f32 %v336, -3.4028235e+38
      %v433 = vmax.f32 %v259, %v338
      %v434 = vmax.f32 %v260, %v337
      %v435 = vmax.f32 %v339, -3.4028235e+38
      %v436 = vmax.f32 %v261, %v341
      %v437 = vmax.f32 %v262, %v340
      %v438 = vmax.f32 %v342, -3.4028235e+38
      %v439 = vmax.f32 %v263, %v344
      %v440 = vmax.f32 %v264, %v343
      %v441 = vmax.f32 %v345, -3.4028235e+38
      %v442 = vmax.f32 %v265, %v347
      %v443 = vmax.f32 %v266, %v346
      %vm445 = vcmask 1045504
      %v446 = vrot.slane %v235, 2
      %v447 = vrot.slane %v236, 2
      %v448 = vsel %vm445, %v446, %v447
      %v449 = vrot.slane -3.4028235e+38, 2
      %v450 = vsel %vm445, %v447, %v449
      %v451 = vrot.slane %v237, 2
      %v452 = vrot.slane %v238, 2
      %v453 = vsel %vm445, %v451, %v452
      %v454 = vsel %vm445, %v452, %v449
      %v455 = vrot.slane %v239, 2
      %v456 = vrot.slane %v240, 2
      %v457 = vsel %vm445, %v455, %v456
      %v458 = vsel %vm445, %v456, %v449
      %v459 = vrot.slane %v241, 2
      %v460 = vrot.slane %v242, 2
      %v461 = vsel %vm445, %v459, %v460
      %v462 = vsel %vm445, %v460, %v449
      %v463 = vrot.slane %v243, 2
      %v464 = vrot.slane %v244, 2
      %v465 = vsel %vm445, %v463, %v464
      %v466 = vsel %vm445, %v464, %v449
      %v467 = vrot.slane %v245, 2
      %v468 = vrot.slane %v246, 2
      %v469 = vsel %vm445, %v467, %v468
      %v470 = vsel %vm445, %v468, %v449
      %v471 = vrot.slane %v247, 2
      %v472 = vrot.slane %v248, 2
      %v473 = vsel %vm445, %v471, %v472
      %v474 = vsel %vm445, %v472, %v449
      %v475 = vrot.slane %v249, 2
      %v476 = vrot.slane %v250, 2
      %v477 = vsel %vm445, %v475, %v476
      %v478 = vsel %vm445, %v476, %v449
      %v479 = vrot.slane %v251, 2
      %v480 = vrot.slane %v252, 2
      %v481 = vsel %vm445, %v479, %v480
      %v482 = vsel %vm445, %v480, %v449
      %v483 = vrot.slane %v253, 2
      %v484 = vrot.slane %v254, 2
      %v485 = vsel %vm445, %v483, %v484
      %v486 = vsel %vm445, %v484, %v449
      %v487 = vrot.slane %v255, 2
      %v488 = vrot.slane %v256, 2
      %v489 = vsel %vm445, %v487, %v488
      %v490 = vsel %vm445, %v488, %v449
      %v491 = vrot.slane %v257, 2
      %v492 = vrot.slane %v258, 2
      %v493 = vsel %vm445, %v491, %v492
      %v494 = vsel %vm445, %v492, %v449
      %v495 = vrot.slane %v259, 2
      %v496 = vrot.slane %v260, 2
      %v497 = vsel %vm445, %v495, %v496
      %v498 = vsel %vm445, %v496, %v449
      %v499 = vrot.slane %v261, 2
      %v500 = vrot.slane %v262, 2
      %v501 = vsel %vm445, %v499, %v500
      %v502 = vsel %vm445, %v500, %v449
      %v503 = vrot.slane %v263, 2
      %v504 = vrot.slane %v264, 2
      %v505 = vsel %vm445, %v503, %v504
      %v506 = vsel %vm445, %v504, %v449
      %v507 = vrot.slane %v265, 2
      %v508 = vrot.slane %v266, 2
      %v509 = vsel %vm445, %v507, %v508
      %v510 = vsel %vm445, %v508, %v449
      %v559 = vmax.f32 %v396, %v446
      %v560 = vmax.f32 %v397, %v448
      %v561 = vmax.f32 %v398, %v450
      %v562 = vmax.f32 %v399, %v451
      %v563 = vmax.f32 %v400, %v453
      %v564 = vmax.f32 %v401, %v454
      %v565 = vmax.f32 %v402, %v455
      %v566 = vmax.f32 %v403, %v457
      %v567 = vmax.f32 %v404, %v458
      %v568 = vmax.f32 %v405, %v459
      %v569 = vmax.f32 %v406, %v461
      %v570 = vmax.f32 %v407, %v462
      %v571 = vmax.f32 %v408, %v463
      %v572 = vmax.f32 %v409, %v465
      %v573 = vmax.f32 %v410, %v466
      %v574 = vmax.f32 %v411, %v467
      %v575 = vmax.f32 %v412, %v469
      %v576 = vmax.f32 %v413, %v470
      %v577 = vmax.f32 %v414, %v471
      %v578 = vmax.f32 %v415, %v473
      %v579 = vmax.f32 %v416, %v474
      %v580 = vmax.f32 %v417, %v475
      %v581 = vmax.f32 %v418, %v477
      %v582 = vmax.f32 %v419, %v478
      %v583 = vmax.f32 %v420, %v479
      %v584 = vmax.f32 %v421, %v481
      %v585 = vmax.f32 %v422, %v482
      %v586 = vmax.f32 %v423, %v483
      %v587 = vmax.f32 %v424, %v485
      %v588 = vmax.f32 %v425, %v486
      %v589 = vmax.f32 %v426, %v487
      %v590 = vmax.f32 %v427, %v489
      %v591 = vmax.f32 %v428, %v490
      %v592 = vmax.f32 %v429, %v491
      %v593 = vmax.f32 %v430, %v493
      %v594 = vmax.f32 %v431, %v494
      %v595 = vmax.f32 %v432, %v495
      %v596 = vmax.f32 %v433, %v497
      %v597 = vmax.f32 %v434, %v498
      %v598 = vmax.f32 %v435, %v499
      %v599 = vmax.f32 %v436, %v501
      %v600 = vmax.f32 %v437, %v502
      %v601 = vmax.f32 %v438, %v503
      %v602 = vmax.f32 %v439, %v505
      %v603 = vmax.f32 %v440, %v506
      %v604 = vmax.f32 %v441, %v507
      %v605 = vmax.f32 %v442, %v509
      %v606 = vmax.f32 %v443, %v510
      %vm655 = vcmask 1040384
      %v656 = vrot.slane %v559, 7
      %v657 = vrot.slane %v560, 7
      %v658 = vsel %vm655, %v656, %v657
      %v659 = vrot.slane %v561, 7
      %v660 = vsel %vm655, %v657, %v659
      %v661 = vrot.slane %v562, 7
      %v662 = vrot.slane %v563, 7
      %v663 = vsel %vm655, %v661, %v662
      %v664 = vrot.slane %v564, 7
      %v665 = vsel %vm655, %v662, %v664
      %v666 = vrot.slane %v565, 7
      %v667 = vrot.slane %v566, 7
      %v668 = vsel %vm655, %v666, %v667
      %v669 = vrot.slane %v567, 7
      %v670 = vsel %vm655, %v667, %v669
      %v671 = vrot.slane %v568, 7
      %v672 = vrot.slane %v569, 7
      %v673 = vsel %vm655, %v671, %v672
      %v674 = vrot.slane %v570, 7
      %v675 = vsel %vm655, %v672, %v674
      %v676 = vrot.slane %v571, 7
      %v677 = vrot.slane %v572, 7
      %v678 = vsel %vm655, %v676, %v677
      %v679 = vrot.slane %v573, 7
      %v680 = vsel %vm655, %v677, %v679
      %v681 = vrot.slane %v574, 7
      %v682 = vrot.slane %v575, 7
      %v683 = vsel %vm655, %v681, %v682
      %v684 = vrot.slane %v576, 7
      %v685 = vsel %vm655, %v682, %v684
      %v686 = vrot.slane %v577, 7
      %v687 = vrot.slane %v578, 7
      %v688 = vsel %vm655, %v686, %v687
      %v689 = vrot.slane %v579, 7
      %v690 = vsel %vm655, %v687, %v689
      %v691 = vrot.slane %v580, 7
      %v692 = vrot.slane %v581, 7
      %v693 = vsel %vm655, %v691, %v692
      %v694 = vrot.slane %v582, 7
      %v695 = vsel %vm655, %v692, %v694
      %v696 = vrot.slane %v583, 7
      %v697 = vrot.slane %v584, 7
      %v698 = vsel %vm655, %v696, %v697
      %v699 = vrot.slane %v585, 7
      %v700 = vsel %vm655, %v697, %v699
      %v701 = vrot.slane %v586, 7
      %v702 = vrot.slane %v587, 7
      %v703 = vsel %vm655, %v701, %v702
      %v704 = vrot.slane %v588, 7
      %v705 = vsel %vm655, %v702, %v704
      %v706 = vrot.slane %v589, 7
      %v707 = vrot.slane %v590, 7
      %v708 = vsel %vm655, %v706, %v707
      %v709 = vrot.slane %v591, 7
      %v710 = vsel %vm655, %v707, %v709
      %v711 = vrot.slane %v592, 7
      %v712 = vrot.slane %v593, 7
      %v713 = vsel %vm655, %v711, %v712
      %v714 = vrot.slane %v594, 7
      %v715 = vsel %vm655, %v712, %v714
      %v716 = vrot.slane %v595, 7
      %v717 = vrot.slane %v596, 7
      %v718 = vsel %vm655, %v716, %v717
      %v719 = vrot.slane %v597, 7
      %v720 = vsel %vm655, %v717, %v719
      %v721 = vrot.slane %v598, 7
      %v722 = vrot.slane %v599, 7
      %v723 = vsel %vm655, %v721, %v722
      %v724 = vrot.slane %v600, 7
      %v725 = vsel %vm655, %v722, %v724
      %v726 = vrot.slane %v601, 7
      %v727 = vrot.slane %v602, 7
      %v728 = vsel %vm655, %v726, %v727
      %v729 = vrot.slane %v603, 7
      %v730 = vsel %vm655, %v727, %v729
      %v731 = vrot.slane %v604, 7
      %v732 = vrot.slane %v605, 7
      %v733 = vsel %vm655, %v731, %v732
      %v734 = vrot.slane %v606, 7
      %v735 = vsel %vm655, %v732, %v734
      %v736 = vld [vmem:[%s1] sm:$0xf]
      %v737 = vld [vmem:[%s2] sm:$0x1]
      %v739 = vlaneseq
      %v740 = vshrl.u32 %v739, 7
      %v741 = vsub.s32 0, %v740
      %v742 = vrot.slane %v737, %v741
      %vm744 = vcmask 31744
      %v745 = vsel %vm744, %v658, 0
      %v747 = vsel %vm744, %v660, 0
      %v749 = vsel %vm744, %v663, 0
      %v751 = vsel %vm744, %v665, 0
      %v753 = vsel %vm744, %v668, 0
      %v755 = vsel %vm744, %v670, 0
      %v757 = vsel %vm744, %v673, 0
      %v759 = vsel %vm744, %v675, 0
      %v761 = vsel %vm744, %v678, 0
      %v763 = vsel %vm744, %v680, 0
      %v765 = vsel %vm744, %v683, 0
      %v767 = vsel %vm744, %v685, 0
      %v769 = vsel %vm744, %v688, 0
      %v771 = vsel %vm744, %v690, 0
      %v773 = vsel %vm744, %v693, 0
      %v775 = vsel %vm744, %v695, 0
      %v777 = vsel %vm744, %v698, 0
      %v779 = vsel %vm744, %v700, 0
      %v781 = vsel %vm744, %v703, 0
      %v783 = vsel %vm744, %v705, 0
      %v785 = vsel %vm744, %v708, 0
      %v787 = vsel %vm744, %v710, 0
      %v789 = vsel %vm744, %v713, 0
      %v791 = vsel %vm744, %v715, 0
      %v793 = vsel %vm744, %v718, 0
      %v795 = vsel %vm744, %v720, 0
      %v797 = vsel %vm744, %v723, 0
      %v799 = vsel %vm744, %v725, 0
      %v801 = vsel %vm744, %v728, 0
      %v803 = vsel %vm744, %v730, 0
      %v805 = vsel %vm744, %v733, 0
      %v807 = vsel %vm744, %v735, 0
      %vm809 = vcmask 1043456
      %v811 = vsel %vm809, %v736, 0
      %813 = vmatprep.subr.mxu0 0.0
      %814 = vmatpush1.msra.mxu0 %v811
      %815 = vmatprep.subr.mxu0 0.0
      %816 = vmatpush1.msra.mxu0 0.0
      %817 = vmatprep.subr.mxu0 0.0
      %818 = vmatpush1.msra.mxu0 0.0
      %819 = vmatprep.subr.mxu0 0.0
      %820 = vmatpush1.msra.mxu0 0.0
      %821 = vmatprep.subr.mxu0 0.0
      %822 = vmatpush1.msra.mxu0 0.0
      %823 = vmatprep.subr.mxu0 0.0
      %824 = vmatpush1.msra.mxu0 0.0
      %825 = vmatprep.subr.mxu0 0.0
      %826 = vmatpush1.msra.mxu0 0.0
      %827 = vmatprep.subr.mxu0 0.0
      %828 = vmatpush1.msra.mxu0 0.0
      %829 = vmatprep.subr.mxu0 0.0
      %830 = vmatpush1.msra.mxu0 0.0
      %831 = vmatprep.subr.mxu0 0.0
      %832 = vmatpush1.msra.mxu0 0.0
      %833 = vmatprep.subr.mxu0 0.0
      %834 = vmatpush1.msra.mxu0 0.0
      %835 = vmatprep.subr.mxu0 0.0
      %836 = vmatpush1.msra.mxu0 0.0
      %837 = vmatprep.subr.mxu0 0.0
      %838 = vmatpush1.msra.mxu0 0.0
      %839 = vmatprep.subr.mxu0 0.0
      %840 = vmatpush1.msra.mxu0 0.0
      %841 = vmatprep.subr.mxu0 0.0
      %842 = vmatpush1.msra.mxu0 0.0
      %843 = vmatprep.subr.mxu0 0.0
      %844 = vmatpush1.msra.mxu0 0.0
      %845 = vmatprep.subr.mxu0 0.0
      %846 = vmatpush1.msra.mxu0 0.0
      %847 = vmatprep.subr.mxu0 0.0
      %848 = vmatpush1.msra.mxu0 0.0
      %849 = vmatprep.subr.mxu0 0.0
      %850 = vmatpush1.msra.mxu0 0.0
      %851 = vmatprep.subr.mxu0 0.0
      %852 = vmatpush1.msra.mxu0 0.0
      %853 = vmatprep.subr.mxu0 0.0
      %854 = vmatpush1.msra.mxu0 0.0
      %855 = vmatprep.subr.mxu0 0.0
      %856 = vmatpush1.msra.mxu0 0.0
      %857 = vmatprep.subr.mxu0 0.0
      %858 = vmatpush1.msra.mxu0 0.0
      %859 = vmatprep.subr.mxu0 0.0
      %860 = vmatpush1.msra.mxu0 0.0
      %861 = vmatprep.subr.mxu0 0.0
      %862 = vmatpush1.msra.mxu0 0.0
      %863 = vmatprep.subr.mxu0 0.0
      %864 = vmatpush1.msra.mxu0 0.0
      %865 = vmatprep.subr.mxu0 0.0
      %866 = vmatpush1.msra.mxu0 0.0
      %867 = vmatprep.subr.mxu0 0.0
      %868 = vmatpush1.msra.mxu0 0.0
      %869 = vmatprep.subr.mxu0 0.0
      %870 = vmatpush1.msra.mxu0 0.0
      %871 = vmatprep.subr.mxu0 0.0
      %872 = vmatpush1.msra.mxu0 0.0
      %873 = vmatprep.subr.mxu0 0.0
      %874 = vmatpush1.msra.mxu0 0.0
      %875 = vmatprep.subr.mxu0 0.0
      %876 = vmatpush1.msra.mxu0 0.0
      %877 = vmatprep.mubr.f32.mxu0 0.0
      %878 = vmatmul.mubr.f32.gmra.mrb[0].mxu0 %v745
      %v879 = vpop.f32.mrb[0].mxu0
      %v880 = vadd.f32 %v742, %v879
      %v881 = vpop.f32.mrb[0].mxu0
      %882 = vmatprep.mubr.f32.mxu0 0.0
      %883 = vmatmul.mubr.f32.gmra.mrb[0].mxu0 %v747
      %v884 = vpop.f32.mrb[0].mxu0
      %v885 = vadd.f32 %v742, %v884
      %v886 = vpop.f32.mrb[0].mxu0
      %887 = vmatprep.mubr.f32.mxu0 0.0
      %888 = vmatmul.mubr.f32.gmra.mrb[0].mxu0 %v749
      %v889 = vpop.f32.mrb[0].mxu0
      %v890 = vadd.f32 %v742, %v889
      %v891 = vpop.f32.mrb[0].mxu0
      %892 = vmatprep.mubr.f32.mxu0 0.0
      %893 = vmatmul.mubr.f32.gmra.mrb[0].mxu0 %v751
      %v894 = vpop.f32.mrb[0].mxu0
      %v895 = vadd.f32 %v742, %v894
      %v896 = vpop.f32.mrb[0].mxu0
      %897 = vmatprep.mubr.f32.mxu0 0.0
      %898 = vmatmul.mubr.f32.gmra.mrb[0].mxu0 %v753
      %v899 = vpop.f32.mrb[0].mxu0
      %v900 = vadd.f32 %v742, %v899
      %v901 = vpop.f32.mrb[0].mxu0
      %902 = vmatprep.mubr.f32.mxu0 0.0
      %903 = vmatmul.mubr.f32.gmra.mrb[0].mxu0 %v755
      %v904 = vpop.f32.mrb[0].mxu0
      %v905 = vadd.f32 %v742, %v904
      %v906 = vpop.f32.mrb[0].mxu0
      %907 = vmatprep.mubr.f32.mxu0 0.0
      %908 = vmatmul.mubr.f32.gmra.mrb[0].mxu0 %v757
      %v909 = vpop.f32.mrb[0].mxu0
      %v910 = vadd.f32 %v742, %v909
      %v911 = vpop.f32.mrb[0].mxu0
      %912 = vmatprep.mubr.f32.mxu0 0.0
      %913 = vmatmul.mubr.f32.gmra.mrb[0].mxu0 %v759
      %v914 = vpop.f32.mrb[0].mxu0
      %v915 = vadd.f32 %v742, %v914
      %v916 = vpop.f32.mrb[0].mxu0
      %917 = vmatprep.mubr.f32.mxu0 0.0
      %918 = vmatmul.mubr.f32.gmra.mrb[0].mxu0 %v761
      %v919 = vpop.f32.mrb[0].mxu0
      %v920 = vadd.f32 %v742, %v919
      %v921 = vpop.f32.mrb[0].mxu0
      %922 = vmatprep.mubr.f32.mxu0 0.0
      %923 = vmatmul.mubr.f32.gmra.mrb[0].mxu0 %v763
      %v924 = vpop.f32.mrb[0].mxu0
      %v925 = vadd.f32 %v742, %v924
      %v926 = vpop.f32.mrb[0].mxu0
      %927 = vmatprep.mubr.f32.mxu0 0.0
      %928 = vmatmul.mubr.f32.gmra.mrb[0].mxu0 %v765
      %v929 = vpop.f32.mrb[0].mxu0
      %v930 = vadd.f32 %v742, %v929
      %v931 = vpop.f32.mrb[0].mxu0
      %932 = vmatprep.mubr.f32.mxu0 0.0
      %933 = vmatmul.mubr.f32.gmra.mrb[0].mxu0 %v767
      %v934 = vpop.f32.mrb[0].mxu0
      %v935 = vadd.f32 %v742, %v934
      %v936 = vpop.f32.mrb[0].mxu0
      %937 = vmatprep.mubr.f32.mxu0 0.0
      %938 = vmatmul.mubr.f32.gmra.mrb[0].mxu0 %v769
      %v939 = vpop.f32.mrb[0].mxu0
      %v940 = vadd.f32 %v742, %v939
      %v941 = vpop.f32.mrb[0].mxu0
      %942 = vmatprep.mubr.f32.mxu0 0.0
      %943 = vmatmul.mubr.f32.gmra.mrb[0].mxu0 %v771
      %v944 = vpop.f32.mrb[0].mxu0
      %v945 = vadd.f32 %v742, %v944
      %v946 = vpop.f32.mrb[0].mxu0
      %947 = vmatprep.mubr.f32.mxu0 0.0
      %948 = vmatmul.mubr.f32.gmra.mrb[0].mxu0 %v773
      %v949 = vpop.f32.mrb[0].mxu0
      %v950 = vadd.f32 %v742, %v949
      %v951 = vpop.f32.mrb[0].mxu0
      %952 = vmatprep.mubr.f32.mxu0 0.0
      %953 = vmatmul.mubr.f32.gmra.mrb[0].mxu0 %v775
      %v954 = vpop.f32.mrb[0].mxu0
      %v955 = vadd.f32 %v742, %v954
      %v956 = vpop.f32.mrb[0].mxu0
      %957 = vmatprep.mubr.f32.mxu0 0.0
      %958 = vmatmul.mubr.f32.gmra.mrb[0].mxu0 %v777
      %v959 = vpop.f32.mrb[0].mxu0
      %v960 = vadd.f32 %v742, %v959
      %v961 = vpop.f32.mrb[0].mxu0
      %962 = vmatprep.mubr.f32.mxu0 0.0
      %963 = vmatmul.mubr.f32.gmra.mrb[0].mxu0 %v779
      %v964 = vpop.f32.mrb[0].mxu0
      %v965 = vadd.f32 %v742, %v964
      %v966 = vpop.f32.mrb[0].mxu0
      %967 = vmatprep.mubr.f32.mxu0 0.0
      %968 = vmatmul.mubr.f32.gmra.mrb[0].mxu0 %v781
      %v969 = vpop.f32.mrb[0].mxu0
      %v970 = vadd.f32 %v742, %v969
      %v971 = vpop.f32.mrb[0].mxu0
      %972 = vmatprep.mubr.f32.mxu0 0.0
      %973 = vmatmul.mubr.f32.gmra.mrb[0].mxu0 %v783
      %v974 = vpop.f32.mrb[0].mxu0
      %v975 = vadd.f32 %v742, %v974
      %v976 = vpop.f32.mrb[0].mxu0
      %977 = vmatprep.mubr.f32.mxu0 0.0
      %978 = vmatmul.mubr.f32.gmra.mrb[0].mxu0 %v785
      %v979 = vpop.f32.mrb[0].mxu0
      %v980 = vadd.f32 %v742, %v979
      %v981 = vpop.f32.mrb[0].mxu0
      %982 = vmatprep.mubr.f32.mxu0 0.0
      %983 = vmatmul.mubr.f32.gmra.mrb[0].mxu0 %v787
      %v984 = vpop.f32.mrb[0].mxu0
      %v985 = vadd.f32 %v742, %v984
      %v986 = vpop.f32.mrb[0].mxu0
      %987 = vmatprep.mubr.f32.mxu0 0.0
      %988 = vmatmul.mubr.f32.gmra.mrb[0].mxu0 %v789
      %v989 = vpop.f32.mrb[0].mxu0
      %v990 = vadd.f32 %v742, %v989
      %v991 = vpop.f32.mrb[0].mxu0
      %992 = vmatprep.mubr.f32.mxu0 0.0
      %993 = vmatmul.mubr.f32.gmra.mrb[0].mxu0 %v791
      %v994 = vpop.f32.mrb[0].mxu0
      %v995 = vadd.f32 %v742, %v994
      %v996 = vpop.f32.mrb[0].mxu0
      %997 = vmatprep.mubr.f32.mxu0 0.0
      %998 = vmatmul.mubr.f32.gmra.mrb[0].mxu0 %v793
      %v999 = vpop.f32.mrb[0].mxu0
      %v1000 = vadd.f32 %v742, %v999
      %v1001 = vpop.f32.mrb[0].mxu0
      %1002 = vmatprep.mubr.f32.mxu0 0.0
      %1003 = vmatmul.mubr.f32.gmra.mrb[0].mxu0 %v795
      %v1004 = vpop.f32.mrb[0].mxu0
      %v1005 = vadd.f32 %v742, %v1004
      %v1006 = vpop.f32.mrb[0].mxu0
      %1007 = vmatprep.mubr.f32.mxu0 0.0
      %1008 = vmatmul.mubr.f32.gmra.mrb[0].mxu0 %v797
      %v1009 = vpop.f32.mrb[0].mxu0
      %v1010 = vadd.f32 %v742, %v1009
      %v1011 = vpop.f32.mrb[0].mxu0
      %1012 = vmatprep.mubr.f32.mxu0 0.0
      %1013 = vmatmul.mubr.f32.gmra.mrb[0].mxu0 %v799
      %v1014 = vpop.f32.mrb[0].mxu0
      %v1015 = vadd.f32 %v742, %v1014
      %v1016 = vpop.f32.mrb[0].mxu0
      %1017 = vmatprep.mubr.f32.mxu0 0.0
      %1018 = vmatmul.mubr.f32.gmra.mrb[0].mxu0 %v801
      %v1019 = vpop.f32.mrb[0].mxu0
      %v1020 = vadd.f32 %v742, %v1019
      %v1021 = vpop.f32.mrb[0].mxu0
      %1022 = vmatprep.mubr.f32.mxu0 0.0
      %1023 = vmatmul.mubr.f32.gmra.mrb[0].mxu0 %v803
      %v1024 = vpop.f32.mrb[0].mxu0
      %v1025 = vadd.f32 %v742, %v1024
      %v1026 = vpop.f32.mrb[0].mxu0
      %1027 = vmatprep.mubr.f32.mxu0 0.0
      %1028 = vmatmul.mubr.f32.gmra.mrb[0].mxu0 %v805
      %v1029 = vpop.f32.mrb[0].mxu0
      %v1030 = vadd.f32 %v742, %v1029
      %v1031 = vpop.f32.mrb[0].mxu0
      %1032 = vmatprep.mubr.f32.mxu0 0.0
      %1033 = vmatmul.mubr.f32.gmra.mrb[0].mxu0 %v807
      %v1034 = vpop.f32.mrb[0].mxu0
      %v1035 = vadd.f32 %v742, %v1034
      %v1036 = vpop.f32.mrb[0].mxu0
      %1037 = vdwg.mxu0
      %v1038 = vmax.f32 %v880, 0.0
      %v1039 = vmax.f32 %v885, 0.0
      %v1040 = vmax.f32 %v890, 0.0
      %v1041 = vmax.f32 %v895, 0.0
      %v1042 = vmax.f32 %v900, 0.0
      %v1043 = vmax.f32 %v905, 0.0
      %v1044 = vmax.f32 %v910, 0.0
      %v1045 = vmax.f32 %v915, 0.0
      %v1046 = vmax.f32 %v920, 0.0
      %v1047 = vmax.f32 %v925, 0.0
      %v1048 = vmax.f32 %v930, 0.0
      %v1049 = vmax.f32 %v935, 0.0
      %v1050 = vmax.f32 %v940, 0.0
      %v1051 = vmax.f32 %v945, 0.0
      %v1052 = vmax.f32 %v950, 0.0
      %v1053 = vmax.f32 %v955, 0.0
      %v1054 = vmax.f32 %v960, 0.0
      %v1055 = vmax.f32 %v965, 0.0
      %v1056 = vmax.f32 %v970, 0.0
      %v1057 = vmax.f32 %v975, 0.0
      %v1058 = vmax.f32 %v980, 0.0
      %v1059 = vmax.f32 %v985, 0.0
      %v1060 = vmax.f32 %v990, 0.0
      %v1061 = vmax.f32 %v995, 0.0
      %v1062 = vmax.f32 %v1000, 0.0
      %v1063 = vmax.f32 %v1005, 0.0
      %v1064 = vmax.f32 %v1010, 0.0
      %v1065 = vmax.f32 %v1015, 0.0
      %v1066 = vmax.f32 %v1020, 0.0
      %v1067 = vmax.f32 %v1025, 0.0
      %v1068 = vmax.f32 %v1030, 0.0
      %v1069 = vmax.f32 %v1035, 0.0
      %1070 = vst [vmem:[%s170] sm:$0xff] %v1038
      %1071 = vst [vmem:[%s170 + $0x8] sm:$0xff] %v1039
      %1072 = vst [vmem:[%s170 + $0x10] sm:$0xff] %v1040
      %1073 = vst [vmem:[%s170 + $0x18] sm:$0xff] %v1041
      %1074 = vst [vmem:[%s170 + $0x20] sm:$0xff] %v1042
      %1075 = vst [vmem:[%s170 + $0x28] sm:$0xff] %v1043
      %1076 = vst [vmem:[%s170 + $0x30] sm:$0xff] %v1044
      %1077 = vst [vmem:[%s170 + $0x38] sm:$0xff] %v1045
      %1078 = vst [vmem:[%s170 + $0x40] sm:$0xff] %v1046
      %1079 = vst [vmem:[%s170 + $0x48] sm:$0xff] %v1047
      %1080 = vst [vmem:[%s170 + $0x50] sm:$0xff] %v1048
      %1081 = vst [vmem:[%s170 + $0x58] sm:$0xff] %v1049
      %1082 = vst [vmem:[%s170 + $0x60] sm:$0xff] %v1050
      %1083 = vst [vmem:[%s170 + $0x68] sm:$0xff] %v1051
      %1084 = vst [vmem:[%s170 + $0x70] sm:$0xff] %v1052
      %1085 = vst [vmem:[%s170 + $0x78] sm:$0xff] %v1053
      %1086 = vst [vmem:[%s170 + $0x80] sm:$0xff] %v1054
      %1087 = vst [vmem:[%s170 + $0x88] sm:$0xff] %v1055
      %1088 = vst [vmem:[%s170 + $0x90] sm:$0xff] %v1056
      %1089 = vst [vmem:[%s170 + $0x98] sm:$0xff] %v1057
      %1090 = vst [vmem:[%s170 + $0xa0] sm:$0xff] %v1058
      %1091 = vst [vmem:[%s170 + $0xa8] sm:$0xff] %v1059
      %1092 = vst [vmem:[%s170 + $0xb0] sm:$0xff] %v1060
      %1093 = vst [vmem:[%s170 + $0xb8] sm:$0xff] %v1061
      %1094 = vst [vmem:[%s170 + $0xc0] sm:$0xff] %v1062
      %1095 = vst [vmem:[%s170 + $0xc8] sm:$0xff] %v1063
      %1096 = vst [vmem:[%s170 + $0xd0] sm:$0xff] %v1064
      %1097 = vst [vmem:[%s170 + $0xd8] sm:$0xff] %v1065
      %1098 = vst [vmem:[%s170 + $0xe0] sm:$0xff] %v1066
      %1099 = vst [vmem:[%s170 + $0xe8] sm:$0xff] %v1067
      %1100 = vst [vmem:[%s170 + $0xf0] sm:$0xff] %v1068
      %1101 = vst [vmem:[%s170 + $0xf8] sm:$0xff] %v1069
      %p1102 = scmp.lt.s32.totalorder %s14, 1
      %s1103 = scalar_select %p1102, %s14, 1
      %s1104 = smul.addr %s1103, 32
      %s1105 = smul.addr %s1104, 8
      %s1106 = scalar_lea.vmem %s3, %s1105
      // Predicated region
      $region33: #{inception_v1_forward.7} parent=31 // pred_check
        %p1107 = pneg %p100
      $region34: #{inception_v1_forward.7} parent=31 // pred_check_branch
        %1109 = sbr.rel (%p1107) target = $region36
      $region35: #{inception_v1_forward.7} parent=31 // pred_region
        _
      $region36: #{inception_v1_forward.7} parent=31 // pred_fallthru
        _
    $region32: #{inception_v1_forward.7} parent=5 // pred_fallthru
      _
    %p1110 = scmp.le.s32.totalorder 2, %s9
    // Predicated region
    $region37: #{inception_v1_forward.7} parent=5 // pred_check
      %p1111 = pneg %p1110
    $region38: #{inception_v1_forward.7} parent=5 // pred_check_branch
      %1113 = sbr.rel (%p1111) target = $region40
    $region39: #{inception_v1_forward.7} parent=5 // pred_region
      %s1114 = ssub.s32 %s9, 2
      // Predicated region
      $region41: #{inception_v1_forward.7} parent=39 // pred_check
        %p1115 = pneg %p106
      $region42: #{inception_v1_forward.7} parent=39 // pred_check_branch
        %1117 = sbr.rel (%p1115) target = $region44
      $region43: #{inception_v1_forward.7} parent=39 // pred_region
        %p1118 = scmp.lt.s32.totalorder %s15, 1
        %s1119 = scalar_select %p1118, %s15, 1
        %s1120 = smul.addr %s1119, 32
        %s1121 = smul.addr %s1120, 8
        %s1122 = scalar_lea.vmem %s3, %s1121
      $region44: #{inception_v1_forward.7} parent=39 // pred_fallthru
        _
    $region40: #{inception_v1_forward.7} parent=5 // pred_fallthru
      _
  $region6: #{inception_v1_forward.7} parent=0 // loop_footer
    %s13 = sadd.s32 1, %s9
  $region7: #{inception_v1_forward.7} parent=0 // loop_footer_branch
    %8 = sbr.rel target = $region3
  $region8: #{inception_v1_forward.7} parent=0 // loop_exit
    _

// kernel: inception_v1_forward.4
$region0: #{inception_v1_forward.4}
  #allocation0 [shape = 'u32[]', space=smem, size = 0x4, offset = 0x4, fixed_abs, tag = 'smem constant byte address 0x4 - core index']
  #allocation1 [shape = 'u32[144,128]{1,0:T(1,128)}', space=vmem, size = 0x12000, scoped, tag = 'internal scratch']
  %s0 = inlined_call_operand.vmem [shape: f32[512,4], index: 0, kind: input, shape index: {}]
  %s1 = inlined_call_operand.vmem [shape: f32[4,384], index: 1, kind: input, shape index: {}]
  %s2 = inlined_call_operand.vmem [shape: f32[1,384], index: 2, kind: input, shape index: {}]
  %s3 = inlined_call_operand.vmem [shape: f32[512,128], index: 3, kind: output, shape index: {0}]
  %s4 = inlined_call_operand.vmem [shape: f32[512,128], index: 4, kind: output, shape index: {1}]
  %s5 = inlined_call_operand.vmem [shape: f32[512,128], index: 5, kind: output, shape index: {2}]
  %6 = xla_tuple %s3, %s4, %s5
  %s7 = sld [smem:[#allocation0]]
  $region38: #{inception_v1_forward.4} parent=0
    _
  %s9 = ssub.s32 1, %s7
  %s10 = scalar_select 0, %s9, %s7
  // Predicated region
  $region2: #{inception_v1_forward.4} parent=0 // pred_check
    _
  $region3: #{inception_v1_forward.4} parent=0 // pred_check_branch
    %12 = sbr.rel (0) target = $region5
  $region4: #{inception_v1_forward.4} parent=0 // pred_region
    _
  $region5: #{inception_v1_forward.4} parent=0 // pred_fallthru
    _
  // Predicated region
  $region6: #{inception_v1_forward.4} parent=0 // pred_check
    _
  $region7: #{inception_v1_forward.4} parent=0 // pred_check_branch
    %14 = sbr.rel (0) target = $region9
  $region8: #{inception_v1_forward.4} parent=0 // pred_region
    _
  $region9: #{inception_v1_forward.4} parent=0 // pred_fallthru
    _
  // Predicated region
  $region10: #{inception_v1_forward.4} parent=0 // pred_check
    _
  $region11: #{inception_v1_forward.4} parent=0 // pred_check_branch
    %16 = sbr.rel (0) target = $region13
  $region12: #{inception_v1_forward.4} parent=0 // pred_region
    _
  $region13: #{inception_v1_forward.4} parent=0 // pred_fallthru
    _
  %v17 = vld [vmem:[%s0] sm:$0xff]
  %v18 = vld [vmem:[%s0 + $0x8] sm:$0xff]
  %v19 = vld [vmem:[%s0 + $0x10] sm:$0xff]
  %v20 = vld [vmem:[%s0 + $0x18] sm:$0xff]
  %v21 = vld [vmem:[%s0 + $0x20] sm:$0xff]
  %v22 = vld [vmem:[%s0 + $0x28] sm:$0xff]
  %v23 = vld [vmem:[%s0 + $0x30] sm:$0xff]
  %v24 = vld [vmem:[%s0 + $0x38] sm:$0xff]
  %v25 = vld [vmem:[%s0 + $0x40] sm:$0xff]
  %v26 = vld [vmem:[%s0 + $0x48] sm:$0xff]
  %v27 = vld [vmem:[%s0 + $0x50] sm:$0xff]
  %v28 = vld [vmem:[%s0 + $0x58] sm:$0xff]
  %v29 = vld [vmem:[%s0 + $0x60] sm:$0xff]
  %v30 = vld [vmem:[%s0 + $0x68] sm:$0xff]
  %v31 = vld [vmem:[%s0 + $0x70] sm:$0xff]
  %v32 = vld [vmem:[%s0 + $0x78] sm:$0xff]
  %v33 = vld [vmem:[%s0 + $0x80] sm:$0xff]
  %v34 = vld [vmem:[%s0 + $0x88] sm:$0xff]
  %v35 = vld [vmem:[%s0 + $0x90] sm:$0xff]
  %v36 = vld [vmem:[%s0 + $0x98] sm:$0xff]
  %v37 = vld [vmem:[%s0 + $0xa0] sm:$0xff]
  %v38 = vld [vmem:[%s0 + $0xa8] sm:$0xff]
  %v39 = vld [vmem:[%s0 + $0xb0] sm:$0xff]
  %v40 = vld [vmem:[%s0 + $0xb8] sm:$0xff]
  %v41 = vld [vmem:[%s0 + $0xc0] sm:$0xff]
  %v42 = vld [vmem:[%s0 + $0xc8] sm:$0xff]
  %v43 = vld [vmem:[%s0 + $0xd0] sm:$0xff]
  %v44 = vld [vmem:[%s0 + $0xd8] sm:$0xff]
  %v45 = vld [vmem:[%s0 + $0xe0] sm:$0xff]
  %v46 = vld [vmem:[%s0 + $0xe8] sm:$0xff]
  %v47 = vld [vmem:[%s0 + $0xf0] sm:$0xff]
  %v48 = vld [vmem:[%s0 + $0xf8] sm:$0xff]
  %v49 = vld [vmem:[%s0 + $0x100] sm:$0xff]
  %v50 = vld [vmem:[%s0 + $0x108] sm:$0xff]
  %v51 = vld [vmem:[%s0 + $0x110] sm:$0xff]
  %v52 = vld [vmem:[%s0 + $0x118] sm:$0xff]
  %v53 = vld [vmem:[%s0 + $0x120] sm:$0xff]
  %v54 = vld [vmem:[%s0 + $0x128] sm:$0xff]
  %v55 = vld [vmem:[%s0 + $0x130] sm:$0xff]
  %v56 = vld [vmem:[%s0 + $0x138] sm:$0xff]
  %v57 = vld [vmem:[%s0 + $0x140] sm:$0xff]
  %v58 = vld [vmem:[%s0 + $0x148] sm:$0xff]
  %v59 = vld [vmem:[%s0 + $0x150] sm:$0xff]
  %v60 = vld [vmem:[%s0 + $0x158] sm:$0xff]
  %v61 = vld [vmem:[%s0 + $0x160] sm:$0xff]
  %v62 = vld [vmem:[%s0 + $0x168] sm:$0xff]
  %v63 = vld [vmem:[%s0 + $0x170] sm:$0xff]
  %v64 = vld [vmem:[%s0 + $0x178] sm:$0xff]
  %v65 = vld [vmem:[%s0 + $0x180] sm:$0xff]
  %v66 = vld [vmem:[%s0 + $0x188] sm:$0xff]
  %v67 = vld [vmem:[%s0 + $0x190] sm:$0xff]
  %v68 = vld [vmem:[%s0 + $0x198] sm:$0xff]
  %v69 = vld [vmem:[%s0 + $0x1a0] sm:$0xff]
  %v70 = vld [vmem:[%s0 + $0x1a8] sm:$0xff]
  %v71 = vld [vmem:[%s0 + $0x1b0] sm:$0xff]
  %v72 = vld [vmem:[%s0 + $0x1b8] sm:$0xff]
  %v73 = vld [vmem:[%s0 + $0x1c0] sm:$0xff]
  %v74 = vld [vmem:[%s0 + $0x1c8] sm:$0xff]
  %v75 = vld [vmem:[%s0 + $0x1d0] sm:$0xff]
  %v76 = vld [vmem:[%s0 + $0x1d8] sm:$0xff]
  %v77 = vld [vmem:[%s0 + $0x1e0] sm:$0xff]
  %v78 = vld [vmem:[%s0 + $0x1e8] sm:$0xff]
  %v79 = vld [vmem:[%s0 + $0x1f0] sm:$0xff]
  %v80 = vld [vmem:[%s0 + $0x1f8] sm:$0xff]
  %v81 = vld [vmem:[%s1] sm:$0xff]
  %v82 = vld [vmem:[%s1 + $0x8] sm:$0xf]
  %v83 = vld [vmem:[%s2] sm:$0x7]
  %v85 = vlaneseq
  %v86 = vshrl.u32 %v85, 7
  %v87 = vsub.s32 0, %v86
  %v88 = vrot.slane %v83, %v87
  %v89 = vlaneseq
  %v90 = vshrl.u32 %v89, 7
  %v91 = vsub.s32 1, %v90
  %v92 = vrot.slane %v83, %v91
  %v93 = vlaneseq
  %v94 = vshrl.u32 %v93, 7
  %v95 = vsub.s32 2, %v94
  %v96 = vrot.slane %v83, %v95
  %v102 = vcombine.high %v81, %v81
  %vm103 = vcmask 31744
  %v105 = vsel %vm103, %v17, 0
  %v108 = vsel %vm103, %v18, 0
  %v111 = vsel %vm103, %v19, 0
  %v114 = vsel %vm103, %v20, 0
  %v117 = vsel %vm103, %v21, 0
  %v120 = vsel %vm103, %v22, 0
  %v123 = vsel %vm103, %v23, 0
  %v126 = vsel %vm103, %v24, 0
  %v129 = vsel %vm103, %v25, 0
  %v132 = vsel %vm103, %v26, 0
  %v135 = vsel %vm103, %v27, 0
  %v138 = vsel %vm103, %v28, 0
  %v141 = vsel %vm103, %v29, 0
  %v144 = vsel %vm103, %v30, 0
  %v147 = vsel %vm103, %v31, 0
  %v150 = vsel %vm103, %v32, 0
  %v153 = vsel %vm103, %v33, 0
  %v156 = vsel %vm103, %v34, 0
  %v159 = vsel %vm103, %v35, 0
  %v162 = vsel %vm103, %v36, 0
  %v165 = vsel %vm103, %v37, 0
  %v168 = vsel %vm103, %v38, 0
  %v171 = vsel %vm103, %v39, 0
  %v174 = vsel %vm103, %v40, 0
  %v177 = vsel %vm103, %v41, 0
  %v180 = vsel %vm103, %v42, 0
  %v183 = vsel %vm103, %v43, 0
  %v186 = vsel %vm103, %v44, 0
  %v189 = vsel %vm103, %v45, 0
  %v192 = vsel %vm103, %v46, 0
  %v195 = vsel %vm103, %v47, 0
  %v198 = vsel %vm103, %v48, 0
  %v201 = vsel %vm103, %v49, 0
  %v204 = vsel %vm103, %v50, 0
  %v207 = vsel %vm103, %v51, 0
  %v210 = vsel %vm103, %v52, 0
  %v213 = vsel %vm103, %v53, 0
  %v216 = vsel %vm103, %v54, 0
  %v219 = vsel %vm103, %v55, 0
  %v222 = vsel %vm103, %v56, 0
  %v225 = vsel %vm103, %v57, 0
  %v228 = vsel %vm103, %v58, 0
  %v231 = vsel %vm103, %v59, 0
  %v234 = vsel %vm103, %v60, 0
  %v237 = vsel %vm103, %v61, 0
  %v240 = vsel %vm103, %v62, 0
  %v243 = vsel %vm103, %v63, 0
  %v246 = vsel %vm103, %v64, 0
  %v249 = vsel %vm103, %v65, 0
  %v252 = vsel %vm103, %v66, 0
  %v255 = vsel %vm103, %v67, 0
  %v258 = vsel %vm103, %v68, 0
  %v261 = vsel %vm103, %v69, 0
  %v264 = vsel %vm103, %v70, 0
  %v267 = vsel %vm103, %v71, 0
  %v270 = vsel %vm103, %v72, 0
  %v273 = vsel %vm103, %v73, 0
  %v276 = vsel %vm103, %v74, 0
  %v279 = vsel %vm103, %v75, 0
  %v282 = vsel %vm103, %v76, 0
  %v285 = vsel %vm103, %v77, 0
  %v288 = vsel %vm103, %v78, 0
  %v291 = vsel %vm103, %v79, 0
  %v294 = vsel %vm103, %v80, 0
  %vm296 = vcmask 1043456
  %v297 = vsel %vm296, %v81, 0
  %v299 = vsel %vm296, %v102, 0
  %v301 = vsel %vm296, %v82, 0
  %303 = vmatprep.subr.mxu0 %v299
  %304 = vmatpush1.msra.mxu0 %v297
  %305 = vmatprep.subr.mxu0 0.0
  %306 = vmatpush1.msra.mxu0 0.0
  %307 = vmatprep.subr.mxu0 0.0
  %308 = vmatpush1.msra.mxu0 0.0
  %309 = vmatprep.subr.mxu0 0.0
  %310 = vmatpush1.msra.mxu0 0.0
  %311 = vmatprep.subr.mxu0 0.0
  %312 = vmatpush1.msra.mxu0 0.0
  %313 = vmatprep.subr.mxu0 0.0
  %314 = vmatpush1.msra.mxu0 0.0
  %315 = vmatprep.subr.mxu0 0.0
  %316 = vmatpush1.msra.mxu0 0.0
  %317 = vmatprep.subr.mxu0 0.0
  %318 = vmatpush1.msra.mxu0 0.0
  %319 = vmatprep.subr.mxu0 0.0
  %320 = vmatpush1.msra.mxu0 0.0
  %321 = vmatprep.subr.mxu0 0.0
  %322 = vmatpush1.msra.mxu0 0.0
  %323 = vmatprep.subr.mxu0 0.0
  %324 = vmatpush1.msra.mxu0 0.0
  %325 = vmatprep.subr.mxu0 0.0
  %326 = vmatpush1.msra.mxu0 0.0
  %327 = vmatprep.subr.mxu0 0.0
  %328 = vmatpush1.msra.mxu0 0.0
  %329 = vmatprep.subr.mxu0 0.0
  %330 = vmatpush1.msra.mxu0 0.0
  %331 = vmatprep.subr.mxu0 0.0
  %332 = vmatpush1.msra.mxu0 0.0
  %333 = vmatprep.subr.mxu0 0.0
  %334 = vmatpush1.msra.mxu0 0.0
  %335 = vmatprep.subr.mxu0 0.0
  %336 = vmatpush1.msra.mxu0 0.0
  %337 = vmatprep.subr.mxu0 0.0
  %338 = vmatpush1.msra.mxu0 0.0
  %339 = vmatprep.subr.mxu0 0.0
  %340 = vmatpush1.msra.mxu0 0.0
  %341 = vmatprep.subr.mxu0 0.0
  %342 = vmatpush1.msra.mxu0 0.0
  %343 = vmatprep.subr.mxu0 0.0
  %344 = vmatpush1.msra.mxu0 0.0
  %345 = vmatprep.subr.mxu0 0.0
  %346 = vmatpush1.msra.mxu0 0.0
  %347 = vmatprep.subr.mxu0 0.0
  %348 = vmatpush1.msra.mxu0 0.0
  %349 = vmatprep.subr.mxu0 0.0
  %350 = vmatpush1.msra.mxu0 0.0
  %351 = vmatprep.subr.mxu0 0.0
  %352 = vmatpush1.msra.mxu0 0.0
  %353 = vmatprep.subr.mxu0 0.0
  %354 = vmatpush1.msra.mxu0 0.0
  %355 = vmatprep.subr.mxu0 0.0
  %356 = vmatpush1.msra.mxu0 0.0
  %357 = vmatprep.subr.mxu0 0.0
  %358 = vmatpush1.msra.mxu0 0.0
  %359 = vmatprep.subr.mxu0 0.0
  %360 = vmatpush1.msra.mxu0 0.0
  %361 = vmatprep.subr.mxu0 0.0
  %362 = vmatpush1.msra.mxu0 0.0
  %363 = vmatprep.subr.mxu0 0.0
  %364 = vmatpush1.msra.mxu0 0.0
  %365 = vmatprep.subr.mxu0 0.0
  %366 = vmatpush1.msra.mxu0 0.0
  %367 = vmatprep.mubr.f32.mxu0 0.0
  %368 = vmatmul.mubr.f32.gmra.mrb[0].mxu0 %v105
  %v369 = vpop.f32.mrb[0].mxu0
  %v370 = vadd.f32 %v88, %v369
  %v371 = vpop.f32.mrb[0].mxu0
  %v372 = vadd.f32 %v92, %v371
  %373 = vmatprep.mubr.f32.mxu0 0.0
  %374 = vmatmul.mubr.f32.gmra.mrb[0].mxu0 %v108
  %v375 = vpop.f32.mrb[0].mxu0
  %v376 = vadd.f32 %v88, %v375
  %v377 = vpop.f32.mrb[0].mxu0
  %v378 = vadd.f32 %v92, %v377
  %379 = vmatprep.mubr.f32.mxu0 0.0
  %380 = vmatmul.mubr.f32.gmra.mrb[0].mxu0 %v111
  %v381 = vpop.f32.mrb[0].mxu0
  %v382 = vadd.f32 %v88, %v381
  %v383 = vpop.f32.mrb[0].mxu0
  %v384 = vadd.f32 %v92, %v383
  %385 = vmatprep.mubr.f32.mxu0 0.0
  %386 = vmatmul.mubr.f32.gmra.mrb[0].mxu0 %v114
  %v387 = vpop.f32.mrb[0].mxu0
  %v388 = vadd.f32 %v88, %v387
  %v389 = vpop.f32.mrb[0].mxu0
  %v390 = vadd.f32 %v92, %v389
  %391 = vmatprep.mubr.f32.mxu0 0.0
  %392 = vmatmul.mubr.f32.gmra.mrb[0].mxu0 %v117
  %v393 = vpop.f32.mrb[0].mxu0
  %v394 = vadd.f32 %v88, %v393
  %v395 = vpop.f32.mrb[0].mxu0
  %v396 = vadd.f32 %v92, %v395
  %397 = vmatprep.mubr.f32.mxu0 0.0
  %398 = vmatmul.mubr.f32.gmra.mrb[0].mxu0 %v120
  %v399 = vpop.f32.mrb[0].mxu0
  %v400 = vadd.f32 %v88, %v399
  %v401 = vpop.f32.mrb[0].mxu0
  %v402 = vadd.f32 %v92, %v401
  %403 = vmatprep.mubr.f32.mxu0 0.0
  %404 = vmatmul.mubr.f32.gmra.mrb[0].mxu0 %v123
  %v405 = vpop.f32.mrb[0].mxu0
  %v406 = vadd.f32 %v88, %v405
  %v407 = vpop.f32.mrb[0].mxu0
  %v408 = vadd.f32 %v92, %v407
  %409 = vmatprep.mubr.f32.mxu0 0.0
  %410 = vmatmul.mubr.f32.gmra.mrb[0].mxu0 %v126
  %v411 = vpop.f32.mrb[0].mxu0
  %v412 = vadd.f32 %v88, %v411
  %v413 = vpop.f32.mrb[0].mxu0
  %v414 = vadd.f32 %v92, %v413
  %415 = vmatprep.mubr.f32.mxu0 0.0
  %416 = vmatmul.mubr.f32.gmra.mrb[0].mxu0 %v129
  %v417 = vpop.f32.mrb[0].mxu0
  %v418 = vadd.f32 %v88, %v417
  %v419 = vpop.f32.mrb[0].mxu0
  %v420 = vadd.f32 %v92, %v419
  %421 = vmatprep.mubr.f32.mxu0 0.0
  %422 = vmatmul.mubr.f32.gmra.mrb[0].mxu0 %v132
  %v423 = vpop.f32.mrb[0].mxu0
  %v424 = vadd.f32 %v88, %v423
  %v425 = vpop.f32.mrb[0].mxu0
  %v426 = vadd.f32 %v92, %v425
  %427 = vmatprep.mubr.f32.mxu0 0.0
  %428 = vmatmul.mubr.f32.gmra.mrb[0].mxu0 %v135
  %v429 = vpop.f32.mrb[0].mxu0
  %v430 = vadd.f32 %v88, %v429
  %v431 = vpop.f32.mrb[0].mxu0
  %v432 = vadd.f32 %v92, %v431
  %433 = vmatprep.mubr.f32.mxu0 0.0
  %434 = vmatmul.mubr.f32.gmra.mrb[0].mxu0 %v138
  %v435 = vpop.f32.mrb[0].mxu0
  %v436 = vadd.f32 %v88, %v435
  %v437 = vpop.f32.mrb[0].mxu0
  %v438 = vadd.f32 %v92, %v437
  %439 = vmatprep.mubr.f32.mxu0 0.0
  %440 = vmatmul.mubr.f32.gmra.mrb[0].mxu0 %v141
  %v441 = vpop.f32.mrb[0].mxu0
  %v442 = vadd.f32 %v88, %v441
  %v443 = vpop.f32.mrb[0].mxu0
  %v444 = vadd.f32 %v92, %v443
  %445 = vmatprep.mubr.f32.mxu0 0.0
  %446 = vmatmul.mubr.f32.gmra.mrb[0].mxu0 %v144
  %v447 = vpop.f32.mrb[0].mxu0
  %v448 = vadd.f32 %v88, %v447
  %v449 = vpop.f32.mrb[0].mxu0
  %v450 = vadd.f32 %v92, %v449
  %451 = vmatprep.mubr.f32.mxu0 0.0
  %452 = vmatmul.mubr.f32.gmra.mrb[0].mxu0 %v147
  %v453 = vpop.f32.mrb[0].mxu0
  %v454 = vadd.f32 %v88, %v453
  %v455 = vpop.f32.mrb[0].mxu0
  %v456 = vadd.f32 %v92, %v455
  %457 = vmatprep.mubr.f32.mxu0 0.0
  %458 = vmatmul.mubr.f32.gmra.mrb[0].mxu0 %v150
  %v459 = vpop.f32.mrb[0].mxu0
  %v460 = vadd.f32 %v88, %v459
  %v461 = vpop.f32.mrb[0].mxu0
  %v462 = vadd.f32 %v92, %v461
  %463 = vmatprep.mubr.f32.mxu0 0.0
  %464 = vmatmul.mubr.f32.gmra.mrb[0].mxu0 %v153
  %v465 = vpop.f32.mrb[0].mxu0
  %v466 = vadd.f32 %v88, %v465
  %v467 = vpop.f32.mrb[0].mxu0
  %v468 = vadd.f32 %v92, %v467
  %469 = vmatprep.mubr.f32.mxu0 0.0
  %470 = vmatmul.mubr.f32.gmra.mrb[0].mxu0 %v156
  %v471 = vpop.f32.mrb[0].mxu0
  %v472 = vadd.f32 %v88, %v471
  %v473 = vpop.f32.mrb[0].mxu0
  %v474 = vadd.f32 %v92, %v473
  %475 = vmatprep.mubr.f32.mxu0 0.0
  %476 = vmatmul.mubr.f32.gmra.mrb[0].mxu0 %v159
  %v477 = vpop.f32.mrb[0].mxu0
  %v478 = vadd.f32 %v88, %v477
  %v479 = vpop.f32.mrb[0].mxu0
  %v480 = vadd.f32 %v92, %v479
  %481 = vmatprep.mubr.f32.mxu0 0.0
  %482 = vmatmul.mubr.f32.gmra.mrb[0].mxu0 %v162
  %v483 = vpop.f32.mrb[0].mxu0
  %v484 = vadd.f32 %v88, %v483
  %v485 = vpop.f32.mrb[0].mxu0
  %v486 = vadd.f32 %v92, %v485
  %487 = vmatprep.mubr.f32.mxu0 0.0
  %488 = vmatmul.mubr.f32.gmra.mrb[0].mxu0 %v165
  %v489 = vpop.f32.mrb[0].mxu0
  %v490 = vadd.f32 %v88, %v489
  %v491 = vpop.f32.mrb[0].mxu0
  %v492 = vadd.f32 %v92, %v491
  %493 = vmatprep.mubr.f32.mxu0 0.0
  %494 = vmatmul.mubr.f32.gmra.mrb[0].mxu0 %v168
  %v495 = vpop.f32.mrb[0].mxu0
  %v496 = vadd.f32 %v88, %v495
  %v497 = vpop.f32.mrb[0].mxu0
  %v498 = vadd.f32 %v92, %v497
  %499 = vmatprep.mubr.f32.mxu0 0.0
  %500 = vmatmul.mubr.f32.gmra.mrb[0].mxu0 %v171
  %v501 = vpop.f32.mrb[0].mxu0
  %v502 = vadd.f32 %v88, %v501
  %v503 = vpop.f32.mrb[0].mxu0
  %v504 = vadd.f32 %v92, %v503
  %505 = vmatprep.mubr.f32.mxu0 0.0
  %506 = vmatmul.mubr.f32.gmra.mrb[0].mxu0 %v174
  %v507 = vpop.f32.mrb[0].mxu0
  %v508 = vadd.f32 %v88, %v507
  %v509 = vpop.f32.mrb[0].mxu0
  %v510 = vadd.f32 %v92, %v509
  %511 = vmatprep.mubr.f32.mxu0 0.0
  %512 = vmatmul.mubr.f32.gmra.mrb[0].mxu0 %v177
  %v513 = vpop.f32.mrb[0].mxu0
  %v514 = vadd.f32 %v88, %v513
  %v515 = vpop.f32.mrb[0].mxu0
  %v516 = vadd.f32 %v92, %v515
  %517 = vmatprep.mubr.f32.mxu0 0.0
  %518 = vmatmul.mubr.f32.gmra.mrb[0].mxu0 %v180
  %v519 = vpop.f32.mrb[0].mxu0
  %v520 = vadd.f32 %v88, %v519
  %v521 = vpop.f32.mrb[0].mxu0
  %v522 = vadd.f32 %v92, %v521
  %523 = vmatprep.mubr.f32.mxu0 0.0
  %524 = vmatmul.mubr.f32.gmra.mrb[0].mxu0 %v183
  %v525 = vpop.f32.mrb[0].mxu0
  %v526 = vadd.f32 %v88, %v525
  %v527 = vpop.f32.mrb[0].mxu0
  %v528 = vadd.f32 %v92, %v527
  %529 = vmatprep.mubr.f32.mxu0 0.0
  %530 = vmatmul.mubr.f32.gmra.mrb[0].mxu0 %v186
  %v531 = vpop.f32.mrb[0].mxu0
  %v532 = vadd.f32 %v88, %v531
  %v533 = vpop.f32.mrb[0].mxu0
  %v534 = vadd.f32 %v92, %v533
  %535 = vmatprep.mubr.f32.mxu0 0.0
  %536 = vmatmul.mubr.f32.gmra.mrb[0].mxu0 %v189
  %v537 = vpop.f32.mrb[0].mxu0
  %v538 = vadd.f32 %v88, %v537
  %v539 = vpop.f32.mrb[0].mxu0
  %v540 = vadd.f32 %v92, %v539
  %541 = vmatprep.mubr.f32.mxu0 0.0
  %542 = vmatmul.mubr.f32.gmra.mrb[0].mxu0 %v192
  %v543 = vpop.f32.mrb[0].mxu0
  %v544 = vadd.f32 %v88, %v543
  %v545 = vpop.f32.mrb[0].mxu0
  %v546 = vadd.f32 %v92, %v545
  %547 = vmatprep.mubr.f32.mxu0 0.0
  %548 = vmatmul.mubr.f32.gmra.mrb[0].mxu0 %v195
  %v549 = vpop.f32.mrb[0].mxu0
  %v550 = vadd.f32 %v88, %v549
  %v551 = vpop.f32.mrb[0].mxu0
  %v552 = vadd.f32 %v92, %v551
  %553 = vmatprep.mubr.f32.mxu0 0.0
  %554 = vmatmul.mubr.f32.gmra.mrb[0].mxu0 %v198
  %v555 = vpop.f32.mrb[0].mxu0
  %v556 = vadd.f32 %v88, %v555
  %v557 = vpop.f32.mrb[0].mxu0
  %v558 = vadd.f32 %v92, %v557
  %559 = vmatprep.mubr.f32.mxu0 0.0
  %560 = vmatmul.mubr.f32.gmra.mrb[0].mxu0 %v201
  %v561 = vpop.f32.mrb[0].mxu0
  %v562 = vadd.f32 %v88, %v561
  %v563 = vpop.f32.mrb[0].mxu0
  %v564 = vadd.f32 %v92, %v563
  %565 = vmatprep.mubr.f32.mxu0 0.0
  %566 = vmatmul.mubr.f32.gmra.mrb[0].mxu0 %v204
  %v567 = vpop.f32.mrb[0].mxu0
  %v568 = vadd.f32 %v88, %v567
  %v569 = vpop.f32.mrb[0].mxu0
  %v570 = vadd.f32 %v92, %v569
  %571 = vmatprep.mubr.f32.mxu0 0.0
  %572 = vmatmul.mubr.f32.gmra.mrb[0].mxu0 %v207
  %v573 = vpop.f32.mrb[0].mxu0
  %v574 = vadd.f32 %v88, %v573
  %v575 = vpop.f32.mrb[0].mxu0
  %v576 = vadd.f32 %v92, %v575
  %577 = vmatprep.mubr.f32.mxu0 0.0
  %578 = vmatmul.mubr.f32.gmra.mrb[0].mxu0 %v210
  %v579 = vpop.f32.mrb[0].mxu0
  %v580 = vadd.f32 %v88, %v579
  %v581 = vpop.f32.mrb[0].mxu0
  %v582 = vadd.f32 %v92, %v581
  %583 = vmatprep.mubr.f32.mxu0 0.0
  %584 = vmatmul.mubr.f32.gmra.mrb[0].mxu0 %v213
  %v585 = vpop.f32.mrb[0].mxu0
  %v586 = vadd.f32 %v88, %v585
  %v587 = vpop.f32.mrb[0].mxu0
  %v588 = vadd.f32 %v92, %v587
  %589 = vmatprep.mubr.f32.mxu0 0.0
  %590 = vmatmul.mubr.f32.gmra.mrb[0].mxu0 %v216
  %v591 = vpop.f32.mrb[0].mxu0
  %v592 = vadd.f32 %v88, %v591
  %v593 = vpop.f32.mrb[0].mxu0
  %v594 = vadd.f32 %v92, %v593
  %595 = vmatprep.mubr.f32.mxu0 0.0
  %596 = vmatmul.mubr.f32.gmra.mrb[0].mxu0 %v219
  %v597 = vpop.f32.mrb[0].mxu0
  %v598 = vadd.f32 %v88, %v597
  %v599 = vpop.f32.mrb[0].mxu0
  %v600 = vadd.f32 %v92, %v599
  %601 = vmatprep.mubr.f32.mxu0 0.0
  %602 = vmatmul.mubr.f32.gmra.mrb[0].mxu0 %v222
  %v603 = vpop.f32.mrb[0].mxu0
  %v604 = vadd.f32 %v88, %v603
  %v605 = vpop.f32.mrb[0].mxu0
  %v606 = vadd.f32 %v92, %v605
  %607 = vmatprep.mubr.f32.mxu0 0.0
  %608 = vmatmul.mubr.f32.gmra.mrb[0].mxu0 %v225
  %v609 = vpop.f32.mrb[0].mxu0
  %v610 = vadd.f32 %v88, %v609
  %v611 = vpop.f32.mrb[0].mxu0
  %v612 = vadd.f32 %v92, %v611
  %613 = vmatprep.mubr.f32.mxu0 0.0
  %614 = vmatmul.mubr.f32.gmra.mrb[0].mxu0 %v228
  %v615 = vpop.f32.mrb[0].mxu0
  %v616 = vadd.f32 %v88, %v615
  %v617 = vpop.f32.mrb[0].mxu0
  %v618 = vadd.f32 %v92, %v617
  %619 = vmatprep.mubr.f32.mxu0 0.0
  %620 = vmatmul.mubr.f32.gmra.mrb[0].mxu0 %v231
  %v621 = vpop.f32.mrb[0].mxu0
  %v622 = vadd.f32 %v88, %v621
  %v623 = vpop.f32.mrb[0].mxu0
  %v624 = vadd.f32 %v92, %v623
  %625 = vmatprep.mubr.f32.mxu0 0.0
  %626 = vmatmul.mubr.f32.gmra.mrb[0].mxu0 %v234
  %v627 = vpop.f32.mrb[0].mxu0
  %v628 = vadd.f32 %v88, %v627
  %v629 = vpop.f32.mrb[0].mxu0
  %v630 = vadd.f32 %v92, %v629
  %631 = vmatprep.mubr.f32.mxu0 0.0
  %632 = vmatmul.mubr.f32.gmra.mrb[0].mxu0 %v237
  %v633 = vpop.f32.mrb[0].mxu0
  %v634 = vadd.f32 %v88, %v633
  %v635 = vpop.f32.mrb[0].mxu0
  %v636 = vadd.f32 %v92, %v635
  %637 = vmatprep.mubr.f32.mxu0 0.0
  %638 = vmatmul.mubr.f32.gmra.mrb[0].mxu0 %v240
  %v639 = vpop.f32.mrb[0].mxu0
  %v640 = vadd.f32 %v88, %v639
  %v641 = vpop.f32.mrb[0].mxu0
  %v642 = vadd.f32 %v92, %v641
  %643 = vmatprep.mubr.f32.mxu0 0.0
  %644 = vmatmul.mubr.f32.gmra.mrb[0].mxu0 %v243
  %v645 = vpop.f32.mrb[0].mxu0
  %v646 = vadd.f32 %v88, %v645
  %v647 = vpop.f32.mrb[0].mxu0
  %v648 = vadd.f32 %v92, %v647
  %649 = vmatprep.mubr.f32.mxu0 0.0
  %650 = vmatmul.mubr.f32.gmra.mrb[0].mxu0 %v246
  %v651 = vpop.f32.mrb[0].mxu0
  %v652 = vadd.f32 %v88, %v651
  %v653 = vpop.f32.mrb[0].mxu0
  %v654 = vadd.f32 %v92, %v653
  %655 = vmatprep.mubr.f32.mxu0 0.0
  %656 = vmatmul.mubr.f32.gmra.mrb[0].mxu0 %v249
  %v657 = vpop.f32.mrb[0].mxu0
  %v658 = vadd.f32 %v88, %v657
  %v659 = vpop.f32.mrb[0].mxu0
  %v660 = vadd.f32 %v92, %v659
  %661 = vmatprep.mubr.f32.mxu0 0.0
  %662 = vmatmul.mubr.f32.gmra.mrb[0].mxu0 %v252
  %v663 = vpop.f32.mrb[0].mxu0
  %v664 = vadd.f32 %v88, %v663
  %v665 = vpop.f32.mrb[0].mxu0
  %v666 = vadd.f32 %v92, %v665
  %667 = vmatprep.mubr.f32.mxu0 0.0
  %668 = vmatmul.mubr.f32.gmra.mrb[0].mxu0 %v255
  %v669 = vpop.f32.mrb[0].mxu0
  %v670 = vadd.f32 %v88, %v669
  %v671 = vpop.f32.mrb[0].mxu0
  %v672 = vadd.f32 %v92, %v671
  %673 = vmatprep.mubr.f32.mxu0 0.0
  %674 = vmatmul.mubr.f32.gmra.mrb[0].mxu0 %v258
  %v675 = vpop.f32.mrb[0].mxu0
  %v676 = vadd.f32 %v88, %v675
  %v677 = vpop.f32.mrb[0].mxu0
  %v678 = vadd.f32 %v92, %v677
  %679 = vmatprep.mubr.f32.mxu0 0.0
  %680 = vmatmul.mubr.f32.gmra.mrb[0].mxu0 %v261
  %v681 = vpop.f32.mrb[0].mxu0
  %v682 = vadd.f32 %v88, %v681
  %v683 = vpop.f32.mrb[0].mxu0
  %v684 = vadd.f32 %v92, %v683
  %685 = vmatprep.mubr.f32.mxu0 0.0
  %686 = vmatmul.mubr.f32.gmra.mrb[0].mxu0 %v264
  %v687 = vpop.f32.mrb[0].mxu0
  %v688 = vadd.f32 %v88, %v687
  %v689 = vpop.f32.mrb[0].mxu0
  %v690 = vadd.f32 %v92, %v689
  %691 = vmatprep.mubr.f32.mxu0 0.0
  %692 = vmatmul.mubr.f32.gmra.mrb[0].mxu0 %v267
  %v693 = vpop.f32.mrb[0].mxu0
  %v694 = vadd.f32 %v88, %v693
  %v695 = vpop.f32.mrb[0].mxu0
  %v696 = vadd.f32 %v92, %v695
  %697 = vmatprep.mubr.f32.mxu0 0.0
  %698 = vmatmul.mubr.f32.gmra.mrb[0].mxu0 %v270
  %v699 = vpop.f32.mrb[0].mxu0
  %v700 = vadd.f32 %v88, %v699
  %v701 = vpop.f32.mrb[0].mxu0
  %v702 = vadd.f32 %v92, %v701
  %703 = vmatprep.mubr.f32.mxu0 0.0
  %704 = vmatmul.mubr.f32.gmra.mrb[0].mxu0 %v273
  %v705 = vpop.f32.mrb[0].mxu0
  %v706 = vadd.f32 %v88, %v705
  %v707 = vpop.f32.mrb[0].mxu0
  %v708 = vadd.f32 %v92, %v707
  %709 = vmatprep.mubr.f32.mxu0 0.0
  %710 = vmatmul.mubr.f32.gmra.mrb[0].mxu0 %v276
  %v711 = vpop.f32.mrb[0].mxu0
  %v712 = vadd.f32 %v88, %v711
  %v713 = vpop.f32.mrb[0].mxu0
  %v714 = vadd.f32 %v92, %v713
  %715 = vmatprep.mubr.f32.mxu0 0.0
  %716 = vmatmul.mubr.f32.gmra.mrb[0].mxu0 %v279
  %v717 = vpop.f32.mrb[0].mxu0
  %v718 = vadd.f32 %v88, %v717
  %v719 = vpop.f32.mrb[0].mxu0
  %v720 = vadd.f32 %v92, %v719
  %721 = vmatprep.mubr.f32.mxu0 0.0
  %722 = vmatmul.mubr.f32.gmra.mrb[0].mxu0 %v282
  %v723 = vpop.f32.mrb[0].mxu0
  %v724 = vadd.f32 %v88, %v723
  %v725 = vpop.f32.mrb[0].mxu0
  %v726 = vadd.f32 %v92, %v725
  %727 = vmatprep.mubr.f32.mxu0 0.0
  %728 = vmatmul.mubr.f32.gmra.mrb[0].mxu0 %v285
  %v729 = vpop.f32.mrb[0].mxu0
  %v730 = vadd.f32 %v88, %v729
  %v731 = vpop.f32.mrb[0].mxu0
  %v732 = vadd.f32 %v92, %v731
  %733 = vmatprep.mubr.f32.mxu0 0.0
  %734 = vmatmul.mubr.f32.gmra.mrb[0].mxu0 %v288
  %v735 = vpop.f32.mrb[0].mxu0
  %v736 = vadd.f32 %v88, %v735
  %v737 = vpop.f32.mrb[0].mxu0
  %v738 = vadd.f32 %v92, %v737
  %739 = vmatprep.mubr.f32.mxu0 0.0
  %740 = vmatmul.mubr.f32.gmra.mrb[0].mxu0 %v291
  %v741 = vpop.f32.mrb[0].mxu0
  %v742 = vadd.f32 %v88, %v741
  %v743 = vpop.f32.mrb[0].mxu0
  %v744 = vadd.f32 %v92, %v743
  %745 = vmatprep.mubr.f32.mxu0 0.0
  %746 = vmatmul.mubr.f32.gmra.mrb[0].mxu0 %v294
  %v747 = vpop.f32.mrb[0].mxu0
  %v748 = vadd.f32 %v88, %v747
  %v749 = vpop.f32.mrb[0].mxu0
  %v750 = vadd.f32 %v92, %v749
  %751 = vdwg.mxu0
  %752 = vmatprep.subr.mxu0 0.0
  %753 = vmatpush1.msra.mxu0 %v301
  %754 = vmatprep.subr.mxu0 0.0
  %755 = vmatpush1.msra.mxu0 0.0
  %756 = vmatprep.subr.mxu0 0.0
  %757 = vmatpush1.msra.mxu0 0.0
  %758 = vmatprep.subr.mxu0 0.0
  %759 = vmatpush1.msra.mxu0 0.0
  %760 = vmatprep.subr.mxu0 0.0
  %761 = vmatpush1.msra.mxu0 0.0
  %762 = vmatprep.subr.mxu0 0.0
  %763 = vmatpush1.msra.mxu0 0.0
  %764 = vmatprep.subr.mxu0 0.0
  %765 = vmatpush1.msra.mxu0 0.0
  %766 = vmatprep.subr.mxu0 0.0
  %767 = vmatpush1.msra.mxu0 0.0
  %768 = vmatprep.subr.mxu0 0.0
  %769 = vmatpush1.msra.mxu0 0.0
  %770 = vmatprep.subr.mxu0 0.0
  %771 = vmatpush1.msra.mxu0 0.0
  %772 = vmatprep.subr.mxu0 0.0
  %773 = vmatpush1.msra.mxu0 0.0
  %774 = vmatprep.subr.mxu0 0.0
  %775 = vmatpush1.msra.mxu0 0.0
  %776 = vmatprep.subr.mxu0 0.0
  %777 = vmatpush1.msra.mxu0 0.0
  %778 = vmatprep.subr.mxu0 0.0
  %779 = vmatpush1.msra.mxu0 0.0
  %780 = vmatprep.subr.mxu0 0.0
  %781 = vmatpush1.msra.mxu0 0.0
  %782 = vmatprep.subr.mxu0 0.0
  %783 = vmatpush1.msra.mxu0 0.0
  %784 = vmatprep.subr.mxu0 0.0
  %785 = vmatpush1.msra.mxu0 0.0
  %786 = vmatprep.subr.mxu0 0.0
  %787 = vmatpush1.msra.mxu0 0.0
  %788 = vmatprep.subr.mxu0 0.0
  %789 = vmatpush1.msra.mxu0 0.0
  %790 = vmatprep.subr.mxu0 0.0
  %791 = vmatpush1.msra.mxu0 0.0
  %792 = vmatprep.subr.mxu0 0.0
  %793 = vmatpush1.msra.mxu0 0.0
  %794 = vmatprep.subr.mxu0 0.0
  %795 = vmatpush1.msra.mxu0 0.0
  %796 = vmatprep.subr.mxu0 0.0
  %797 = vmatpush1.msra.mxu0 0.0
  %798 = vmatprep.subr.mxu0 0.0
  %799 = vmatpush1.msra.mxu0 0.0
  %800 = vmatprep.subr.mxu0 0.0
  %801 = vmatpush1.msra.mxu0 0.0
  %802 = vmatprep.subr.mxu0 0.0
  %803 = vmatpush1.msra.mxu0 0.0
  %804 = vmatprep.subr.mxu0 0.0
  %805 = vmatpush1.msra.mxu0 0.0
  %806 = vmatprep.subr.mxu0 0.0
  %807 = vmatpush1.msra.mxu0 0.0
  %808 = vmatprep.subr.mxu0 0.0
  %809 = vmatpush1.msra.mxu0 0.0
  %810 = vmatprep.subr.mxu0 0.0
  %811 = vmatpush1.msra.mxu0 0.0
  %812 = vmatprep.subr.mxu0 0.0
  %813 = vmatpush1.msra.mxu0 0.0
  %814 = vmatprep.subr.mxu0 0.0
  %815 = vmatpush1.msra.mxu0 0.0
  %816 = vmatprep.mubr.f32.mxu0 0.0
  %817 = vmatmul.mubr.f32.gmra.mrb[0].mxu0 %v105
  %v818 = vpop.f32.mrb[0].mxu0
  %v819 = vadd.f32 %v96, %v818
  %v820 = vpop.f32.mrb[0].mxu0
  %821 = vmatprep.mubr.f32.mxu0 0.0
  %822 = vmatmul.mubr.f32.gmra.mrb[0].mxu0 %v108
  %v823 = vpop.f32.mrb[0].mxu0
  %v824 = vadd.f32 %v96, %v823
  %v825 = vpop.f32.mrb[0].mxu0
  %826 = vmatprep.mubr.f32.mxu0 0.0
  %827 = vmatmul.mubr.f32.gmra.mrb[0].mxu0 %v111
  %v828 = vpop.f32.mrb[0].mxu0
  %v829 = vadd.f32 %v96, %v828
  %v830 = vpop.f32.mrb[0].mxu0
  %831 = vmatprep.mubr.f32.mxu0 0.0
  %832 = vmatmul.mubr.f32.gmra.mrb[0].mxu0 %v114
  %v833 = vpop.f32.mrb[0].mxu0
  %v834 = vadd.f32 %v96, %v833
  %v835 = vpop.f32.mrb[0].mxu0
  %836 = vmatprep.mubr.f32.mxu0 0.0
  %837 = vmatmul.mubr.f32.gmra.mrb[0].mxu0 %v117
  %v838 = vpop.f32.mrb[0].mxu0
  %v839 = vadd.f32 %v96, %v838
  %v840 = vpop.f32.mrb[0].mxu0
  %841 = vmatprep.mubr.f32.mxu0 0.0
  %842 = vmatmul.mubr.f32.gmra.mrb[0].mxu0 %v120
  %v843 = vpop.f32.mrb[0].mxu0
  %v844 = vadd.f32 %v96, %v843
  %v845 = vpop.f32.mrb[0].mxu0
  %846 = vmatprep.mubr.f32.mxu0 0.0
  %847 = vmatmul.mubr.f32.gmra.mrb[0].mxu0 %v123
  %v848 = vpop.f32.mrb[0].mxu0
  %v849 = vadd.f32 %v96, %v848
  %v850 = vpop.f32.mrb[0].mxu0
  %851 = vmatprep.mubr.f32.mxu0 0.0
  %852 = vmatmul.mubr.f32.gmra.mrb[0].mxu0 %v126
  %v853 = vpop.f32.mrb[0].mxu0
  %v854 = vadd.f32 %v96, %v853
  %v855 = vpop.f32.mrb[0].mxu0
  %856 = vmatprep.mubr.f32.mxu0 0.0
  %857 = vmatmul.mubr.f32.gmra.mrb[0].mxu0 %v129
  %v858 = vpop.f32.mrb[0].mxu0
  %v859 = vadd.f32 %v96, %v858
  %v860 = vpop.f32.mrb[0].mxu0
  %861 = vmatprep.mubr.f32.mxu0 0.0
  %862 = vmatmul.mubr.f32.gmra.mrb[0].mxu0 %v132
  %v863 = vpop.f32.mrb[0].mxu0
  %v864 = vadd.f32 %v96, %v863
  %v865 = vpop.f32.mrb[0].mxu0
  %866 = vmatprep.mubr.f32.mxu0 0.0
  %867 = vmatmul.mubr.f32.gmra.mrb[0].mxu0 %v135
  %v868 = vpop.f32.mrb[0].mxu0
  %v869 = vadd.f32 %v96, %v868
  %v870 = vpop.f32.mrb[0].mxu0
  %871 = vmatprep.mubr.f32.mxu0 0.0
  %872 = vmatmul.mubr.f32.gmra.mrb[0].mxu0 %v138
  %v873 = vpop.f32.mrb[0].mxu0
  %v874 = vadd.f32 %v96, %v873
  %v875 = vpop.f32.mrb[0].mxu0
  %876 = vmatprep.mubr.f32.mxu0 0.0
  %877 = vmatmul.mubr.f32.gmra.mrb[0].mxu0 %v141
  %v878 = vpop.f32.mrb[0].mxu0
  %v879 = vadd.f32 %v96, %v878
  %v880 = vpop.f32.mrb[0].mxu0
  %881 = vmatprep.mubr.f32.mxu0 0.0
  %882 = vmatmul.mubr.f32.gmra.mrb[0].mxu0 %v144
  %v883 = vpop.f32.mrb[0].mxu0
  %v884 = vadd.f32 %v96, %v883
  %v885 = vpop.f32.mrb[0].mxu0
  %886 = vmatprep.mubr.f32.mxu0 0.0
  %887 = vmatmul.mubr.f32.gmra.mrb[0].mxu0 %v147
  %v888 = vpop.f32.mrb[0].mxu0
  %v889 = vadd.f32 %v96, %v888
  %v890 = vpop.f32.mrb[0].mxu0
  %891 = vmatprep.mubr.f32.mxu0 0.0
  %892 = vmatmul.mubr.f32.gmra.mrb[0].mxu0 %v150
  %v893 = vpop.f32.mrb[0].mxu0
  %v894 = vadd.f32 %v96, %v893
  %v895 = vpop.f32.mrb[0].mxu0
  %896 = vmatprep.mubr.f32.mxu0 0.0
  %897 = vmatmul.mubr.f32.gmra.mrb[0].mxu0 %v153
  %v898 = vpop.f32.mrb[0].mxu0
  %v899 = vadd.f32 %v96, %v898
  %v900 = vpop.f32.mrb[0].mxu0
  %901 = vmatprep.mubr.f32.mxu0 0.0
  %902 = vmatmul.mubr.f32.gmra.mrb[0].mxu0 %v156
  %v903 = vpop.f32.mrb[0].mxu0
  %v904 = vadd.f32 %v96, %v903
  %v905 = vpop.f32.mrb[0].mxu0
  %906 = vmatprep.mubr.f32.mxu0 0.0
  %907 = vmatmul.mubr.f32.gmra.mrb[0].mxu0 %v159
  %v908 = vpop.f32.mrb[0].mxu0
  %v909 = vadd.f32 %v96, %v908
  %v910 = vpop.f32.mrb[0].mxu0
  %911 = vmatprep.mubr.f32.mxu0 0.0
  %912 = vmatmul.mubr.f32.gmra.mrb[0].mxu0 %v162
  %v913 = vpop.f32.mrb[0].mxu0
  %v914 = vadd.f32 %v96, %v913
  %v915 = vpop.f32.mrb[0].mxu0
  %916 = vmatprep.mubr.f32.mxu0 0.0
  %917 = vmatmul.mubr.f32.gmra.mrb[0].mxu0 %v165
  %v918 = vpop.f32.mrb[0].mxu0
  %v919 = vadd.f32 %v96, %v918
  %v920 = vpop.f32.mrb[0].mxu0
  %921 = vmatprep.mubr.f32.mxu0 0.0
  %922 = vmatmul.mubr.f32.gmra.mrb[0].mxu0 %v168
  %v923 = vpop.f32.mrb[0].mxu0
  %v924 = vadd.f32 %v96, %v923
  %v925 = vpop.f32.mrb[0].mxu0
  %926 = vmatprep.mubr.f32.mxu0 0.0
  %927 = vmatmul.mubr.f32.gmra.mrb[0].mxu0 %v171
  %v928 = vpop.f32.mrb[0].mxu0
  %v929 = vadd.f32 %v96, %v928
  %v930 = vpop.f32.mrb[0].mxu0
  %931 = vmatprep.mubr.f32.mxu0 0.0
  %932 = vmatmul.mubr.f32.gmra.mrb[0].mxu0 %v174
  %v933 = vpop.f32.mrb[0].mxu0
  %v934 = vadd.f32 %v96, %v933
  %v935 = vpop.f32.mrb[0].mxu0
  %936 = vmatprep.mubr.f32.mxu0 0.0
  %937 = vmatmul.mubr.f32.gmra.mrb[0].mxu0 %v177
  %v938 = vpop.f32.mrb[0].mxu0
  %v939 = vadd.f32 %v96, %v938
  %v940 = vpop.f32.mrb[0].mxu0
  %941 = vmatprep.mubr.f32.mxu0 0.0
  %942 = vmatmul.mubr.f32.gmra.mrb[0].mxu0 %v180
  %v943 = vpop.f32.mrb[0].mxu0
  %v944 = vadd.f32 %v96, %v943
  %v945 = vpop.f32.mrb[0].mxu0
  %946 = vmatprep.mubr.f32.mxu0 0.0
  %947 = vmatmul.mubr.f32.gmra.mrb[0].mxu0 %v183
  %v948 = vpop.f32.mrb[0].mxu0
  %v949 = vadd.f32 %v96, %v948
  %v950 = vpop.f32.mrb[0].mxu0
  %951 = vmatprep.mubr.f32.mxu0 0.0
  %952 = vmatmul.mubr.f32.gmra.mrb[0].mxu0 %v186
  %v953 = vpop.f32.mrb[0].mxu0
  %v954 = vadd.f32 %v96, %v953
  %v955 = vpop.f32.mrb[0].mxu0
  %956 = vmatprep.mubr.f32.mxu0 0.0
  %957 = vmatmul.mubr.f32.gmra.mrb[0].mxu0 %v189
  %v958 = vpop.f32.mrb[0].mxu0
  %v959 = vadd.f32 %v96, %v958
  %v960 = vpop.f32.mrb[0].mxu0
  %961 = vmatprep.mubr.f32.mxu0 0.0
  %962 = vmatmul.mubr.f32.gmra.mrb[0].mxu0 %v192
  %v963 = vpop.f32.mrb[0].mxu0
  %v964 = vadd.f32 %v96, %v963
  %v965 = vpop.f32.mrb[0].mxu0
  %966 = vmatprep.mubr.f32.mxu0 0.0
  %967 = vmatmul.mubr.f32.gmra.mrb[0].mxu0 %v195
  %v968 = vpop.f32.mrb[0].mxu0
  %v969 = vadd.f32 %v96, %v968
  %v970 = vpop.f32.mrb[0].mxu0
  %971 = vmatprep.mubr.f32.mxu0 0.0
  %972 = vmatmul.mubr.f32.gmra.mrb[0].mxu0 %v198
  %v973 = vpop.f32.mrb[0].mxu0
  %v974 = vadd.f32 %v96, %v973
  %v975 = vpop.f32.mrb[0].mxu0
  %976 = vmatprep.mubr.f32.mxu0 0.0
  %977 = vmatmul.mubr.f32.gmra.mrb[0].mxu0 %v201
  %v978 = vpop.f32.mrb[0].mxu0
  %v979 = vadd.f32 %v96, %v978
  %v980 = vpop.f32.mrb[0].mxu0
  %981 = vmatprep.mubr.f32.mxu0 0.0
  %982 = vmatmul.mubr.f32.gmra.mrb[0].mxu0 %v204
  %v983 = vpop.f32.mrb[0].mxu0
  %v984 = vadd.f32 %v96, %v983
  %v985 = vpop.f32.mrb[0].mxu0
  %986 = vmatprep.mubr.f32.mxu0 0.0
  %987 = vmatmul.mubr.f32.gmra.mrb[0].mxu0 %v207
  %v988 = vpop.f32.mrb[0].mxu0
  %v989 = vadd.f32 %v96, %v988
  %v990 = vpop.f32.mrb[0].mxu0
  %991 = vmatprep.mubr.f32.mxu0 0.0
  %992 = vmatmul.mubr.f32.gmra.mrb[0].mxu0 %v210
  %v993 = vpop.f32.mrb[0].mxu0
  %v994 = vadd.f32 %v96, %v993
  %v995 = vpop.f32.mrb[0].mxu0
  %996 = vmatprep.mubr.f32.mxu0 0.0
  %997 = vmatmul.mubr.f32.gmra.mrb[0].mxu0 %v213
  %v998 = vpop.f32.mrb[0].mxu0
  %v999 = vadd.f32 %v96, %v998
  %v1000 = vpop.f32.mrb[0].mxu0
  %1001 = vmatprep.mubr.f32.mxu0 0.0
  %1002 = vmatmul.mubr.f32.gmra.mrb[0].mxu0 %v216
  %v1003 = vpop.f32.mrb[0].mxu0
  %v1004 = vadd.f32 %v96, %v1003
  %v1005 = vpop.f32.mrb[0].mxu0
  %1006 = vmatprep.mubr.f32.mxu0 0.0
  %1007 = vmatmul.mubr.f32.gmra.mrb[0].mxu0 %v219
  %v1008 = vpop.f32.mrb[0].mxu0
  %v1009 = vadd.f32 %v96, %v1008
  %v1010 = vpop.f32.mrb[0].mxu0
  %1011 = vmatprep.mubr.f32.mxu0 0.0
  %1012 = vmatmul.mubr.f32.gmra.mrb[0].mxu0 %v222
  %v1013 = vpop.f32.mrb[0].mxu0
  %v1014 = vadd.f32 %v96, %v1013
  %v1015 = vpop.f32.mrb[0].mxu0
  %1016 = vmatprep.mubr.f32.mxu0 0.0
  %1017 = vmatmul.mubr.f32.gmra.mrb[0].mxu0 %v225
  %v1018 = vpop.f32.mrb[0].mxu0
  %v1019 = vadd.f32 %v96, %v1018
  %v1020 = vpop.f32.mrb[0].mxu0
  %1021 = vmatprep.mubr.f32.mxu0 0.0
  %1022 = vmatmul.mubr.f32.gmra.mrb[0].mxu0 %v228
  %v1023 = vpop.f32.mrb[0].mxu0
  %v1024 = vadd.f32 %v96, %v1023
  %v1025 = vpop.f32.mrb[0].mxu0
  %1026 = vmatprep.mubr.f32.mxu0 0.0
  %1027 = vmatmul.mubr.f32.gmra.mrb[0].mxu0 %v231
  %v1028 = vpop.f32.mrb[0].mxu0
  %v1029 = vadd.f32 %v96, %v1028
  %v1030 = vpop.f32.mrb[0].mxu0
  %1031 = vmatprep.mubr.f32.mxu0 0.0
  %1032 = vmatmul.mubr.f32.gmra.mrb[0].mxu0 %v234
  %v1033 = vpop.f32.mrb[0].mxu0
  %v1034 = vadd.f32 %v96, %v1033
  %v1035 = vpop.f32.mrb[0].mxu0
  %1036 = vmatprep.mubr.f32.mxu0 0.0
  %1037 = vmatmul.mubr.f32.gmra.mrb[0].mxu0 %v237
  %v1038 = vpop.f32.mrb[0].mxu0
  %v1039 = vadd.f32 %v96, %v1038
  %v1040 = vpop.f32.mrb[0].mxu0
  %1041 = vmatprep.mubr.f32.mxu0 0.0
  %1042 = vmatmul.mubr.f32.gmra.mrb[0].mxu0 %v240
  %v1043 = vpop.f32.mrb[0].mxu0
  %v1044 = vadd.f32 %v96, %v1043
  %v1045 = vpop.f32.mrb[0].mxu0
  %1046 = vmatprep.mubr.f32.mxu0 0.0
  %1047 = vmatmul.mubr.f32.gmra.mrb[0].mxu0 %v243
  %v1048 = vpop.f32.mrb[0].mxu0
  %v1049 = vadd.f32 %v96, %v1048
  %v1050 = vpop.f32.mrb[0].mxu0
  %1051 = vmatprep.mubr.f32.mxu0 0.0
  %1052 = vmatmul.mubr.f32.gmra.mrb[0].mxu0 %v246
  %v1053 = vpop.f32.mrb[0].mxu0
  %v1054 = vadd.f32 %v96, %v1053
  %v1055 = vpop.f32.mrb[0].mxu0
  %1056 = vmatprep.mubr.f32.mxu0 0.0
  %1057 = vmatmul.mubr.f32.gmra.mrb[0].mxu0 %v249
  %v1058 = vpop.f32.mrb[0].mxu0
  %v1059 = vadd.f32 %v96, %v1058
  %v1060 = vpop.f32.mrb[0].mxu0
  %1061 = vmatprep.mubr.f32.mxu0 0.0
  %1062 = vmatmul.mubr.f32.gmra.mrb[0].mxu0 %v252
  %v1063 = vpop.f32.mrb[0].mxu0
  %v1064 = vadd.f32 %v96, %v1063
  %v1065 = vpop.f32.mrb[0].mxu0
  %1066 = vmatprep.mubr.f32.mxu0 0.0
  %1067 = vmatmul.mubr.f32.gmra.mrb[0].mxu0 %v255
  %v1068 = vpop.f32.mrb[0].mxu0
  %v1069 = vadd.f32 %v96, %v1068
  %v1070 = vpop.f32.mrb[0].mxu0
  %1071 = vmatprep.mubr.f32.mxu0 0.0
  %1072 = vmatmul.mubr.f32.gmra.mrb[0].mxu0 %v258
  %v1073 = vpop.f32.mrb[0].mxu0
  %v1074 = vadd.f32 %v96, %v1073
  %v1075 = vpop.f32.mrb[0].mxu0
  %1076 = vmatprep.mubr.f32.mxu0 0.0
  %1077 = vmatmul.mubr.f32.gmra.mrb[0].mxu0 %v261
  %v1078 = vpop.f32.mrb[0].mxu0
  %v1079 = vadd.f32 %v96, %v1078
  %v1080 = vpop.f32.mrb[0].mxu0
  %1081 = vmatprep.mubr.f32.mxu0 0.0
  %1082 = vmatmul.mubr.f32.gmra.mrb[0].mxu0 %v264
  %v1083 = vpop.f32.mrb[0].mxu0
  %v1084 = vadd.f32 %v96, %v1083
  %v1085 = vpop.f32.mrb[0].mxu0
  %1086 = vmatprep.mubr.f32.mxu0 0.0
  %1087 = vmatmul.mubr.f32.gmra.mrb[0].mxu0 %v267
  %v1088 = vpop.f32.mrb[0].mxu0
  %v1089 = vadd.f32 %v96, %v1088
  %v1090 = vpop.f32.mrb[0].mxu0
  %1091 = vmatprep.mubr.f32.mxu0 0.0
  %1092 = vmatmul.mubr.f32.gmra.mrb[0].mxu0 %v270
  %v1093 = vpop.f32.mrb[0].mxu0
  %v1094 = vadd.f32 %v96, %v1093
  %v1095 = vpop.f32.mrb[0].mxu0
  %1096 = vmatprep.mubr.f32.mxu0 0.0
  %1097 = vmatmul.mubr.f32.gmra.mrb[0].mxu0 %v273
  %v1098 = vpop.f32.mrb[0].mxu0
  %v1099 = vadd.f32 %v96, %v1098
  %v1100 = vpop.f32.mrb[0].mxu0
  %1101 = vmatprep.mubr.f32.mxu0 0.0
  %1102 = vmatmul.mubr.f32.gmra.mrb[0].mxu0 %v276
  %v1103 = vpop.f32.mrb[0].mxu0
  %v1104 = vadd.f32 %v96, %v1103
  %v1105 = vpop.f32.mrb[0].mxu0
  %1106 = vmatprep.mubr.f32.mxu0 0.0
  %1107 = vmatmul.mubr.f32.gmra.mrb[0].mxu0 %v279
  %v1108 = vpop.f32.mrb[0].mxu0
  %v1109 = vadd.f32 %v96, %v1108
  %v1110 = vpop.f32.mrb[0].mxu0
  %1111 = vmatprep.mubr.f32.mxu0 0.0
  %1112 = vmatmul.mubr.f32.gmra.mrb[0].mxu0 %v282
  %v1113 = vpop.f32.mrb[0].mxu0
  %v1114 = vadd.f32 %v96, %v1113
  %v1115 = vpop.f32.mrb[0].mxu0
  %1116 = vmatprep.mubr.f32.mxu0 0.0
  %1117 = vmatmul.mubr.f32.gmra.mrb[0].mxu0 %v285
  %v1118 = vpop.f32.mrb[0].mxu0
  %v1119 = vadd.f32 %v96, %v1118
  %v1120 = vpop.f32.mrb[0].mxu0
  %1121 = vmatprep.mubr.f32.mxu0 0.0
  %1122 = vmatmul.mubr.f32.gmra.mrb[0].mxu0 %v288
  %v1123 = vpop.f32.mrb[0].mxu0
  %v1124 = vadd.f32 %v96, %v1123
  %v1125 = vpop.f32.mrb[0].mxu0
  %1126 = vmatprep.mubr.f32.mxu0 0.0
  %1127 = vmatmul.mubr.f32.gmra.mrb[0].mxu0 %v291
  %v1128 = vpop.f32.mrb[0].mxu0
  %v1129 = vadd.f32 %v96, %v1128
  %v1130 = vpop.f32.mrb[0].mxu0
  %1131 = vmatprep.mubr.f32.mxu0 0.0
  %1132 = vmatmul.mubr.f32.gmra.mrb[0].mxu0 %v294
  %v1133 = vpop.f32.mrb[0].mxu0
  %v1134 = vadd.f32 %v96, %v1133
  %v1135 = vpop.f32.mrb[0].mxu0
  %1136 = vdwg.mxu0
  %v1137 = vmax.f32 %v370, 0.0
  %v1138 = vmax.f32 %v372, 0.0
  %v1139 = vmax.f32 %v819, 0.0
  %v1140 = vmax.f32 %v376, 0.0
  %v1141 = vmax.f32 %v378, 0.0
  %v1142 = vmax.f32 %v824, 0.0
  %v1143 = vmax.f32 %v382, 0.0
  %v1144 = vmax.f32 %v384, 0.0
  %v1145 = vmax.f32 %v829, 0.0
  %v1146 = vmax.f32 %v388, 0.0
  %v1147 = vmax.f32 %v390, 0.0
  %v1148 = vmax.f32 %v834, 0.0
  %v1149 = vmax.f32 %v394, 0.0
  %v1150 = vmax.f32 %v396, 0.0
  %v1151 = vmax.f32 %v839, 0.0
  %v1152 = vmax.f32 %v400, 0.0
  %v1153 = vmax.f32 %v402, 0.0
  %v1154 = vmax.f32 %v844, 0.0
  %v1155 = vmax.f32 %v406, 0.0
  %v1156 = vmax.f32 %v408, 0.0
  %v1157 = vmax.f32 %v849, 0.0
  %v1158 = vmax.f32 %v412, 0.0
  %v1159 = vmax.f32 %v414, 0.0
  %v1160 = vmax.f32 %v854, 0.0
  %v1161 = vmax.f32 %v418, 0.0
  %v1162 = vmax.f32 %v420, 0.0
  %v1163 = vmax.f32 %v859, 0.0
  %v1164 = vmax.f32 %v424, 0.0
  %v1165 = vmax.f32 %v426, 0.0
  %v1166 = vmax.f32 %v864, 0.0
  %v1167 = vmax.f32 %v430, 0.0
  %v1168 = vmax.f32 %v432, 0.0
  %v1169 = vmax.f32 %v869, 0.0
  %v1170 = vmax.f32 %v436, 0.0
  %v1171 = vmax.f32 %v438, 0.0
  %v1172 = vmax.f32 %v874, 0.0
  %v1173 = vmax.f32 %v442, 0.0
  %v1174 = vmax.f32 %v444, 0.0
  %v1175 = vmax.f32 %v879, 0.0
  %v1176 = vmax.f32 %v448, 0.0
  %v1177 = vmax.f32 %v450, 0.0
  %v1178 = vmax.f32 %v884, 0.0
  %v1179 = vmax.f32 %v454, 0.0
  %v1180 = vmax.f32 %v456, 0.0
  %v1181 = vmax.f32 %v889, 0.0
  %v1182 = vmax.f32 %v460, 0.0
  %v1183 = vmax.f32 %v462, 0.0
  %v1184 = vmax.f32 %v894, 0.0
  %v1185 = vmax.f32 %v466, 0.0
  %v1186 = vmax.f32 %v468, 0.0
  %v1187 = vmax.f32 %v899, 0.0
  %v1188 = vmax.f32 %v472, 0.0
  %v1189 = vmax.f32 %v474, 0.0
  %v1190 = vmax.f32 %v904, 0.0
  %v1191 = vmax.f32 %v478, 0.0
  %v1192 = vmax.f32 %v480, 0.0
  %v1193 = vmax.f32 %v909, 0.0
  %v1194 = vmax.f32 %v484, 0.0
  %v1195 = vmax.f32 %v486, 0.0
  %v1196 = vmax.f32 %v914, 0.0
  %v1197 = vmax.f32 %v490, 0.0
  %v1198 = vmax.f32 %v492, 0.0
  %v1199 = vmax.f32 %v919, 0.0
  %v1200 = vmax.f32 %v496, 0.0
  %v1201 = vmax.f32 %v498, 0.0
  %v1202 = vmax.f32 %v924, 0.0
  %v1203 = vmax.f32 %v502, 0.0
  %v1204 = vmax.f32 %v504, 0.0
  %v1205 = vmax.f32 %v929, 0.0
  %v1206 = vmax.f32 %v508, 0.0
  %v1207 = vmax.f32 %v510, 0.0
  %v1208 = vmax.f32 %v934, 0.0
  %v1209 = vmax.f32 %v514, 0.0
  %v1210 = vmax.f32 %v516, 0.0
  %v1211 = vmax.f32 %v939, 0.0
  %v1212 = vmax.f32 %v520, 0.0
  %v1213 = vmax.f32 %v522, 0.0
  %v1214 = vmax.f32 %v944, 0.0
  %v1215 = vmax.f32 %v526, 0.0
  %v1216 = vmax.f32 %v528, 0.0
  %v1217 = vmax.f32 %v949, 0.0
  %v1218 = vmax.f32 %v532, 0.0
  %v1219 = vmax.f32 %v534, 0.0
  %v1220 = vmax.f32 %v954, 0.0
  %v1221 = vmax.f32 %v538, 0.0
  %v1222 = vmax.f32 %v540, 0.0
  %v1223 = vmax.f32 %v959, 0.0
  %v1224 = vmax.f32 %v544, 0.0
  %v1225 = vmax.f32 %v546, 0.0
  %v1226 = vmax.f32 %v964, 0.0
  %v1227 = vmax.f32 %v550, 0.0
  %v1228 = vmax.f32 %v552, 0.0
  %v1229 = vmax.f32 %v969, 0.0
  %v1230 = vmax.f32 %v556, 0.0
  %v1231 = vmax.f32 %v558, 0.0
  %v1232 = vmax.f32 %v974, 0.0
  %v1233 = vmax.f32 %v562, 0.0
  %v1234 = vmax.f32 %v564, 0.0
  %v1235 = vmax.f32 %v979, 0.0
  %v1236 = vmax.f32 %v568, 0.0
  %v1237 = vmax.f32 %v570, 0.0
  %v1238 = vmax.f32 %v984, 0.0
  %v1239 = vmax.f32 %v574, 0.0
  %v1240 = vmax.f32 %v576, 0.0
  %v1241 = vmax.f32 %v989, 0.0
  %v1242 = vmax.f32 %v580, 0.0
  %v1243 = vmax.f32 %v582, 0.0
  %v1244 = vmax.f32 %v994, 0.0
  %v1245 = vmax.f32 %v586, 0.0
  %v1246 = vmax.f32 %v588, 0.0
  %v1247 = vmax.f32 %v999, 0.0
  %v1248 = vmax.f32 %v592, 0.0
  %v1249 = vmax.f32 %v594, 0.0
  %v1250 = vmax.f32 %v1004, 0.0
  %v1251 = vmax.f32 %v598, 0.0
  %v1252 = vmax.f32 %v600, 0.0
  %v1253 = vmax.f32 %v1009, 0.0
  %v1254 = vmax.f32 %v604, 0.0
  %v1255 = vmax.f32 %v606, 0.0
  %v1256 = vmax.f32 %v1014, 0.0
  %v1257 = vmax.f32 %v610, 0.0
  %v1258 = vmax.f32 %v612, 0.0
  %v1259 = vmax.f32 %v1019, 0.0
  %v1260 = vmax.f32 %v616, 0.0
  %v1261 = vmax.f32 %v618, 0.0
  %v1262 = vmax.f32 %v1024, 0.0
  %v1263 = vmax.f32 %v622, 0.0
  %v1264 = vmax.f32 %v624, 0.0
  %v1265 = vmax.f32 %v1029, 0.0
  %v1266 = vmax.f32 %v628, 0.0
  %v1267 = vmax.f32 %v630, 0.0
  %v1268 = vmax.f32 %v1034, 0.0
  %v1269 = vmax.f32 %v634, 0.0
  %v1270 = vmax.f32 %v636, 0.0
  %v1271 = vmax.f32 %v1039, 0.0
  %v1272 = vmax.f32 %v640, 0.0
  %v1273 = vmax.f32 %v642, 0.0
  %v1274 = vmax.f32 %v1044, 0.0
  %v1275 = vmax.f32 %v646, 0.0
  %v1276 = vmax.f32 %v648, 0.0
  %v1277 = vmax.f32 %v1049, 0.0
  %v1278 = vmax.f32 %v652, 0.0
  %v1279 = vmax.f32 %v654, 0.0
  %v1280 = vmax.f32 %v1054, 0.0
  %v1281 = vmax.f32 %v658, 0.0
  %v1282 = vmax.f32 %v660, 0.0
  %v1283 = vmax.f32 %v1059, 0.0
  %v1284 = vmax.f32 %v664, 0.0
  %v1285 = vmax.f32 %v666, 0.0
  %v1286 = vmax.f32 %v1064, 0.0
  %v1287 = vmax.f32 %v670, 0.0
  %v1288 = vmax.f32 %v672, 0.0
  %v1289 = vmax.f32 %v1069, 0.0
  %v1290 = vmax.f32 %v676, 0.0
  %v1291 = vmax.f32 %v678, 0.0
  %v1292 = vmax.f32 %v1074, 0.0
  %v1293 = vmax.f32 %v682, 0.0
  %v1294 = vmax.f32 %v684, 0.0
  %v1295 = vmax.f32 %v1079, 0.0
  %v1296 = vmax.f32 %v688, 0.0
  %v1297 = vmax.f32 %v690, 0.0
  %v1298 = vmax.f32 %v1084, 0.0
  %v1299 = vmax.f32 %v694, 0.0
  %v1300 = vmax.f32 %v696, 0.0
  %v1301 = vmax.f32 %v1089, 0.0
  %v1302 = vmax.f32 %v700, 0.0
  %v1303 = vmax.f32 %v702, 0.0
  %v1304 = vmax.f32 %v1094, 0.0
  %v1305 = vmax.f32 %v706, 0.0
  %v1306 = vmax.f32 %v708, 0.0
  %v1307 = vmax.f32 %v1099, 0.0
  %v1308 = vmax.f32 %v712, 0.0
  %v1309 = vmax.f32 %v714, 0.0
  %v1310 = vmax.f32 %v1104, 0.0
  %v1311 = vmax.f32 %v718, 0.0
  %v1312 = vmax.f32 %v720, 0.0
  %v1313 = vmax.f32 %v1109, 0.0
  %v1314 = vmax.f32 %v724, 0.0
  %v1315 = vmax.f32 %v726, 0.0
  %v1316 = vmax.f32 %v1114, 0.0
  %v1317 = vmax.f32 %v730, 0.0
  %v1318 = vmax.f32 %v732, 0.0
  %v1319 = vmax.f32 %v1119, 0.0
  %v1320 = vmax.f32 %v736, 0.0
  %v1321 = vmax.f32 %v738, 0.0
  %v1322 = vmax.f32 %v1124, 0.0
  %v1323 = vmax.f32 %v742, 0.0
  %v1324 = vmax.f32 %v744, 0.0
  %v1325 = vmax.f32 %v1129, 0.0
  %v1326 = vmax.f32 %v748, 0.0
  %v1327 = vmax.f32 %v750, 0.0
  %v1328 = vmax.f32 %v1134, 0.0
  %1329 = vst [vmem:[%s3] sm:$0xff] %v1137
  %1330 = vst [vmem:[%s3 + $0x8] sm:$0xff] %v1140
  %1331 = vst [vmem:[%s3 + $0x10] sm:$0xff] %v1143
  %1332 = vst [vmem:[%s3 + $0x18] sm:$0xff] %v1146
  %1333 = vst [vmem:[%s3 + $0x20] sm:$0xff] %v1149
  %1334 = vst [vmem:[%s3 + $0x28] sm:$0xff] %v1152
  %1335 = vst [vmem:[%s3 + $0x30] sm:$0xff] %v1155
  %1336 = vst [vmem:[%s3 + $0x38] sm:$0xff] %v1158
  %1337 = vst [vmem:[%s3 + $0x40] sm:$0xff] %v1161
  %1338 = vst [vmem:[%s3 + $0x48] sm:$0xff] %v1164
  %1339 = vst [vmem:[%s3 + $0x50] sm:$0xff] %v1167
  %1340 = vst [vmem:[%s3 + $0x58] sm:$0xff] %v1170
  %1341 = vst [vmem:[%s3 + $0x60] sm:$0xff] %v1173
  %1342 = vst [vmem:[%s3 + $0x68] sm:$0xff] %v1176
  %1343 = vst [vmem:[%s3 + $0x70] sm:$0xff] %v1179
  %1344 = vst [vmem:[%s3 + $0x78] sm:$0xff] %v1182
  %1345 = vst [vmem:[%s3 + $0x80] sm:$0xff] %v1185
  %1346 = vst [vmem:[%s3 + $0x88] sm:$0xff] %v1188
  %1347 = vst [vmem:[%s3 + $0x90] sm:$0xff] %v1191
  %1348 = vst [vmem:[%s3 + $0x98] sm:$0xff] %v1194
  %1349 = vst [vmem:[%s3 + $0xa0] sm:$0xff] %v1197
  %1350 = vst [vmem:[%s3 + $0xa8] sm:$0xff] %v1200
  %1351 = vst [vmem:[%s3 + $0xb0] sm:$0xff] %v1203
  %1352 = vst [vmem:[%s3 + $0xb8] sm:$0xff] %v1206
  %1353 = vst [vmem:[%s3 + $0xc0] sm:$0xff] %v1209
  %1354 = vst [vmem:[%s3 + $0xc8] sm:$0xff] %v1212
  %1355 = vst [vmem:[%s3 + $0xd0] sm:$0xff] %v1215
  %1356 = vst [vmem:[%s3 + $0xd8] sm:$0xff] %v1218
  %1357 = vst [vmem:[%s3 + $0xe0] sm:$0xff] %v1221
  %1358 = vst [vmem:[%s3 + $0xe8] sm:$0xff] %v1224
  %1359 = vst [vmem:[%s3 + $0xf0] sm:$0xff] %v1227
  %1360 = vst [vmem:[%s3 + $0xf8] sm:$0xff] %v1230
  %1361 = vst [vmem:[%s3 + $0x100] sm:$0xff] %v1233
  %1362 = vst [vmem:[%s3 + $0x108] sm:$0xff] %v1236
  %1363 = vst [vmem:[%s3 + $0x110] sm:$0xff] %v1239
  %1364 = vst [vmem:[%s3 + $0x118] sm:$0xff] %v1242
  %1365 = vst [vmem:[%s3 + $0x120] sm:$0xff] %v1245
  %1366 = vst [vmem:[%s3 + $0x128] sm:$0xff] %v1248
  %1367 = vst [vmem:[%s3 + $0x130] sm:$0xff] %v1251
  %1368 = vst [vmem:[%s3 + $0x138] sm:$0xff] %v1254
  %1369 = vst [vmem:[%s3 + $0x140] sm:$0xff] %v1257
  %1370 = vst [vmem:[%s3 + $0x148] sm:$0xff] %v1260
  %1371 = vst [vmem:[%s3 + $0x150] sm:$0xff] %v1263
  %1372 = vst [vmem:[%s3 + $0x158] sm:$0xff] %v1266
  %1373 = vst [vmem:[%s3 + $0x160] sm:$0xff] %v1269
  %1374 = vst [vmem:[%s3 + $0x168] sm:$0xff] %v1272
  %1375 = vst [vmem:[%s3 + $0x170] sm:$0xff] %v1275
  %1376 = vst [vmem:[%s3 + $0x178] sm:$0xff] %v1278
  %1377 = vst [vmem:[%s3 + $0x180] sm:$0xff] %v1281
  %1378 = vst [vmem:[%s3 + $0x188] sm:$0xff] %v1284
  %1379 = vst [vmem:[%s3 + $0x190] sm:$0xff] %v1287
  %1380 = vst [vmem:[%s3 + $0x198] sm:$0xff] %v1290
  %1381 = vst [vmem:[%s3 + $0x1a0] sm:$0xff] %v1293
  %1382 = vst [vmem:[%s3 + $0x1a8] sm:$0xff] %v1296
  %1383 = vst [vmem:[%s3 + $0x1b0] sm:$0xff] %v1299
  %1384 = vst [vmem:[%s3 + $0x1b8] sm:$0xff] %v1302
  %1385 = vst [vmem:[%s3 + $0x1c0] sm:$0xff] %v1305
  %1386 = vst [vmem:[%s3 + $0x1c8] sm:$0xff] %v1308
  %1387 = vst [vmem:[%s3 + $0x1d0] sm:$0xff] %v1311
  %1388 = vst [vmem:[%s3 + $0x1d8] sm:$0xff] %v1314
  %1389 = vst [vmem:[%s3 + $0x1e0] sm:$0xff] %v1317
  %1390 = vst [vmem:[%s3 + $0x1e8] sm:$0xff] %v1320
  %1391 = vst [vmem:[%s3 + $0x1f0] sm:$0xff] %v1323
  %1392 = vst [vmem:[%s3 + $0x1f8] sm:$0xff] %v1326
  %1393 = vst [vmem:[%s4] sm:$0xff] %v1138
  %1394 = vst [vmem:[%s4 + $0x8] sm:$0xff] %v1141
  %1395 = vst [vmem:[%s4 + $0x10] sm:$0xff] %v1144
  %1396 = vst [vmem:[%s4 + $0x18] sm:$0xff] %v1147
  %1397 = vst [vmem:[%s4 + $0x20] sm:$0xff] %v1150
  %1398 = vst [vmem:[%s4 + $0x28] sm:$0xff] %v1153
  %1399 = vst [vmem:[%s4 + $0x30] sm:$0xff] %v1156
  %1400 = vst [vmem:[%s4 + $0x38] sm:$0xff] %v1159
  %1401 = vst [vmem:[%s4 + $0x40] sm:$0xff] %v1162
  %1402 = vst [vmem:[%s4 + $0x48] sm:$0xff] %v1165
  %1403 = vst [vmem:[%s4 + $0x50] sm:$0xff] %v1168
  %1404 = vst [vmem:[%s4 + $0x58] sm:$0xff] %v1171
  %1405 = vst [vmem:[%s4 + $0x60] sm:$0xff] %v1174
  %1406 = vst [vmem:[%s4 + $0x68] sm:$0xff] %v1177
  %1407 = vst [vmem:[%s4 + $0x70] sm:$0xff] %v1180
  %1408 = vst [vmem:[%s4 + $0x78] sm:$0xff] %v1183
  %1409 = vst [vmem:[%s4 + $0x80] sm:$0xff] %v1186
  %1410 = vst [vmem:[%s4 + $0x88] sm:$0xff] %v1189
  %1411 = vst [vmem:[%s4 + $0x90] sm:$0xff] %v1192
  %1412 = vst [vmem:[%s4 + $0x98] sm:$0xff] %v1195
  %1413 = vst [vmem:[%s4 + $0xa0] sm:$0xff] %v1198
  %1414 = vst [vmem:[%s4 + $0xa8] sm:$0xff] %v1201
  %1415 = vst [vmem:[%s4 + $0xb0] sm:$0xff] %v1204
  %1416 = vst [vmem:[%s4 + $0xb8] sm:$0xff] %v1207
  %1417 = vst [vmem:[%s4 + $0xc0] sm:$0xff] %v1210
  %1418 = vst [vmem:[%s4 + $0xc8] sm:$0xff] %v1213
  %1419 = vst [vmem:[%s4 + $0xd0] sm:$0xff] %v1216
  %1420 = vst [vmem:[%s4 + $0xd8] sm:$0xff] %v1219
  %1421 = vst [vmem:[%s4 + $0xe0] sm:$0xff] %v1222
  %1422 = vst [vmem:[%s4 + $0xe8] sm:$0xff] %v1225
  %1423 = vst [vmem:[%s4 + $0xf0] sm:$0xff] %v1228
  %1424 = vst [vmem:[%s4 + $0xf8] sm:$0xff] %v1231
  %1425 = vst [vmem:[%s4 + $0x100] sm:$0xff] %v1234
  %1426 = vst [vmem:[%s4 + $0x108] sm:$0xff] %v1237
  %1427 = vst [vmem:[%s4 + $0x110] sm:$0xff] %v1240
  %1428 = vst [vmem:[%s4 + $0x118] sm:$0xff] %v1243
  %1429 = vst [vmem:[%s4 + $0x120] sm:$0xff] %v1246
  %1430 = vst [vmem:[%s4 + $0x128] sm:$0xff] %v1249
  %1431 = vst [vmem:[%s4 + $0x130] sm:$0xff] %v1252
  %1432 = vst [vmem:[%s4 + $0x138] sm:$0xff] %v1255
  %1433 = vst [vmem:[%s4 + $0x140] sm:$0xff] %v1258
  %1434 = vst [vmem:[%s4 + $0x148] sm:$0xff] %v1261
  %1435 = vst [vmem:[%s4 + $0x150] sm:$0xff] %v1264
  %1436 = vst [vmem:[%s4 + $0x158] sm:$0xff] %v1267
  %1437 = vst [vmem:[%s4 + $0x160] sm:$0xff] %v1270
  %1438 = vst [vmem:[%s4 + $0x168] sm:$0xff] %v1273
  %1439 = vst [vmem:[%s4 + $0x170] sm:$0xff] %v1276
  %1440 = vst [vmem:[%s4 + $0x178] sm:$0xff] %v1279
  %1441 = vst [vmem:[%s4 + $0x180] sm:$0xff] %v1282
  %1442 = vst [vmem:[%s4 + $0x188] sm:$0xff] %v1285
  %1443 = vst [vmem:[%s4 + $0x190] sm:$0xff] %v1288
  %1444 = vst [vmem:[%s4 + $0x198] sm:$0xff] %v1291
  %1445 = vst [vmem:[%s4 + $0x1a0] sm:$0xff] %v1294
  %1446 = vst [vmem:[%s4 + $0x1a8] sm:$0xff] %v1297
  %1447 = vst [vmem:[%s4 + $0x1b0] sm:$0xff] %v1300
  %1448 = vst [vmem:[%s4 + $0x1b8] sm:$0xff] %v1303
  %1449 = vst [vmem:[%s4 + $0x1c0] sm:$0xff] %v1306
  %1450 = vst [vmem:[%s4 + $0x1c8] sm:$0xff] %v1309
  %1451 = vst [vmem:[%s4 + $0x1d0] sm:$0xff] %v1312
  %1452 = vst [vmem:[%s4 + $0x1d8] sm:$0xff] %v1315
  %1453 = vst [vmem:[%s4 + $0x1e0] sm:$0xff] %v1318
  %1454 = vst [vmem:[%s4 + $0x1e8] sm:$0xff] %v1321
  %1455 = vst [vmem:[%s4 + $0x1f0] sm:$0xff] %v1324
  %1456 = vst [vmem:[%s4 + $0x1f8] sm:$0xff] %v1327
  %1457 = vst [vmem:[%s5] sm:$0xff] %v1139
  %1458 = vst [vmem:[%s5 + $0x8] sm:$0xff] %v1142
  %1459 = vst [vmem:[%s5 + $0x10] sm:$0xff] %v1145
  %1460 = vst [vmem:[%s5 + $0x18] sm:$0xff] %v1148
  %1461 = vst [vmem:[%s5 + $0x20] sm:$0xff] %v1151
  %1462 = vst [vmem:[%s5 + $0x28] sm:$0xff] %v1154
  %1463 = vst [vmem:[%s5 + $0x30] sm:$0xff] %v1157
  %1464 = vst [vmem:[%s5 + $0x38] sm:$0xff] %v1160
  %1465 = vst [vmem:[%s5 + $0x40] sm:$0xff] %v1163
  %1466 = vst [vmem:[%s5 + $0x48] sm:$0xff] %v1166
  %1467 = vst [vmem:[%s5 + $0x50] sm:$0xff] %v1169
  %1468 = vst [vmem:[%s5 + $0x58] sm:$0xff] %v1172
  %1469 = vst [vmem:[%s5 + $0x60] sm:$0xff] %v1175
  %1470 = vst [vmem:[%s5 + $0x68] sm:$0xff] %v1178
  %1471 = vst [vmem:[%s5 + $0x70] sm:$0xff] %v1181
  %1472 = vst [vmem:[%s5 + $0x78] sm:$0xff] %v1184
  %1473 = vst [vmem:[%s5 + $0x80] sm:$0xff] %v1187
  %1474 = vst [vmem:[%s5 + $0x88] sm:$0xff] %v1190
  %1475 = vst [vmem:[%s5 + $0x90] sm:$0xff] %v1193
  %1476 = vst [vmem:[%s5 + $0x98] sm:$0xff] %v1196
  %1477 = vst [vmem:[%s5 + $0xa0] sm:$0xff] %v1199
  %1478 = vst [vmem:[%s5 + $0xa8] sm:$0xff] %v1202
  %1479 = vst [vmem:[%s5 + $0xb0] sm:$0xff] %v1205
  %1480 = vst [vmem:[%s5 + $0xb8] sm:$0xff] %v1208
  %1481 = vst [vmem:[%s5 + $0xc0] sm:$0xff] %v1211
  %1482 = vst [vmem:[%s5 + $0xc8] sm:$0xff] %v1214
  %1483 = vst [vmem:[%s5 + $0xd0] sm:$0xff] %v1217
  %1484 = vst [vmem:[%s5 + $0xd8] sm:$0xff] %v1220
  %1485 = vst [vmem:[%s5 + $0xe0] sm:$0xff] %v1223
  %1486 = vst [vmem:[%s5 + $0xe8] sm:$0xff] %v1226
  %1487 = vst [vmem:[%s5 + $0xf0] sm:$0xff] %v1229
  %1488 = vst [vmem:[%s5 + $0xf8] sm:$0xff] %v1232
  %1489 = vst [vmem:[%s5 + $0x100] sm:$0xff] %v1235
  %1490 = vst [vmem:[%s5 + $0x108] sm:$0xff] %v1238
  %1491 = vst [vmem:[%s5 + $0x110] sm:$0xff] %v1241
  %1492 = vst [vmem:[%s5 + $0x118] sm:$0xff] %v1244
  %1493 = vst [vmem:[%s5 + $0x120] sm:$0xff] %v1247
  %1494 = vst [vmem:[%s5 + $0x128] sm:$0xff] %v1250
  %1495 = vst [vmem:[%s5 + $0x130] sm:$0xff] %v1253
  %1496 = vst [vmem:[%s5 + $0x138] sm:$0xff] %v1256
  %1497 = vst [vmem:[%s5 + $0x140] sm:$0xff] %v1259
  %1498 = vst [vmem:[%s5 + $0x148] sm:$0xff] %v1262
  %1499 = vst [vmem:[%s5 + $0x150] sm:$0xff] %v1265
  %1500 = vst [vmem:[%s5 + $0x158] sm:$0xff] %v1268
  %1501 = vst [vmem:[%s5 + $0x160] sm:$0xff] %v1271
  %1502 = vst [vmem:[%s5 + $0x168] sm:$0xff] %v1274
  %1503 = vst [vmem:[%s5 + $0x170] sm:$0xff] %v1277
  %1504 = vst [vmem:[%s5 + $0x178] sm:$0xff] %v1280
  %1505 = vst [vmem:[%s5 + $0x180] sm:$0xff] %v1283
  %1506 = vst [vmem:[%s5 + $0x188] sm:$0xff] %v1286
  %1507 = vst [vmem:[%s5 + $0x190] sm:$0xff] %v1289
  %1508 = vst [vmem:[%s5 + $0x198] sm:$0xff] %v1292
  %1509 = vst [vmem:[%s5 + $0x1a0] sm:$0xff] %v1295
  %1510 = vst [vmem:[%s5 + $0x1a8] sm:$0xff] %v1298
  %1511 = vst [vmem:[%s5 + $0x1b0] sm:$0xff] %v1301
  %1512 = vst [vmem:[%s5 + $0x1b8] sm:$0xff] %v1304
  %1513 = vst [vmem:[%s5 + $0x1c0] sm:$0xff] %v1307
  %1514 = vst [vmem:[%s5 + $0x1c8] sm:$0xff] %v1310
  %1515 = vst [vmem:[%s5 + $0x1d0] sm:$0xff] %v1313
  %1516 = vst [vmem:[%s5 + $0x1d8] sm:$0xff] %v1316
  %1517 = vst [vmem:[%s5 + $0x1e0] sm:$0xff] %v1319
  %1518 = vst [vmem:[%s5 + $0x1e8] sm:$0xff] %v1322
  %1519 = vst [vmem:[%s5 + $0x1f0] sm:$0xff] %v1325
  %1520 = vst [vmem:[%s5 + $0x1f8] sm:$0xff] %v1328
  // Predicated region
  $region14: #{inception_v1_forward.4} parent=0 // pred_check
    _
  $region15: #{inception_v1_forward.4} parent=0 // pred_check_branch
    %1522 = sbr.rel (0) target = $region17
  $region16: #{inception_v1_forward.4} parent=0 // pred_region
    _
  $region17: #{inception_v1_forward.4} parent=0 // pred_fallthru
    _
  // Predicated region
  $region18: #{inception_v1_forward.4} parent=0 // pred_check
    _
  $region19: #{inception_v1_forward.4} parent=0 // pred_check_branch
    %1524 = sbr.rel (0) target = $region21
  $region20: #{inception_v1_forward.4} parent=0 // pred_region
    _
  $region21: #{inception_v1_forward.4} parent=0 // pred_fallthru
    _
  // Predicated region
  $region22: #{inception_v1_forward.4} parent=0 // pred_check
    _
  $region23: #{inception_v1_forward.4} parent=0 // pred_check_branch
    %1526 = sbr.rel (0) target = $region25
  $region24: #{inception_v1_forward.4} parent=0 // pred_region
    _
  $region25: #{inception_v1_forward.4} parent=0 // pred_fallthru
    _
  // Predicated region
  $region26: #{inception_v1_forward.4} parent=0 // pred_check
    _
  $region27: #{inception_v1_forward.4} parent=0 // pred_check_branch
    %1528 = sbr.rel (0) target = $region29
  $region28: #{inception_v1_forward.4} parent=0 // pred_region
    _
  $region29: #{inception_v1_forward.4} parent=0 // pred_fallthru
    _
  // Predicated region
  $region30: #{inception_v1_forward.4} parent=0 // pred_check
    _
  $region31: #{inception_v1_forward.4} parent=0 // pred_check_branch
    %1530 = sbr.rel (0) target = $region33
  $region32: #{inception_v1_forward.4} parent=0 // pred_region
    _
  $region33: #{inception_v1_forward.4} parent=0 // pred_fallthru
    _
  // Predicated region
  $region34: #{inception_v1_forward.4} parent=0 // pred_check
    _
  $region35: #{inception_v1_forward.4} parent=0 // pred_check_branch
    %1532 = sbr.rel (0) target = $region37
  $region36: #{inception_v1_forward.4} parent=0 // pred_region
    _
  $region37: #{inception_v1_forward.4} parent=0 // pred_fallthru
    _

// kernel: inception_v1_forward.5
$region0: #{inception_v1_forward.5}
  #allocation0 [shape = 'u32[]', space=smem, size = 0x4, offset = 0x4, fixed_abs, tag = 'smem constant byte address 0x4 - core index']
  #allocation1 [shape = 'u32[144,128]{1,0:T(1,128)}', space=vmem, size = 0x12000, scoped, tag = 'internal scratch']
  %s0 = inlined_call_operand.vmem [shape: f32[2,16,16,128], index: 0, kind: input, shape index: {}]
  %s1 = inlined_call_operand.vmem [shape: f32[1152,128], index: 1, kind: input, shape index: {}]
  %s2 = inlined_call_operand.vmem [shape: f32[1,128], index: 2, kind: input, shape index: {}]
  %s3 = inlined_call_operand.vmem [shape: f32[2,16,16,128], index: 3, kind: output, shape index: {}]
  %s4 = sld [smem:[#allocation0]]
  $region45: #{inception_v1_forward.5} parent=0
    _
  %s6 = ssub.s32 1, %s4
  %s7 = scalar_select 0, %s6, %s4
  loop: start=0, step=1, limit=4
  $region2: #{inception_v1_forward.5} parent=0 // loop_pre_header
    _
  $region3: #{inception_v1_forward.5} parent=0 // loop_header
    %s9 = sphi 0, %s13
    %p10 = scmp.ge.s32.totalorder %s9, 4
    %s19 = sphi 0, %s21
    %s22 = sphi 0, %s19
    %s23 = sphi 0, %s22
    %s39 = sphi 0, %s23
    %s43 = sphi 0, %s43
    %s45 = sphi 0, %s43
    %s46 = sphi 0, %s45
    %s60 = sphi 0, %s46
    %s64 = sphi 0, %s64
    %s66 = sphi 0, %s64
    %s67 = sphi 0, %s66
    %s81 = sphi 0, %s67
    %s87 = sphi 0, %s89
    %s90 = sphi 0, %s87
    %s91 = sphi 0, %s90
    %s107 = sphi 0, %s91
  $region4: #{inception_v1_forward.5} parent=0 // loop_header_branch
    %12 = sbr.rel (%p10) target = $region8
  $region5: #{inception_v1_forward.5} parent=0 // loop_body
    %s14 = ssub.s32 %s9, 1
    %s15 = ssub.s32 %s9, 2
    %s16 = sadd.s32 %s9, 1
    %s17 = ssub.s32 %s9, %s16
    %p18 = scmp.eq.s32.totalorder %s17, 0
    %s20 = sadd.s32 %s19, 1
    %s21 = scalar_select %p18, %s19, %s20
    %p24 = pneg %p18
    %p25 = scmp.eq.s32.totalorder %s9, 1
    %p26 = por %p24, %p25
    %p27 = scmp.ne.s32.totalorder %s19, %s22
    %p28 = scmp.eq.s32.totalorder %s9, 0
    %p29 = por %p27, %p28
    %p30 = scmp.ne.s32.totalorder %s19, %s22
    %p31 = scmp.eq.s32.totalorder %s14, 1
    %p32 = por %p30, %p31
    %p33 = scmp.ne.s32.totalorder %s22, %s23
    %p34 = scmp.eq.s32.totalorder %s14, 0
    %p35 = por %p33, %p34
    %p36 = scmp.ne.s32.totalorder %s22, %s23
    %p37 = scmp.eq.s32.totalorder %s15, 1
    %p38 = por %p36, %p37
    %p40 = scmp.ne.s32.totalorder %s23, %s39
    %p41 = scmp.eq.s32.totalorder %s15, 0
    %p42 = por %p40, %p41
    %s44 = sadd.s32 %s43, 1
    %p47 = scmp.eq.s32.totalorder %s9, 1
    %p48 = scmp.ne.s32.totalorder %s43, %s45
    %p49 = scmp.eq.s32.totalorder %s9, 0
    %p50 = por %p48, %p49
    %p51 = scmp.ne.s32.totalorder %s43, %s45
    %p52 = scmp.eq.s32.totalorder %s14, 1
    %p53 = por %p51, %p52
    %p54 = scmp.ne.s32.totalorder %s45, %s46
    %p55 = scmp.eq.s32.totalorder %s14, 0
    %p56 = por %p54, %p55
    %p57 = scmp.ne.s32.totalorder %s45, %s46
    %p58 = scmp.eq.s32.totalorder %s15, 1
    %p59 = por %p57, %p58
    %p61 = scmp.ne.s32.totalorder %s46, %s60
    %p62 = scmp.eq.s32.totalorder %s15, 0
    %p63 = por %p61, %p62
    %s65 = sadd.s32 %s64, 1
    %p68 = scmp.eq.s32.totalorder %s9, 1
    %p69 = scmp.ne.s32.totalorder %s64, %s66
    %p70 = scmp.eq.s32.totalorder %s9, 0
    %p71 = por %p69, %p70
    %p72 = scmp.ne.s32.totalorder %s64, %s66
    %p73 = scmp.eq.s32.totalorder %s14, 1
    %p74 = por %p72, %p73
    %p75 = scmp.ne.s32.totalorder %s66, %s67
    %p76 = scmp.eq.s32.totalorder %s14, 0
    %p77 = por %p75, %p76
    %p78 = scmp.ne.s32.totalorder %s66, %s67
    %p79 = scmp.eq.s32.totalorder %s15, 1
    %p80 = por %p78, %p79
    %p82 = scmp.ne.s32.totalorder %s67, %s81
    %p83 = scmp.eq.s32.totalorder %s15, 0
    %p84 = por %p82, %p83
    %s85 = ssub.s32 %s9, %s16
    %p86 = scmp.eq.s32.totalorder %s85, 0
    %s88 = sadd.s32 %s87, 1
    %s89 = scalar_select %p86, %s87, %s88
    %p92 = pneg %p86
    %p93 = scmp.eq.s32.totalorder %s9, 1
    %p94 = por %p92, %p93
    %p95 = scmp.ne.s32.totalorder %s87, %s90
    %p96 = scmp.eq.s32.totalorder %s9, 0
    %p97 = por %p95, %p96
    %p98 = scmp.ne.s32.totalorder %s87, %s90
    %p99 = scmp.eq.s32.totalorder %s14, 1
    %p100 = por %p98, %p99
    %p101 = scmp.ne.s32.totalorder %s90, %s91
    %p102 = scmp.eq.s32.totalorder %s14, 0
    %p103 = por %p101, %p102
    %p104 = scmp.ne.s32.totalorder %s90, %s91
    %p105 = scmp.eq.s32.totalorder %s15, 1
    %p106 = por %p104, %p105
    %p108 = scmp.ne.s32.totalorder %s91, %s107
    %p109 = scmp.eq.s32.totalorder %s15, 0
    %p110 = por %p108, %p109
    %p111 = scmp.le.s32.totalorder 1, %s9
    %p112 = scmp.lt.s32.totalorder %s9, 3
    %p113 = pnand %p111, %p112
    %p114 = pneg %p113
    // Predicated region
    $region9: #{inception_v1_forward.5} parent=5 // pred_check
      _
    $region10: #{inception_v1_forward.5} parent=5 // pred_check_branch
      %116 = sbr.rel (%p113) target = $region12
    $region11: #{inception_v1_forward.5} parent=5 // pred_region
      %s117 = ssub.s32 %s9, 1
      // Predicated region
      $region13: #{inception_v1_forward.5} parent=11 // pred_check
        %p118 = pneg %p56
      $region14: #{inception_v1_forward.5} parent=11 // pred_check_branch
        %120 = sbr.rel (%p118) target = $region16
      $region15: #{inception_v1_forward.5} parent=11 // pred_region
        _
      $region16: #{inception_v1_forward.5} parent=11 // pred_fallthru
        _
      // Predicated region
      $region17: #{inception_v1_forward.5} parent=11 // pred_check
        %p121 = pneg %p77
      $region18: #{inception_v1_forward.5} parent=11 // pred_check_branch
        %123 = sbr.rel (%p121) target = $region20
      $region19: #{inception_v1_forward.5} parent=11 // pred_region
        _
      $region20: #{inception_v1_forward.5} parent=11 // pred_fallthru
        _
    $region12: #{inception_v1_forward.5} parent=5 // pred_fallthru
      _
    %p124 = scmp.lt.s32.totalorder %s9, 2
    // Predicated region
    $region21: #{inception_v1_forward.5} parent=5 // pred_check
      %p125 = pneg %p124
    $region22: #{inception_v1_forward.5} parent=5 // pred_check_branch
      %127 = sbr.rel (%p125) target = $region24
    $region23: #{inception_v1_forward.5} parent=5 // pred_region
      // Predicated region
      $region25: #{inception_v1_forward.5} parent=23 // pred_check
        %p128 = pneg %p29
      $region26: #{inception_v1_forward.5} parent=23 // pred_check_branch
        %130 = sbr.rel (%p128) target = $region28
      $region27: #{inception_v1_forward.5} parent=23 // pred_region
        %p131 = scmp.lt.s32.totalorder %s9, 1
        %s132 = scalar_select %p131, %s9, 1
        %s133 = smul.addr %s132, 32
        %s134 = smul.addr %s133, 8
        %s135 = scalar_lea.vmem %s0, %s134
      $region28: #{inception_v1_forward.5} parent=23 // pred_fallthru
        _
    $region24: #{inception_v1_forward.5} parent=5 // pred_fallthru
      _
    %p136 = scmp.le.s32.totalorder 1, %s9
    %p137 = scmp.lt.s32.totalorder %s9, 3
    %p138 = pnand %p136, %p137
    %p139 = pneg %p138
    // Predicated region
    $region29: #{inception_v1_forward.5} parent=5 // pred_check
      _
    $region30: #{inception_v1_forward.5} parent=5 // pred_check_branch
      %141 = sbr.rel (%p138) target = $region32
    $region31: #{inception_v1_forward.5} parent=5 // pred_region
      %s142 = ssub.s32 %s9, 1
      %p143 = scmp.lt.s32.totalorder %s14, 1
      %s144 = scalar_select %p143, %s14, 1
      %s145 = smul.addr %s144, 32
      %s146 = smul.addr %s145, 8
      %s147 = scalar_lea.vmem %s0, %s146
      %p148 = pneg %p35
      %p149 = pneg %p32
      %p150 = pneg %p56
      %p151 = pneg %p53
      %p152 = pneg %p77
      %p153 = pneg %p74
      %p154 = pneg %p103
      %p155 = pneg %p100
      %p156 = scmp.lt.s32.totalorder %s14, 1
      %s157 = scalar_select %p156, %s14, 1
      %s158 = smul.addr %s157, 32
      %s159 = smul.addr %s158, 8
      %s160 = scalar_lea.vmem %s3, %s159
      %p161 = scmp.lt.s32.totalorder %s14, 1
      %s162 = scalar_select %p161, %s14, 1
      %s163 = smul.addr %s162, 32
      %s164 = smul.addr %s163, 8
      %s165 = scalar_lea.vmem %s0, %s164
      %p166 = scmp.lt.s32.totalorder %s14, 1
      %s167 = scalar_select %p166, %s14, 1
      %s168 = smul.addr %s167, 32
      %s169 = smul.addr %s168, 8
      %s170 = scalar_lea.vmem %s3, %s169
      %v171 = vld [vmem:[%s165] sm:$0xff]
      %v172 = vld [vmem:[%s165 + $0x8] sm:$0xff]
      %v173 = vld [vmem:[%s165 + $0x10] sm:$0xff]
      %v174 = vld [vmem:[%s165 + $0x18] sm:$0xff]
      %v175 = vld [vmem:[%s165 + $0x20] sm:$0xff]
      %v176 = vld [vmem:[%s165 + $0x28] sm:$0xff]
      %v177 = vld [vmem:[%s165 + $0x30] sm:$0xff]
      %v178 = vld [vmem:[%s165 + $0x38] sm:$0xff]
      %v179 = vld [vmem:[%s165 + $0x40] sm:$0xff]
      %v180 = vld [vmem:[%s165 + $0x48] sm:$0xff]
      %v181 = vld [vmem:[%s165 + $0x50] sm:$0xff]
      %v182 = vld [vmem:[%s165 + $0x58] sm:$0xff]
      %v183 = vld [vmem:[%s165 + $0x60] sm:$0xff]
      %v184 = vld [vmem:[%s165 + $0x68] sm:$0xff]
      %v185 = vld [vmem:[%s165 + $0x70] sm:$0xff]
      %v186 = vld [vmem:[%s165 + $0x78] sm:$0xff]
      %v187 = vld [vmem:[%s165 + $0x80] sm:$0xff]
      %v188 = vld [vmem:[%s165 + $0x88] sm:$0xff]
      %v189 = vld [vmem:[%s165 + $0x90] sm:$0xff]
      %v190 = vld [vmem:[%s165 + $0x98] sm:$0xff]
      %v191 = vld [vmem:[%s165 + $0xa0] sm:$0xff]
      %v192 = vld [vmem:[%s165 + $0xa8] sm:$0xff]
      %v193 = vld [vmem:[%s165 + $0xb0] sm:$0xff]
      %v194 = vld [vmem:[%s165 + $0xb8] sm:$0xff]
      %v195 = vld [vmem:[%s165 + $0xc0] sm:$0xff]
      %v196 = vld [vmem:[%s165 + $0xc8] sm:$0xff]
      %v197 = vld [vmem:[%s165 + $0xd0] sm:$0xff]
      %v198 = vld [vmem:[%s165 + $0xd8] sm:$0xff]
      %v199 = vld [vmem:[%s165 + $0xe0] sm:$0xff]
      %v200 = vld [vmem:[%s165 + $0xe8] sm:$0xff]
      %v201 = vld [vmem:[%s165 + $0xf0] sm:$0xff]
      %v202 = vld [vmem:[%s165 + $0xf8] sm:$0xff]
      %vm234 = vcmask 1046528
      %v235 = vrot.slane 0.0, 1
      %v236 = vsel %vm234, %v235, %v235
      %v237 = vrot.slane %v171, 1
      %v238 = vrot.slane %v172, 1
      %v239 = vsel %vm234, %v237, %v238
      %v240 = vrot.slane %v173, 1
      %v241 = vrot.slane %v174, 1
      %v242 = vsel %vm234, %v240, %v241
      %v243 = vrot.slane %v175, 1
      %v244 = vrot.slane %v176, 1
      %v245 = vsel %vm234, %v243, %v244
      %v246 = vrot.slane %v177, 1
      %v247 = vrot.slane %v178, 1
      %v248 = vsel %vm234, %v246, %v247
      %v249 = vrot.slane %v179, 1
      %v250 = vrot.slane %v180, 1
      %v251 = vsel %vm234, %v249, %v250
      %v252 = vrot.slane %v181, 1
      %v253 = vrot.slane %v182, 1
      %v254 = vsel %vm234, %v252, %v253
      %v255 = vrot.slane %v183, 1
      %v256 = vrot.slane %v184, 1
      %v257 = vsel %vm234, %v255, %v256
      %v258 = vrot.slane %v185, 1
      %v259 = vrot.slane %v186, 1
      %v260 = vsel %vm234, %v258, %v259
      %v261 = vrot.slane %v187, 1
      %v262 = vrot.slane %v188, 1
      %v263 = vsel %vm234, %v261, %v262
      %v264 = vrot.slane %v189, 1
      %v265 = vrot.slane %v190, 1
      %v266 = vsel %vm234, %v264, %v265
      %v267 = vrot.slane %v191, 1
      %v268 = vrot.slane %v192, 1
      %v269 = vsel %vm234, %v267, %v268
      %v270 = vrot.slane %v193, 1
      %v271 = vrot.slane %v194, 1
      %v272 = vsel %vm234, %v270, %v271
      %v273 = vrot.slane %v195, 1
      %v274 = vrot.slane %v196, 1
      %v275 = vsel %vm234, %v273, %v274
      %v276 = vrot.slane %v197, 1
      %v277 = vrot.slane %v198, 1
      %v278 = vsel %vm234, %v276, %v277
      %v279 = vrot.slane %v199, 1
      %v280 = vrot.slane %v200, 1
      %v281 = vsel %vm234, %v279, %v280
      %vm282 = vcmask 1045504
      %v283 = vrot.slane 0.0, 2
      %v284 = vsel %vm282, %v283, %v283
      %v285 = vrot.slane %v171, 2
      %v286 = vrot.slane %v172, 2
      %v287 = vsel %vm282, %v285, %v286
      %v288 = vsel %vm282, %v286, %v283
      %v289 = vrot.slane %v173, 2
      %v290 = vrot.slane %v174, 2
      %v291 = vsel %vm282, %v289, %v290
      %v292 = vsel %vm282, %v290, %v283
      %v293 = vrot.slane %v175, 2
      %v294 = vrot.slane %v176, 2
      %v295 = vsel %vm282, %v293, %v294
      %v296 = vsel %vm282, %v294, %v283
      %v297 = vrot.slane %v177, 2
      %v298 = vrot.slane %v178, 2
      %v299 = vsel %vm282, %v297, %v298
      %v300 = vsel %vm282, %v298, %v283
      %v301 = vrot.slane %v179, 2
      %v302 = vrot.slane %v180, 2
      %v303 = vsel %vm282, %v301, %v302
      %v304 = vsel %vm282, %v302, %v283
      %v305 = vrot.slane %v181, 2
      %v306 = vrot.slane %v182, 2
      %v307 = vsel %vm282, %v305, %v306
      %v308 = vsel %vm282, %v306, %v283
      %v309 = vrot.slane %v183, 2
      %v310 = vrot.slane %v184, 2
      %v311 = vsel %vm282, %v309, %v310
      %v312 = vsel %vm282, %v310, %v283
      %v313 = vrot.slane %v185, 2
      %v314 = vrot.slane %v186, 2
      %v315 = vsel %vm282, %v313, %v314
      %v316 = vsel %vm282, %v314, %v283
      %v317 = vrot.slane %v187, 2
      %v318 = vrot.slane %v188, 2
      %v319 = vsel %vm282, %v317, %v318
      %v320 = vsel %vm282, %v318, %v283
      %v321 = vrot.slane %v189, 2
      %v322 = vrot.slane %v190, 2
      %v323 = vsel %vm282, %v321, %v322
      %v324 = vsel %vm282, %v322, %v283
      %v325 = vrot.slane %v191, 2
      %v326 = vrot.slane %v192, 2
      %v327 = vsel %vm282, %v325, %v326
      %v328 = vsel %vm282, %v326, %v283
      %v329 = vrot.slane %v193, 2
      %v330 = vrot.slane %v194, 2
      %v331 = vsel %vm282, %v329, %v330
      %v332 = vsel %vm282, %v330, %v283
      %v333 = vrot.slane %v195, 2
      %v334 = vrot.slane %v196, 2
      %v335 = vsel %vm282, %v333, %v334
      %v336 = vsel %vm282, %v334, %v283
      %v337 = vrot.slane %v197, 2
      %v338 = vrot.slane %v198, 2
      %v339 = vsel %vm282, %v337, %v338
      %v340 = vsel %vm282, %v338, %v283
      %v341 = vrot.slane %v199, 2
      %v342 = vrot.slane %v200, 2
      %v343 = vsel %vm282, %v341, %v342
      %v344 = vsel %vm282, %v342, %v283
      %v347 = vrot.slane %v201, 1
      %v348 = vrot.slane %v202, 1
      %v349 = vsel %vm234, %v347, %v348
      %v350 = vrot.slane %v201, 2
      %v351 = vrot.slane %v202, 2
      %v352 = vsel %vm282, %v350, %v351
      %v353 = vsel %vm282, %v351, %v283
      %vm354 = vcmask 1040384
      %v355 = vrot.slane 0.0, 7
      %v356 = vsel %vm354, %v355, %v355
      %v357 = vrot.slane %v235, 7
      %v358 = vrot.slane %v236, 7
      %v359 = vsel %vm354, %v357, %v358
      %v360 = vrot.slane %v283, 7
      %v361 = vrot.slane %v284, 7
      %v362 = vsel %vm354, %v360, %v361
      %v363 = vrot.slane %v171, 7
      %v364 = vsel %vm354, %v355, %v363
      %v365 = vrot.slane %v237, 7
      %v366 = vrot.slane %v239, 7
      %v367 = vsel %vm354, %v365, %v366
      %v368 = vrot.slane %v285, 7
      %v369 = vrot.slane %v287, 7
      %v370 = vsel %vm354, %v368, %v369
      %v371 = vrot.slane %v173, 7
      %v372 = vsel %vm354, %v355, %v371
      %v373 = vrot.slane %v240, 7
      %v374 = vrot.slane %v242, 7
      %v375 = vsel %vm354, %v373, %v374
      %v376 = vrot.slane %v289, 7
      %v377 = vrot.slane %v291, 7
      %v378 = vsel %vm354, %v376, %v377
      %v379 = vsel %vm354, %v358, %v357
      %v380 = vsel %vm354, %v361, %v361
      %v381 = vrot.slane %v172, 7
      %v382 = vsel %vm354, %v363, %v381
      %v383 = vrot.slane %v238, 7
      %v384 = vsel %vm354, %v366, %v383
      %v385 = vrot.slane %v288, 7
      %v386 = vsel %vm354, %v369, %v385
      %v387 = vrot.slane %v174, 7
      %v388 = vsel %vm354, %v371, %v387
      %v389 = vrot.slane %v241, 7
      %v390 = vsel %vm354, %v374, %v389
      %v391 = vrot.slane %v292, 7
      %v392 = vsel %vm354, %v377, %v391
      %v393 = vrot.slane %v175, 7
      %v394 = vsel %vm354, %v355, %v393
      %v395 = vrot.slane %v243, 7
      %v396 = vrot.slane %v245, 7
      %v397 = vsel %vm354, %v395, %v396
      %v398 = vrot.slane %v293, 7
      %v399 = vrot.slane %v295, 7
      %v400 = vsel %vm354, %v398, %v399
      %v401 = vrot.slane %v176, 7
      %v402 = vsel %vm354, %v393, %v401
      %v403 = vrot.slane %v244, 7
      %v404 = vsel %vm354, %v396, %v403
      %v405 = vrot.slane %v296, 7
      %v406 = vsel %vm354, %v399, %v405
      %v407 = vrot.slane %v177, 7
      %v408 = vsel %vm354, %v355, %v407
      %v409 = vrot.slane %v246, 7
      %v410 = vrot.slane %v248, 7
      %v411 = vsel %vm354, %v409, %v410
      %v412 = vrot.slane %v297, 7
      %v413 = vrot.slane %v299, 7
      %v414 = vsel %vm354, %v412, %v413
      %v415 = vrot.slane %v178, 7
      %v416 = vsel %vm354, %v407, %v415
      %v417 = vrot.slane %v247, 7
      %v418 = vsel %vm354, %v410, %v417
      %v419 = vrot.slane %v300, 7
      %v420 = vsel %vm354, %v413, %v419
      %v421 = vrot.slane %v179, 7
      %v422 = vsel %vm354, %v355, %v421
      %v423 = vrot.slane %v249, 7
      %v424 = vrot.slane %v251, 7
      %v425 = vsel %vm354, %v423, %v424
      %v426 = vrot.slane %v301, 7
      %v427 = vrot.slane %v303, 7
      %v428 = vsel %vm354, %v426, %v427
      %v429 = vrot.slane %v180, 7
      %v430 = vsel %vm354, %v421, %v429
      %v431 = vrot.slane %v250, 7
      %v432 = vsel %vm354, %v424, %v431
      %v433 = vrot.slane %v304, 7
      %v434 = vsel %vm354, %v427, %v433
      %v435 = vrot.slane %v181, 7
      %v436 = vsel %vm354, %v355, %v435
      %v437 = vrot.slane %v252, 7
      %v438 = vrot.slane %v254, 7
      %v439 = vsel %vm354, %v437, %v438
      %v440 = vrot.slane %v305, 7
      %v441 = vrot.slane %v307, 7
      %v442 = vsel %vm354, %v440, %v441
      %v443 = vrot.slane %v182, 7
      %v444 = vsel %vm354, %v435, %v443
      %v445 = vrot.slane %v253, 7
      %v446 = vsel %vm354, %v438, %v445
      %v447 = vrot.slane %v308, 7
      %v448 = vsel %vm354, %v441, %v447
      %v449 = vrot.slane %v183, 7
      %v450 = vsel %vm354, %v355, %v449
      %v451 = vrot.slane %v255, 7
      %v452 = vrot.slane %v257, 7
      %v453 = vsel %vm354, %v451, %v452
      %v454 = vrot.slane %v309, 7
      %v455 = vrot.slane %v311, 7
      %v456 = vsel %vm354, %v454, %v455
      %v457 = vrot.slane %v184, 7
      %v458 = vsel %vm354, %v449, %v457
      %v459 = vrot.slane %v256, 7
      %v460 = vsel %vm354, %v452, %v459
      %v461 = vrot.slane %v312, 7
      %v462 = vsel %vm354, %v455, %v461
      %v463 = vrot.slane %v185, 7
      %v464 = vsel %vm354, %v355, %v463
      %v465 = vrot.slane %v258, 7
      %v466 = vrot.slane %v260, 7
      %v467 = vsel %vm354, %v465, %v466
      %v468 = vrot.slane %v313, 7
      %v469 = vrot.slane %v315, 7
      %v470 = vsel %vm354, %v468, %v469
      %v471 = vrot.slane %v186, 7
      %v472 = vsel %vm354, %v463, %v471
      %v473 = vrot.slane %v259, 7
      %v474 = vsel %vm354, %v466, %v473
      %v475 = vrot.slane %v316, 7
      %v476 = vsel %vm354, %v469, %v475
      %v477 = vrot.slane %v187, 7
      %v478 = vsel %vm354, %v355, %v477
      %v479 = vrot.slane %v261, 7
      %v480 = vrot.slane %v263, 7
      %v481 = vsel %vm354, %v479, %v480
      %v482 = vrot.slane %v317, 7
      %v483 = vrot.slane %v319, 7
      %v484 = vsel %vm354, %v482, %v483
      %v485 = vrot.slane %v188, 7
      %v486 = vsel %vm354, %v477, %v485
      %v487 = vrot.slane %v262, 7
      %v488 = vsel %vm354, %v480, %v487
      %v489 = vrot.slane %v320, 7
      %v490 = vsel %vm354, %v483, %v489
      %v491 = vrot.slane %v189, 7
      %v492 = vsel %vm354, %v355, %v491
      %v493 = vrot.slane %v264, 7
      %v494 = vrot.slane %v266, 7
      %v495 = vsel %vm354, %v493, %v494
      %v496 = vrot.slane %v321, 7
      %v497 = vrot.slane %v323, 7
      %v498 = vsel %vm354, %v496, %v497
      %v499 = vrot.slane %v190, 7
      %v500 = vsel %vm354, %v491, %v499
      %v501 = vrot.slane %v265, 7
      %v502 = vsel %vm354, %v494, %v501
      %v503 = vrot.slane %v324, 7
      %v504 = vsel %vm354, %v497, %v503
      %v505 = vrot.slane %v191, 7
      %v506 = vsel %vm354, %v355, %v505
      %v507 = vrot.slane %v267, 7
      %v508 = vrot.slane %v269, 7
      %v509 = vsel %vm354, %v507, %v508
      %v510 = vrot.slane %v325, 7
      %v511 = vrot.slane %v327, 7
      %v512 = vsel %vm354, %v510, %v511
      %v513 = vrot.slane %v192, 7
      %v514 = vsel %vm354, %v505, %v513
      %v515 = vrot.slane %v268, 7
      %v516 = vsel %vm354, %v508, %v515
      %v517 = vrot.slane %v328, 7
      %v518 = vsel %vm354, %v511, %v517
      %v519 = vrot.slane %v193, 7
      %v520 = vsel %vm354, %v355, %v519
      %v521 = vrot.slane %v270, 7
      %v522 = vrot.slane %v272, 7
      %v523 = vsel %vm354, %v521, %v522
      %v524 = vrot.slane %v329, 7
      %v525 = vrot.slane %v331, 7
      %v526 = vsel %vm354, %v524, %v525
      %v527 = vrot.slane %v194, 7
      %v528 = vsel %vm354, %v519, %v527
      %v529 = vrot.slane %v271, 7
      %v530 = vsel %vm354, %v522, %v529
      %v531 = vrot.slane %v332, 7
      %v532 = vsel %vm354, %v525, %v531
      %v533 = vrot.slane %v195, 7
      %v534 = vsel %vm354, %v355, %v533
      %v535 = vrot.slane %v273, 7
      %v536 = vrot.slane %v275, 7
      %v537 = vsel %vm354, %v535, %v536
      %v538 = vrot.slane %v333, 7
      %v539 = vrot.slane %v335, 7
      %v540 = vsel %vm354, %v538, %v539
      %v541 = vrot.slane %v196, 7
      %v542 = vsel %vm354, %v533, %v541
      %v543 = vrot.slane %v274, 7
      %v544 = vsel %vm354, %v536, %v543
      %v545 = vrot.slane %v336, 7
      %v546 = vsel %vm354, %v539, %v545
      %v547 = vrot.slane %v197, 7
      %v548 = vsel %vm354, %v355, %v547
      %v549 = vrot.slane %v276, 7
      %v550 = vrot.slane %v278, 7
      %v551 = vsel %vm354, %v549, %v550
      %v552 = vrot.slane %v337, 7
      %v553 = vrot.slane %v339, 7
      %v554 = vsel %vm354, %v552, %v553
      %v555 = vrot.slane %v198, 7
      %v556 = vsel %vm354, %v547, %v555
      %v557 = vrot.slane %v277, 7
      %v558 = vsel %vm354, %v550, %v557
      %v559 = vrot.slane %v340, 7
      %v560 = vsel %vm354, %v553, %v559
      %v561 = vrot.slane %v199, 7
      %v562 = vsel %vm354, %v355, %v561
      %v563 = vrot.slane %v279, 7
      %v564 = vrot.slane %v281, 7
      %v565 = vsel %vm354, %v563, %v564
      %v566 = vrot.slane %v341, 7
      %v567 = vrot.slane %v343, 7
      %v568 = vsel %vm354, %v566, %v567
      %v569 = vrot.slane %v200, 7
      %v570 = vsel %vm354, %v561, %v569
      %v571 = vrot.slane %v280, 7
      %v572 = vsel %vm354, %v564, %v571
      %v573 = vrot.slane %v344, 7
      %v574 = vsel %vm354, %v567, %v573
      %v575 = vrot.slane %v201, 7
      %v576 = vsel %vm354, %v355, %v575
      %v577 = vrot.slane %v347, 7
      %v578 = vrot.slane %v349, 7
      %v579 = vsel %vm354, %v577, %v578
      %v580 = vrot.slane %v350, 7
      %v581 = vrot.slane %v352, 7
      %v582 = vsel %vm354, %v580, %v581
      %v583 = vrot.slane %v202, 7
      %v584 = vsel %vm354, %v575, %v583
      %v585 = vrot.slane %v348, 7
      %v586 = vsel %vm354, %v578, %v585
      %v587 = vrot.slane %v353, 7
      %v588 = vsel %vm354, %v581, %v587
      %v690 = vld [vmem:[%s1] sm:$0xff]
      %v691 = vld [vmem:[%s1 + $0x8] sm:$0xff]
      %v692 = vld [vmem:[%s1 + $0x10] sm:$0xff]
      %v693 = vld [vmem:[%s1 + $0x18] sm:$0xff]
      %v694 = vld [vmem:[%s1 + $0x20] sm:$0xff]
      %v695 = vld [vmem:[%s1 + $0x28] sm:$0xff]
      %v696 = vld [vmem:[%s1 + $0x30] sm:$0xff]
      %v697 = vld [vmem:[%s1 + $0x38] sm:$0xff]
      %v698 = vld [vmem:[%s1 + $0x40] sm:$0xff]
      %v699 = vld [vmem:[%s1 + $0x48] sm:$0xff]
      %v700 = vld [vmem:[%s1 + $0x50] sm:$0xff]
      %v701 = vld [vmem:[%s1 + $0x58] sm:$0xff]
      %v702 = vld [vmem:[%s1 + $0x60] sm:$0xff]
      %v703 = vld [vmem:[%s1 + $0x68] sm:$0xff]
      %v704 = vld [vmem:[%s1 + $0x70] sm:$0xff]
      %v705 = vld [vmem:[%s1 + $0x78] sm:$0xff]
      %v706 = vld [vmem:[%s1 + $0x80] sm:$0xff]
      %v707 = vld [vmem:[%s1 + $0x88] sm:$0xff]
      %v708 = vld [vmem:[%s1 + $0x90] sm:$0xff]
      %v709 = vld [vmem:[%s1 + $0x98] sm:$0xff]
      %v710 = vld [vmem:[%s1 + $0xa0] sm:$0xff]
      %v711 = vld [vmem:[%s1 + $0xa8] sm:$0xff]
      %v712 = vld [vmem:[%s1 + $0xb0] sm:$0xff]
      %v713 = vld [vmem:[%s1 + $0xb8] sm:$0xff]
      %v714 = vld [vmem:[%s1 + $0xc0] sm:$0xff]
      %v715 = vld [vmem:[%s1 + $0xc8] sm:$0xff]
      %v716 = vld [vmem:[%s1 + $0xd0] sm:$0xff]
      %v717 = vld [vmem:[%s1 + $0xd8] sm:$0xff]
      %v718 = vld [vmem:[%s1 + $0xe0] sm:$0xff]
      %v719 = vld [vmem:[%s1 + $0xe8] sm:$0xff]
      %v720 = vld [vmem:[%s1 + $0xf0] sm:$0xff]
      %v721 = vld [vmem:[%s1 + $0xf8] sm:$0xff]
      %v722 = vld [vmem:[%s1 + $0x100] sm:$0xff]
      %v723 = vld [vmem:[%s1 + $0x108] sm:$0xff]
      %v724 = vld [vmem:[%s1 + $0x110] sm:$0xff]
      %v725 = vld [vmem:[%s1 + $0x118] sm:$0xff]
      %v726 = vld [vmem:[%s1 + $0x120] sm:$0xff]
      %v727 = vld [vmem:[%s1 + $0x128] sm:$0xff]
      %v728 = vld [vmem:[%s1 + $0x130] sm:$0xff]
      %v729 = vld [vmem:[%s1 + $0x138] sm:$0xff]
      %v730 = vld [vmem:[%s1 + $0x140] sm:$0xff]
      %v731 = vld [vmem:[%s1 + $0x148] sm:$0xff]
      %v732 = vld [vmem:[%s1 + $0x150] sm:$0xff]
      %v733 = vld [vmem:[%s1 + $0x158] sm:$0xff]
      %v734 = vld [vmem:[%s1 + $0x160] sm:$0xff]
      %v735 = vld [vmem:[%s1 + $0x168] sm:$0xff]
      %v736 = vld [vmem:[%s1 + $0x170] sm:$0xff]
      %v737 = vld [vmem:[%s1 + $0x178] sm:$0xff]
      %v738 = vld [vmem:[%s1 + $0x180] sm:$0xff]
      %v739 = vld [vmem:[%s1 + $0x188] sm:$0xff]
      %v740 = vld [vmem:[%s1 + $0x190] sm:$0xff]
      %v741 = vld [vmem:[%s1 + $0x198] sm:$0xff]
      %v742 = vld [vmem:[%s1 + $0x1a0] sm:$0xff]
      %v743 = vld [vmem:[%s1 + $0x1a8] sm:$0xff]
      %v744 = vld [vmem:[%s1 + $0x1b0] sm:$0xff]
      %v745 = vld [vmem:[%s1 + $0x1b8] sm:$0xff]
      %v746 = vld [vmem:[%s1 + $0x1c0] sm:$0xff]
      %v747 = vld [vmem:[%s1 + $0x1c8] sm:$0xff]
      %v748 = vld [vmem:[%s1 + $0x1d0] sm:$0xff]
      %v749 = vld [vmem:[%s1 + $0x1d8] sm:$0xff]
      %v750 = vld [vmem:[%s1 + $0x1e0] sm:$0xff]
      %v751 = vld [vmem:[%s1 + $0x1e8] sm:$0xff]
      %v752 = vld [vmem:[%s1 + $0x1f0] sm:$0xff]
      %v753 = vld [vmem:[%s1 + $0x1f8] sm:$0xff]
      %v754 = vld [vmem:[%s1 + $0x200] sm:$0xff]
      %v755 = vld [vmem:[%s1 + $0x208] sm:$0xff]
      %v756 = vld [vmem:[%s1 + $0x210] sm:$0xff]
      %v757 = vld [vmem:[%s1 + $0x218] sm:$0xff]
      %v758 = vld [vmem:[%s1 + $0x220] sm:$0xff]
      %v759 = vld [vmem:[%s1 + $0x228] sm:$0xff]
      %v760 = vld [vmem:[%s1 + $0x230] sm:$0xff]
      %v761 = vld [vmem:[%s1 + $0x238] sm:$0xff]
      %v762 = vld [vmem:[%s1 + $0x240] sm:$0xff]
      %v763 = vld [vmem:[%s1 + $0x248] sm:$0xff]
      %v764 = vld [vmem:[%s1 + $0x250] sm:$0xff]
      %v765 = vld [vmem:[%s1 + $0x258] sm:$0xff]
      %v766 = vld [vmem:[%s1 + $0x260] sm:$0xff]
      %v767 = vld [vmem:[%s1 + $0x268] sm:$0xff]
      %v768 = vld [vmem:[%s1 + $0x270] sm:$0xff]
      %v769 = vld [vmem:[%s1 + $0x278] sm:$0xff]
      %v770 = vld [vmem:[%s1 + $0x280] sm:$0xff]
      %v771 = vld [vmem:[%s1 + $0x288] sm:$0xff]
      %v772 = vld [vmem:[%s1 + $0x290] sm:$0xff]
      %v773 = vld [vmem:[%s1 + $0x298] sm:$0xff]
      %v774 = vld [vmem:[%s1 + $0x2a0] sm:$0xff]
      %v775 = vld [vmem:[%s1 + $0x2a8] sm:$0xff]
      %v776 = vld [vmem:[%s1 + $0x2b0] sm:$0xff]
      %v777 = vld [vmem:[%s1 + $0x2b8] sm:$0xff]
      %v778 = vld [vmem:[%s1 + $0x2c0] sm:$0xff]
      %v779 = vld [vmem:[%s1 + $0x2c8] sm:$0xff]
      %v780 = vld [vmem:[%s1 + $0x2d0] sm:$0xff]
      %v781 = vld [vmem:[%s1 + $0x2d8] sm:$0xff]
      %v782 = vld [vmem:[%s1 + $0x2e0] sm:$0xff]
      %v783 = vld [vmem:[%s1 + $0x2e8] sm:$0xff]
      %v784 = vld [vmem:[%s1 + $0x2f0] sm:$0xff]
      %v785 = vld [vmem:[%s1 + $0x2f8] sm:$0xff]
      %v786 = vld [vmem:[%s1 + $0x300] sm:$0xff]
      %v787 = vld [vmem:[%s1 + $0x308] sm:$0xff]
      %v788 = vld [vmem:[%s1 + $0x310] sm:$0xff]
      %v789 = vld [vmem:[%s1 + $0x318] sm:$0xff]
      %v790 = vld [vmem:[%s1 + $0x320] sm:$0xff]
      %v791 = vld [vmem:[%s1 + $0x328] sm:$0xff]
      %v792 = vld [vmem:[%s1 + $0x330] sm:$0xff]
      %v793 = vld [vmem:[%s1 + $0x338] sm:$0xff]
      %v794 = vld [vmem:[%s1 + $0x340] sm:$0xff]
      %v795 = vld [vmem:[%s1 + $0x348] sm:$0xff]
      %v796 = vld [vmem:[%s1 + $0x350] sm:$0xff]
      %v797 = vld [vmem:[%s1 + $0x358] sm:$0xff]
      %v798 = vld [vmem:[%s1 + $0x360] sm:$0xff]
      %v799 = vld [vmem:[%s1 + $0x368] sm:$0xff]
      %v800 = vld [vmem:[%s1 + $0x370] sm:$0xff]
      %v801 = vld [vmem:[%s1 + $0x378] sm:$0xff]
      %v802 = vld [vmem:[%s1 + $0x380] sm:$0xff]
      %v803 = vld [vmem:[%s1 + $0x388] sm:$0xff]
      %v804 = vld [vmem:[%s1 + $0x390] sm:$0xff]
      %v805 = vld [vmem:[%s1 + $0x398] sm:$0xff]
      %v806 = vld [vmem:[%s1 + $0x3a0] sm:$0xff]
      %v807 = vld [vmem:[%s1 + $0x3a8] sm:$0xff]
      %v808 = vld [vmem:[%s1 + $0x3b0] sm:$0xff]
      %v809 = vld [vmem:[%s1 + $0x3b8] sm:$0xff]
      %v810 = vld [vmem:[%s1 + $0x3c0] sm:$0xff]
      %v811 = vld [vmem:[%s1 + $0x3c8] sm:$0xff]
      %v812 = vld [vmem:[%s1 + $0x3d0] sm:$0xff]
      %v813 = vld [vmem:[%s1 + $0x3d8] sm:$0xff]
      %v814 = vld [vmem:[%s1 + $0x3e0] sm:$0xff]
      %v815 = vld [vmem:[%s1 + $0x3e8] sm:$0xff]
      %v816 = vld [vmem:[%s1 + $0x3f0] sm:$0xff]
      %v817 = vld [vmem:[%s1 + $0x3f8] sm:$0xff]
      %v818 = vld [vmem:[%s1 + $0x400] sm:$0xff]
      %v819 = vld [vmem:[%s1 + $0x408] sm:$0xff]
      %v820 = vld [vmem:[%s1 + $0x410] sm:$0xff]
      %v821 = vld [vmem:[%s1 + $0x418] sm:$0xff]
      %v822 = vld [vmem:[%s1 + $0x420] sm:$0xff]
      %v823 = vld [vmem:[%s1 + $0x428] sm:$0xff]
      %v824 = vld [vmem:[%s1 + $0x430] sm:$0xff]
      %v825 = vld [vmem:[%s1 + $0x438] sm:$0xff]
      %v826 = vld [vmem:[%s1 + $0x440] sm:$0xff]
      %v827 = vld [vmem:[%s1 + $0x448] sm:$0xff]
      %v828 = vld [vmem:[%s1 + $0x450] sm:$0xff]
      %v829 = vld [vmem:[%s1 + $0x458] sm:$0xff]
      %v830 = vld [vmem:[%s1 + $0x460] sm:$0xff]
      %v831 = vld [vmem:[%s1 + $0x468] sm:$0xff]
      %v832 = vld [vmem:[%s1 + $0x470] sm:$0xff]
      %v833 = vld [vmem:[%s1 + $0x478] sm:$0xff]
      %v834 = vld [vmem:[%s2] sm:$0x1]
      %v836 = vlaneseq
      %v837 = vshrl.u32 %v836, 7
      %v838 = vsub.s32 0, %v837
      %v839 = vrot.slane %v834, %v838
      %841 = vmatprep.subr.mxu0 0.0
      %842 = vmatpush1.msra.mxu0 %v690
      %843 = vmatprep.subr.mxu0 0.0
      %844 = vmatpush1.msra.mxu0 %v691
      %845 = vmatprep.subr.mxu0 0.0
      %846 = vmatpush1.msra.mxu0 %v692
      %847 = vmatprep.subr.mxu0 0.0
      %848 = vmatpush1.msra.mxu0 %v693
      %849 = vmatprep.subr.mxu0 0.0
      %850 = vmatpush1.msra.mxu0 %v694
      %851 = vmatprep.subr.mxu0 0.0
      %852 = vmatpush1.msra.mxu0 %v695
      %853 = vmatprep.subr.mxu0 0.0
      %854 = vmatpush1.msra.mxu0 %v696
      %855 = vmatprep.subr.mxu0 0.0
      %856 = vmatpush1.msra.mxu0 %v697
      %857 = vmatprep.subr.mxu0 0.0
      %858 = vmatpush1.msra.mxu0 %v698
      %859 = vmatprep.subr.mxu0 0.0
      %860 = vmatpush1.msra.mxu0 %v699
      %861 = vmatprep.subr.mxu0 0.0
      %862 = vmatpush1.msra.mxu0 %v700
      %863 = vmatprep.subr.mxu0 0.0
      %864 = vmatpush1.msra.mxu0 %v701
      %865 = vmatprep.subr.mxu0 0.0
      %866 = vmatpush1.msra.mxu0 %v702
      %867 = vmatprep.subr.mxu0 0.0
      %868 = vmatpush1.msra.mxu0 %v703
      %869 = vmatprep.subr.mxu0 0.0
      %870 = vmatpush1.msra.mxu0 %v704
      %871 = vmatprep.subr.mxu0 0.0
      %872 = vmatpush1.msra.mxu0 %v705
      %873 = vmatprep.subr.mxu0 0.0
      %874 = vmatpush1.msra.mxu0 %v706
      %875 = vmatprep.subr.mxu0 0.0
      %876 = vmatpush1.msra.mxu0 %v707
      %877 = vmatprep.subr.mxu0 0.0
      %878 = vmatpush1.msra.mxu0 %v708
      %879 = vmatprep.subr.mxu0 0.0
      %880 = vmatpush1.msra.mxu0 %v709
      %881 = vmatprep.subr.mxu0 0.0
      %882 = vmatpush1.msra.mxu0 %v710
      %883 = vmatprep.subr.mxu0 0.0
      %884 = vmatpush1.msra.mxu0 %v711
      %885 = vmatprep.subr.mxu0 0.0
      %886 = vmatpush1.msra.mxu0 %v712
      %887 = vmatprep.subr.mxu0 0.0
      %888 = vmatpush1.msra.mxu0 %v713
      %889 = vmatprep.subr.mxu0 0.0
      %890 = vmatpush1.msra.mxu0 %v714
      %891 = vmatprep.subr.mxu0 0.0
      %892 = vmatpush1.msra.mxu0 %v715
      %893 = vmatprep.subr.mxu0 0.0
      %894 = vmatpush1.msra.mxu0 %v716
      %895 = vmatprep.subr.mxu0 0.0
      %896 = vmatpush1.msra.mxu0 %v717
      %897 = vmatprep.subr.mxu0 0.0
      %898 = vmatpush1.msra.mxu0 %v718
      %899 = vmatprep.subr.mxu0 0.0
      %900 = vmatpush1.msra.mxu0 %v719
      %901 = vmatprep.subr.mxu0 0.0
      %902 = vmatpush1.msra.mxu0 %v720
      %903 = vmatprep.subr.mxu0 0.0
      %904 = vmatpush1.msra.mxu0 %v721
      %905 = vmatprep.mubr.f32.mxu0 %v359
      %906 = vmatmul.mubr.f32.gmra.mrb[0].mxu0 %v356
      %v907 = vpop.f32.mrb[0].mxu0
      %v908 = vadd.f32 %v839, %v907
      %v909 = vpop.f32.mrb[0].mxu0
      %910 = vmatprep.mubr.f32.mxu0 %v379
      %911 = vmatmul.mubr.f32.gmra.mrb[0].mxu0 %v356
      %v912 = vpop.f32.mrb[0].mxu0
      %v913 = vadd.f32 %v839, %v912
      %v914 = vpop.f32.mrb[0].mxu0
      %915 = vmatprep.mubr.f32.mxu0 %v367
      %916 = vmatmul.mubr.f32.gmra.mrb[0].mxu0 %v364
      %v917 = vpop.f32.mrb[0].mxu0
      %v918 = vadd.f32 %v839, %v917
      %v919 = vpop.f32.mrb[0].mxu0
      %920 = vmatprep.mubr.f32.mxu0 %v384
      %921 = vmatmul.mubr.f32.gmra.mrb[0].mxu0 %v382
      %v922 = vpop.f32.mrb[0].mxu0
      %v923 = vadd.f32 %v839, %v922
      %v924 = vpop.f32.mrb[0].mxu0
      %925 = vmatprep.mubr.f32.mxu0 %v375
      %926 = vmatmul.mubr.f32.gmra.mrb[0].mxu0 %v372
      %v927 = vpop.f32.mrb[0].mxu0
      %v928 = vadd.f32 %v839, %v927
      %v929 = vpop.f32.mrb[0].mxu0
      %930 = vmatprep.mubr.f32.mxu0 %v390
      %931 = vmatmul.mubr.f32.gmra.mrb[0].mxu0 %v388
      %v932 = vpop.f32.mrb[0].mxu0
      %v933 = vadd.f32 %v839, %v932
      %v934 = vpop.f32.mrb[0].mxu0
      %935 = vmatprep.mubr.f32.mxu0 %v397
      %936 = vmatmul.mubr.f32.gmra.mrb[0].mxu0 %v394
      %v937 = vpop.f32.mrb[0].mxu0
      %v938 = vadd.f32 %v839, %v937
      %v939 = vpop.f32.mrb[0].mxu0
      %940 = vmatprep.mubr.f32.mxu0 %v404
      %941 = vmatmul.mubr.f32.gmra.mrb[0].mxu0 %v402
      %v942 = vpop.f32.mrb[0].mxu0
      %v943 = vadd.f32 %v839, %v942
      %v944 = vpop.f32.mrb[0].mxu0
      %945 = vmatprep.mubr.f32.mxu0 %v411
      %946 = vmatmul.mubr.f32.gmra.mrb[0].mxu0 %v408
      %v947 = vpop.f32.mrb[0].mxu0
      %v948 = vadd.f32 %v839, %v947
      %v949 = vpop.f32.mrb[0].mxu0
      %950 = vmatprep.mubr.f32.mxu0 %v418
      %951 = vmatmul.mubr.f32.gmra.mrb[0].mxu0 %v416
      %v952 = vpop.f32.mrb[0].mxu0
      %v953 = vadd.f32 %v839, %v952
      %v954 = vpop.f32.mrb[0].mxu0
      %955 = vmatprep.mubr.f32.mxu0 %v425
      %956 = vmatmul.mubr.f32.gmra.mrb[0].mxu0 %v422
      %v957 = vpop.f32.mrb[0].mxu0
      %v958 = vadd.f32 %v839, %v957
      %v959 = vpop.f32.mrb[0].mxu0
      %960 = vmatprep.mubr.f32.mxu0 %v432
      %961 = vmatmul.mubr.f32.gmra.mrb[0].mxu0 %v430
      %v962 = vpop.f32.mrb[0].mxu0
      %v963 = vadd.f32 %v839, %v962
      %v964 = vpop.f32.mrb[0].mxu0
      %965 = vmatprep.mubr.f32.mxu0 %v439
      %966 = vmatmul.mubr.f32.gmra.mrb[0].mxu0 %v436
      %v967 = vpop.f32.mrb[0].mxu0
      %v968 = vadd.f32 %v839, %v967
      %v969 = vpop.f32.mrb[0].mxu0
      %970 = vmatprep.mubr.f32.mxu0 %v446
      %971 = vmatmul.mubr.f32.gmra.mrb[0].mxu0 %v444
      %v972 = vpop.f32.mrb[0].mxu0
      %v973 = vadd.f32 %v839, %v972
      %v974 = vpop.f32.mrb[0].mxu0
      %975 = vmatprep.mubr.f32.mxu0 %v453
      %976 = vmatmul.mubr.f32.gmra.mrb[0].mxu0 %v450
      %v977 = vpop.f32.mrb[0].mxu0
      %v978 = vadd.f32 %v839, %v977
      %v979 = vpop.f32.mrb[0].mxu0
      %980 = vmatprep.mubr.f32.mxu0 %v460
      %981 = vmatmul.mubr.f32.gmra.mrb[0].mxu0 %v458
      %v982 = vpop.f32.mrb[0].mxu0
      %v983 = vadd.f32 %v839, %v982
      %v984 = vpop.f32.mrb[0].mxu0
      %985 = vmatprep.mubr.f32.mxu0 %v467
      %986 = vmatmul.mubr.f32.gmra.mrb[0].mxu0 %v464
      %v987 = vpop.f32.mrb[0].mxu0
      %v988 = vadd.f32 %v839, %v987
      %v989 = vpop.f32.mrb[0].mxu0
      %990 = vmatprep.mubr.f32.mxu0 %v474
      %991 = vmatmul.mubr.f32.gmra.mrb[0].mxu0 %v472
      %v992 = vpop.f32.mrb[0].mxu0
      %v993 = vadd.f32 %v839, %v992
      %v994 = vpop.f32.mrb[0].mxu0
      %995 = vmatprep.mubr.f32.mxu0 %v481
      %996 = vmatmul.mubr.f32.gmra.mrb[0].mxu0 %v478
      %v997 = vpop.f32.mrb[0].mxu0
      %v998 = vadd.f32 %v839, %v997
      %v999 = vpop.f32.mrb[0].mxu0
      %1000 = vmatprep.mubr.f32.mxu0 %v488
      %1001 = vmatmul.mubr.f32.gmra.mrb[0].mxu0 %v486
      %v1002 = vpop.f32.mrb[0].mxu0
      %v1003 = vadd.f32 %v839, %v1002
      %v1004 = vpop.f32.mrb[0].mxu0
      %1005 = vmatprep.mubr.f32.mxu0 %v495
      %1006 = vmatmul.mubr.f32.gmra.mrb[0].mxu0 %v492
      %v1007 = vpop.f32.mrb[0].mxu0
      %v1008 = vadd.f32 %v839, %v1007
      %v1009 = vpop.f32.mrb[0].mxu0
      %1010 = vmatprep.mubr.f32.mxu0 %v502
      %1011 = vmatmul.mubr.f32.gmra.mrb[0].mxu0 %v500
      %v1012 = vpop.f32.mrb[0].mxu0
      %v1013 = vadd.f32 %v839, %v1012
      %v1014 = vpop.f32.mrb[0].mxu0
      %1015 = vmatprep.mubr.f32.mxu0 %v509
      %1016 = vmatmul.mubr.f32.gmra.mrb[0].mxu0 %v506
      %v1017 = vpop.f32.mrb[0].mxu0
      %v1018 = vadd.f32 %v839, %v1017
      %v1019 = vpop.f32.mrb[0].mxu0
      %1020 = vmatprep.mubr.f32.mxu0 %v516
      %1021 = vmatmul.mubr.f32.gmra.mrb[0].mxu0 %v514
      %v1022 = vpop.f32.mrb[0].mxu0
      %v1023 = vadd.f32 %v839, %v1022
      %v1024 = vpop.f32.mrb[0].mxu0
      %1025 = vmatprep.mubr.f32.mxu0 %v523
      %1026 = vmatmul.mubr.f32.gmra.mrb[0].mxu0 %v520
      %v1027 = vpop.f32.mrb[0].mxu0
      %v1028 = vadd.f32 %v839, %v1027
      %v1029 = vpop.f32.mrb[0].mxu0
      %1030 = vmatprep.mubr.f32.mxu0 %v530
      %1031 = vmatmul.mubr.f32.gmra.mrb[0].mxu0 %v528
      %v1032 = vpop.f32.mrb[0].mxu0
      %v1033 = vadd.f32 %v839, %v1032
      %v1034 = vpop.f32.mrb[0].mxu0
      %1035 = vmatprep.mubr.f32.mxu0 %v537
      %1036 = vmatmul.mubr.f32.gmra.mrb[0].mxu0 %v534
      %v1037 = vpop.f32.mrb[0].mxu0
      %v1038 = vadd.f32 %v839, %v1037
      %v1039 = vpop.f32.mrb[0].mxu0
      %1040 = vmatprep.mubr.f32.mxu0 %v544
      %1041 = vmatmul.mubr.f32.gmra.mrb[0].mxu0 %v542
      %v1042 = vpop.f32.mrb[0].mxu0
      %v1043 = vadd.f32 %v839, %v1042
      %v1044 = vpop.f32.mrb[0].mxu0
      %1045 = vmatprep.mubr.f32.mxu0 %v551
      %1046 = vmatmul.mubr.f32.gmra.mrb[0].mxu0 %v548
      %v1047 = vpop.f32.mrb[0].mxu0
      %v1048 = vadd.f32 %v839, %v1047
      %v1049 = vpop.f32.mrb[0].mxu0
      %1050 = vmatprep.mubr.f32.mxu0 %v558
      %1051 = vmatmul.mubr.f32.gmra.mrb[0].mxu0 %v556
      %v1052 = vpop.f32.mrb[0].mxu0
      %v1053 = vadd.f32 %v839, %v1052
      %v1054 = vpop.f32.mrb[0].mxu0
      %1055 = vmatprep.mubr.f32.mxu0 %v565
      %1056 = vmatmul.mubr.f32.gmra.mrb[0].mxu0 %v562
      %v1057 = vpop.f32.mrb[0].mxu0
      %v1058 = vadd.f32 %v839, %v1057
      %v1059 = vpop.f32.mrb[0].mxu0
      %1060 = vmatprep.mubr.f32.mxu0 %v572
      %1061 = vmatmul.mubr.f32.gmra.mrb[0].mxu0 %v570
      %v1062 = vpop.f32.mrb[0].mxu0
      %v1063 = vadd.f32 %v839, %v1062
      %v1064 = vpop.f32.mrb[0].mxu0
      %1065 = vdwg.mxu0
      %1066 = vmatprep.subr.mxu0 0.0
      %1067 = vmatpush1.msra.mxu0 %v722
      %1068 = vmatprep.subr.mxu0 0.0
      %1069 = vmatpush1.msra.mxu0 %v723
      %1070 = vmatprep.subr.mxu0 0.0
      %1071 = vmatpush1.msra.mxu0 %v724
      %1072 = vmatprep.subr.mxu0 0.0
      %1073 = vmatpush1.msra.mxu0 %v725
      %1074 = vmatprep.subr.mxu0 0.0
      %1075 = vmatpush1.msra.mxu0 %v726
      %1076 = vmatprep.subr.mxu0 0.0
      %1077 = vmatpush1.msra.mxu0 %v727
      %1078 = vmatprep.subr.mxu0 0.0
      %1079 = vmatpush1.msra.mxu0 %v728
      %1080 = vmatprep.subr.mxu0 0.0
      %1081 = vmatpush1.msra.mxu0 %v729
      %1082 = vmatprep.subr.mxu0 0.0
      %1083 = vmatpush1.msra.mxu0 %v730
      %1084 = vmatprep.subr.mxu0 0.0
      %1085 = vmatpush1.msra.mxu0 %v731
      %1086 = vmatprep.subr.mxu0 0.0
      %1087 = vmatpush1.msra.mxu0 %v732
      %1088 = vmatprep.subr.mxu0 0.0
      %1089 = vmatpush1.msra.mxu0 %v733
      %1090 = vmatprep.subr.mxu0 0.0
      %1091 = vmatpush1.msra.mxu0 %v734
      %1092 = vmatprep.subr.mxu0 0.0
      %1093 = vmatpush1.msra.mxu0 %v735
      %1094 = vmatprep.subr.mxu0 0.0
      %1095 = vmatpush1.msra.mxu0 %v736
      %1096 = vmatprep.subr.mxu0 0.0
      %1097 = vmatpush1.msra.mxu0 %v737
      %1098 = vmatprep.subr.mxu0 0.0
      %1099 = vmatpush1.msra.mxu0 %v738
      %1100 = vmatprep.subr.mxu0 0.0
      %1101 = vmatpush1.msra.mxu0 %v739
      %1102 = vmatprep.subr.mxu0 0.0
      %1103 = vmatpush1.msra.mxu0 %v740
      %1104 = vmatprep.subr.mxu0 0.0
      %1105 = vmatpush1.msra.mxu0 %v741
      %1106 = vmatprep.subr.mxu0 0.0
      %1107 = vmatpush1.msra.mxu0 %v742
      %1108 = vmatprep.subr.mxu0 0.0
      %1109 = vmatpush1.msra.mxu0 %v743
      %1110 = vmatprep.subr.mxu0 0.0
      %1111 = vmatpush1.msra.mxu0 %v744
      %1112 = vmatprep.subr.mxu0 0.0
      %1113 = vmatpush1.msra.mxu0 %v745
      %1114 = vmatprep.subr.mxu0 0.0
      %1115 = vmatpush1.msra.mxu0 %v746
      %1116 = vmatprep.subr.mxu0 0.0
      %1117 = vmatpush1.msra.mxu0 %v747
      %1118 = vmatprep.subr.mxu0 0.0
      %1119 = vmatpush1.msra.mxu0 %v748
      %1120 = vmatprep.subr.mxu0 0.0
      %1121 = vmatpush1.msra.mxu0 %v749
      %1122 = vmatprep.subr.mxu0 0.0
      %1123 = vmatpush1.msra.mxu0 %v750
      %1124 = vmatprep.subr.mxu0 0.0
      %1125 = vmatpush1.msra.mxu0 %v751
      %1126 = vmatprep.subr.mxu0 0.0
      %1127 = vmatpush1.msra.mxu0 %v752
      %1128 = vmatprep.subr.mxu0 0.0
      %1129 = vmatpush1.msra.mxu0 %v753
      %1130 = vmatprep.mubr.f32.mxu0 %v364
      %1131 = vmatmul.mubr.f32.gmra.mrb[0].mxu0 %v362
      %v1132 = vpop.f32.mrb[0].mxu0
      %v1133 = vadd.f32 %v908, %v1132
      %v1134 = vpop.f32.mrb[0].mxu0
      %1135 = vmatprep.mubr.f32.mxu0 %v382
      %1136 = vmatmul.mubr.f32.gmra.mrb[0].mxu0 %v380
      %v1137 = vpop.f32.mrb[0].mxu0
      %v1138 = vadd.f32 %v913, %v1137
      %v1139 = vpop.f32.mrb[0].mxu0
      %1140 = vmatprep.mubr.f32.mxu0 %v372
      %1141 = vmatmul.mubr.f32.gmra.mrb[0].mxu0 %v370
      %v1142 = vpop.f32.mrb[0].mxu0
      %v1143 = vadd.f32 %v918, %v1142
      %v1144 = vpop.f32.mrb[0].mxu0
      %1145 = vmatprep.mubr.f32.mxu0 %v388
      %1146 = vmatmul.mubr.f32.gmra.mrb[0].mxu0 %v386
      %v1147 = vpop.f32.mrb[0].mxu0
      %v1148 = vadd.f32 %v923, %v1147
      %v1149 = vpop.f32.mrb[0].mxu0
      %1150 = vmatprep.mubr.f32.mxu0 %v394
      %1151 = vmatmul.mubr.f32.gmra.mrb[0].mxu0 %v378
      %v1152 = vpop.f32.mrb[0].mxu0
      %v1153 = vadd.f32 %v928, %v1152
      %v1154 = vpop.f32.mrb[0].mxu0
      %1155 = vmatprep.mubr.f32.mxu0 %v402
      %1156 = vmatmul.mubr.f32.gmra.mrb[0].mxu0 %v392
      %v1157 = vpop.f32.mrb[0].mxu0
      %v1158 = vadd.f32 %v933, %v1157
      %v1159 = vpop.f32.mrb[0].mxu0
      %1160 = vmatprep.mubr.f32.mxu0 %v408
      %1161 = vmatmul.mubr.f32.gmra.mrb[0].mxu0 %v400
      %v1162 = vpop.f32.mrb[0].mxu0
      %v1163 = vadd.f32 %v938, %v1162
      %v1164 = vpop.f32.mrb[0].mxu0
      %1165 = vmatprep.mubr.f32.mxu0 %v416
      %1166 = vmatmul.mubr.f32.gmra.mrb[0].mxu0 %v406
      %v1167 = vpop.f32.mrb[0].mxu0
      %v1168 = vadd.f32 %v943, %v1167
      %v1169 = vpop.f32.mrb[0].mxu0
      %1170 = vmatprep.mubr.f32.mxu0 %v422
      %1171 = vmatmul.mubr.f32.gmra.mrb[0].mxu0 %v414
      %v1172 = vpop.f32.mrb[0].mxu0
      %v1173 = vadd.f32 %v948, %v1172
      %v1174 = vpop.f32.mrb[0].mxu0
      %1175 = vmatprep.mubr.f32.mxu0 %v430
      %1176 = vmatmul.mubr.f32.gmra.mrb[0].mxu0 %v420
      %v1177 = vpop.f32.mrb[0].mxu0
      %v1178 = vadd.f32 %v953, %v1177
      %v1179 = vpop.f32.mrb[0].mxu0
      %1180 = vmatprep.mubr.f32.mxu0 %v436
      %1181 = vmatmul.mubr.f32.gmra.mrb[0].mxu0 %v428
      %v1182 = vpop.f32.mrb[0].mxu0
      %v1183 = vadd.f32 %v958, %v1182
      %v1184 = vpop.f32.mrb[0].mxu0
      %1185 = vmatprep.mubr.f32.mxu0 %v444
      %1186 = vmatmul.mubr.f32.gmra.mrb[0].mxu0 %v434
      %v1187 = vpop.f32.mrb[0].mxu0
      %v1188 = vadd.f32 %v963, %v1187
      %v1189 = vpop.f32.mrb[0].mxu0
      %1190 = vmatprep.mubr.f32.mxu0 %v450
      %1191 = vmatmul.mubr.f32.gmra.mrb[0].mxu0 %v442
      %v1192 = vpop.f32.mrb[0].mxu0
      %v1193 = vadd.f32 %v968, %v1192
      %v1194 = vpop.f32.mrb[0].mxu0
      %1195 = vmatprep.mubr.f32.mxu0 %v458
      %1196 = vmatmul.mubr.f32.gmra.mrb[0].mxu0 %v448
      %v1197 = vpop.f32.mrb[0].mxu0
      %v1198 = vadd.f32 %v973, %v1197
      %v1199 = vpop.f32.mrb[0].mxu0
      %1200 = vmatprep.mubr.f32.mxu0 %v464
      %1201 = vmatmul.mubr.f32.gmra.mrb[0].mxu0 %v456
      %v1202 = vpop.f32.mrb[0].mxu0
      %v1203 = vadd.f32 %v978, %v1202
      %v1204 = vpop.f32.mrb[0].mxu0
      %1205 = vmatprep.mubr.f32.mxu0 %v472
      %1206 = vmatmul.mubr.f32.gmra.mrb[0].mxu0 %v462
      %v1207 = vpop.f32.mrb[0].mxu0
      %v1208 = vadd.f32 %v983, %v1207
      %v1209 = vpop.f32.mrb[0].mxu0
      %1210 = vmatprep.mubr.f32.mxu0 %v478
      %1211 = vmatmul.mubr.f32.gmra.mrb[0].mxu0 %v470
      %v1212 = vpop.f32.mrb[0].mxu0
      %v1213 = vadd.f32 %v988, %v1212
      %v1214 = vpop.f32.mrb[0].mxu0
      %1215 = vmatprep.mubr.f32.mxu0 %v486
      %1216 = vmatmul.mubr.f32.gmra.mrb[0].mxu0 %v476
      %v1217 = vpop.f32.mrb[0].mxu0
      %v1218 = vadd.f32 %v993, %v1217
      %v1219 = vpop.f32.mrb[0].mxu0
      %1220 = vmatprep.mubr.f32.mxu0 %v492
      %1221 = vmatmul.mubr.f32.gmra.mrb[0].mxu0 %v484
      %v1222 = vpop.f32.mrb[0].mxu0
      %v1223 = vadd.f32 %v998, %v1222
      %v1224 = vpop.f32.mrb[0].mxu0
      %1225 = vmatprep.mubr.f32.mxu0 %v500
      %1226 = vmatmul.mubr.f32.gmra.mrb[0].mxu0 %v490
      %v1227 = vpop.f32.mrb[0].mxu0
      %v1228 = vadd.f32 %v1003, %v1227
      %v1229 = vpop.f32.mrb[0].mxu0
      %1230 = vmatprep.mubr.f32.mxu0 %v506
      %1231 = vmatmul.mubr.f32.gmra.mrb[0].mxu0 %v498
      %v1232 = vpop.f32.mrb[0].mxu0
      %v1233 = vadd.f32 %v1008, %v1232
      %v1234 = vpop.f32.mrb[0].mxu0
      %1235 = vmatprep.mubr.f32.mxu0 %v514
      %1236 = vmatmul.mubr.f32.gmra.mrb[0].mxu0 %v504
      %v1237 = vpop.f32.mrb[0].mxu0
      %v1238 = vadd.f32 %v1013, %v1237
      %v1239 = vpop.f32.mrb[0].mxu0
      %1240 = vmatprep.mubr.f32.mxu0 %v520
      %1241 = vmatmul.mubr.f32.gmra.mrb[0].mxu0 %v512
      %v1242 = vpop.f32.mrb[0].mxu0
      %v1243 = vadd.f32 %v1018, %v1242
      %v1244 = vpop.f32.mrb[0].mxu0
      %1245 = vmatprep.mubr.f32.mxu0 %v528
      %1246 = vmatmul.mubr.f32.gmra.mrb[0].mxu0 %v518
      %v1247 = vpop.f32.mrb[0].mxu0
      %v1248 = vadd.f32 %v1023, %v1247
      %v1249 = vpop.f32.mrb[0].mxu0
      %1250 = vmatprep.mubr.f32.mxu0 %v534
      %1251 = vmatmul.mubr.f32.gmra.mrb[0].mxu0 %v526
      %v1252 = vpop.f32.mrb[0].mxu0
      %v1253 = vadd.f32 %v1028, %v1252
      %v1254 = vpop.f32.mrb[0].mxu0
      %1255 = vmatprep.mubr.f32.mxu0 %v542
      %1256 = vmatmul.mubr.f32.gmra.mrb[0].mxu0 %v532
      %v1257 = vpop.f32.mrb[0].mxu0
      %v1258 = vadd.f32 %v1033, %v1257
      %v1259 = vpop.f32.mrb[0].mxu0
      %1260 = vmatprep.mubr.f32.mxu0 %v548
      %1261 = vmatmul.mubr.f32.gmra.mrb[0].mxu0 %v540
      %v1262 = vpop.f32.mrb[0].mxu0
      %v1263 = vadd.f32 %v1038, %v1262
      %v1264 = vpop.f32.mrb[0].mxu0
      %1265 = vmatprep.mubr.f32.mxu0 %v556
      %1266 = vmatmul.mubr.f32.gmra.mrb[0].mxu0 %v546
      %v1267 = vpop.f32.mrb[0].mxu0
      %v1268 = vadd.f32 %v1043, %v1267
      %v1269 = vpop.f32.mrb[0].mxu0
      %1270 = vmatprep.mubr.f32.mxu0 %v562
      %1271 = vmatmul.mubr.f32.gmra.mrb[0].mxu0 %v554
      %v1272 = vpop.f32.mrb[0].mxu0
      %v1273 = vadd.f32 %v1048, %v1272
      %v1274 = vpop.f32.mrb[0].mxu0
      %1275 = vmatprep.mubr.f32.mxu0 %v570
      %1276 = vmatmul.mubr.f32.gmra.mrb[0].mxu0 %v560
      %v1277 = vpop.f32.mrb[0].mxu0
      %v1278 = vadd.f32 %v1053, %v1277
      %v1279 = vpop.f32.mrb[0].mxu0
      %1280 = vmatprep.mubr.f32.mxu0 %v576
      %1281 = vmatmul.mubr.f32.gmra.mrb[0].mxu0 %v568
      %v1282 = vpop.f32.mrb[0].mxu0
      %v1283 = vadd.f32 %v1058, %v1282
      %v1284 = vpop.f32.mrb[0].mxu0
      %1285 = vmatprep.mubr.f32.mxu0 %v584
      %1286 = vmatmul.mubr.f32.gmra.mrb[0].mxu0 %v574
      %v1287 = vpop.f32.mrb[0].mxu0
      %v1288 = vadd.f32 %v1063, %v1287
      %v1289 = vpop.f32.mrb[0].mxu0
      %1290 = vdwg.mxu0
      %1291 = vmatprep.subr.mxu0 0.0
      %1292 = vmatpush1.msra.mxu0 %v754
      %1293 = vmatprep.subr.mxu0 0.0
      %1294 = vmatpush1.msra.mxu0 %v755
      %1295 = vmatprep.subr.mxu0 0.0
      %1296 = vmatpush1.msra.mxu0 %v756
      %1297 = vmatprep.subr.mxu0 0.0
      %1298 = vmatpush1.msra.mxu0 %v757
      %1299 = vmatprep.subr.mxu0 0.0
      %1300 = vmatpush1.msra.mxu0 %v758
      %1301 = vmatprep.subr.mxu0 0.0
      %1302 = vmatpush1.msra.mxu0 %v759
      %1303 = vmatprep.subr.mxu0 0.0
      %1304 = vmatpush1.msra.mxu0 %v760
      %1305 = vmatprep.subr.mxu0 0.0
      %1306 = vmatpush1.msra.mxu0 %v761
      %1307 = vmatprep.subr.mxu0 0.0
      %1308 = vmatpush1.msra.mxu0 %v762
      %1309 = vmatprep.subr.mxu0 0.0
      %1310 = vmatpush1.msra.mxu0 %v763
      %1311 = vmatprep.subr.mxu0 0.0
      %1312 = vmatpush1.msra.mxu0 %v764
      %1313 = vmatprep.subr.mxu0 0.0
      %1314 = vmatpush1.msra.mxu0 %v765
      %1315 = vmatprep.subr.mxu0 0.0
      %1316 = vmatpush1.msra.mxu0 %v766
      %1317 = vmatprep.subr.mxu0 0.0
      %1318 = vmatpush1.msra.mxu0 %v767
      %1319 = vmatprep.subr.mxu0 0.0
      %1320 = vmatpush1.msra.mxu0 %v768
      %1321 = vmatprep.subr.mxu0 0.0
      %1322 = vmatpush1.msra.mxu0 %v769
      %1323 = vmatprep.subr.mxu0 0.0
      %1324 = vmatpush1.msra.mxu0 %v770
      %1325 = vmatprep.subr.mxu0 0.0
      %1326 = vmatpush1.msra.mxu0 %v771
      %1327 = vmatprep.subr.mxu0 0.0
      %1328 = vmatpush1.msra.mxu0 %v772
      %1329 = vmatprep.subr.mxu0 0.0
      %1330 = vmatpush1.msra.mxu0 %v773
      %1331 = vmatprep.subr.mxu0 0.0
      %1332 = vmatpush1.msra.mxu0 %v774
      %1333 = vmatprep.subr.mxu0 0.0
      %1334 = vmatpush1.msra.mxu0 %v775
      %1335 = vmatprep.subr.mxu0 0.0
      %1336 = vmatpush1.msra.mxu0 %v776
      %1337 = vmatprep.subr.mxu0 0.0
      %1338 = vmatpush1.msra.mxu0 %v777
      %1339 = vmatprep.subr.mxu0 0.0
      %1340 = vmatpush1.msra.mxu0 %v778
      %1341 = vmatprep.subr.mxu0 0.0
      %1342 = vmatpush1.msra.mxu0 %v779
      %1343 = vmatprep.subr.mxu0 0.0
      %1344 = vmatpush1.msra.mxu0 %v780
      %1345 = vmatprep.subr.mxu0 0.0
      %1346 = vmatpush1.msra.mxu0 %v781
      %1347 = vmatprep.subr.mxu0 0.0
      %1348 = vmatpush1.msra.mxu0 %v782
      %1349 = vmatprep.subr.mxu0 0.0
      %1350 = vmatpush1.msra.mxu0 %v783
      %1351 = vmatprep.subr.mxu0 0.0
      %1352 = vmatpush1.msra.mxu0 %v784
      %1353 = vmatprep.subr.mxu0 0.0
      %1354 = vmatpush1.msra.mxu0 %v785
      %1355 = vmatprep.mubr.f32.mxu0 %v370
      %1356 = vmatmul.mubr.f32.gmra.mrb[0].mxu0 %v367
      %v1357 = vpop.f32.mrb[0].mxu0
      %v1358 = vadd.f32 %v1133, %v1357
      %v1359 = vpop.f32.mrb[0].mxu0
      %1360 = vmatprep.mubr.f32.mxu0 %v386
      %1361 = vmatmul.mubr.f32.gmra.mrb[0].mxu0 %v384
      %v1362 = vpop.f32.mrb[0].mxu0
      %v1363 = vadd.f32 %v1138, %v1362
      %v1364 = vpop.f32.mrb[0].mxu0
      %1365 = vmatprep.mubr.f32.mxu0 %v378
      %1366 = vmatmul.mubr.f32.gmra.mrb[0].mxu0 %v375
      %v1367 = vpop.f32.mrb[0].mxu0
      %v1368 = vadd.f32 %v1143, %v1367
      %v1369 = vpop.f32.mrb[0].mxu0
      %1370 = vmatprep.mubr.f32.mxu0 %v392
      %1371 = vmatmul.mubr.f32.gmra.mrb[0].mxu0 %v390
      %v1372 = vpop.f32.mrb[0].mxu0
      %v1373 = vadd.f32 %v1148, %v1372
      %v1374 = vpop.f32.mrb[0].mxu0
      %1375 = vmatprep.mubr.f32.mxu0 %v400
      %1376 = vmatmul.mubr.f32.gmra.mrb[0].mxu0 %v397
      %v1377 = vpop.f32.mrb[0].mxu0
      %v1378 = vadd.f32 %v1153, %v1377
      %v1379 = vpop.f32.mrb[0].mxu0
      %1380 = vmatprep.mubr.f32.mxu0 %v406
      %1381 = vmatmul.mubr.f32.gmra.mrb[0].mxu0 %v404
      %v1382 = vpop.f32.mrb[0].mxu0
      %v1383 = vadd.f32 %v1158, %v1382
      %v1384 = vpop.f32.mrb[0].mxu0
      %1385 = vmatprep.mubr.f32.mxu0 %v414
      %1386 = vmatmul.mubr.f32.gmra.mrb[0].mxu0 %v411
      %v1387 = vpop.f32.mrb[0].mxu0
      %v1388 = vadd.f32 %v1163, %v1387
      %v1389 = vpop.f32.mrb[0].mxu0
      %1390 = vmatprep.mubr.f32.mxu0 %v420
      %1391 = vmatmul.mubr.f32.gmra.mrb[0].mxu0 %v418
      %v1392 = vpop.f32.mrb[0].mxu0
      %v1393 = vadd.f32 %v1168, %v1392
      %v1394 = vpop.f32.mrb[0].mxu0
      %1395 = vmatprep.mubr.f32.mxu0 %v428
      %1396 = vmatmul.mubr.f32.gmra.mrb[0].mxu0 %v425
      %v1397 = vpop.f32.mrb[0].mxu0
      %v1398 = vadd.f32 %v1173, %v1397
      %v1399 = vpop.f32.mrb[0].mxu0
      %1400 = vmatprep.mubr.f32.mxu0 %v434
      %1401 = vmatmul.mubr.f32.gmra.mrb[0].mxu0 %v432
      %v1402 = vpop.f32.mrb[0].mxu0
      %v1403 = vadd.f32 %v1178, %v1402
      %v1404 = vpop.f32.mrb[0].mxu0
      %1405 = vmatprep.mubr.f32.mxu0 %v442
      %1406 = vmatmul.mubr.f32.gmra.mrb[0].mxu0 %v439
      %v1407 = vpop.f32.mrb[0].mxu0
      %v1408 = vadd.f32 %v1183, %v1407
      %v1409 = vpop.f32.mrb[0].mxu0
      %1410 = vmatprep.mubr.f32.mxu0 %v448
      %1411 = vmatmul.mubr.f32.gmra.mrb[0].mxu0 %v446
      %v1412 = vpop.f32.mrb[0].mxu0
      %v1413 = vadd.f32 %v1188, %v1412
      %v1414 = vpop.f32.mrb[0].mxu0
      %1415 = vmatprep.mubr.f32.mxu0 %v456
      %1416 = vmatmul.mubr.f32.gmra.mrb[0].mxu0 %v453
      %v1417 = vpop.f32.mrb[0].mxu0
      %v1418 = vadd.f32 %v1193, %v1417
      %v1419 = vpop.f32.mrb[0].mxu0
      %1420 = vmatprep.mubr.f32.mxu0 %v462
      %1421 = vmatmul.mubr.f32.gmra.mrb[0].mxu0 %v460
      %v1422 = vpop.f32.mrb[0].mxu0
      %v1423 = vadd.f32 %v1198, %v1422
      %v1424 = vpop.f32.mrb[0].mxu0
      %1425 = vmatprep.mubr.f32.mxu0 %v470
      %1426 = vmatmul.mubr.f32.gmra.mrb[0].mxu0 %v467
      %v1427 = vpop.f32.mrb[0].mxu0
      %v1428 = vadd.f32 %v1203, %v1427
      %v1429 = vpop.f32.mrb[0].mxu0
      %1430 = vmatprep.mubr.f32.mxu0 %v476
      %1431 = vmatmul.mubr.f32.gmra.mrb[0].mxu0 %v474
      %v1432 = vpop.f32.mrb[0].mxu0
      %v1433 = vadd.f32 %v1208, %v1432
      %v1434 = vpop.f32.mrb[0].mxu0
      %1435 = vmatprep.mubr.f32.mxu0 %v484
      %1436 = vmatmul.mubr.f32.gmra.mrb[0].mxu0 %v481
      %v1437 = vpop.f32.mrb[0].mxu0
      %v1438 = vadd.f32 %v1213, %v1437
      %v1439 = vpop.f32.mrb[0].mxu0
      %1440 = vmatprep.mubr.f32.mxu0 %v490
      %1441 = vmatmul.mubr.f32.gmra.mrb[0].mxu0 %v488
      %v1442 = vpop.f32.mrb[0].mxu0
      %v1443 = vadd.f32 %v1218, %v1442
      %v1444 = vpop.f32.mrb[0].mxu0
      %1445 = vmatprep.mubr.f32.mxu0 %v498
      %1446 = vmatmul.mubr.f32.gmra.mrb[0].mxu0 %v495
      %v1447 = vpop.f32.mrb[0].mxu0
      %v1448 = vadd.f32 %v1223, %v1447
      %v1449 = vpop.f32.mrb[0].mxu0
      %1450 = vmatprep.mubr.f32.mxu0 %v504
      %1451 = vmatmul.mubr.f32.gmra.mrb[0].mxu0 %v502
      %v1452 = vpop.f32.mrb[0].mxu0
      %v1453 = vadd.f32 %v1228, %v1452
      %v1454 = vpop.f32.mrb[0].mxu0
      %1455 = vmatprep.mubr.f32.mxu0 %v512
      %1456 = vmatmul.mubr.f32.gmra.mrb[0].mxu0 %v509
      %v1457 = vpop.f32.mrb[0].mxu0
      %v1458 = vadd.f32 %v1233, %v1457
      %v1459 = vpop.f32.mrb[0].mxu0
      %1460 = vmatprep.mubr.f32.mxu0 %v518
      %1461 = vmatmul.mubr.f32.gmra.mrb[0].mxu0 %v516
      %v1462 = vpop.f32.mrb[0].mxu0
      %v1463 = vadd.f32 %v1238, %v1462
      %v1464 = vpop.f32.mrb[0].mxu0
      %1465 = vmatprep.mubr.f32.mxu0 %v526
      %1466 = vmatmul.mubr.f32.gmra.mrb[0].mxu0 %v523
      %v1467 = vpop.f32.mrb[0].mxu0
      %v1468 = vadd.f32 %v1243, %v1467
      %v1469 = vpop.f32.mrb[0].mxu0
      %1470 = vmatprep.mubr.f32.mxu0 %v532
      %1471 = vmatmul.mubr.f32.gmra.mrb[0].mxu0 %v530
      %v1472 = vpop.f32.mrb[0].mxu0
      %v1473 = vadd.f32 %v1248, %v1472
      %v1474 = vpop.f32.mrb[0].mxu0
      %1475 = vmatprep.mubr.f32.mxu0 %v540
      %1476 = vmatmul.mubr.f32.gmra.mrb[0].mxu0 %v537
      %v1477 = vpop.f32.mrb[0].mxu0
      %v1478 = vadd.f32 %v1253, %v1477
      %v1479 = vpop.f32.mrb[0].mxu0
      %1480 = vmatprep.mubr.f32.mxu0 %v546
      %1481 = vmatmul.mubr.f32.gmra.mrb[0].mxu0 %v544
      %v1482 = vpop.f32.mrb[0].mxu0
      %v1483 = vadd.f32 %v1258, %v1482
      %v1484 = vpop.f32.mrb[0].mxu0
      %1485 = vmatprep.mubr.f32.mxu0 %v554
      %1486 = vmatmul.mubr.f32.gmra.mrb[0].mxu0 %v551
      %v1487 = vpop.f32.mrb[0].mxu0
      %v1488 = vadd.f32 %v1263, %v1487
      %v1489 = vpop.f32.mrb[0].mxu0
      %1490 = vmatprep.mubr.f32.mxu0 %v560
      %1491 = vmatmul.mubr.f32.gmra.mrb[0].mxu0 %v558
      %v1492 = vpop.f32.mrb[0].mxu0
      %v1493 = vadd.f32 %v1268, %v1492
      %v1494 = vpop.f32.mrb[0].mxu0
      %1495 = vmatprep.mubr.f32.mxu0 %v568
      %1496 = vmatmul.mubr.f32.gmra.mrb[0].mxu0 %v565
      %v1497 = vpop.f32.mrb[0].mxu0
      %v1498 = vadd.f32 %v1273, %v1497
      %v1499 = vpop.f32.mrb[0].mxu0
      %1500 = vmatprep.mubr.f32.mxu0 %v574
      %1501 = vmatmul.mubr.f32.gmra.mrb[0].mxu0 %v572
      %v1502 = vpop.f32.mrb[0].mxu0
      %v1503 = vadd.f32 %v1278, %v1502
      %v1504 = vpop.f32.mrb[0].mxu0
      %1505 = vmatprep.mubr.f32.mxu0 %v582
      %1506 = vmatmul.mubr.f32.gmra.mrb[0].mxu0 %v579
      %v1507 = vpop.f32.mrb[0].mxu0
      %v1508 = vadd.f32 %v1283, %v1507
      %v1509 = vpop.f32.mrb[0].mxu0
      %1510 = vmatprep.mubr.f32.mxu0 %v588
      %1511 = vmatmul.mubr.f32.gmra.mrb[0].mxu0 %v586
      %v1512 = vpop.f32.mrb[0].mxu0
      %v1513 = vadd.f32 %v1288, %v1512
      %v1514 = vpop.f32.mrb[0].mxu0
      %1515 = vdwg.mxu0
      %1516 = vmatprep.subr.mxu0 0.0
      %1517 = vmatpush1.msra.mxu0 %v786
      %1518 = vmatprep.subr.mxu0 0.0
      %1519 = vmatpush1.msra.mxu0 %v787
      %1520 = vmatprep.subr.mxu0 0.0
      %1521 = vmatpush1.msra.mxu0 %v788
      %1522 = vmatprep.subr.mxu0 0.0
      %1523 = vmatpush1.msra.mxu0 %v789
      %1524 = vmatprep.subr.mxu0 0.0
      %1525 = vmatpush1.msra.mxu0 %v790
      %1526 = vmatprep.subr.mxu0 0.0
      %1527 = vmatpush1.msra.mxu0 %v791
      %1528 = vmatprep.subr.mxu0 0.0
      %1529 = vmatpush1.msra.mxu0 %v792
      %1530 = vmatprep.subr.mxu0 0.0
      %1531 = vmatpush1.msra.mxu0 %v793
      %1532 = vmatprep.subr.mxu0 0.0
      %1533 = vmatpush1.msra.mxu0 %v794
      %1534 = vmatprep.subr.mxu0 0.0
      %1535 = vmatpush1.msra.mxu0 %v795
      %1536 = vmatprep.subr.mxu0 0.0
      %1537 = vmatpush1.msra.mxu0 %v796
      %1538 = vmatprep.subr.mxu0 0.0
      %1539 = vmatpush1.msra.mxu0 %v797
      %1540 = vmatprep.subr.mxu0 0.0
      %1541 = vmatpush1.msra.mxu0 %v798
      %1542 = vmatprep.subr.mxu0 0.0
      %1543 = vmatpush1.msra.mxu0 %v799
      %1544 = vmatprep.subr.mxu0 0.0
      %1545 = vmatpush1.msra.mxu0 %v800
      %1546 = vmatprep.subr.mxu0 0.0
      %1547 = vmatpush1.msra.mxu0 %v801
      %1548 = vmatprep.subr.mxu0 0.0
      %1549 = vmatpush1.msra.mxu0 %v802
      %1550 = vmatprep.subr.mxu0 0.0
      %1551 = vmatpush1.msra.mxu0 %v803
      %1552 = vmatprep.subr.mxu0 0.0
      %1553 = vmatpush1.msra.mxu0 %v804
      %1554 = vmatprep.subr.mxu0 0.0
      %1555 = vmatpush1.msra.mxu0 %v805
      %1556 = vmatprep.subr.mxu0 0.0
      %1557 = vmatpush1.msra.mxu0 %v806
      %1558 = vmatprep.subr.mxu0 0.0
      %1559 = vmatpush1.msra.mxu0 %v807
      %1560 = vmatprep.subr.mxu0 0.0
      %1561 = vmatpush1.msra.mxu0 %v808
      %1562 = vmatprep.subr.mxu0 0.0
      %1563 = vmatpush1.msra.mxu0 %v809
      %1564 = vmatprep.subr.mxu0 0.0
      %1565 = vmatpush1.msra.mxu0 %v810
      %1566 = vmatprep.subr.mxu0 0.0
      %1567 = vmatpush1.msra.mxu0 %v811
      %1568 = vmatprep.subr.mxu0 0.0
      %1569 = vmatpush1.msra.mxu0 %v812
      %1570 = vmatprep.subr.mxu0 0.0
      %1571 = vmatpush1.msra.mxu0 %v813
      %1572 = vmatprep.subr.mxu0 0.0
      %1573 = vmatpush1.msra.mxu0 %v814
      %1574 = vmatprep.subr.mxu0 0.0
      %1575 = vmatpush1.msra.mxu0 %v815
      %1576 = vmatprep.subr.mxu0 0.0
      %1577 = vmatpush1.msra.mxu0 %v816
      %1578 = vmatprep.subr.mxu0 0.0
      %1579 = vmatpush1.msra.mxu0 %v817
      %1580 = vmatprep.mubr.f32.mxu0 %v375
      %1581 = vmatmul.mubr.f32.gmra.mrb[0].mxu0 %v372
      %v1582 = vpop.f32.mrb[0].mxu0
      %v1583 = vadd.f32 %v1358, %v1582
      %v1584 = vpop.f32.mrb[0].mxu0
      %1585 = vmatprep.mubr.f32.mxu0 %v390
      %1586 = vmatmul.mubr.f32.gmra.mrb[0].mxu0 %v388
      %v1587 = vpop.f32.mrb[0].mxu0
      %v1588 = vadd.f32 %v1363, %v1587
      %v1589 = vpop.f32.mrb[0].mxu0
      %1590 = vmatprep.mubr.f32.mxu0 %v397
      %1591 = vmatmul.mubr.f32.gmra.mrb[0].mxu0 %v394
      %v1592 = vpop.f32.mrb[0].mxu0
      %v1593 = vadd.f32 %v1368, %v1592
      %v1594 = vpop.f32.mrb[0].mxu0
      %1595 = vmatprep.mubr.f32.mxu0 %v404
      %1596 = vmatmul.mubr.f32.gmra.mrb[0].mxu0 %v402
      %v1597 = vpop.f32.mrb[0].mxu0
      %v1598 = vadd.f32 %v1373, %v1597
      %v1599 = vpop.f32.mrb[0].mxu0
      %1600 = vmatprep.mubr.f32.mxu0 %v411
      %1601 = vmatmul.mubr.f32.gmra.mrb[0].mxu0 %v408
      %v1602 = vpop.f32.mrb[0].mxu0
      %v1603 = vadd.f32 %v1378, %v1602
      %v1604 = vpop.f32.mrb[0].mxu0
      %1605 = vmatprep.mubr.f32.mxu0 %v418
      %1606 = vmatmul.mubr.f32.gmra.mrb[0].mxu0 %v416
      %v1607 = vpop.f32.mrb[0].mxu0
      %v1608 = vadd.f32 %v1383, %v1607
      %v1609 = vpop.f32.mrb[0].mxu0
      %1610 = vmatprep.mubr.f32.mxu0 %v425
      %1611 = vmatmul.mubr.f32.gmra.mrb[0].mxu0 %v422
      %v1612 = vpop.f32.mrb[0].mxu0
      %v1613 = vadd.f32 %v1388, %v1612
      %v1614 = vpop.f32.mrb[0].mxu0
      %1615 = vmatprep.mubr.f32.mxu0 %v432
      %1616 = vmatmul.mubr.f32.gmra.mrb[0].mxu0 %v430
      %v1617 = vpop.f32.mrb[0].mxu0
      %v1618 = vadd.f32 %v1393, %v1617
      %v1619 = vpop.f32.mrb[0].mxu0
      %1620 = vmatprep.mubr.f32.mxu0 %v439
      %1621 = vmatmul.mubr.f32.gmra.mrb[0].mxu0 %v436
      %v1622 = vpop.f32.mrb[0].mxu0
      %v1623 = vadd.f32 %v1398, %v1622
      %v1624 = vpop.f32.mrb[0].mxu0
      %1625 = vmatprep.mubr.f32.mxu0 %v446
      %1626 = vmatmul.mubr.f32.gmra.mrb[0].mxu0 %v444
      %v1627 = vpop.f32.mrb[0].mxu0
      %v1628 = vadd.f32 %v1403, %v1627
      %v1629 = vpop.f32.mrb[0].mxu0
      %1630 = vmatprep.mubr.f32.mxu0 %v453
      %1631 = vmatmul.mubr.f32.gmra.mrb[0].mxu0 %v450
      %v1632 = vpop.f32.mrb[0].mxu0
      %v1633 = vadd.f32 %v1408, %v1632
      %v1634 = vpop.f32.mrb[0].mxu0
      %1635 = vmatprep.mubr.f32.mxu0 %v460
      %1636 = vmatmul.mubr.f32.gmra.mrb[0].mxu0 %v458
      %v1637 = vpop.f32.mrb[0].mxu0
      %v1638 = vadd.f32 %v1413, %v1637
      %v1639 = vpop.f32.mrb[0].mxu0
      %1640 = vmatprep.mubr.f32.mxu0 %v467
      %1641 = vmatmul.mubr.f32.gmra.mrb[0].mxu0 %v464
      %v1642 = vpop.f32.mrb[0].mxu0
      %v1643 = vadd.f32 %v1418, %v1642
      %v1644 = vpop.f32.mrb[0].mxu0
      %1645 = vmatprep.mubr.f32.mxu0 %v474
      %1646 = vmatmul.mubr.f32.gmra.mrb[0].mxu0 %v472
      %v1647 = vpop.f32.mrb[0].mxu0
      %v1648 = vadd.f32 %v1423, %v1647
      %v1649 = vpop.f32.mrb[0].mxu0
      %1650 = vmatprep.mubr.f32.mxu0 %v481
      %1651 = vmatmul.mubr.f32.gmra.mrb[0].mxu0 %v478
      %v1652 = vpop.f32.mrb[0].mxu0
      %v1653 = vadd.f32 %v1428, %v1652
      %v1654 = vpop.f32.mrb[0].mxu0
      %1655 = vmatprep.mubr.f32.mxu0 %v488
      %1656 = vmatmul.mubr.f32.gmra.mrb[0].mxu0 %v486
      %v1657 = vpop.f32.mrb[0].mxu0
      %v1658 = vadd.f32 %v1433, %v1657
      %v1659 = vpop.f32.mrb[0].mxu0
      %1660 = vmatprep.mubr.f32.mxu0 %v495
      %1661 = vmatmul.mubr.f32.gmra.mrb[0].mxu0 %v492
      %v1662 = vpop.f32.mrb[0].mxu0
      %v1663 = vadd.f32 %v1438, %v1662
      %v1664 = vpop.f32.mrb[0].mxu0
      %1665 = vmatprep.mubr.f32.mxu0 %v502
      %1666 = vmatmul.mubr.f32.gmra.mrb[0].mxu0 %v500
      %v1667 = vpop.f32.mrb[0].mxu0
      %v1668 = vadd.f32 %v1443, %v1667
      %v1669 = vpop.f32.mrb[0].mxu0
      %1670 = vmatprep.mubr.f32.mxu0 %v509
      %1671 = vmatmul.mubr.f32.gmra.mrb[0].mxu0 %v506
      %v1672 = vpop.f32.mrb[0].mxu0
      %v1673 = vadd.f32 %v1448, %v1672
      %v1674 = vpop.f32.mrb[0].mxu0
      %1675 = vmatprep.mubr.f32.mxu0 %v516
      %1676 = vmatmul.mubr.f32.gmra.mrb[0].mxu0 %v514
      %v1677 = vpop.f32.mrb[0].mxu0
      %v1678 = vadd.f32 %v1453, %v1677
      %v1679 = vpop.f32.mrb[0].mxu0
      %1680 = vmatprep.mubr.f32.mxu0 %v523
      %1681 = vmatmul.mubr.f32.gmra.mrb[0].mxu0 %v520
      %v1682 = vpop.f32.mrb[0].mxu0
      %v1683 = vadd.f32 %v1458, %v1682
      %v1684 = vpop.f32.mrb[0].mxu0
      %1685 = vmatprep.mubr.f32.mxu0 %v530
      %1686 = vmatmul.mubr.f32.gmra.mrb[0].mxu0 %v528
      %v1687 = vpop.f32.mrb[0].mxu0
      %v1688 = vadd.f32 %v1463, %v1687
      %v1689 = vpop.f32.mrb[0].mxu0
      %1690 = vmatprep.mubr.f32.mxu0 %v537
      %1691 = vmatmul.mubr.f32.gmra.mrb[0].mxu0 %v534
      %v1692 = vpop.f32.mrb[0].mxu0
      %v1693 = vadd.f32 %v1468, %v1692
      %v1694 = vpop.f32.mrb[0].mxu0
      %1695 = vmatprep.mubr.f32.mxu0 %v544
      %1696 = vmatmul.mubr.f32.gmra.mrb[0].mxu0 %v542
      %v1697 = vpop.f32.mrb[0].mxu0
      %v1698 = vadd.f32 %v1473, %v1697
      %v1699 = vpop.f32.mrb[0].mxu0
      %1700 = vmatprep.mubr.f32.mxu0 %v551
      %1701 = vmatmul.mubr.f32.gmra.mrb[0].mxu0 %v548
      %v1702 = vpop.f32.mrb[0].mxu0
      %v1703 = vadd.f32 %v1478, %v1702
      %v1704 = vpop.f32.mrb[0].mxu0
      %1705 = vmatprep.mubr.f32.mxu0 %v558
      %1706 = vmatmul.mubr.f32.gmra.mrb[0].mxu0 %v556
      %v1707 = vpop.f32.mrb[0].mxu0
      %v1708 = vadd.f32 %v1483, %v1707
      %v1709 = vpop.f32.mrb[0].mxu0
      %1710 = vmatprep.mubr.f32.mxu0 %v565
      %1711 = vmatmul.mubr.f32.gmra.mrb[0].mxu0 %v562
      %v1712 = vpop.f32.mrb[0].mxu0
      %v1713 = vadd.f32 %v1488, %v1712
      %v1714 = vpop.f32.mrb[0].mxu0
      %1715 = vmatprep.mubr.f32.mxu0 %v572
      %1716 = vmatmul.mubr.f32.gmra.mrb[0].mxu0 %v570
      %v1717 = vpop.f32.mrb[0].mxu0
      %v1718 = vadd.f32 %v1493, %v1717
      %v1719 = vpop.f32.mrb[0].mxu0
      %1720 = vmatprep.mubr.f32.mxu0 %v579
      %1721 = vmatmul.mubr.f32.gmra.mrb[0].mxu0 %v576
      %v1722 = vpop.f32.mrb[0].mxu0
      %v1723 = vadd.f32 %v1498, %v1722
      %v1724 = vpop.f32.mrb[0].mxu0
      %1725 = vmatprep.mubr.f32.mxu0 %v586
      %1726 = vmatmul.mubr.f32.gmra.mrb[0].mxu0 %v584
      %v1727 = vpop.f32.mrb[0].mxu0
      %v1728 = vadd.f32 %v1503, %v1727
      %v1729 = vpop.f32.mrb[0].mxu0
      %1730 = vmatprep.mubr.f32.mxu0 %v359
      %1731 = vmatmul.mubr.f32.gmra.mrb[0].mxu0 %v356
      %v1732 = vpop.f32.mrb[0].mxu0
      %v1733 = vadd.f32 %v1508, %v1732
      %v1734 = vpop.f32.mrb[0].mxu0
      %1735 = vmatprep.mubr.f32.mxu0 %v379
      %1736 = vmatmul.mubr.f32.gmra.mrb[0].mxu0 %v356
      %v1737 = vpop.f32.mrb[0].mxu0
      %v1738 = vadd.f32 %v1513, %v1737
      %v1739 = vpop.f32.mrb[0].mxu0
      %1740 = vdwg.mxu0
      %1741 = vmatprep.subr.mxu0 0.0
      %1742 = vmatpush1.msra.mxu0 %v818
      %1743 = vmatprep.subr.mxu0 0.0
      %1744 = vmatpush1.msra.mxu0 %v819
      %1745 = vmatprep.subr.mxu0 0.0
      %1746 = vmatpush1.msra.mxu0 %v820
      %1747 = vmatprep.subr.mxu0 0.0
      %1748 = vmatpush1.msra.mxu0 %v821
      %1749 = vmatprep.subr.mxu0 0.0
      %1750 = vmatpush1.msra.mxu0 %v822
      %1751 = vmatprep.subr.mxu0 0.0
      %1752 = vmatpush1.msra.mxu0 %v823
      %1753 = vmatprep.subr.mxu0 0.0
      %1754 = vmatpush1.msra.mxu0 %v824
      %1755 = vmatprep.subr.mxu0 0.0
      %1756 = vmatpush1.msra.mxu0 %v825
      %1757 = vmatprep.subr.mxu0 0.0
      %1758 = vmatpush1.msra.mxu0 %v826
      %1759 = vmatprep.subr.mxu0 0.0
      %1760 = vmatpush1.msra.mxu0 %v827
      %1761 = vmatprep.subr.mxu0 0.0
      %1762 = vmatpush1.msra.mxu0 %v828
      %1763 = vmatprep.subr.mxu0 0.0
      %1764 = vmatpush1.msra.mxu0 %v829
      %1765 = vmatprep.subr.mxu0 0.0
      %1766 = vmatpush1.msra.mxu0 %v830
      %1767 = vmatprep.subr.mxu0 0.0
      %1768 = vmatpush1.msra.mxu0 %v831
      %1769 = vmatprep.subr.mxu0 0.0
      %1770 = vmatpush1.msra.mxu0 %v832
      %1771 = vmatprep.subr.mxu0 0.0
      %1772 = vmatpush1.msra.mxu0 %v833
      %1773 = vmatprep.subr.mxu0 0.0
      %1774 = vmatpush1.msra.mxu0 0.0
      %1775 = vmatprep.subr.mxu0 0.0
      %1776 = vmatpush1.msra.mxu0 0.0
      %1777 = vmatprep.subr.mxu0 0.0
      %1778 = vmatpush1.msra.mxu0 0.0
      %1779 = vmatprep.subr.mxu0 0.0
      %1780 = vmatpush1.msra.mxu0 0.0
      %1781 = vmatprep.subr.mxu0 0.0
      %1782 = vmatpush1.msra.mxu0 0.0
      %1783 = vmatprep.subr.mxu0 0.0
      %1784 = vmatpush1.msra.mxu0 0.0
      %1785 = vmatprep.subr.mxu0 0.0
      %1786 = vmatpush1.msra.mxu0 0.0
      %1787 = vmatprep.subr.mxu0 0.0
      %1788 = vmatpush1.msra.mxu0 0.0
      %1789 = vmatprep.subr.mxu0 0.0
      %1790 = vmatpush1.msra.mxu0 0.0
      %1791 = vmatprep.subr.mxu0 0.0
      %1792 = vmatpush1.msra.mxu0 0.0
      %1793 = vmatprep.subr.mxu0 0.0
      %1794 = vmatpush1.msra.mxu0 0.0
      %1795 = vmatprep.subr.mxu0 0.0
      %1796 = vmatpush1.msra.mxu0 0.0
      %1797 = vmatprep.subr.mxu0 0.0
      %1798 = vmatpush1.msra.mxu0 0.0
      %1799 = vmatprep.subr.mxu0 0.0
      %1800 = vmatpush1.msra.mxu0 0.0
      %1801 = vmatprep.subr.mxu0 0.0
      %1802 = vmatpush1.msra.mxu0 0.0
      %1803 = vmatprep.subr.mxu0 0.0
      %1804 = vmatpush1.msra.mxu0 0.0
      %1805 = vmatprep.mubr.f32.mxu0 0.0
      %1806 = vmatmul.mubr.f32.gmra.mrb[0].mxu0 %v378
      %v1807 = vpop.f32.mrb[0].mxu0
      %v1808 = vadd.f32 %v1583, %v1807
      %v1809 = vpop.f32.mrb[0].mxu0
      %1810 = vmatprep.mubr.f32.mxu0 0.0
      %1811 = vmatmul.mubr.f32.gmra.mrb[0].mxu0 %v392
      %v1812 = vpop.f32.mrb[0].mxu0
      %v1813 = vadd.f32 %v1588, %v1812
      %v1814 = vpop.f32.mrb[0].mxu0
      %1815 = vmatprep.mubr.f32.mxu0 0.0
      %1816 = vmatmul.mubr.f32.gmra.mrb[0].mxu0 %v400
      %v1817 = vpop.f32.mrb[0].mxu0
      %v1818 = vadd.f32 %v1593, %v1817
      %v1819 = vpop.f32.mrb[0].mxu0
      %1820 = vmatprep.mubr.f32.mxu0 0.0
      %1821 = vmatmul.mubr.f32.gmra.mrb[0].mxu0 %v406
      %v1822 = vpop.f32.mrb[0].mxu0
      %v1823 = vadd.f32 %v1598, %v1822
      %v1824 = vpop.f32.mrb[0].mxu0
      %1825 = vmatprep.mubr.f32.mxu0 0.0
      %1826 = vmatmul.mubr.f32.gmra.mrb[0].mxu0 %v414
      %v1827 = vpop.f32.mrb[0].mxu0
      %v1828 = vadd.f32 %v1603, %v1827
      %v1829 = vpop.f32.mrb[0].mxu0
      %1830 = vmatprep.mubr.f32.mxu0 0.0
      %1831 = vmatmul.mubr.f32.gmra.mrb[0].mxu0 %v420
      %v1832 = vpop.f32.mrb[0].mxu0
      %v1833 = vadd.f32 %v1608, %v1832
      %v1834 = vpop.f32.mrb[0].mxu0
      %1835 = vmatprep.mubr.f32.mxu0 0.0
      %1836 = vmatmul.mubr.f32.gmra.mrb[0].mxu0 %v428
      %v1837 = vpop.f32.mrb[0].mxu0
      %v1838 = vadd.f32 %v1613, %v1837
      %v1839 = vpop.f32.mrb[0].mxu0
      %1840 = vmatprep.mubr.f32.mxu0 0.0
      %1841 = vmatmul.mubr.f32.gmra.mrb[0].mxu0 %v434
      %v1842 = vpop.f32.mrb[0].mxu0
      %v1843 = vadd.f32 %v1618, %v1842
      %v1844 = vpop.f32.mrb[0].mxu0
      %1845 = vmatprep.mubr.f32.mxu0 0.0
      %1846 = vmatmul.mubr.f32.gmra.mrb[0].mxu0 %v442
      %v1847 = vpop.f32.mrb[0].mxu0
      %v1848 = vadd.f32 %v1623, %v1847
      %v1849 = vpop.f32.mrb[0].mxu0
      %1850 = vmatprep.mubr.f32.mxu0 0.0
      %1851 = vmatmul.mubr.f32.gmra.mrb[0].mxu0 %v448
      %v1852 = vpop.f32.mrb[0].mxu0
      %v1853 = vadd.f32 %v1628, %v1852
      %v1854 = vpop.f32.mrb[0].mxu0
      %1855 = vmatprep.mubr.f32.mxu0 0.0
      %1856 = vmatmul.mubr.f32.gmra.mrb[0].mxu0 %v456
      %v1857 = vpop.f32.mrb[0].mxu0
      %v1858 = vadd.f32 %v1633, %v1857
      %v1859 = vpop.f32.mrb[0].mxu0
      %1860 = vmatprep.mubr.f32.mxu0 0.0
      %1861 = vmatmul.mubr.f32.gmra.mrb[0].mxu0 %v462
      %v1862 = vpop.f32.mrb[0].mxu0
      %v1863 = vadd.f32 %v1638, %v1862
      %v1864 = vpop.f32.mrb[0].mxu0
      %1865 = vmatprep.mubr.f32.mxu0 0.0
      %1866 = vmatmul.mubr.f32.gmra.mrb[0].mxu0 %v470
      %v1867 = vpop.f32.mrb[0].mxu0
      %v1868 = vadd.f32 %v1643, %v1867
      %v1869 = vpop.f32.mrb[0].mxu0
      %1870 = vmatprep.mubr.f32.mxu0 0.0
      %1871 = vmatmul.mubr.f32.gmra.mrb[0].mxu0 %v476
      %v1872 = vpop.f32.mrb[0].mxu0
      %v1873 = vadd.f32 %v1648, %v1872
      %v1874 = vpop.f32.mrb[0].mxu0
      %1875 = vmatprep.mubr.f32.mxu0 0.0
      %1876 = vmatmul.mubr.f32.gmra.mrb[0].mxu0 %v484
      %v1877 = vpop.f32.mrb[0].mxu0
      %v1878 = vadd.f32 %v1653, %v1877
      %v1879 = vpop.f32.mrb[0].mxu0
      %1880 = vmatprep.mubr.f32.mxu0 0.0
      %1881 = vmatmul.mubr.f32.gmra.mrb[0].mxu0 %v490
      %v1882 = vpop.f32.mrb[0].mxu0
      %v1883 = vadd.f32 %v1658, %v1882
      %v1884 = vpop.f32.mrb[0].mxu0
      %1885 = vmatprep.mubr.f32.mxu0 0.0
      %1886 = vmatmul.mubr.f32.gmra.mrb[0].mxu0 %v498
      %v1887 = vpop.f32.mrb[0].mxu0
      %v1888 = vadd.f32 %v1663, %v1887
      %v1889 = vpop.f32.mrb[0].mxu0
      %1890 = vmatprep.mubr.f32.mxu0 0.0
      %1891 = vmatmul.mubr.f32.gmra.mrb[0].mxu0 %v504
      %v1892 = vpop.f32.mrb[0].mxu0
      %v1893 = vadd.f32 %v1668, %v1892
      %v1894 = vpop.f32.mrb[0].mxu0
      %1895 = vmatprep.mubr.f32.mxu0 0.0
      %1896 = vmatmul.mubr.f32.gmra.mrb[0].mxu0 %v512
      %v1897 = vpop.f32.mrb[0].mxu0
      %v1898 = vadd.f32 %v1673, %v1897
      %v1899 = vpop.f32.mrb[0].mxu0
      %1900 = vmatprep.mubr.f32.mxu0 0.0
      %1901 = vmatmul.mubr.f32.gmra.mrb[0].mxu0 %v518
      %v1902 = vpop.f32.mrb[0].mxu0
      %v1903 = vadd.f32 %v1678, %v1902
      %v1904 = vpop.f32.mrb[0].mxu0
      %1905 = vmatprep.mubr.f32.mxu0 0.0
      %1906 = vmatmul.mubr.f32.gmra.mrb[0].mxu0 %v526
      %v1907 = vpop.f32.mrb[0].mxu0
      %v1908 = vadd.f32 %v1683, %v1907
      %v1909 = vpop.f32.mrb[0].mxu0
      %1910 = vmatprep.mubr.f32.mxu0 0.0
      %1911 = vmatmul.mubr.f32.gmra.mrb[0].mxu0 %v532
      %v1912 = vpop.f32.mrb[0].mxu0
      %v1913 = vadd.f32 %v1688, %v1912
      %v1914 = vpop.f32.mrb[0].mxu0
      %1915 = vmatprep.mubr.f32.mxu0 0.0
      %1916 = vmatmul.mubr.f32.gmra.mrb[0].mxu0 %v540
      %v1917 = vpop.f32.mrb[0].mxu0
      %v1918 = vadd.f32 %v1693, %v1917
      %v1919 = vpop.f32.mrb[0].mxu0
      %1920 = vmatprep.mubr.f32.mxu0 0.0
      %1921 = vmatmul.mubr.f32.gmra.mrb[0].mxu0 %v546
      %v1922 = vpop.f32.mrb[0].mxu0
      %v1923 = vadd.f32 %v1698, %v1922
      %v1924 = vpop.f32.mrb[0].mxu0
      %1925 = vmatprep.mubr.f32.mxu0 0.0
      %1926 = vmatmul.mubr.f32.gmra.mrb[0].mxu0 %v554
      %v1927 = vpop.f32.mrb[0].mxu0
      %v1928 = vadd.f32 %v1703, %v1927
      %v1929 = vpop.f32.mrb[0].mxu0
      %1930 = vmatprep.mubr.f32.mxu0 0.0
      %1931 = vmatmul.mubr.f32.gmra.mrb[0].mxu0 %v560
      %v1932 = vpop.f32.mrb[0].mxu0
      %v1933 = vadd.f32 %v1708, %v1932
      %v1934 = vpop.f32.mrb[0].mxu0
      %1935 = vmatprep.mubr.f32.mxu0 0.0
      %1936 = vmatmul.mubr.f32.gmra.mrb[0].mxu0 %v568
      %v1937 = vpop.f32.mrb[0].mxu0
      %v1938 = vadd.f32 %v1713, %v1937
      %v1939 = vpop.f32.mrb[0].mxu0
      %1940 = vmatprep.mubr.f32.mxu0 0.0
      %1941 = vmatmul.mubr.f32.gmra.mrb[0].mxu0 %v574
      %v1942 = vpop.f32.mrb[0].mxu0
      %v1943 = vadd.f32 %v1718, %v1942
      %v1944 = vpop.f32.mrb[0].mxu0
      %1945 = vmatprep.mubr.f32.mxu0 0.0
      %1946 = vmatmul.mubr.f32.gmra.mrb[0].mxu0 %v582
      %v1947 = vpop.f32.mrb[0].mxu0
      %v1948 = vadd.f32 %v1723, %v1947
      %v1949 = vpop.f32.mrb[0].mxu0
      %1950 = vmatprep.mubr.f32.mxu0 0.0
      %1951 = vmatmul.mubr.f32.gmra.mrb[0].mxu0 %v588
      %v1952 = vpop.f32.mrb[0].mxu0
      %v1953 = vadd.f32 %v1728, %v1952
      %v1954 = vpop.f32.mrb[0].mxu0
      %1955 = vmatprep.mubr.f32.mxu0 0.0
      %1956 = vmatmul.mubr.f32.gmra.mrb[0].mxu0 %v362
      %v1957 = vpop.f32.mrb[0].mxu0
      %v1958 = vadd.f32 %v1733, %v1957
      %v1959 = vpop.f32.mrb[0].mxu0
      %1960 = vmatprep.mubr.f32.mxu0 0.0
      %1961 = vmatmul.mubr.f32.gmra.mrb[0].mxu0 %v380
      %v1962 = vpop.f32.mrb[0].mxu0
      %v1963 = vadd.f32 %v1738, %v1962
      %v1964 = vpop.f32.mrb[0].mxu0
      %1965 = vdwg.mxu0
      %v1966 = vmax.f32 %v1808, 0.0
      %v1967 = vmax.f32 %v1813, 0.0
      %v1968 = vmax.f32 %v1818, 0.0
      %v1969 = vmax.f32 %v1823, 0.0
      %v1970 = vmax.f32 %v1828, 0.0
      %v1971 = vmax.f32 %v1833, 0.0
      %v1972 = vmax.f32 %v1838, 0.0
      %v1973 = vmax.f32 %v1843, 0.0
      %v1974 = vmax.f32 %v1848, 0.0
      %v1975 = vmax.f32 %v1853, 0.0
      %v1976 = vmax.f32 %v1858, 0.0
      %v1977 = vmax.f32 %v1863, 0.0
      %v1978 = vmax.f32 %v1868, 0.0
      %v1979 = vmax.f32 %v1873, 0.0
      %v1980 = vmax.f32 %v1878, 0.0
      %v1981 = vmax.f32 %v1883, 0.0
      %v1982 = vmax.f32 %v1888, 0.0
      %v1983 = vmax.f32 %v1893, 0.0
      %v1984 = vmax.f32 %v1898, 0.0
      %v1985 = vmax.f32 %v1903, 0.0
      %v1986 = vmax.f32 %v1908, 0.0
      %v1987 = vmax.f32 %v1913, 0.0
      %v1988 = vmax.f32 %v1918, 0.0
      %v1989 = vmax.f32 %v1923, 0.0
      %v1990 = vmax.f32 %v1928, 0.0
      %v1991 = vmax.f32 %v1933, 0.0
      %v1992 = vmax.f32 %v1938, 0.0
      %v1993 = vmax.f32 %v1943, 0.0
      %v1994 = vmax.f32 %v1948, 0.0
      %v1995 = vmax.f32 %v1953, 0.0
      %v1996 = vmax.f32 %v1958, 0.0
      %v1997 = vmax.f32 %v1963, 0.0
      %1998 = vst [vmem:[%s170] sm:$0xff] %v1966
      %1999 = vst [vmem:[%s170 + $0x8] sm:$0xff] %v1967
      %2000 = vst [vmem:[%s170 + $0x10] sm:$0xff] %v1968
      %2001 = vst [vmem:[%s170 + $0x18] sm:$0xff] %v1969
      %2002 = vst [vmem:[%s170 + $0x20] sm:$0xff] %v1970
      %2003 = vst [vmem:[%s170 + $0x28] sm:$0xff] %v1971
      %2004 = vst [vmem:[%s170 + $0x30] sm:$0xff] %v1972
      %2005 = vst [vmem:[%s170 + $0x38] sm:$0xff] %v1973
      %2006 = vst [vmem:[%s170 + $0x40] sm:$0xff] %v1974
      %2007 = vst [vmem:[%s170 + $0x48] sm:$0xff] %v1975
      %2008 = vst [vmem:[%s170 + $0x50] sm:$0xff] %v1976
      %2009 = vst [vmem:[%s170 + $0x58] sm:$0xff] %v1977
      %2010 = vst [vmem:[%s170 + $0x60] sm:$0xff] %v1978
      %2011 = vst [vmem:[%s170 + $0x68] sm:$0xff] %v1979
      %2012 = vst [vmem:[%s170 + $0x70] sm:$0xff] %v1980
      %2013 = vst [vmem:[%s170 + $0x78] sm:$0xff] %v1981
      %2014 = vst [vmem:[%s170 + $0x80] sm:$0xff] %v1982
      %2015 = vst [vmem:[%s170 + $0x88] sm:$0xff] %v1983
      %2016 = vst [vmem:[%s170 + $0x90] sm:$0xff] %v1984
      %2017 = vst [vmem:[%s170 + $0x98] sm:$0xff] %v1985
      %2018 = vst [vmem:[%s170 + $0xa0] sm:$0xff] %v1986
      %2019 = vst [vmem:[%s170 + $0xa8] sm:$0xff] %v1987
      %2020 = vst [vmem:[%s170 + $0xb0] sm:$0xff] %v1988
      %2021 = vst [vmem:[%s170 + $0xb8] sm:$0xff] %v1989
      %2022 = vst [vmem:[%s170 + $0xc0] sm:$0xff] %v1990
      %2023 = vst [vmem:[%s170 + $0xc8] sm:$0xff] %v1991
      %2024 = vst [vmem:[%s170 + $0xd0] sm:$0xff] %v1992
      %2025 = vst [vmem:[%s170 + $0xd8] sm:$0xff] %v1993
      %2026 = vst [vmem:[%s170 + $0xe0] sm:$0xff] %v1994
      %2027 = vst [vmem:[%s170 + $0xe8] sm:$0xff] %v1995
      %2028 = vst [vmem:[%s170 + $0xf0] sm:$0xff] %v1996
      %2029 = vst [vmem:[%s170 + $0xf8] sm:$0xff] %v1997
      %p2030 = scmp.lt.s32.totalorder %s14, 1
      %s2031 = scalar_select %p2030, %s14, 1
      %s2032 = smul.addr %s2031, 32
      %s2033 = smul.addr %s2032, 8
      %s2034 = scalar_lea.vmem %s3, %s2033
      // Predicated region
      $region33: #{inception_v1_forward.5} parent=31 // pred_check
        %p2035 = pneg %p100
      $region34: #{inception_v1_forward.5} parent=31 // pred_check_branch
        %2037 = sbr.rel (%p2035) target = $region36
      $region35: #{inception_v1_forward.5} parent=31 // pred_region
        _
      $region36: #{inception_v1_forward.5} parent=31 // pred_fallthru
        _
    $region32: #{inception_v1_forward.5} parent=5 // pred_fallthru
      _
    %p2038 = scmp.le.s32.totalorder 2, %s9
    // Predicated region
    $region37: #{inception_v1_forward.5} parent=5 // pred_check
      %p2039 = pneg %p2038
    $region38: #{inception_v1_forward.5} parent=5 // pred_check_branch
      %2041 = sbr.rel (%p2039) target = $region40
    $region39: #{inception_v1_forward.5} parent=5 // pred_region
      %s2042 = ssub.s32 %s9, 2
      // Predicated region
      $region41: #{inception_v1_forward.5} parent=39 // pred_check
        %p2043 = pneg %p106
      $region42: #{inception_v1_forward.5} parent=39 // pred_check_branch
        %2045 = sbr.rel (%p2043) target = $region44
      $region43: #{inception_v1_forward.5} parent=39 // pred_region
        %p2046 = scmp.lt.s32.totalorder %s15, 1
        %s2047 = scalar_select %p2046, %s15, 1
        %s2048 = smul.addr %s2047, 32
        %s2049 = smul.addr %s2048, 8
        %s2050 = scalar_lea.vmem %s3, %s2049
      $region44: #{inception_v1_forward.5} parent=39 // pred_fallthru
        _
    $region40: #{inception_v1_forward.5} parent=5 // pred_fallthru
      _
  $region6: #{inception_v1_forward.5} parent=0 // loop_footer
    %s13 = sadd.s32 1, %s9
  $region7: #{inception_v1_forward.5} parent=0 // loop_footer_branch
    %8 = sbr.rel target = $region3
  $region8: #{inception_v1_forward.5} parent=0 // loop_exit
    _

// kernel: inception_v1_forward.6
$region0: #{inception_v1_forward.6}
  #allocation0 [shape = 'u32[]', space=smem, size = 0x4, offset = 0x4, fixed_abs, tag = 'smem constant byte address 0x4 - core index']
  #allocation1 [shape = 'u32[144,128]{1,0:T(1,128)}', space=vmem, size = 0x12000, scoped, tag = 'internal scratch']
  %s0 = inlined_call_operand.vmem [shape: f32[2,16,16,128], index: 0, kind: input, shape index: {}]
  %s1 = inlined_call_operand.vmem [shape: f32[3200,128], index: 1, kind: input, shape index: {}]
  %s2 = inlined_call_operand.vmem [shape: f32[1,128], index: 2, kind: input, shape index: {}]
  %s3 = inlined_call_operand.vmem [shape: f32[2,16,16,128], index: 3, kind: output, shape index: {}]
  %s4 = sld [smem:[#allocation0]]
  $region45: #{inception_v1_forward.6} parent=0
    _
  %s6 = ssub.s32 1, %s4
  %s7 = scalar_select 0, %s6, %s4
  loop: start=0, step=1, limit=4
  $region2: #{inception_v1_forward.6} parent=0 // loop_pre_header
    _
  $region3: #{inception_v1_forward.6} parent=0 // loop_header
    %s9 = sphi 0, %s13
    %p10 = scmp.ge.s32.totalorder %s9, 4
    %s19 = sphi 0, %s21
    %s22 = sphi 0, %s19
    %s23 = sphi 0, %s22
    %s39 = sphi 0, %s23
    %s43 = sphi 0, %s43
    %s45 = sphi 0, %s43
    %s46 = sphi 0, %s45
    %s60 = sphi 0, %s46
    %s64 = sphi 0, %s64
    %s66 = sphi 0, %s64
    %s67 = sphi 0, %s66
    %s81 = sphi 0, %s67
    %s87 = sphi 0, %s89
    %s90 = sphi 0, %s87
    %s91 = sphi 0, %s90
    %s107 = sphi 0, %s91
  $region4: #{inception_v1_forward.6} parent=0 // loop_header_branch
    %12 = sbr.rel (%p10) target = $region8
  $region5: #{inception_v1_forward.6} parent=0 // loop_body
    %s14 = ssub.s32 %s9, 1
    %s15 = ssub.s32 %s9, 2
    %s16 = sadd.s32 %s9, 1
    %s17 = ssub.s32 %s9, %s16
    %p18 = scmp.eq.s32.totalorder %s17, 0
    %s20 = sadd.s32 %s19, 1
    %s21 = scalar_select %p18, %s19, %s20
    %p24 = pneg %p18
    %p25 = scmp.eq.s32.totalorder %s9, 1
    %p26 = por %p24, %p25
    %p27 = scmp.ne.s32.totalorder %s19, %s22
    %p28 = scmp.eq.s32.totalorder %s9, 0
    %p29 = por %p27, %p28
    %p30 = scmp.ne.s32.totalorder %s19, %s22
    %p31 = scmp.eq.s32.totalorder %s14, 1
    %p32 = por %p30, %p31
    %p33 = scmp.ne.s32.totalorder %s22, %s23
    %p34 = scmp.eq.s32.totalorder %s14, 0
    %p35 = por %p33, %p34
    %p36 = scmp.ne.s32.totalorder %s22, %s23
    %p37 = scmp.eq.s32.totalorder %s15, 1
    %p38 = por %p36, %p37
    %p40 = scmp.ne.s32.totalorder %s23, %s39
    %p41 = scmp.eq.s32.totalorder %s15, 0
    %p42 = por %p40, %p41
    %s44 = sadd.s32 %s43, 1
    %p47 = scmp.eq.s32.totalorder %s9, 1
    %p48 = scmp.ne.s32.totalorder %s43, %s45
    %p49 = scmp.eq.s32.totalorder %s9, 0
    %p50 = por %p48, %p49
    %p51 = scmp.ne.s32.totalorder %s43, %s45
    %p52 = scmp.eq.s32.totalorder %s14, 1
    %p53 = por %p51, %p52
    %p54 = scmp.ne.s32.totalorder %s45, %s46
    %p55 = scmp.eq.s32.totalorder %s14, 0
    %p56 = por %p54, %p55
    %p57 = scmp.ne.s32.totalorder %s45, %s46
    %p58 = scmp.eq.s32.totalorder %s15, 1
    %p59 = por %p57, %p58
    %p61 = scmp.ne.s32.totalorder %s46, %s60
    %p62 = scmp.eq.s32.totalorder %s15, 0
    %p63 = por %p61, %p62
    %s65 = sadd.s32 %s64, 1
    %p68 = scmp.eq.s32.totalorder %s9, 1
    %p69 = scmp.ne.s32.totalorder %s64, %s66
    %p70 = scmp.eq.s32.totalorder %s9, 0
    %p71 = por %p69, %p70
    %p72 = scmp.ne.s32.totalorder %s64, %s66
    %p73 = scmp.eq.s32.totalorder %s14, 1
    %p74 = por %p72, %p73
    %p75 = scmp.ne.s32.totalorder %s66, %s67
    %p76 = scmp.eq.s32.totalorder %s14, 0
    %p77 = por %p75, %p76
    %p78 = scmp.ne.s32.totalorder %s66, %s67
    %p79 = scmp.eq.s32.totalorder %s15, 1
    %p80 = por %p78, %p79
    %p82 = scmp.ne.s32.totalorder %s67, %s81
    %p83 = scmp.eq.s32.totalorder %s15, 0
    %p84 = por %p82, %p83
    %s85 = ssub.s32 %s9, %s16
    %p86 = scmp.eq.s32.totalorder %s85, 0
    %s88 = sadd.s32 %s87, 1
    %s89 = scalar_select %p86, %s87, %s88
    %p92 = pneg %p86
    %p93 = scmp.eq.s32.totalorder %s9, 1
    %p94 = por %p92, %p93
    %p95 = scmp.ne.s32.totalorder %s87, %s90
    %p96 = scmp.eq.s32.totalorder %s9, 0
    %p97 = por %p95, %p96
    %p98 = scmp.ne.s32.totalorder %s87, %s90
    %p99 = scmp.eq.s32.totalorder %s14, 1
    %p100 = por %p98, %p99
    %p101 = scmp.ne.s32.totalorder %s90, %s91
    %p102 = scmp.eq.s32.totalorder %s14, 0
    %p103 = por %p101, %p102
    %p104 = scmp.ne.s32.totalorder %s90, %s91
    %p105 = scmp.eq.s32.totalorder %s15, 1
    %p106 = por %p104, %p105
    %p108 = scmp.ne.s32.totalorder %s91, %s107
    %p109 = scmp.eq.s32.totalorder %s15, 0
    %p110 = por %p108, %p109
    %p111 = scmp.le.s32.totalorder 1, %s9
    %p112 = scmp.lt.s32.totalorder %s9, 3
    %p113 = pnand %p111, %p112
    %p114 = pneg %p113
    // Predicated region
    $region9: #{inception_v1_forward.6} parent=5 // pred_check
      _
    $region10: #{inception_v1_forward.6} parent=5 // pred_check_branch
      %116 = sbr.rel (%p113) target = $region12
    $region11: #{inception_v1_forward.6} parent=5 // pred_region
      %s117 = ssub.s32 %s9, 1
      // Predicated region
      $region13: #{inception_v1_forward.6} parent=11 // pred_check
        %p118 = pneg %p56
      $region14: #{inception_v1_forward.6} parent=11 // pred_check_branch
        %120 = sbr.rel (%p118) target = $region16
      $region15: #{inception_v1_forward.6} parent=11 // pred_region
        _
      $region16: #{inception_v1_forward.6} parent=11 // pred_fallthru
        _
      // Predicated region
      $region17: #{inception_v1_forward.6} parent=11 // pred_check
        %p121 = pneg %p77
      $region18: #{inception_v1_forward.6} parent=11 // pred_check_branch
        %123 = sbr.rel (%p121) target = $region20
      $region19: #{inception_v1_forward.6} parent=11 // pred_region
        _
      $region20: #{inception_v1_forward.6} parent=11 // pred_fallthru
        _
    $region12: #{inception_v1_forward.6} parent=5 // pred_fallthru
      _
    %p124 = scmp.lt.s32.totalorder %s9, 2
    // Predicated region
    $region21: #{inception_v1_forward.6} parent=5 // pred_check
      %p125 = pneg %p124
    $region22: #{inception_v1_forward.6} parent=5 // pred_check_branch
      %127 = sbr.rel (%p125) target = $region24
    $region23: #{inception_v1_forward.6} parent=5 // pred_region
      // Predicated region
      $region25: #{inception_v1_forward.6} parent=23 // pred_check
        %p128 = pneg %p29
      $region26: #{inception_v1_forward.6} parent=23 // pred_check_branch
        %130 = sbr.rel (%p128) target = $region28
      $region27: #{inception_v1_forward.6} parent=23 // pred_region
        %p131 = scmp.lt.s32.totalorder %s9, 1
        %s132 = scalar_select %p131, %s9, 1
        %s133 = smul.addr %s132, 32
        %s134 = smul.addr %s133, 8
        %s135 = scalar_lea.vmem %s0, %s134
      $region28: #{inception_v1_forward.6} parent=23 // pred_fallthru
        _
    $region24: #{inception_v1_forward.6} parent=5 // pred_fallthru
      _
    %p136 = scmp.le.s32.totalorder 1, %s9
    %p137 = scmp.lt.s32.totalorder %s9, 3
    %p138 = pnand %p136, %p137
    %p139 = pneg %p138
    // Predicated region
    $region29: #{inception_v1_forward.6} parent=5 // pred_check
      _
    $region30: #{inception_v1_forward.6} parent=5 // pred_check_branch
      %141 = sbr.rel (%p138) target = $region32
    $region31: #{inception_v1_forward.6} parent=5 // pred_region
      %s142 = ssub.s32 %s9, 1
      %p143 = scmp.lt.s32.totalorder %s14, 1
      %s144 = scalar_select %p143, %s14, 1
      %s145 = smul.addr %s144, 32
      %s146 = smul.addr %s145, 8
      %s147 = scalar_lea.vmem %s0, %s146
      %p148 = pneg %p35
      %p149 = pneg %p32
      %p150 = pneg %p56
      %p151 = pneg %p53
      %p152 = pneg %p77
      %p153 = pneg %p74
      %p154 = pneg %p103
      %p155 = pneg %p100
      %p156 = scmp.lt.s32.totalorder %s14, 1
      %s157 = scalar_select %p156, %s14, 1
      %s158 = smul.addr %s157, 32
      %s159 = smul.addr %s158, 8
      %s160 = scalar_lea.vmem %s3, %s159
      %p161 = scmp.lt.s32.totalorder %s14, 1
      %s162 = scalar_select %p161, %s14, 1
      %s163 = smul.addr %s162, 32
      %s164 = smul.addr %s163, 8
      %s165 = scalar_lea.vmem %s0, %s164
      %p166 = scmp.lt.s32.totalorder %s14, 1
      %s167 = scalar_select %p166, %s14, 1
      %s168 = smul.addr %s167, 32
      %s169 = smul.addr %s168, 8
      %s170 = scalar_lea.vmem %s3, %s169
      %v171 = vld [vmem:[%s165] sm:$0xff]
      %v172 = vld [vmem:[%s165 + $0x8] sm:$0xff]
      %v173 = vld [vmem:[%s165 + $0x10] sm:$0xff]
      %v174 = vld [vmem:[%s165 + $0x18] sm:$0xff]
      %v175 = vld [vmem:[%s165 + $0x20] sm:$0xff]
      %v176 = vld [vmem:[%s165 + $0x28] sm:$0xff]
      %v177 = vld [vmem:[%s165 + $0x30] sm:$0xff]
      %v178 = vld [vmem:[%s165 + $0x38] sm:$0xff]
      %v179 = vld [vmem:[%s165 + $0x40] sm:$0xff]
      %v180 = vld [vmem:[%s165 + $0x48] sm:$0xff]
      %v181 = vld [vmem:[%s165 + $0x50] sm:$0xff]
      %v182 = vld [vmem:[%s165 + $0x58] sm:$0xff]
      %v183 = vld [vmem:[%s165 + $0x60] sm:$0xff]
      %v184 = vld [vmem:[%s165 + $0x68] sm:$0xff]
      %v185 = vld [vmem:[%s165 + $0x70] sm:$0xff]
      %v186 = vld [vmem:[%s165 + $0x78] sm:$0xff]
      %v187 = vld [vmem:[%s165 + $0x80] sm:$0xff]
      %v188 = vld [vmem:[%s165 + $0x88] sm:$0xff]
      %v189 = vld [vmem:[%s165 + $0x90] sm:$0xff]
      %v190 = vld [vmem:[%s165 + $0x98] sm:$0xff]
      %v191 = vld [vmem:[%s165 + $0xa0] sm:$0xff]
      %v192 = vld [vmem:[%s165 + $0xa8] sm:$0xff]
      %v193 = vld [vmem:[%s165 + $0xb0] sm:$0xff]
      %v194 = vld [vmem:[%s165 + $0xb8] sm:$0xff]
      %v195 = vld [vmem:[%s165 + $0xc0] sm:$0xff]
      %v196 = vld [vmem:[%s165 + $0xc8] sm:$0xff]
      %v197 = vld [vmem:[%s165 + $0xd0] sm:$0xff]
      %v198 = vld [vmem:[%s165 + $0xd8] sm:$0xff]
      %v199 = vld [vmem:[%s165 + $0xe0] sm:$0xff]
      %v200 = vld [vmem:[%s165 + $0xe8] sm:$0xff]
      %v201 = vld [vmem:[%s165 + $0xf0] sm:$0xff]
      %v202 = vld [vmem:[%s165 + $0xf8] sm:$0xff]
      %vm232 = vcmask 1046528
      %v233 = vrot.slane 0.0, 1
      %v234 = vsel %vm232, %v233, %v233
      %v235 = vrot.slane %v171, 1
      %v236 = vsel %vm232, %v233, %v235
      %v237 = vrot.slane %v172, 1
      %v238 = vsel %vm232, %v235, %v237
      %v239 = vrot.slane %v173, 1
      %v240 = vsel %vm232, %v233, %v239
      %v241 = vrot.slane %v174, 1
      %v242 = vsel %vm232, %v239, %v241
      %v243 = vrot.slane %v175, 1
      %v244 = vsel %vm232, %v233, %v243
      %v245 = vrot.slane %v176, 1
      %v246 = vsel %vm232, %v243, %v245
      %v247 = vrot.slane %v177, 1
      %v248 = vsel %vm232, %v233, %v247
      %v249 = vrot.slane %v178, 1
      %v250 = vsel %vm232, %v247, %v249
      %v251 = vrot.slane %v179, 1
      %v252 = vsel %vm232, %v233, %v251
      %v253 = vrot.slane %v180, 1
      %v254 = vsel %vm232, %v251, %v253
      %v255 = vrot.slane %v181, 1
      %v256 = vsel %vm232, %v233, %v255
      %v257 = vrot.slane %v182, 1
      %v258 = vsel %vm232, %v255, %v257
      %v259 = vrot.slane %v183, 1
      %v260 = vsel %vm232, %v233, %v259
      %v261 = vrot.slane %v184, 1
      %v262 = vsel %vm232, %v259, %v261
      %v263 = vrot.slane %v185, 1
      %v264 = vsel %vm232, %v233, %v263
      %v265 = vrot.slane %v186, 1
      %v266 = vsel %vm232, %v263, %v265
      %v267 = vrot.slane %v187, 1
      %v268 = vsel %vm232, %v233, %v267
      %v269 = vrot.slane %v188, 1
      %v270 = vsel %vm232, %v267, %v269
      %v271 = vrot.slane %v189, 1
      %v272 = vsel %vm232, %v233, %v271
      %v273 = vrot.slane %v190, 1
      %v274 = vsel %vm232, %v271, %v273
      %v275 = vrot.slane %v191, 1
      %v276 = vsel %vm232, %v233, %v275
      %v277 = vrot.slane %v192, 1
      %v278 = vsel %vm232, %v275, %v277
      %v279 = vrot.slane %v193, 1
      %v280 = vsel %vm232, %v233, %v279
      %v281 = vrot.slane %v194, 1
      %v282 = vsel %vm232, %v279, %v281
      %v283 = vrot.slane %v195, 1
      %v284 = vsel %vm232, %v233, %v283
      %v285 = vrot.slane %v196, 1
      %v286 = vsel %vm232, %v283, %v285
      %v287 = vrot.slane %v197, 1
      %v288 = vsel %vm232, %v233, %v287
      %v289 = vrot.slane %v198, 1
      %v290 = vsel %vm232, %v287, %v289
      %vm291 = vcmask 1045504
      %v292 = vrot.slane 0.0, 2
      %v293 = vsel %vm291, %v292, %v292
      %v294 = vrot.slane %v171, 2
      %v295 = vrot.slane %v172, 2
      %v296 = vsel %vm291, %v294, %v295
      %v297 = vrot.slane %v173, 2
      %v298 = vrot.slane %v174, 2
      %v299 = vsel %vm291, %v297, %v298
      %v300 = vrot.slane %v175, 2
      %v301 = vrot.slane %v176, 2
      %v302 = vsel %vm291, %v300, %v301
      %v303 = vrot.slane %v177, 2
      %v304 = vrot.slane %v178, 2
      %v305 = vsel %vm291, %v303, %v304
      %v306 = vrot.slane %v179, 2
      %v307 = vrot.slane %v180, 2
      %v308 = vsel %vm291, %v306, %v307
      %v309 = vrot.slane %v181, 2
      %v310 = vrot.slane %v182, 2
      %v311 = vsel %vm291, %v309, %v310
      %v312 = vrot.slane %v183, 2
      %v313 = vrot.slane %v184, 2
      %v314 = vsel %vm291, %v312, %v313
      %v315 = vrot.slane %v185, 2
      %v316 = vrot.slane %v186, 2
      %v317 = vsel %vm291, %v315, %v316
      %v318 = vrot.slane %v187, 2
      %v319 = vrot.slane %v188, 2
      %v320 = vsel %vm291, %v318, %v319
      %v321 = vrot.slane %v189, 2
      %v322 = vrot.slane %v190, 2
      %v323 = vsel %vm291, %v321, %v322
      %v324 = vrot.slane %v191, 2
      %v325 = vrot.slane %v192, 2
      %v326 = vsel %vm291, %v324, %v325
      %v327 = vrot.slane %v193, 2
      %v328 = vrot.slane %v194, 2
      %v329 = vsel %vm291, %v327, %v328
      %v330 = vrot.slane %v195, 2
      %v331 = vrot.slane %v196, 2
      %v332 = vsel %vm291, %v330, %v331
      %v333 = vrot.slane %v197, 2
      %v334 = vrot.slane %v198, 2
      %v335 = vsel %vm291, %v333, %v334
      %vm336 = vcmask 1044480
      %v337 = vrot.slane 0.0, 3
      %v338 = vsel %vm336, %v337, %v337
      %v339 = vrot.slane %v171, 3
      %v340 = vrot.slane %v172, 3
      %v341 = vsel %vm336, %v339, %v340
      %v342 = vsel %vm336, %v340, %v337
      %v343 = vrot.slane %v173, 3
      %v344 = vrot.slane %v174, 3
      %v345 = vsel %vm336, %v343, %v344
      %v346 = vsel %vm336, %v344, %v337
      %v347 = vrot.slane %v175, 3
      %v348 = vrot.slane %v176, 3
      %v349 = vsel %vm336, %v347, %v348
      %v350 = vsel %vm336, %v348, %v337
      %v351 = vrot.slane %v177, 3
      %v352 = vrot.slane %v178, 3
      %v353 = vsel %vm336, %v351, %v352
      %v354 = vsel %vm336, %v352, %v337
      %v355 = vrot.slane %v179, 3
      %v356 = vrot.slane %v180, 3
      %v357 = vsel %vm336, %v355, %v356
      %v358 = vsel %vm336, %v356, %v337
      %v359 = vrot.slane %v181, 3
      %v360 = vrot.slane %v182, 3
      %v361 = vsel %vm336, %v359, %v360
      %v362 = vsel %vm336, %v360, %v337
      %v363 = vrot.slane %v183, 3
      %v364 = vrot.slane %v184, 3
      %v365 = vsel %vm336, %v363, %v364
      %v366 = vsel %vm336, %v364, %v337
      %v367 = vrot.slane %v185, 3
      %v368 = vrot.slane %v186, 3
      %v369 = vsel %vm336, %v367, %v368
      %v370 = vsel %vm336, %v368, %v337
      %v371 = vrot.slane %v187, 3
      %v372 = vrot.slane %v188, 3
      %v373 = vsel %vm336, %v371, %v372
      %v374 = vsel %vm336, %v372, %v337
      %v375 = vrot.slane %v189, 3
      %v376 = vrot.slane %v190, 3
      %v377 = vsel %vm336, %v375, %v376
      %v378 = vsel %vm336, %v376, %v337
      %v379 = vrot.slane %v191, 3
      %v380 = vrot.slane %v192, 3
      %v381 = vsel %vm336, %v379, %v380
      %v382 = vsel %vm336, %v380, %v337
      %v383 = vrot.slane %v193, 3
      %v384 = vrot.slane %v194, 3
      %v385 = vsel %vm336, %v383, %v384
      %v386 = vsel %vm336, %v384, %v337
      %v387 = vrot.slane %v195, 3
      %v388 = vrot.slane %v196, 3
      %v389 = vsel %vm336, %v387, %v388
      %v390 = vsel %vm336, %v388, %v337
      %v391 = vrot.slane %v197, 3
      %v392 = vrot.slane %v198, 3
      %v393 = vsel %vm336, %v391, %v392
      %v394 = vsel %vm336, %v392, %v337
      %vm395 = vcmask 1043456
      %v396 = vrot.slane 0.0, 4
      %v397 = vsel %vm395, %v396, %v396
      %v398 = vrot.slane %v171, 4
      %v399 = vrot.slane %v172, 4
      %v400 = vsel %vm395, %v398, %v399
      %v401 = vsel %vm395, %v399, %v396
      %v402 = vrot.slane %v173, 4
      %v403 = vrot.slane %v174, 4
      %v404 = vsel %vm395, %v402, %v403
      %v405 = vsel %vm395, %v403, %v396
      %v406 = vrot.slane %v175, 4
      %v407 = vrot.slane %v176, 4
      %v408 = vsel %vm395, %v406, %v407
      %v409 = vsel %vm395, %v407, %v396
      %v410 = vrot.slane %v177, 4
      %v411 = vrot.slane %v178, 4
      %v412 = vsel %vm395, %v410, %v411
      %v413 = vsel %vm395, %v411, %v396
      %v414 = vrot.slane %v179, 4
      %v415 = vrot.slane %v180, 4
      %v416 = vsel %vm395, %v414, %v415
      %v417 = vsel %vm395, %v415, %v396
      %v418 = vrot.slane %v181, 4
      %v419 = vrot.slane %v182, 4
      %v420 = vsel %vm395, %v418, %v419
      %v421 = vsel %vm395, %v419, %v396
      %v422 = vrot.slane %v183, 4
      %v423 = vrot.slane %v184, 4
      %v424 = vsel %vm395, %v422, %v423
      %v425 = vsel %vm395, %v423, %v396
      %v426 = vrot.slane %v185, 4
      %v427 = vrot.slane %v186, 4
      %v428 = vsel %vm395, %v426, %v427
      %v429 = vsel %vm395, %v427, %v396
      %v430 = vrot.slane %v187, 4
      %v431 = vrot.slane %v188, 4
      %v432 = vsel %vm395, %v430, %v431
      %v433 = vsel %vm395, %v431, %v396
      %v434 = vrot.slane %v189, 4
      %v435 = vrot.slane %v190, 4
      %v436 = vsel %vm395, %v434, %v435
      %v437 = vsel %vm395, %v435, %v396
      %v438 = vrot.slane %v191, 4
      %v439 = vrot.slane %v192, 4
      %v440 = vsel %vm395, %v438, %v439
      %v441 = vsel %vm395, %v439, %v396
      %v442 = vrot.slane %v193, 4
      %v443 = vrot.slane %v194, 4
      %v444 = vsel %vm395, %v442, %v443
      %v445 = vsel %vm395, %v443, %v396
      %v446 = vrot.slane %v195, 4
      %v447 = vrot.slane %v196, 4
      %v448 = vsel %vm395, %v446, %v447
      %v449 = vsel %vm395, %v447, %v396
      %v450 = vrot.slane %v197, 4
      %v451 = vrot.slane %v198, 4
      %v452 = vsel %vm395, %v450, %v451
      %v453 = vsel %vm395, %v451, %v396
      %v456 = vrot.slane %v199, 1
      %v457 = vsel %vm232, %v233, %v456
      %v458 = vrot.slane %v200, 1
      %v459 = vsel %vm232, %v456, %v458
      %v460 = vrot.slane %v199, 2
      %v461 = vrot.slane %v200, 2
      %v462 = vsel %vm291, %v460, %v461
      %v463 = vrot.slane %v199, 3
      %v464 = vrot.slane %v200, 3
      %v465 = vsel %vm336, %v463, %v464
      %v466 = vsel %vm336, %v464, %v337
      %v467 = vrot.slane %v199, 4
      %v468 = vrot.slane %v200, 4
      %v469 = vsel %vm395, %v467, %v468
      %v470 = vsel %vm395, %v468, %v396
      %v473 = vrot.slane %v201, 1
      %v474 = vsel %vm232, %v233, %v473
      %v475 = vrot.slane %v202, 1
      %v476 = vsel %vm232, %v473, %v475
      %v477 = vrot.slane %v201, 2
      %v478 = vrot.slane %v202, 2
      %v479 = vsel %vm291, %v477, %v478
      %v480 = vrot.slane %v201, 3
      %v481 = vrot.slane %v202, 3
      %v482 = vsel %vm336, %v480, %v481
      %v483 = vsel %vm336, %v481, %v337
      %v484 = vrot.slane %v201, 4
      %v485 = vrot.slane %v202, 4
      %v486 = vsel %vm395, %v484, %v485
      %v487 = vsel %vm395, %v485, %v396
      %v488 = vsel %vm291, %v298, %v292
      %v489 = vsel %vm291, %v301, %v292
      %v490 = vsel %vm291, %v304, %v292
      %v491 = vsel %vm291, %v307, %v292
      %v492 = vsel %vm291, %v310, %v292
      %v493 = vsel %vm291, %v313, %v292
      %v494 = vsel %vm291, %v316, %v292
      %v495 = vsel %vm291, %v319, %v292
      %v496 = vsel %vm291, %v322, %v292
      %v497 = vsel %vm291, %v325, %v292
      %v498 = vsel %vm291, %v328, %v292
      %v499 = vsel %vm291, %v331, %v292
      %v500 = vsel %vm291, %v334, %v292
      %v501 = vsel %vm291, %v461, %v292
      %v502 = vsel %vm291, %v478, %v292
      %vm503 = vcmask 1040384
      %v504 = vrot.slane 0.0, 7
      %v505 = vrot.slane %v175, 7
      %v506 = vsel %vm503, %v504, %v505
      %v507 = vrot.slane %v176, 7
      %v508 = vsel %vm503, %v505, %v507
      %v509 = vrot.slane %v177, 7
      %v510 = vsel %vm503, %v504, %v509
      %v511 = vrot.slane %v178, 7
      %v512 = vsel %vm503, %v509, %v511
      %v513 = vrot.slane %v179, 7
      %v514 = vsel %vm503, %v504, %v513
      %v515 = vrot.slane %v180, 7
      %v516 = vsel %vm503, %v513, %v515
      %v517 = vrot.slane %v181, 7
      %v518 = vsel %vm503, %v504, %v517
      %v519 = vrot.slane %v182, 7
      %v520 = vsel %vm503, %v517, %v519
      %v521 = vrot.slane %v183, 7
      %v522 = vsel %vm503, %v504, %v521
      %v523 = vrot.slane %v184, 7
      %v524 = vsel %vm503, %v521, %v523
      %v525 = vrot.slane %v185, 7
      %v526 = vsel %vm503, %v504, %v525
      %v527 = vrot.slane %v186, 7
      %v528 = vsel %vm503, %v525, %v527
      %v529 = vrot.slane %v187, 7
      %v530 = vsel %vm503, %v504, %v529
      %v531 = vrot.slane %v188, 7
      %v532 = vsel %vm503, %v529, %v531
      %v533 = vrot.slane %v189, 7
      %v534 = vsel %vm503, %v504, %v533
      %v535 = vrot.slane %v190, 7
      %v536 = vsel %vm503, %v533, %v535
      %v537 = vrot.slane %v191, 7
      %v538 = vsel %vm503, %v504, %v537
      %v539 = vrot.slane %v192, 7
      %v540 = vsel %vm503, %v537, %v539
      %v541 = vrot.slane %v193, 7
      %v542 = vsel %vm503, %v504, %v541
      %v543 = vrot.slane %v194, 7
      %v544 = vsel %vm503, %v541, %v543
      %v545 = vrot.slane %v195, 7
      %v546 = vsel %vm503, %v504, %v545
      %v547 = vrot.slane %v196, 7
      %v548 = vsel %vm503, %v545, %v547
      %v549 = vrot.slane %v197, 7
      %v550 = vsel %vm503, %v504, %v549
      %v551 = vrot.slane %v198, 7
      %v552 = vsel %vm503, %v549, %v551
      %v553 = vrot.slane %v199, 7
      %v554 = vsel %vm503, %v504, %v553
      %v555 = vrot.slane %v200, 7
      %v556 = vsel %vm503, %v553, %v555
      %v557 = vrot.slane %v201, 7
      %v558 = vsel %vm503, %v504, %v557
      %v559 = vrot.slane %v202, 7
      %v560 = vsel %vm503, %v557, %v559
      %v561 = vsel %vm503, %v504, %v504
      %v562 = vrot.slane %v239, 1
      %v563 = vrot.slane %v242, 1
      %v564 = vsel %vm232, %v562, %v563
      %v565 = vrot.slane %v297, 1
      %v566 = vrot.slane %v299, 1
      %v567 = vsel %vm232, %v565, %v566
      %v568 = vrot.slane %v343, 1
      %v569 = vrot.slane %v345, 1
      %v570 = vsel %vm232, %v568, %v569
      %v571 = vrot.slane %v504, 1
      %v572 = vrot.slane %v506, 1
      %v573 = vsel %vm232, %v571, %v572
      %v574 = vrot.slane %v243, 1
      %v575 = vrot.slane %v246, 1
      %v576 = vsel %vm232, %v574, %v575
      %v577 = vrot.slane %v300, 1
      %v578 = vrot.slane %v302, 1
      %v579 = vsel %vm232, %v577, %v578
      %v580 = vrot.slane %v347, 1
      %v581 = vrot.slane %v349, 1
      %v582 = vsel %vm232, %v580, %v581
      %v583 = vrot.slane %v241, 1
      %v584 = vsel %vm232, %v563, %v583
      %v585 = vrot.slane %v488, 1
      %v586 = vsel %vm232, %v566, %v585
      %v587 = vrot.slane %v346, 1
      %v588 = vsel %vm232, %v569, %v587
      %v589 = vrot.slane %v508, 1
      %v590 = vsel %vm232, %v572, %v589
      %v591 = vrot.slane %v245, 1
      %v592 = vsel %vm232, %v575, %v591
      %v593 = vrot.slane %v489, 1
      %v594 = vsel %vm232, %v578, %v593
      %v595 = vrot.slane %v350, 1
      %v596 = vsel %vm232, %v581, %v595
      %v597 = vrot.slane %v510, 1
      %v598 = vsel %vm232, %v571, %v597
      %v599 = vrot.slane %v247, 1
      %v600 = vrot.slane %v250, 1
      %v601 = vsel %vm232, %v599, %v600
      %v602 = vrot.slane %v303, 1
      %v603 = vrot.slane %v305, 1
      %v604 = vsel %vm232, %v602, %v603
      %v605 = vrot.slane %v351, 1
      %v606 = vrot.slane %v353, 1
      %v607 = vsel %vm232, %v605, %v606
      %v608 = vrot.slane %v512, 1
      %v609 = vsel %vm232, %v597, %v608
      %v610 = vrot.slane %v249, 1
      %v611 = vsel %vm232, %v600, %v610
      %v612 = vrot.slane %v490, 1
      %v613 = vsel %vm232, %v603, %v612
      %v614 = vrot.slane %v354, 1
      %v615 = vsel %vm232, %v606, %v614
      %v616 = vrot.slane %v514, 1
      %v617 = vsel %vm232, %v571, %v616
      %v618 = vrot.slane %v251, 1
      %v619 = vrot.slane %v254, 1
      %v620 = vsel %vm232, %v618, %v619
      %v621 = vrot.slane %v306, 1
      %v622 = vrot.slane %v308, 1
      %v623 = vsel %vm232, %v621, %v622
      %v624 = vrot.slane %v355, 1
      %v625 = vrot.slane %v357, 1
      %v626 = vsel %vm232, %v624, %v625
      %v627 = vrot.slane %v516, 1
      %v628 = vsel %vm232, %v616, %v627
      %v629 = vrot.slane %v253, 1
      %v630 = vsel %vm232, %v619, %v629
      %v631 = vrot.slane %v491, 1
      %v632 = vsel %vm232, %v622, %v631
      %v633 = vrot.slane %v358, 1
      %v634 = vsel %vm232, %v625, %v633
      %v635 = vrot.slane %v518, 1
      %v636 = vsel %vm232, %v571, %v635
      %v637 = vrot.slane %v255, 1
      %v638 = vrot.slane %v258, 1
      %v639 = vsel %vm232, %v637, %v638
      %v640 = vrot.slane %v309, 1
      %v641 = vrot.slane %v311, 1
      %v642 = vsel %vm232, %v640, %v641
      %v643 = vrot.slane %v359, 1
      %v644 = vrot.slane %v361, 1
      %v645 = vsel %vm232, %v643, %v644
      %v646 = vrot.slane %v520, 1
      %v647 = vsel %vm232, %v635, %v646
      %v648 = vrot.slane %v257, 1
      %v649 = vsel %vm232, %v638, %v648
      %v650 = vrot.slane %v492, 1
      %v651 = vsel %vm232, %v641, %v650
      %v652 = vrot.slane %v362, 1
      %v653 = vsel %vm232, %v644, %v652
      %v654 = vrot.slane %v522, 1
      %v655 = vsel %vm232, %v571, %v654
      %v656 = vrot.slane %v259, 1
      %v657 = vrot.slane %v262, 1
      %v658 = vsel %vm232, %v656, %v657
      %v659 = vrot.slane %v312, 1
      %v660 = vrot.slane %v314, 1
      %v661 = vsel %vm232, %v659, %v660
      %v662 = vrot.slane %v363, 1
      %v663 = vrot.slane %v365, 1
      %v664 = vsel %vm232, %v662, %v663
      %v665 = vrot.slane %v524, 1
      %v666 = vsel %vm232, %v654, %v665
      %v667 = vrot.slane %v261, 1
      %v668 = vsel %vm232, %v657, %v667
      %v669 = vrot.slane %v493, 1
      %v670 = vsel %vm232, %v660, %v669
      %v671 = vrot.slane %v366, 1
      %v672 = vsel %vm232, %v663, %v671
      %v673 = vrot.slane %v526, 1
      %v674 = vsel %vm232, %v571, %v673
      %v675 = vrot.slane %v263, 1
      %v676 = vrot.slane %v266, 1
      %v677 = vsel %vm232, %v675, %v676
      %v678 = vrot.slane %v315, 1
      %v679 = vrot.slane %v317, 1
      %v680 = vsel %vm232, %v678, %v679
      %v681 = vrot.slane %v367, 1
      %v682 = vrot.slane %v369, 1
      %v683 = vsel %vm232, %v681, %v682
      %v684 = vrot.slane %v528, 1
      %v685 = vsel %vm232, %v673, %v684
      %v686 = vrot.slane %v265, 1
      %v687 = vsel %vm232, %v676, %v686
      %v688 = vrot.slane %v494, 1
      %v689 = vsel %vm232, %v679, %v688
      %v690 = vrot.slane %v370, 1
      %v691 = vsel %vm232, %v682, %v690
      %v692 = vrot.slane %v530, 1
      %v693 = vsel %vm232, %v571, %v692
      %v694 = vrot.slane %v267, 1
      %v695 = vrot.slane %v270, 1
      %v696 = vsel %vm232, %v694, %v695
      %v697 = vrot.slane %v318, 1
      %v698 = vrot.slane %v320, 1
      %v699 = vsel %vm232, %v697, %v698
      %v700 = vrot.slane %v371, 1
      %v701 = vrot.slane %v373, 1
      %v702 = vsel %vm232, %v700, %v701
      %v703 = vrot.slane %v532, 1
      %v704 = vsel %vm232, %v692, %v703
      %v705 = vrot.slane %v269, 1
      %v706 = vsel %vm232, %v695, %v705
      %v707 = vrot.slane %v495, 1
      %v708 = vsel %vm232, %v698, %v707
      %v709 = vrot.slane %v374, 1
      %v710 = vsel %vm232, %v701, %v709
      %v711 = vrot.slane %v534, 1
      %v712 = vsel %vm232, %v571, %v711
      %v713 = vrot.slane %v271, 1
      %v714 = vrot.slane %v274, 1
      %v715 = vsel %vm232, %v713, %v714
      %v716 = vrot.slane %v321, 1
      %v717 = vrot.slane %v323, 1
      %v718 = vsel %vm232, %v716, %v717
      %v719 = vrot.slane %v375, 1
      %v720 = vrot.slane %v377, 1
      %v721 = vsel %vm232, %v719, %v720
      %v722 = vrot.slane %v536, 1
      %v723 = vsel %vm232, %v711, %v722
      %v724 = vrot.slane %v273, 1
      %v725 = vsel %vm232, %v714, %v724
      %v726 = vrot.slane %v496, 1
      %v727 = vsel %vm232, %v717, %v726
      %v728 = vrot.slane %v378, 1
      %v729 = vsel %vm232, %v720, %v728
      %v730 = vrot.slane %v538, 1
      %v731 = vsel %vm232, %v571, %v730
      %v732 = vrot.slane %v275, 1
      %v733 = vrot.slane %v278, 1
      %v734 = vsel %vm232, %v732, %v733
      %v735 = vrot.slane %v324, 1
      %v736 = vrot.slane %v326, 1
      %v737 = vsel %vm232, %v735, %v736
      %v738 = vrot.slane %v379, 1
      %v739 = vrot.slane %v381, 1
      %v740 = vsel %vm232, %v738, %v739
      %v741 = vrot.slane %v540, 1
      %v742 = vsel %vm232, %v730, %v741
      %v743 = vrot.slane %v277, 1
      %v744 = vsel %vm232, %v733, %v743
      %v745 = vrot.slane %v497, 1
      %v746 = vsel %vm232, %v736, %v745
      %v747 = vrot.slane %v382, 1
      %v748 = vsel %vm232, %v739, %v747
      %v749 = vrot.slane %v542, 1
      %v750 = vsel %vm232, %v571, %v749
      %v751 = vrot.slane %v279, 1
      %v752 = vrot.slane %v282, 1
      %v753 = vsel %vm232, %v751, %v752
      %v754 = vrot.slane %v327, 1
      %v755 = vrot.slane %v329, 1
      %v756 = vsel %vm232, %v754, %v755
      %v757 = vrot.slane %v383, 1
      %v758 = vrot.slane %v385, 1
      %v759 = vsel %vm232, %v757, %v758
      %v760 = vrot.slane %v544, 1
      %v761 = vsel %vm232, %v749, %v760
      %v762 = vrot.slane %v281, 1
      %v763 = vsel %vm232, %v752, %v762
      %v764 = vrot.slane %v498, 1
      %v765 = vsel %vm232, %v755, %v764
      %v766 = vrot.slane %v386, 1
      %v767 = vsel %vm232, %v758, %v766
      %v768 = vrot.slane %v546, 1
      %v769 = vsel %vm232, %v571, %v768
      %v770 = vrot.slane %v283, 1
      %v771 = vrot.slane %v286, 1
      %v772 = vsel %vm232, %v770, %v771
      %v773 = vrot.slane %v330, 1
      %v774 = vrot.slane %v332, 1
      %v775 = vsel %vm232, %v773, %v774
      %v776 = vrot.slane %v387, 1
      %v777 = vrot.slane %v389, 1
      %v778 = vsel %vm232, %v776, %v777
      %v779 = vrot.slane %v548, 1
      %v780 = vsel %vm232, %v768, %v779
      %v781 = vrot.slane %v285, 1
      %v782 = vsel %vm232, %v771, %v781
      %v783 = vrot.slane %v499, 1
      %v784 = vsel %vm232, %v774, %v783
      %v785 = vrot.slane %v390, 1
      %v786 = vsel %vm232, %v777, %v785
      %v787 = vrot.slane %v550, 1
      %v788 = vsel %vm232, %v571, %v787
      %v789 = vrot.slane %v287, 1
      %v790 = vrot.slane %v290, 1
      %v791 = vsel %vm232, %v789, %v790
      %v792 = vrot.slane %v333, 1
      %v793 = vrot.slane %v335, 1
      %v794 = vsel %vm232, %v792, %v793
      %v795 = vrot.slane %v391, 1
      %v796 = vrot.slane %v393, 1
      %v797 = vsel %vm232, %v795, %v796
      %v798 = vrot.slane %v552, 1
      %v799 = vsel %vm232, %v787, %v798
      %v800 = vrot.slane %v289, 1
      %v801 = vsel %vm232, %v790, %v800
      %v802 = vrot.slane %v500, 1
      %v803 = vsel %vm232, %v793, %v802
      %v804 = vrot.slane %v394, 1
      %v805 = vsel %vm232, %v796, %v804
      %v806 = vrot.slane %v554, 1
      %v807 = vsel %vm232, %v571, %v806
      %v808 = vrot.slane %v456, 1
      %v809 = vrot.slane %v459, 1
      %v810 = vsel %vm232, %v808, %v809
      %v811 = vrot.slane %v460, 1
      %v812 = vrot.slane %v462, 1
      %v813 = vsel %vm232, %v811, %v812
      %v814 = vrot.slane %v463, 1
      %v815 = vrot.slane %v465, 1
      %v816 = vsel %vm232, %v814, %v815
      %v817 = vrot.slane %v556, 1
      %v818 = vsel %vm232, %v806, %v817
      %v819 = vrot.slane %v458, 1
      %v820 = vsel %vm232, %v809, %v819
      %v821 = vrot.slane %v501, 1
      %v822 = vsel %vm232, %v812, %v821
      %v823 = vrot.slane %v466, 1
      %v824 = vsel %vm232, %v815, %v823
      %v825 = vrot.slane %v558, 1
      %v826 = vsel %vm232, %v571, %v825
      %v827 = vrot.slane %v473, 1
      %v828 = vrot.slane %v476, 1
      %v829 = vsel %vm232, %v827, %v828
      %v830 = vrot.slane %v477, 1
      %v831 = vrot.slane %v479, 1
      %v832 = vsel %vm232, %v830, %v831
      %v833 = vrot.slane %v480, 1
      %v834 = vrot.slane %v482, 1
      %v835 = vsel %vm232, %v833, %v834
      %v836 = vrot.slane %v560, 1
      %v837 = vsel %vm232, %v825, %v836
      %v838 = vrot.slane %v475, 1
      %v839 = vsel %vm232, %v828, %v838
      %v840 = vrot.slane %v502, 1
      %v841 = vsel %vm232, %v831, %v840
      %v842 = vrot.slane %v483, 1
      %v843 = vsel %vm232, %v834, %v842
      %v844 = vrot.slane %v561, 1
      %v845 = vsel %vm232, %v571, %v844
      %v846 = vrot.slane %v233, 1
      %v847 = vrot.slane %v234, 1
      %v848 = vsel %vm232, %v846, %v847
      %v849 = vrot.slane %v292, 1
      %v850 = vrot.slane %v293, 1
      %v851 = vsel %vm232, %v849, %v850
      %v852 = vrot.slane %v337, 1
      %v853 = vrot.slane %v338, 1
      %v854 = vsel %vm232, %v852, %v853
      %v855 = vsel %vm232, %v844, %v844
      %v856 = vsel %vm232, %v847, %v846
      %v857 = vsel %vm232, %v850, %v850
      %v858 = vsel %vm232, %v853, %v853
      %vm859 = vcmask 1041408
      %v860 = vrot.slane 0.0, 6
      %v861 = vsel %vm859, %v860, %v860
      %v862 = vrot.slane %v234, 6
      %v863 = vsel %vm859, %v862, %v862
      %v864 = vrot.slane %v292, 6
      %v865 = vrot.slane %v293, 6
      %v866 = vsel %vm859, %v864, %v865
      %v867 = vrot.slane %v337, 6
      %v868 = vrot.slane %v338, 6
      %v869 = vsel %vm859, %v867, %v868
      %v870 = vrot.slane %v396, 6
      %v871 = vrot.slane %v397, 6
      %v872 = vsel %vm859, %v870, %v871
      %v873 = vrot.slane %v171, 6
      %v874 = vsel %vm859, %v860, %v873
      %v875 = vrot.slane %v236, 6
      %v876 = vrot.slane %v238, 6
      %v877 = vsel %vm859, %v875, %v876
      %v878 = vrot.slane %v294, 6
      %v879 = vrot.slane %v296, 6
      %v880 = vsel %vm859, %v878, %v879
      %v881 = vrot.slane %v339, 6
      %v882 = vrot.slane %v341, 6
      %v883 = vsel %vm859, %v881, %v882
      %v884 = vrot.slane %v398, 6
      %v885 = vrot.slane %v400, 6
      %v886 = vsel %vm859, %v884, %v885
      %v887 = vrot.slane %v173, 6
      %v888 = vsel %vm859, %v860, %v887
      %v889 = vrot.slane %v240, 6
      %v890 = vrot.slane %v242, 6
      %v891 = vsel %vm859, %v889, %v890
      %v892 = vrot.slane %v564, 6
      %v893 = vrot.slane %v584, 6
      %v894 = vsel %vm859, %v892, %v893
      %v895 = vrot.slane %v567, 6
      %v896 = vrot.slane %v586, 6
      %v897 = vsel %vm859, %v895, %v896
      %v898 = vrot.slane %v570, 6
      %v899 = vrot.slane %v588, 6
      %v900 = vsel %vm859, %v898, %v899
      %v901 = vrot.slane %v573, 6
      %v902 = vrot.slane %v590, 6
      %v903 = vsel %vm859, %v901, %v902
      %v904 = vrot.slane %v244, 6
      %v905 = vrot.slane %v246, 6
      %v906 = vsel %vm859, %v904, %v905
      %v907 = vrot.slane %v576, 6
      %v908 = vrot.slane %v592, 6
      %v909 = vsel %vm859, %v907, %v908
      %v910 = vrot.slane %v579, 6
      %v911 = vrot.slane %v594, 6
      %v912 = vsel %vm859, %v910, %v911
      %v913 = vrot.slane %v582, 6
      %v914 = vrot.slane %v596, 6
      %v915 = vsel %vm859, %v913, %v914
      %v916 = vrot.slane %v233, 6
      %v917 = vsel %vm859, %v862, %v916
      %v918 = vsel %vm859, %v865, %v864
      %v919 = vsel %vm859, %v868, %v868
      %v920 = vsel %vm859, %v871, %v871
      %v921 = vrot.slane %v172, 6
      %v922 = vsel %vm859, %v873, %v921
      %v923 = vrot.slane %v237, 6
      %v924 = vsel %vm859, %v876, %v923
      %v925 = vrot.slane %v295, 6
      %v926 = vsel %vm859, %v879, %v925
      %v927 = vrot.slane %v342, 6
      %v928 = vsel %vm859, %v882, %v927
      %v929 = vrot.slane %v401, 6
      %v930 = vsel %vm859, %v885, %v929
      %v931 = vrot.slane %v174, 6
      %v932 = vsel %vm859, %v887, %v931
      %v933 = vrot.slane %v241, 6
      %v934 = vsel %vm859, %v890, %v933
      %v935 = vrot.slane %v583, 6
      %v936 = vsel %vm859, %v893, %v935
      %v937 = vrot.slane %v585, 6
      %v938 = vsel %vm859, %v896, %v937
      %v939 = vrot.slane %v587, 6
      %v940 = vsel %vm859, %v899, %v939
      %v941 = vrot.slane %v589, 6
      %v942 = vsel %vm859, %v902, %v941
      %v943 = vrot.slane %v245, 6
      %v944 = vsel %vm859, %v905, %v943
      %v945 = vrot.slane %v591, 6
      %v946 = vsel %vm859, %v908, %v945
      %v947 = vrot.slane %v593, 6
      %v948 = vsel %vm859, %v911, %v947
      %v949 = vrot.slane %v595, 6
      %v950 = vsel %vm859, %v914, %v949
      %v951 = vrot.slane %v297, 6
      %v952 = vrot.slane %v299, 6
      %v953 = vsel %vm859, %v951, %v952
      %v954 = vrot.slane %v343, 6
      %v955 = vrot.slane %v345, 6
      %v956 = vsel %vm859, %v954, %v955
      %v957 = vrot.slane %v402, 6
      %v958 = vrot.slane %v404, 6
      %v959 = vsel %vm859, %v957, %v958
      %v960 = vrot.slane %v175, 6
      %v961 = vsel %vm859, %v860, %v960
      %v962 = vrot.slane %v598, 6
      %v963 = vrot.slane %v609, 6
      %v964 = vsel %vm859, %v962, %v963
      %v965 = vrot.slane %v248, 6
      %v966 = vrot.slane %v250, 6
      %v967 = vsel %vm859, %v965, %v966
      %v968 = vrot.slane %v601, 6
      %v969 = vrot.slane %v611, 6
      %v970 = vsel %vm859, %v968, %v969
      %v971 = vrot.slane %v604, 6
      %v972 = vrot.slane %v613, 6
      %v973 = vsel %vm859, %v971, %v972
      %v974 = vrot.slane %v607, 6
      %v975 = vrot.slane %v615, 6
      %v976 = vsel %vm859, %v974, %v975
      %v977 = vrot.slane %v298, 6
      %v978 = vsel %vm859, %v952, %v977
      %v979 = vrot.slane %v346, 6
      %v980 = vsel %vm859, %v955, %v979
      %v981 = vrot.slane %v405, 6
      %v982 = vsel %vm859, %v958, %v981
      %v983 = vrot.slane %v176, 6
      %v984 = vsel %vm859, %v960, %v983
      %v985 = vrot.slane %v608, 6
      %v986 = vsel %vm859, %v963, %v985
      %v987 = vrot.slane %v249, 6
      %v988 = vsel %vm859, %v966, %v987
      %v989 = vrot.slane %v610, 6
      %v990 = vsel %vm859, %v969, %v989
      %v991 = vrot.slane %v612, 6
      %v992 = vsel %vm859, %v972, %v991
      %v993 = vrot.slane %v614, 6
      %v994 = vsel %vm859, %v975, %v993
      %v995 = vrot.slane %v300, 6
      %v996 = vrot.slane %v302, 6
      %v997 = vsel %vm859, %v995, %v996
      %v998 = vrot.slane %v347, 6
      %v999 = vrot.slane %v349, 6
      %v1000 = vsel %vm859, %v998, %v999
      %v1001 = vrot.slane %v406, 6
      %v1002 = vrot.slane %v408, 6
      %v1003 = vsel %vm859, %v1001, %v1002
      %v1004 = vrot.slane %v177, 6
      %v1005 = vsel %vm859, %v860, %v1004
      %v1006 = vrot.slane %v617, 6
      %v1007 = vrot.slane %v628, 6
      %v1008 = vsel %vm859, %v1006, %v1007
      %v1009 = vrot.slane %v252, 6
      %v1010 = vrot.slane %v254, 6
      %v1011 = vsel %vm859, %v1009, %v1010
      %v1012 = vrot.slane %v620, 6
      %v1013 = vrot.slane %v630, 6
      %v1014 = vsel %vm859, %v1012, %v1013
      %v1015 = vrot.slane %v623, 6
      %v1016 = vrot.slane %v632, 6
      %v1017 = vsel %vm859, %v1015, %v1016
      %v1018 = vrot.slane %v626, 6
      %v1019 = vrot.slane %v634, 6
      %v1020 = vsel %vm859, %v1018, %v1019
      %v1021 = vrot.slane %v301, 6
      %v1022 = vsel %vm859, %v996, %v1021
      %v1023 = vrot.slane %v350, 6
      %v1024 = vsel %vm859, %v999, %v1023
      %v1025 = vrot.slane %v409, 6
      %v1026 = vsel %vm859, %v1002, %v1025
      %v1027 = vrot.slane %v178, 6
      %v1028 = vsel %vm859, %v1004, %v1027
      %v1029 = vrot.slane %v627, 6
      %v1030 = vsel %vm859, %v1007, %v1029
      %v1031 = vrot.slane %v253, 6
      %v1032 = vsel %vm859, %v1010, %v1031
      %v1033 = vrot.slane %v629, 6
      %v1034 = vsel %vm859, %v1013, %v1033
      %v1035 = vrot.slane %v631, 6
      %v1036 = vsel %vm859, %v1016, %v1035
      %v1037 = vrot.slane %v633, 6
      %v1038 = vsel %vm859, %v1019, %v1037
      %v1039 = vrot.slane %v303, 6
      %v1040 = vrot.slane %v305, 6
      %v1041 = vsel %vm859, %v1039, %v1040
      %v1042 = vrot.slane %v351, 6
      %v1043 = vrot.slane %v353, 6
      %v1044 = vsel %vm859, %v1042, %v1043
      %v1045 = vrot.slane %v410, 6
      %v1046 = vrot.slane %v412, 6
      %v1047 = vsel %vm859, %v1045, %v1046
      %v1048 = vrot.slane %v179, 6
      %v1049 = vsel %vm859, %v860, %v1048
      %v1050 = vrot.slane %v636, 6
      %v1051 = vrot.slane %v647, 6
      %v1052 = vsel %vm859, %v1050, %v1051
      %v1053 = vrot.slane %v256, 6
      %v1054 = vrot.slane %v258, 6
      %v1055 = vsel %vm859, %v1053, %v1054
      %v1056 = vrot.slane %v639, 6
      %v1057 = vrot.slane %v649, 6
      %v1058 = vsel %vm859, %v1056, %v1057
      %v1059 = vrot.slane %v642, 6
      %v1060 = vrot.slane %v651, 6
      %v1061 = vsel %vm859, %v1059, %v1060
      %v1062 = vrot.slane %v645, 6
      %v1063 = vrot.slane %v653, 6
      %v1064 = vsel %vm859, %v1062, %v1063
      %v1065 = vrot.slane %v304, 6
      %v1066 = vsel %vm859, %v1040, %v1065
      %v1067 = vrot.slane %v354, 6
      %v1068 = vsel %vm859, %v1043, %v1067
      %v1069 = vrot.slane %v413, 6
      %v1070 = vsel %vm859, %v1046, %v1069
      %v1071 = vrot.slane %v180, 6
      %v1072 = vsel %vm859, %v1048, %v1071
      %v1073 = vrot.slane %v646, 6
      %v1074 = vsel %vm859, %v1051, %v1073
      %v1075 = vrot.slane %v257, 6
      %v1076 = vsel %vm859, %v1054, %v1075
      %v1077 = vrot.slane %v648, 6
      %v1078 = vsel %vm859, %v1057, %v1077
      %v1079 = vrot.slane %v650, 6
      %v1080 = vsel %vm859, %v1060, %v1079
      %v1081 = vrot.slane %v652, 6
      %v1082 = vsel %vm859, %v1063, %v1081
      %v1083 = vrot.slane %v306, 6
      %v1084 = vrot.slane %v308, 6
      %v1085 = vsel %vm859, %v1083, %v1084
      %v1086 = vrot.slane %v355, 6
      %v1087 = vrot.slane %v357, 6
      %v1088 = vsel %vm859, %v1086, %v1087
      %v1089 = vrot.slane %v414, 6
      %v1090 = vrot.slane %v416, 6
      %v1091 = vsel %vm859, %v1089, %v1090
      %v1092 = vrot.slane %v181, 6
      %v1093 = vsel %vm859, %v860, %v1092
      %v1094 = vrot.slane %v655, 6
      %v1095 = vrot.slane %v666, 6
      %v1096 = vsel %vm859, %v1094, %v1095
      %v1097 = vrot.slane %v260, 6
      %v1098 = vrot.slane %v262, 6
      %v1099 = vsel %vm859, %v1097, %v1098
      %v1100 = vrot.slane %v658, 6
      %v1101 = vrot.slane %v668, 6
      %v1102 = vsel %vm859, %v1100, %v1101
      %v1103 = vrot.slane %v661, 6
      %v1104 = vrot.slane %v670, 6
      %v1105 = vsel %vm859, %v1103, %v1104
      %v1106 = vrot.slane %v664, 6
      %v1107 = vrot.slane %v672, 6
      %v1108 = vsel %vm859, %v1106, %v1107
      %v1109 = vrot.slane %v307, 6
      %v1110 = vsel %vm859, %v1084, %v1109
      %v1111 = vrot.slane %v358, 6
      %v1112 = vsel %vm859, %v1087, %v1111
      %v1113 = vrot.slane %v417, 6
      %v1114 = vsel %vm859, %v1090, %v1113
      %v1115 = vrot.slane %v182, 6
      %v1116 = vsel %vm859, %v1092, %v1115
      %v1117 = vrot.slane %v665, 6
      %v1118 = vsel %vm859, %v1095, %v1117
      %v1119 = vrot.slane %v261, 6
      %v1120 = vsel %vm859, %v1098, %v1119
      %v1121 = vrot.slane %v667, 6
      %v1122 = vsel %vm859, %v1101, %v1121
      %v1123 = vrot.slane %v669, 6
      %v1124 = vsel %vm859, %v1104, %v1123
      %v1125 = vrot.slane %v671, 6
      %v1126 = vsel %vm859, %v1107, %v1125
      %v1127 = vrot.slane %v309, 6
      %v1128 = vrot.slane %v311, 6
      %v1129 = vsel %vm859, %v1127, %v1128
      %v1130 = vrot.slane %v359, 6
      %v1131 = vrot.slane %v361, 6
      %v1132 = vsel %vm859, %v1130, %v1131
      %v1133 = vrot.slane %v418, 6
      %v1134 = vrot.slane %v420, 6
      %v1135 = vsel %vm859, %v1133, %v1134
      %v1136 = vrot.slane %v183, 6
      %v1137 = vsel %vm859, %v860, %v1136
      %v1138 = vrot.slane %v674, 6
      %v1139 = vrot.slane %v685, 6
      %v1140 = vsel %vm859, %v1138, %v1139
      %v1141 = vrot.slane %v264, 6
      %v1142 = vrot.slane %v266, 6
      %v1143 = vsel %vm859, %v1141, %v1142
      %v1144 = vrot.slane %v677, 6
      %v1145 = vrot.slane %v687, 6
      %v1146 = vsel %vm859, %v1144, %v1145
      %v1147 = vrot.slane %v680, 6
      %v1148 = vrot.slane %v689, 6
      %v1149 = vsel %vm859, %v1147, %v1148
      %v1150 = vrot.slane %v683, 6
      %v1151 = vrot.slane %v691, 6
      %v1152 = vsel %vm859, %v1150, %v1151
      %v1153 = vrot.slane %v310, 6
      %v1154 = vsel %vm859, %v1128, %v1153
      %v1155 = vrot.slane %v362, 6
      %v1156 = vsel %vm859, %v1131, %v1155
      %v1157 = vrot.slane %v421, 6
      %v1158 = vsel %vm859, %v1134, %v1157
      %v1159 = vrot.slane %v184, 6
      %v1160 = vsel %vm859, %v1136, %v1159
      %v1161 = vrot.slane %v684, 6
      %v1162 = vsel %vm859, %v1139, %v1161
      %v1163 = vrot.slane %v265, 6
      %v1164 = vsel %vm859, %v1142, %v1163
      %v1165 = vrot.slane %v686, 6
      %v1166 = vsel %vm859, %v1145, %v1165
      %v1167 = vrot.slane %v688, 6
      %v1168 = vsel %vm859, %v1148, %v1167
      %v1169 = vrot.slane %v690, 6
      %v1170 = vsel %vm859, %v1151, %v1169
      %v1171 = vrot.slane %v312, 6
      %v1172 = vrot.slane %v314, 6
      %v1173 = vsel %vm859, %v1171, %v1172
      %v1174 = vrot.slane %v363, 6
      %v1175 = vrot.slane %v365, 6
      %v1176 = vsel %vm859, %v1174, %v1175
      %v1177 = vrot.slane %v422, 6
      %v1178 = vrot.slane %v424, 6
      %v1179 = vsel %vm859, %v1177, %v1178
      %v1180 = vrot.slane %v185, 6
      %v1181 = vsel %vm859, %v860, %v1180
      %v1182 = vrot.slane %v693, 6
      %v1183 = vrot.slane %v704, 6
      %v1184 = vsel %vm859, %v1182, %v1183
      %v1185 = vrot.slane %v268, 6
      %v1186 = vrot.slane %v270, 6
      %v1187 = vsel %vm859, %v1185, %v1186
      %v1188 = vrot.slane %v696, 6
      %v1189 = vrot.slane %v706, 6
      %v1190 = vsel %vm859, %v1188, %v1189
      %v1191 = vrot.slane %v699, 6
      %v1192 = vrot.slane %v708, 6
      %v1193 = vsel %vm859, %v1191, %v1192
      %v1194 = vrot.slane %v702, 6
      %v1195 = vrot.slane %v710, 6
      %v1196 = vsel %vm859, %v1194, %v1195
      %v1197 = vrot.slane %v313, 6
      %v1198 = vsel %vm859, %v1172, %v1197
      %v1199 = vrot.slane %v366, 6
      %v1200 = vsel %vm859, %v1175, %v1199
      %v1201 = vrot.slane %v425, 6
      %v1202 = vsel %vm859, %v1178, %v1201
      %v1203 = vrot.slane %v186, 6
      %v1204 = vsel %vm859, %v1180, %v1203
      %v1205 = vrot.slane %v703, 6
      %v1206 = vsel %vm859, %v1183, %v1205
      %v1207 = vrot.slane %v269, 6
      %v1208 = vsel %vm859, %v1186, %v1207
      %v1209 = vrot.slane %v705, 6
      %v1210 = vsel %vm859, %v1189, %v1209
      %v1211 = vrot.slane %v707, 6
      %v1212 = vsel %vm859, %v1192, %v1211
      %v1213 = vrot.slane %v709, 6
      %v1214 = vsel %vm859, %v1195, %v1213
      %v1215 = vrot.slane %v315, 6
      %v1216 = vrot.slane %v317, 6
      %v1217 = vsel %vm859, %v1215, %v1216
      %v1218 = vrot.slane %v367, 6
      %v1219 = vrot.slane %v369, 6
      %v1220 = vsel %vm859, %v1218, %v1219
      %v1221 = vrot.slane %v426, 6
      %v1222 = vrot.slane %v428, 6
      %v1223 = vsel %vm859, %v1221, %v1222
      %v1224 = vrot.slane %v187, 6
      %v1225 = vsel %vm859, %v860, %v1224
      %v1226 = vrot.slane %v712, 6
      %v1227 = vrot.slane %v723, 6
      %v1228 = vsel %vm859, %v1226, %v1227
      %v1229 = vrot.slane %v272, 6
      %v1230 = vrot.slane %v274, 6
      %v1231 = vsel %vm859, %v1229, %v1230
      %v1232 = vrot.slane %v715, 6
      %v1233 = vrot.slane %v725, 6
      %v1234 = vsel %vm859, %v1232, %v1233
      %v1235 = vrot.slane %v718, 6
      %v1236 = vrot.slane %v727, 6
      %v1237 = vsel %vm859, %v1235, %v1236
      %v1238 = vrot.slane %v721, 6
      %v1239 = vrot.slane %v729, 6
      %v1240 = vsel %vm859, %v1238, %v1239
      %v1241 = vrot.slane %v316, 6
      %v1242 = vsel %vm859, %v1216, %v1241
      %v1243 = vrot.slane %v370, 6
      %v1244 = vsel %vm859, %v1219, %v1243
      %v1245 = vrot.slane %v429, 6
      %v1246 = vsel %vm859, %v1222, %v1245
      %v1247 = vrot.slane %v188, 6
      %v1248 = vsel %vm859, %v1224, %v1247
      %v1249 = vrot.slane %v722, 6
      %v1250 = vsel %vm859, %v1227, %v1249
      %v1251 = vrot.slane %v273, 6
      %v1252 = vsel %vm859, %v1230, %v1251
      %v1253 = vrot.slane %v724, 6
      %v1254 = vsel %vm859, %v1233, %v1253
      %v1255 = vrot.slane %v726, 6
      %v1256 = vsel %vm859, %v1236, %v1255
      %v1257 = vrot.slane %v728, 6
      %v1258 = vsel %vm859, %v1239, %v1257
      %v1259 = vrot.slane %v318, 6
      %v1260 = vrot.slane %v320, 6
      %v1261 = vsel %vm859, %v1259, %v1260
      %v1262 = vrot.slane %v371, 6
      %v1263 = vrot.slane %v373, 6
      %v1264 = vsel %vm859, %v1262, %v1263
      %v1265 = vrot.slane %v430, 6
      %v1266 = vrot.slane %v432, 6
      %v1267 = vsel %vm859, %v1265, %v1266
      %v1268 = vrot.slane %v189, 6
      %v1269 = vsel %vm859, %v860, %v1268
      %v1270 = vrot.slane %v731, 6
      %v1271 = vrot.slane %v742, 6
      %v1272 = vsel %vm859, %v1270, %v1271
      %v1273 = vrot.slane %v276, 6
      %v1274 = vrot.slane %v278, 6
      %v1275 = vsel %vm859, %v1273, %v1274
      %v1276 = vrot.slane %v734, 6
      %v1277 = vrot.slane %v744, 6
      %v1278 = vsel %vm859, %v1276, %v1277
      %v1279 = vrot.slane %v737, 6
      %v1280 = vrot.slane %v746, 6
      %v1281 = vsel %vm859, %v1279, %v1280
      %v1282 = vrot.slane %v740, 6
      %v1283 = vrot.slane %v748, 6
      %v1284 = vsel %vm859, %v1282, %v1283
      %v1285 = vrot.slane %v319, 6
      %v1286 = vsel %vm859, %v1260, %v1285
      %v1287 = vrot.slane %v374, 6
      %v1288 = vsel %vm859, %v1263, %v1287
      %v1289 = vrot.slane %v433, 6
      %v1290 = vsel %vm859, %v1266, %v1289
      %v1291 = vrot.slane %v190, 6
      %v1292 = vsel %vm859, %v1268, %v1291
      %v1293 = vrot.slane %v741, 6
      %v1294 = vsel %vm859, %v1271, %v1293
      %v1295 = vrot.slane %v277, 6
      %v1296 = vsel %vm859, %v1274, %v1295
      %v1297 = vrot.slane %v743, 6
      %v1298 = vsel %vm859, %v1277, %v1297
      %v1299 = vrot.slane %v745, 6
      %v1300 = vsel %vm859, %v1280, %v1299
      %v1301 = vrot.slane %v747, 6
      %v1302 = vsel %vm859, %v1283, %v1301
      %v1303 = vrot.slane %v321, 6
      %v1304 = vrot.slane %v323, 6
      %v1305 = vsel %vm859, %v1303, %v1304
      %v1306 = vrot.slane %v375, 6
      %v1307 = vrot.slane %v377, 6
      %v1308 = vsel %vm859, %v1306, %v1307
      %v1309 = vrot.slane %v434, 6
      %v1310 = vrot.slane %v436, 6
      %v1311 = vsel %vm859, %v1309, %v1310
      %v1312 = vrot.slane %v191, 6
      %v1313 = vsel %vm859, %v860, %v1312
      %v1314 = vrot.slane %v750, 6
      %v1315 = vrot.slane %v761, 6
      %v1316 = vsel %vm859, %v1314, %v1315
      %v1317 = vrot.slane %v280, 6
      %v1318 = vrot.slane %v282, 6
      %v1319 = vsel %vm859, %v1317, %v1318
      %v1320 = vrot.slane %v753, 6
      %v1321 = vrot.slane %v763, 6
      %v1322 = vsel %vm859, %v1320, %v1321
      %v1323 = vrot.slane %v756, 6
      %v1324 = vrot.slane %v765, 6
      %v1325 = vsel %vm859, %v1323, %v1324
      %v1326 = vrot.slane %v759, 6
      %v1327 = vrot.slane %v767, 6
      %v1328 = vsel %vm859, %v1326, %v1327
      %v1329 = vrot.slane %v322, 6
      %v1330 = vsel %vm859, %v1304, %v1329
      %v1331 = vrot.slane %v378, 6
      %v1332 = vsel %vm859, %v1307, %v1331
      %v1333 = vrot.slane %v437, 6
      %v1334 = vsel %vm859, %v1310, %v1333
      %v1335 = vrot.slane %v192, 6
      %v1336 = vsel %vm859, %v1312, %v1335
      %v1337 = vrot.slane %v760, 6
      %v1338 = vsel %vm859, %v1315, %v1337
      %v1339 = vrot.slane %v281, 6
      %v1340 = vsel %vm859, %v1318, %v1339
      %v1341 = vrot.slane %v762, 6
      %v1342 = vsel %vm859, %v1321, %v1341
      %v1343 = vrot.slane %v764, 6
      %v1344 = vsel %vm859, %v1324, %v1343
      %v1345 = vrot.slane %v766, 6
      %v1346 = vsel %vm859, %v1327, %v1345
      %v1347 = vrot.slane %v324, 6
      %v1348 = vrot.slane %v326, 6
      %v1349 = vsel %vm859, %v1347, %v1348
      %v1350 = vrot.slane %v379, 6
      %v1351 = vrot.slane %v381, 6
      %v1352 = vsel %vm859, %v1350, %v1351
      %v1353 = vrot.slane %v438, 6
      %v1354 = vrot.slane %v440, 6
      %v1355 = vsel %vm859, %v1353, %v1354
      %v1356 = vrot.slane %v193, 6
      %v1357 = vsel %vm859, %v860, %v1356
      %v1358 = vrot.slane %v769, 6
      %v1359 = vrot.slane %v780, 6
      %v1360 = vsel %vm859, %v1358, %v1359
      %v1361 = vrot.slane %v284, 6
      %v1362 = vrot.slane %v286, 6
      %v1363 = vsel %vm859, %v1361, %v1362
      %v1364 = vrot.slane %v772, 6
      %v1365 = vrot.slane %v782, 6
      %v1366 = vsel %vm859, %v1364, %v1365
      %v1367 = vrot.slane %v775, 6
      %v1368 = vrot.slane %v784, 6
      %v1369 = vsel %vm859, %v1367, %v1368
      %v1370 = vrot.slane %v778, 6
      %v1371 = vrot.slane %v786, 6
      %v1372 = vsel %vm859, %v1370, %v1371
      %v1373 = vrot.slane %v325, 6
      %v1374 = vsel %vm859, %v1348, %v1373
      %v1375 = vrot.slane %v382, 6
      %v1376 = vsel %vm859, %v1351, %v1375
      %v1377 = vrot.slane %v441, 6
      %v1378 = vsel %vm859, %v1354, %v1377
      %v1379 = vrot.slane %v194, 6
      %v1380 = vsel %vm859, %v1356, %v1379
      %v1381 = vrot.slane %v779, 6
      %v1382 = vsel %vm859, %v1359, %v1381
      %v1383 = vrot.slane %v285, 6
      %v1384 = vsel %vm859, %v1362, %v1383
      %v1385 = vrot.slane %v781, 6
      %v1386 = vsel %vm859, %v1365, %v1385
      %v1387 = vrot.slane %v783, 6
      %v1388 = vsel %vm859, %v1368, %v1387
      %v1389 = vrot.slane %v785, 6
      %v1390 = vsel %vm859, %v1371, %v1389
      %v1391 = vrot.slane %v327, 6
      %v1392 = vrot.slane %v329, 6
      %v1393 = vsel %vm859, %v1391, %v1392
      %v1394 = vrot.slane %v383, 6
      %v1395 = vrot.slane %v385, 6
      %v1396 = vsel %vm859, %v1394, %v1395
      %v1397 = vrot.slane %v442, 6
      %v1398 = vrot.slane %v444, 6
      %v1399 = vsel %vm859, %v1397, %v1398
      %v1400 = vrot.slane %v195, 6
      %v1401 = vsel %vm859, %v860, %v1400
      %v1402 = vrot.slane %v788, 6
      %v1403 = vrot.slane %v799, 6
      %v1404 = vsel %vm859, %v1402, %v1403
      %v1405 = vrot.slane %v288, 6
      %v1406 = vrot.slane %v290, 6
      %v1407 = vsel %vm859, %v1405, %v1406
      %v1408 = vrot.slane %v791, 6
      %v1409 = vrot.slane %v801, 6
      %v1410 = vsel %vm859, %v1408, %v1409
      %v1411 = vrot.slane %v794, 6
      %v1412 = vrot.slane %v803, 6
      %v1413 = vsel %vm859, %v1411, %v1412
      %v1414 = vrot.slane %v797, 6
      %v1415 = vrot.slane %v805, 6
      %v1416 = vsel %vm859, %v1414, %v1415
      %v1417 = vrot.slane %v328, 6
      %v1418 = vsel %vm859, %v1392, %v1417
      %v1419 = vrot.slane %v386, 6
      %v1420 = vsel %vm859, %v1395, %v1419
      %v1421 = vrot.slane %v445, 6
      %v1422 = vsel %vm859, %v1398, %v1421
      %v1423 = vrot.slane %v196, 6
      %v1424 = vsel %vm859, %v1400, %v1423
      %v1425 = vrot.slane %v798, 6
      %v1426 = vsel %vm859, %v1403, %v1425
      %v1427 = vrot.slane %v289, 6
      %v1428 = vsel %vm859, %v1406, %v1427
      %v1429 = vrot.slane %v800, 6
      %v1430 = vsel %vm859, %v1409, %v1429
      %v1431 = vrot.slane %v802, 6
      %v1432 = vsel %vm859, %v1412, %v1431
      %v1433 = vrot.slane %v804, 6
      %v1434 = vsel %vm859, %v1415, %v1433
      %v1435 = vrot.slane %v330, 6
      %v1436 = vrot.slane %v332, 6
      %v1437 = vsel %vm859, %v1435, %v1436
      %v1438 = vrot.slane %v387, 6
      %v1439 = vrot.slane %v389, 6
      %v1440 = vsel %vm859, %v1438, %v1439
      %v1441 = vrot.slane %v446, 6
      %v1442 = vrot.slane %v448, 6
      %v1443 = vsel %vm859, %v1441, %v1442
      %v1444 = vrot.slane %v197, 6
      %v1445 = vsel %vm859, %v860, %v1444
      %v1446 = vrot.slane %v807, 6
      %v1447 = vrot.slane %v818, 6
      %v1448 = vsel %vm859, %v1446, %v1447
      %v1449 = vrot.slane %v457, 6
      %v1450 = vrot.slane %v459, 6
      %v1451 = vsel %vm859, %v1449, %v1450
      %v1452 = vrot.slane %v810, 6
      %v1453 = vrot.slane %v820, 6
      %v1454 = vsel %vm859, %v1452, %v1453
      %v1455 = vrot.slane %v813, 6
      %v1456 = vrot.slane %v822, 6
      %v1457 = vsel %vm859, %v1455, %v1456
      %v1458 = vrot.slane %v816, 6
      %v1459 = vrot.slane %v824, 6
      %v1460 = vsel %vm859, %v1458, %v1459
      %v1461 = vrot.slane %v331, 6
      %v1462 = vsel %vm859, %v1436, %v1461
      %v1463 = vrot.slane %v390, 6
      %v1464 = vsel %vm859, %v1439, %v1463
      %v1465 = vrot.slane %v449, 6
      %v1466 = vsel %vm859, %v1442, %v1465
      %v1467 = vrot.slane %v198, 6
      %v1468 = vsel %vm859, %v1444, %v1467
      %v1469 = vrot.slane %v817, 6
      %v1470 = vsel %vm859, %v1447, %v1469
      %v1471 = vrot.slane %v458, 6
      %v1472 = vsel %vm859, %v1450, %v1471
      %v1473 = vrot.slane %v819, 6
      %v1474 = vsel %vm859, %v1453, %v1473
      %v1475 = vrot.slane %v821, 6
      %v1476 = vsel %vm859, %v1456, %v1475
      %v1477 = vrot.slane %v823, 6
      %v1478 = vsel %vm859, %v1459, %v1477
      %v1479 = vrot.slane %v333, 6
      %v1480 = vrot.slane %v335, 6
      %v1481 = vsel %vm859, %v1479, %v1480
      %v1482 = vrot.slane %v391, 6
      %v1483 = vrot.slane %v393, 6
      %v1484 = vsel %vm859, %v1482, %v1483
      %v1485 = vrot.slane %v450, 6
      %v1486 = vrot.slane %v452, 6
      %v1487 = vsel %vm859, %v1485, %v1486
      %v1488 = vrot.slane %v199, 6
      %v1489 = vsel %vm859, %v860, %v1488
      %v1490 = vrot.slane %v826, 6
      %v1491 = vrot.slane %v837, 6
      %v1492 = vsel %vm859, %v1490, %v1491
      %v1493 = vrot.slane %v474, 6
      %v1494 = vrot.slane %v476, 6
      %v1495 = vsel %vm859, %v1493, %v1494
      %v1496 = vrot.slane %v829, 6
      %v1497 = vrot.slane %v839, 6
      %v1498 = vsel %vm859, %v1496, %v1497
      %v1499 = vrot.slane %v832, 6
      %v1500 = vrot.slane %v841, 6
      %v1501 = vsel %vm859, %v1499, %v1500
      %v1502 = vrot.slane %v835, 6
      %v1503 = vrot.slane %v843, 6
      %v1504 = vsel %vm859, %v1502, %v1503
      %v1505 = vrot.slane %v334, 6
      %v1506 = vsel %vm859, %v1480, %v1505
      %v1507 = vrot.slane %v394, 6
      %v1508 = vsel %vm859, %v1483, %v1507
      %v1509 = vrot.slane %v453, 6
      %v1510 = vsel %vm859, %v1486, %v1509
      %v1511 = vrot.slane %v200, 6
      %v1512 = vsel %vm859, %v1488, %v1511
      %v1513 = vrot.slane %v836, 6
      %v1514 = vsel %vm859, %v1491, %v1513
      %v1515 = vrot.slane %v475, 6
      %v1516 = vsel %vm859, %v1494, %v1515
      %v1517 = vrot.slane %v838, 6
      %v1518 = vsel %vm859, %v1497, %v1517
      %v1519 = vrot.slane %v840, 6
      %v1520 = vsel %vm859, %v1500, %v1519
      %v1521 = vrot.slane %v842, 6
      %v1522 = vsel %vm859, %v1503, %v1521
      %v1523 = vrot.slane %v460, 6
      %v1524 = vrot.slane %v462, 6
      %v1525 = vsel %vm859, %v1523, %v1524
      %v1526 = vrot.slane %v463, 6
      %v1527 = vrot.slane %v465, 6
      %v1528 = vsel %vm859, %v1526, %v1527
      %v1529 = vrot.slane %v467, 6
      %v1530 = vrot.slane %v469, 6
      %v1531 = vsel %vm859, %v1529, %v1530
      %v1532 = vrot.slane %v201, 6
      %v1533 = vsel %vm859, %v860, %v1532
      %v1534 = vrot.slane %v845, 6
      %v1535 = vrot.slane %v855, 6
      %v1536 = vsel %vm859, %v1534, %v1535
      %v1537 = vrot.slane %v848, 6
      %v1538 = vrot.slane %v856, 6
      %v1539 = vsel %vm859, %v1537, %v1538
      %v1540 = vrot.slane %v851, 6
      %v1541 = vrot.slane %v857, 6
      %v1542 = vsel %vm859, %v1540, %v1541
      %v1543 = vrot.slane %v854, 6
      %v1544 = vrot.slane %v858, 6
      %v1545 = vsel %vm859, %v1543, %v1544
      %v1546 = vrot.slane %v461, 6
      %v1547 = vsel %vm859, %v1524, %v1546
      %v1548 = vrot.slane %v466, 6
      %v1549 = vsel %vm859, %v1527, %v1548
      %v1550 = vrot.slane %v470, 6
      %v1551 = vsel %vm859, %v1530, %v1550
      %v1552 = vrot.slane %v202, 6
      %v1553 = vsel %vm859, %v1532, %v1552
      %v1554 = vrot.slane %v844, 6
      %v1555 = vsel %vm859, %v1535, %v1554
      %v1556 = vrot.slane %v846, 6
      %v1557 = vsel %vm859, %v1538, %v1556
      %v1558 = vrot.slane %v850, 6
      %v1559 = vsel %vm859, %v1541, %v1558
      %v1560 = vrot.slane %v853, 6
      %v1561 = vsel %vm859, %v1544, %v1560
      %v1562 = vrot.slane %v477, 6
      %v1563 = vrot.slane %v479, 6
      %v1564 = vsel %vm859, %v1562, %v1563
      %v1565 = vrot.slane %v480, 6
      %v1566 = vrot.slane %v482, 6
      %v1567 = vsel %vm859, %v1565, %v1566
      %v1568 = vrot.slane %v484, 6
      %v1569 = vrot.slane %v486, 6
      %v1570 = vsel %vm859, %v1568, %v1569
      %v1571 = vrot.slane %v478, 6
      %v1572 = vsel %vm859, %v1563, %v1571
      %v1573 = vrot.slane %v483, 6
      %v1574 = vsel %vm859, %v1566, %v1573
      %v1575 = vrot.slane %v487, 6
      %v1576 = vsel %vm859, %v1569, %v1575
      %v1872 = vld [vmem:[%s1] sm:$0xff]
      %v1873 = vld [vmem:[%s1 + $0x8] sm:$0xff]
      %v1874 = vld [vmem:[%s1 + $0x10] sm:$0xff]
      %v1875 = vld [vmem:[%s1 + $0x18] sm:$0xff]
      %v1876 = vld [vmem:[%s1 + $0x20] sm:$0xff]
      %v1877 = vld [vmem:[%s1 + $0x28] sm:$0xff]
      %v1878 = vld [vmem:[%s1 + $0x30] sm:$0xff]
      %v1879 = vld [vmem:[%s1 + $0x38] sm:$0xff]
      %v1880 = vld [vmem:[%s1 + $0x40] sm:$0xff]
      %v1881 = vld [vmem:[%s1 + $0x48] sm:$0xff]
      %v1882 = vld [vmem:[%s1 + $0x50] sm:$0xff]
      %v1883 = vld [vmem:[%s1 + $0x58] sm:$0xff]
      %v1884 = vld [vmem:[%s1 + $0x60] sm:$0xff]
      %v1885 = vld [vmem:[%s1 + $0x68] sm:$0xff]
      %v1886 = vld [vmem:[%s1 + $0x70] sm:$0xff]
      %v1887 = vld [vmem:[%s1 + $0x78] sm:$0xff]
      %v1888 = vld [vmem:[%s1 + $0x80] sm:$0xff]
      %v1889 = vld [vmem:[%s1 + $0x88] sm:$0xff]
      %v1890 = vld [vmem:[%s1 + $0x90] sm:$0xff]
      %v1891 = vld [vmem:[%s1 + $0x98] sm:$0xff]
      %v1892 = vld [vmem:[%s1 + $0xa0] sm:$0xff]
      %v1893 = vld [vmem:[%s1 + $0xa8] sm:$0xff]
      %v1894 = vld [vmem:[%s1 + $0xb0] sm:$0xff]
      %v1895 = vld [vmem:[%s1 + $0xb8] sm:$0xff]
      %v1896 = vld [vmem:[%s1 + $0xc0] sm:$0xff]
      %v1897 = vld [vmem:[%s1 + $0xc8] sm:$0xff]
      %v1898 = vld [vmem:[%s1 + $0xd0] sm:$0xff]
      %v1899 = vld [vmem:[%s1 + $0xd8] sm:$0xff]
      %v1900 = vld [vmem:[%s1 + $0xe0] sm:$0xff]
      %v1901 = vld [vmem:[%s1 + $0xe8] sm:$0xff]
      %v1902 = vld [vmem:[%s1 + $0xf0] sm:$0xff]
      %v1903 = vld [vmem:[%s1 + $0xf8] sm:$0xff]
      %v1904 = vld [vmem:[%s1 + $0x100] sm:$0xff]
      %v1905 = vld [vmem:[%s1 + $0x108] sm:$0xff]
      %v1906 = vld [vmem:[%s1 + $0x110] sm:$0xff]
      %v1907 = vld [vmem:[%s1 + $0x118] sm:$0xff]
      %v1908 = vld [vmem:[%s1 + $0x120] sm:$0xff]
      %v1909 = vld [vmem:[%s1 + $0x128] sm:$0xff]
      %v1910 = vld [vmem:[%s1 + $0x130] sm:$0xff]
      %v1911 = vld [vmem:[%s1 + $0x138] sm:$0xff]
      %v1912 = vld [vmem:[%s1 + $0x140] sm:$0xff]
      %v1913 = vld [vmem:[%s1 + $0x148] sm:$0xff]
      %v1914 = vld [vmem:[%s1 + $0x150] sm:$0xff]
      %v1915 = vld [vmem:[%s1 + $0x158] sm:$0xff]
      %v1916 = vld [vmem:[%s1 + $0x160] sm:$0xff]
      %v1917 = vld [vmem:[%s1 + $0x168] sm:$0xff]
      %v1918 = vld [vmem:[%s1 + $0x170] sm:$0xff]
      %v1919 = vld [vmem:[%s1 + $0x178] sm:$0xff]
      %v1920 = vld [vmem:[%s1 + $0x180] sm:$0xff]
      %v1921 = vld [vmem:[%s1 + $0x188] sm:$0xff]
      %v1922 = vld [vmem:[%s1 + $0x190] sm:$0xff]
      %v1923 = vld [vmem:[%s1 + $0x198] sm:$0xff]
      %v1924 = vld [vmem:[%s1 + $0x1a0] sm:$0xff]
      %v1925 = vld [vmem:[%s1 + $0x1a8] sm:$0xff]
      %v1926 = vld [vmem:[%s1 + $0x1b0] sm:$0xff]
      %v1927 = vld [vmem:[%s1 + $0x1b8] sm:$0xff]
      %v1928 = vld [vmem:[%s1 + $0x1c0] sm:$0xff]
      %v1929 = vld [vmem:[%s1 + $0x1c8] sm:$0xff]
      %v1930 = vld [vmem:[%s1 + $0x1d0] sm:$0xff]
      %v1931 = vld [vmem:[%s1 + $0x1d8] sm:$0xff]
      %v1932 = vld [vmem:[%s1 + $0x1e0] sm:$0xff]
      %v1933 = vld [vmem:[%s1 + $0x1e8] sm:$0xff]
      %v1934 = vld [vmem:[%s1 + $0x1f0] sm:$0xff]
      %v1935 = vld [vmem:[%s1 + $0x1f8] sm:$0xff]
      %v1936 = vld [vmem:[%s1 + $0x200] sm:$0xff]
      %v1937 = vld [vmem:[%s1 + $0x208] sm:$0xff]
      %v1938 = vld [vmem:[%s1 + $0x210] sm:$0xff]
      %v1939 = vld [vmem:[%s1 + $0x218] sm:$0xff]
      %v1940 = vld [vmem:[%s1 + $0x220] sm:$0xff]
      %v1941 = vld [vmem:[%s1 + $0x228] sm:$0xff]
      %v1942 = vld [vmem:[%s1 + $0x230] sm:$0xff]
      %v1943 = vld [vmem:[%s1 + $0x238] sm:$0xff]
      %v1944 = vld [vmem:[%s1 + $0x240] sm:$0xff]
      %v1945 = vld [vmem:[%s1 + $0x248] sm:$0xff]
      %v1946 = vld [vmem:[%s1 + $0x250] sm:$0xff]
      %v1947 = vld [vmem:[%s1 + $0x258] sm:$0xff]
      %v1948 = vld [vmem:[%s1 + $0x260] sm:$0xff]
      %v1949 = vld [vmem:[%s1 + $0x268] sm:$0xff]
      %v1950 = vld [vmem:[%s1 + $0x270] sm:$0xff]
      %v1951 = vld [vmem:[%s1 + $0x278] sm:$0xff]
      %v1952 = vld [vmem:[%s1 + $0x280] sm:$0xff]
      %v1953 = vld [vmem:[%s1 + $0x288] sm:$0xff]
      %v1954 = vld [vmem:[%s1 + $0x290] sm:$0xff]
      %v1955 = vld [vmem:[%s1 + $0x298] sm:$0xff]
      %v1956 = vld [vmem:[%s1 + $0x2a0] sm:$0xff]
      %v1957 = vld [vmem:[%s1 + $0x2a8] sm:$0xff]
      %v1958 = vld [vmem:[%s1 + $0x2b0] sm:$0xff]
      %v1959 = vld [vmem:[%s1 + $0x2b8] sm:$0xff]
      %v1960 = vld [vmem:[%s1 + $0x2c0] sm:$0xff]
      %v1961 = vld [vmem:[%s1 + $0x2c8] sm:$0xff]
      %v1962 = vld [vmem:[%s1 + $0x2d0] sm:$0xff]
      %v1963 = vld [vmem:[%s1 + $0x2d8] sm:$0xff]
      %v1964 = vld [vmem:[%s1 + $0x2e0] sm:$0xff]
      %v1965 = vld [vmem:[%s1 + $0x2e8] sm:$0xff]
      %v1966 = vld [vmem:[%s1 + $0x2f0] sm:$0xff]
      %v1967 = vld [vmem:[%s1 + $0x2f8] sm:$0xff]
      %v1968 = vld [vmem:[%s1 + $0x300] sm:$0xff]
      %v1969 = vld [vmem:[%s1 + $0x308] sm:$0xff]
      %v1970 = vld [vmem:[%s1 + $0x310] sm:$0xff]
      %v1971 = vld [vmem:[%s1 + $0x318] sm:$0xff]
      %v1972 = vld [vmem:[%s1 + $0x320] sm:$0xff]
      %v1973 = vld [vmem:[%s1 + $0x328] sm:$0xff]
      %v1974 = vld [vmem:[%s1 + $0x330] sm:$0xff]
      %v1975 = vld [vmem:[%s1 + $0x338] sm:$0xff]
      %v1976 = vld [vmem:[%s1 + $0x340] sm:$0xff]
      %v1977 = vld [vmem:[%s1 + $0x348] sm:$0xff]
      %v1978 = vld [vmem:[%s1 + $0x350] sm:$0xff]
      %v1979 = vld [vmem:[%s1 + $0x358] sm:$0xff]
      %v1980 = vld [vmem:[%s1 + $0x360] sm:$0xff]
      %v1981 = vld [vmem:[%s1 + $0x368] sm:$0xff]
      %v1982 = vld [vmem:[%s1 + $0x370] sm:$0xff]
      %v1983 = vld [vmem:[%s1 + $0x378] sm:$0xff]
      %v1984 = vld [vmem:[%s1 + $0x380] sm:$0xff]
      %v1985 = vld [vmem:[%s1 + $0x388] sm:$0xff]
      %v1986 = vld [vmem:[%s1 + $0x390] sm:$0xff]
      %v1987 = vld [vmem:[%s1 + $0x398] sm:$0xff]
      %v1988 = vld [vmem:[%s1 + $0x3a0] sm:$0xff]
      %v1989 = vld [vmem:[%s1 + $0x3a8] sm:$0xff]
      %v1990 = vld [vmem:[%s1 + $0x3b0] sm:$0xff]
      %v1991 = vld [vmem:[%s1 + $0x3b8] sm:$0xff]
      %v1992 = vld [vmem:[%s1 + $0x3c0] sm:$0xff]
      %v1993 = vld [vmem:[%s1 + $0x3c8] sm:$0xff]
      %v1994 = vld [vmem:[%s1 + $0x3d0] sm:$0xff]
      %v1995 = vld [vmem:[%s1 + $0x3d8] sm:$0xff]
      %v1996 = vld [vmem:[%s1 + $0x3e0] sm:$0xff]
      %v1997 = vld [vmem:[%s1 + $0x3e8] sm:$0xff]
      %v1998 = vld [vmem:[%s1 + $0x3f0] sm:$0xff]
      %v1999 = vld [vmem:[%s1 + $0x3f8] sm:$0xff]
      %v2000 = vld [vmem:[%s1 + $0x400] sm:$0xff]
      %v2001 = vld [vmem:[%s1 + $0x408] sm:$0xff]
      %v2002 = vld [vmem:[%s1 + $0x410] sm:$0xff]
      %v2003 = vld [vmem:[%s1 + $0x418] sm:$0xff]
      %v2004 = vld [vmem:[%s1 + $0x420] sm:$0xff]
      %v2005 = vld [vmem:[%s1 + $0x428] sm:$0xff]
      %v2006 = vld [vmem:[%s1 + $0x430] sm:$0xff]
      %v2007 = vld [vmem:[%s1 + $0x438] sm:$0xff]
      %v2008 = vld [vmem:[%s1 + $0x440] sm:$0xff]
      %v2009 = vld [vmem:[%s1 + $0x448] sm:$0xff]
      %v2010 = vld [vmem:[%s1 + $0x450] sm:$0xff]
      %v2011 = vld [vmem:[%s1 + $0x458] sm:$0xff]
      %v2012 = vld [vmem:[%s1 + $0x460] sm:$0xff]
      %v2013 = vld [vmem:[%s1 + $0x468] sm:$0xff]
      %v2014 = vld [vmem:[%s1 + $0x470] sm:$0xff]
      %v2015 = vld [vmem:[%s1 + $0x478] sm:$0xff]
      %v2016 = vld [vmem:[%s1 + $0x480] sm:$0xff]
      %v2017 = vld [vmem:[%s1 + $0x488] sm:$0xff]
      %v2018 = vld [vmem:[%s1 + $0x490] sm:$0xff]
      %v2019 = vld [vmem:[%s1 + $0x498] sm:$0xff]
      %v2020 = vld [vmem:[%s1 + $0x4a0] sm:$0xff]
      %v2021 = vld [vmem:[%s1 + $0x4a8] sm:$0xff]
      %v2022 = vld [vmem:[%s1 + $0x4b0] sm:$0xff]
      %v2023 = vld [vmem:[%s1 + $0x4b8] sm:$0xff]
      %v2024 = vld [vmem:[%s1 + $0x4c0] sm:$0xff]
      %v2025 = vld [vmem:[%s1 + $0x4c8] sm:$0xff]
      %v2026 = vld [vmem:[%s1 + $0x4d0] sm:$0xff]
      %v2027 = vld [vmem:[%s1 + $0x4d8] sm:$0xff]
      %v2028 = vld [vmem:[%s1 + $0x4e0] sm:$0xff]
      %v2029 = vld [vmem:[%s1 + $0x4e8] sm:$0xff]
      %v2030 = vld [vmem:[%s1 + $0x4f0] sm:$0xff]
      %v2031 = vld [vmem:[%s1 + $0x4f8] sm:$0xff]
      %v2032 = vld [vmem:[%s1 + $0x500] sm:$0xff]
      %v2033 = vld [vmem:[%s1 + $0x508] sm:$0xff]
      %v2034 = vld [vmem:[%s1 + $0x510] sm:$0xff]
      %v2035 = vld [vmem:[%s1 + $0x518] sm:$0xff]
      %v2036 = vld [vmem:[%s1 + $0x520] sm:$0xff]
      %v2037 = vld [vmem:[%s1 + $0x528] sm:$0xff]
      %v2038 = vld [vmem:[%s1 + $0x530] sm:$0xff]
      %v2039 = vld [vmem:[%s1 + $0x538] sm:$0xff]
      %v2040 = vld [vmem:[%s1 + $0x540] sm:$0xff]
      %v2041 = vld [vmem:[%s1 + $0x548] sm:$0xff]
      %v2042 = vld [vmem:[%s1 + $0x550] sm:$0xff]
      %v2043 = vld [vmem:[%s1 + $0x558] sm:$0xff]
      %v2044 = vld [vmem:[%s1 + $0x560] sm:$0xff]
      %v2045 = vld [vmem:[%s1 + $0x568] sm:$0xff]
      %v2046 = vld [vmem:[%s1 + $0x570] sm:$0xff]
      %v2047 = vld [vmem:[%s1 + $0x578] sm:$0xff]
      %v2048 = vld [vmem:[%s1 + $0x580] sm:$0xff]
      %v2049 = vld [vmem:[%s1 + $0x588] sm:$0xff]
      %v2050 = vld [vmem:[%s1 + $0x590] sm:$0xff]
      %v2051 = vld [vmem:[%s1 + $0x598] sm:$0xff]
      %v2052 = vld [vmem:[%s1 + $0x5a0] sm:$0xff]
      %v2053 = vld [vmem:[%s1 + $0x5a8] sm:$0xff]
      %v2054 = vld [vmem:[%s1 + $0x5b0] sm:$0xff]
      %v2055 = vld [vmem:[%s1 + $0x5b8] sm:$0xff]
      %v2056 = vld [vmem:[%s1 + $0x5c0] sm:$0xff]
      %v2057 = vld [vmem:[%s1 + $0x5c8] sm:$0xff]
      %v2058 = vld [vmem:[%s1 + $0x5d0] sm:$0xff]
      %v2059 = vld [vmem:[%s1 + $0x5d8] sm:$0xff]
      %v2060 = vld [vmem:[%s1 + $0x5e0] sm:$0xff]
      %v2061 = vld [vmem:[%s1 + $0x5e8] sm:$0xff]
      %v2062 = vld [vmem:[%s1 + $0x5f0] sm:$0xff]
      %v2063 = vld [vmem:[%s1 + $0x5f8] sm:$0xff]
      %v2064 = vld [vmem:[%s1 + $0x600] sm:$0xff]
      %v2065 = vld [vmem:[%s1 + $0x608] sm:$0xff]
      %v2066 = vld [vmem:[%s1 + $0x610] sm:$0xff]
      %v2067 = vld [vmem:[%s1 + $0x618] sm:$0xff]
      %v2068 = vld [vmem:[%s1 + $0x620] sm:$0xff]
      %v2069 = vld [vmem:[%s1 + $0x628] sm:$0xff]
      %v2070 = vld [vmem:[%s1 + $0x630] sm:$0xff]
      %v2071 = vld [vmem:[%s1 + $0x638] sm:$0xff]
      %v2072 = vld [vmem:[%s1 + $0x640] sm:$0xff]
      %v2073 = vld [vmem:[%s1 + $0x648] sm:$0xff]
      %v2074 = vld [vmem:[%s1 + $0x650] sm:$0xff]
      %v2075 = vld [vmem:[%s1 + $0x658] sm:$0xff]
      %v2076 = vld [vmem:[%s1 + $0x660] sm:$0xff]
      %v2077 = vld [vmem:[%s1 + $0x668] sm:$0xff]
      %v2078 = vld [vmem:[%s1 + $0x670] sm:$0xff]
      %v2079 = vld [vmem:[%s1 + $0x678] sm:$0xff]
      %v2080 = vld [vmem:[%s1 + $0x680] sm:$0xff]
      %v2081 = vld [vmem:[%s1 + $0x688] sm:$0xff]
      %v2082 = vld [vmem:[%s1 + $0x690] sm:$0xff]
      %v2083 = vld [vmem:[%s1 + $0x698] sm:$0xff]
      %v2084 = vld [vmem:[%s1 + $0x6a0] sm:$0xff]
      %v2085 = vld [vmem:[%s1 + $0x6a8] sm:$0xff]
      %v2086 = vld [vmem:[%s1 + $0x6b0] sm:$0xff]
      %v2087 = vld [vmem:[%s1 + $0x6b8] sm:$0xff]
      %v2088 = vld [vmem:[%s1 + $0x6c0] sm:$0xff]
      %v2089 = vld [vmem:[%s1 + $0x6c8] sm:$0xff]
      %v2090 = vld [vmem:[%s1 + $0x6d0] sm:$0xff]
      %v2091 = vld [vmem:[%s1 + $0x6d8] sm:$0xff]
      %v2092 = vld [vmem:[%s1 + $0x6e0] sm:$0xff]
      %v2093 = vld [vmem:[%s1 + $0x6e8] sm:$0xff]
      %v2094 = vld [vmem:[%s1 + $0x6f0] sm:$0xff]
      %v2095 = vld [vmem:[%s1 + $0x6f8] sm:$0xff]
      %v2096 = vld [vmem:[%s1 + $0x700] sm:$0xff]
      %v2097 = vld [vmem:[%s1 + $0x708] sm:$0xff]
      %v2098 = vld [vmem:[%s1 + $0x710] sm:$0xff]
      %v2099 = vld [vmem:[%s1 + $0x718] sm:$0xff]
      %v2100 = vld [vmem:[%s1 + $0x720] sm:$0xff]
      %v2101 = vld [vmem:[%s1 + $0x728] sm:$0xff]
      %v2102 = vld [vmem:[%s1 + $0x730] sm:$0xff]
      %v2103 = vld [vmem:[%s1 + $0x738] sm:$0xff]
      %v2104 = vld [vmem:[%s1 + $0x740] sm:$0xff]
      %v2105 = vld [vmem:[%s1 + $0x748] sm:$0xff]
      %v2106 = vld [vmem:[%s1 + $0x750] sm:$0xff]
      %v2107 = vld [vmem:[%s1 + $0x758] sm:$0xff]
      %v2108 = vld [vmem:[%s1 + $0x760] sm:$0xff]
      %v2109 = vld [vmem:[%s1 + $0x768] sm:$0xff]
      %v2110 = vld [vmem:[%s1 + $0x770] sm:$0xff]
      %v2111 = vld [vmem:[%s1 + $0x778] sm:$0xff]
      %v2112 = vld [vmem:[%s1 + $0x780] sm:$0xff]
      %v2113 = vld [vmem:[%s1 + $0x788] sm:$0xff]
      %v2114 = vld [vmem:[%s1 + $0x790] sm:$0xff]
      %v2115 = vld [vmem:[%s1 + $0x798] sm:$0xff]
      %v2116 = vld [vmem:[%s1 + $0x7a0] sm:$0xff]
      %v2117 = vld [vmem:[%s1 + $0x7a8] sm:$0xff]
      %v2118 = vld [vmem:[%s1 + $0x7b0] sm:$0xff]
      %v2119 = vld [vmem:[%s1 + $0x7b8] sm:$0xff]
      %v2120 = vld [vmem:[%s1 + $0x7c0] sm:$0xff]
      %v2121 = vld [vmem:[%s1 + $0x7c8] sm:$0xff]
      %v2122 = vld [vmem:[%s1 + $0x7d0] sm:$0xff]
      %v2123 = vld [vmem:[%s1 + $0x7d8] sm:$0xff]
      %v2124 = vld [vmem:[%s1 + $0x7e0] sm:$0xff]
      %v2125 = vld [vmem:[%s1 + $0x7e8] sm:$0xff]
      %v2126 = vld [vmem:[%s1 + $0x7f0] sm:$0xff]
      %v2127 = vld [vmem:[%s1 + $0x7f8] sm:$0xff]
      %v2128 = vld [vmem:[%s1 + $0x800] sm:$0xff]
      %v2129 = vld [vmem:[%s1 + $0x808] sm:$0xff]
      %v2130 = vld [vmem:[%s1 + $0x810] sm:$0xff]
      %v2131 = vld [vmem:[%s1 + $0x818] sm:$0xff]
      %v2132 = vld [vmem:[%s1 + $0x820] sm:$0xff]
      %v2133 = vld [vmem:[%s1 + $0x828] sm:$0xff]
      %v2134 = vld [vmem:[%s1 + $0x830] sm:$0xff]
      %v2135 = vld [vmem:[%s1 + $0x838] sm:$0xff]
      %v2136 = vld [vmem:[%s1 + $0x840] sm:$0xff]
      %v2137 = vld [vmem:[%s1 + $0x848] sm:$0xff]
      %v2138 = vld [vmem:[%s1 + $0x850] sm:$0xff]
      %v2139 = vld [vmem:[%s1 + $0x858] sm:$0xff]
      %v2140 = vld [vmem:[%s1 + $0x860] sm:$0xff]
      %v2141 = vld [vmem:[%s1 + $0x868] sm:$0xff]
      %v2142 = vld [vmem:[%s1 + $0x870] sm:$0xff]
      %v2143 = vld [vmem:[%s1 + $0x878] sm:$0xff]
      %v2144 = vld [vmem:[%s1 + $0x880] sm:$0xff]
      %v2145 = vld [vmem:[%s1 + $0x888] sm:$0xff]
      %v2146 = vld [vmem:[%s1 + $0x890] sm:$0xff]
      %v2147 = vld [vmem:[%s1 + $0x898] sm:$0xff]
      %v2148 = vld [vmem:[%s1 + $0x8a0] sm:$0xff]
      %v2149 = vld [vmem:[%s1 + $0x8a8] sm:$0xff]
      %v2150 = vld [vmem:[%s1 + $0x8b0] sm:$0xff]
      %v2151 = vld [vmem:[%s1 + $0x8b8] sm:$0xff]
      %v2152 = vld [vmem:[%s1 + $0x8c0] sm:$0xff]
      %v2153 = vld [vmem:[%s1 + $0x8c8] sm:$0xff]
      %v2154 = vld [vmem:[%s1 + $0x8d0] sm:$0xff]
      %v2155 = vld [vmem:[%s1 + $0x8d8] sm:$0xff]
      %v2156 = vld [vmem:[%s1 + $0x8e0] sm:$0xff]
      %v2157 = vld [vmem:[%s1 + $0x8e8] sm:$0xff]
      %v2158 = vld [vmem:[%s1 + $0x8f0] sm:$0xff]
      %v2159 = vld [vmem:[%s1 + $0x8f8] sm:$0xff]
      %v2160 = vld [vmem:[%s1 + $0x900] sm:$0xff]
      %v2161 = vld [vmem:[%s1 + $0x908] sm:$0xff]
      %v2162 = vld [vmem:[%s1 + $0x910] sm:$0xff]
      %v2163 = vld [vmem:[%s1 + $0x918] sm:$0xff]
      %v2164 = vld [vmem:[%s1 + $0x920] sm:$0xff]
      %v2165 = vld [vmem:[%s1 + $0x928] sm:$0xff]
      %v2166 = vld [vmem:[%s1 + $0x930] sm:$0xff]
      %v2167 = vld [vmem:[%s1 + $0x938] sm:$0xff]
      %v2168 = vld [vmem:[%s1 + $0x940] sm:$0xff]
      %v2169 = vld [vmem:[%s1 + $0x948] sm:$0xff]
      %v2170 = vld [vmem:[%s1 + $0x950] sm:$0xff]
      %v2171 = vld [vmem:[%s1 + $0x958] sm:$0xff]
      %v2172 = vld [vmem:[%s1 + $0x960] sm:$0xff]
      %v2173 = vld [vmem:[%s1 + $0x968] sm:$0xff]
      %v2174 = vld [vmem:[%s1 + $0x970] sm:$0xff]
      %v2175 = vld [vmem:[%s1 + $0x978] sm:$0xff]
      %v2176 = vld [vmem:[%s1 + $0x980] sm:$0xff]
      %v2177 = vld [vmem:[%s1 + $0x988] sm:$0xff]
      %v2178 = vld [vmem:[%s1 + $0x990] sm:$0xff]
      %v2179 = vld [vmem:[%s1 + $0x998] sm:$0xff]
      %v2180 = vld [vmem:[%s1 + $0x9a0] sm:$0xff]
      %v2181 = vld [vmem:[%s1 + $0x9a8] sm:$0xff]
      %v2182 = vld [vmem:[%s1 + $0x9b0] sm:$0xff]
      %v2183 = vld [vmem:[%s1 + $0x9b8] sm:$0xff]
      %v2184 = vld [vmem:[%s1 + $0x9c0] sm:$0xff]
      %v2185 = vld [vmem:[%s1 + $0x9c8] sm:$0xff]
      %v2186 = vld [vmem:[%s1 + $0x9d0] sm:$0xff]
      %v2187 = vld [vmem:[%s1 + $0x9d8] sm:$0xff]
      %v2188 = vld [vmem:[%s1 + $0x9e0] sm:$0xff]
      %v2189 = vld [vmem:[%s1 + $0x9e8] sm:$0xff]
      %v2190 = vld [vmem:[%s1 + $0x9f0] sm:$0xff]
      %v2191 = vld [vmem:[%s1 + $0x9f8] sm:$0xff]
      %v2192 = vld [vmem:[%s1 + $0xa00] sm:$0xff]
      %v2193 = vld [vmem:[%s1 + $0xa08] sm:$0xff]
      %v2194 = vld [vmem:[%s1 + $0xa10] sm:$0xff]
      %v2195 = vld [vmem:[%s1 + $0xa18] sm:$0xff]
      %v2196 = vld [vmem:[%s1 + $0xa20] sm:$0xff]
      %v2197 = vld [vmem:[%s1 + $0xa28] sm:$0xff]
      %v2198 = vld [vmem:[%s1 + $0xa30] sm:$0xff]
      %v2199 = vld [vmem:[%s1 + $0xa38] sm:$0xff]
      %v2200 = vld [vmem:[%s1 + $0xa40] sm:$0xff]
      %v2201 = vld [vmem:[%s1 + $0xa48] sm:$0xff]
      %v2202 = vld [vmem:[%s1 + $0xa50] sm:$0xff]
      %v2203 = vld [vmem:[%s1 + $0xa58] sm:$0xff]
      %v2204 = vld [vmem:[%s1 + $0xa60] sm:$0xff]
      %v2205 = vld [vmem:[%s1 + $0xa68] sm:$0xff]
      %v2206 = vld [vmem:[%s1 + $0xa70] sm:$0xff]
      %v2207 = vld [vmem:[%s1 + $0xa78] sm:$0xff]
      %v2208 = vld [vmem:[%s1 + $0xa80] sm:$0xff]
      %v2209 = vld [vmem:[%s1 + $0xa88] sm:$0xff]
      %v2210 = vld [vmem:[%s1 + $0xa90] sm:$0xff]
      %v2211 = vld [vmem:[%s1 + $0xa98] sm:$0xff]
      %v2212 = vld [vmem:[%s1 + $0xaa0] sm:$0xff]
      %v2213 = vld [vmem:[%s1 + $0xaa8] sm:$0xff]
      %v2214 = vld [vmem:[%s1 + $0xab0] sm:$0xff]
      %v2215 = vld [vmem:[%s1 + $0xab8] sm:$0xff]
      %v2216 = vld [vmem:[%s1 + $0xac0] sm:$0xff]
      %v2217 = vld [vmem:[%s1 + $0xac8] sm:$0xff]
      %v2218 = vld [vmem:[%s1 + $0xad0] sm:$0xff]
      %v2219 = vld [vmem:[%s1 + $0xad8] sm:$0xff]
      %v2220 = vld [vmem:[%s1 + $0xae0] sm:$0xff]
      %v2221 = vld [vmem:[%s1 + $0xae8] sm:$0xff]
      %v2222 = vld [vmem:[%s1 + $0xaf0] sm:$0xff]
      %v2223 = vld [vmem:[%s1 + $0xaf8] sm:$0xff]
      %v2224 = vld [vmem:[%s1 + $0xb00] sm:$0xff]
      %v2225 = vld [vmem:[%s1 + $0xb08] sm:$0xff]
      %v2226 = vld [vmem:[%s1 + $0xb10] sm:$0xff]
      %v2227 = vld [vmem:[%s1 + $0xb18] sm:$0xff]
      %v2228 = vld [vmem:[%s1 + $0xb20] sm:$0xff]
      %v2229 = vld [vmem:[%s1 + $0xb28] sm:$0xff]
      %v2230 = vld [vmem:[%s1 + $0xb30] sm:$0xff]
      %v2231 = vld [vmem:[%s1 + $0xb38] sm:$0xff]
      %v2232 = vld [vmem:[%s1 + $0xb40] sm:$0xff]
      %v2233 = vld [vmem:[%s1 + $0xb48] sm:$0xff]
      %v2234 = vld [vmem:[%s1 + $0xb50] sm:$0xff]
      %v2235 = vld [vmem:[%s1 + $0xb58] sm:$0xff]
      %v2236 = vld [vmem:[%s1 + $0xb60] sm:$0xff]
      %v2237 = vld [vmem:[%s1 + $0xb68] sm:$0xff]
      %v2238 = vld [vmem:[%s1 + $0xb70] sm:$0xff]
      %v2239 = vld [vmem:[%s1 + $0xb78] sm:$0xff]
      %v2240 = vld [vmem:[%s1 + $0xb80] sm:$0xff]
      %v2241 = vld [vmem:[%s1 + $0xb88] sm:$0xff]
      %v2242 = vld [vmem:[%s1 + $0xb90] sm:$0xff]
      %v2243 = vld [vmem:[%s1 + $0xb98] sm:$0xff]
      %v2244 = vld [vmem:[%s1 + $0xba0] sm:$0xff]
      %v2245 = vld [vmem:[%s1 + $0xba8] sm:$0xff]
      %v2246 = vld [vmem:[%s1 + $0xbb0] sm:$0xff]
      %v2247 = vld [vmem:[%s1 + $0xbb8] sm:$0xff]
      %v2248 = vld [vmem:[%s1 + $0xbc0] sm:$0xff]
      %v2249 = vld [vmem:[%s1 + $0xbc8] sm:$0xff]
      %v2250 = vld [vmem:[%s1 + $0xbd0] sm:$0xff]
      %v2251 = vld [vmem:[%s1 + $0xbd8] sm:$0xff]
      %v2252 = vld [vmem:[%s1 + $0xbe0] sm:$0xff]
      %v2253 = vld [vmem:[%s1 + $0xbe8] sm:$0xff]
      %v2254 = vld [vmem:[%s1 + $0xbf0] sm:$0xff]
      %v2255 = vld [vmem:[%s1 + $0xbf8] sm:$0xff]
      %v2256 = vld [vmem:[%s1 + $0xc00] sm:$0xff]
      %v2257 = vld [vmem:[%s1 + $0xc08] sm:$0xff]
      %v2258 = vld [vmem:[%s1 + $0xc10] sm:$0xff]
      %v2259 = vld [vmem:[%s1 + $0xc18] sm:$0xff]
      %v2260 = vld [vmem:[%s1 + $0xc20] sm:$0xff]
      %v2261 = vld [vmem:[%s1 + $0xc28] sm:$0xff]
      %v2262 = vld [vmem:[%s1 + $0xc30] sm:$0xff]
      %v2263 = vld [vmem:[%s1 + $0xc38] sm:$0xff]
      %v2264 = vld [vmem:[%s1 + $0xc40] sm:$0xff]
      %v2265 = vld [vmem:[%s1 + $0xc48] sm:$0xff]
      %v2266 = vld [vmem:[%s1 + $0xc50] sm:$0xff]
      %v2267 = vld [vmem:[%s1 + $0xc58] sm:$0xff]
      %v2268 = vld [vmem:[%s1 + $0xc60] sm:$0xff]
      %v2269 = vld [vmem:[%s1 + $0xc68] sm:$0xff]
      %v2270 = vld [vmem:[%s1 + $0xc70] sm:$0xff]
      %v2271 = vld [vmem:[%s1 + $0xc78] sm:$0xff]
      %v2272 = vld [vmem:[%s2] sm:$0x1]
      %v2274 = vlaneseq
      %v2275 = vshrl.u32 %v2274, 7
      %v2276 = vsub.s32 0, %v2275
      %v2277 = vrot.slane %v2272, %v2276
      %2279 = vmatprep.subr.mxu0 0.0
      %2280 = vmatpush1.msra.mxu0 %v1872
      %2281 = vmatprep.subr.mxu0 0.0
      %2282 = vmatpush1.msra.mxu0 %v1873
      %2283 = vmatprep.subr.mxu0 0.0
      %2284 = vmatpush1.msra.mxu0 %v1874
      %2285 = vmatprep.subr.mxu0 0.0
      %2286 = vmatpush1.msra.mxu0 %v1875
      %2287 = vmatprep.subr.mxu0 0.0
      %2288 = vmatpush1.msra.mxu0 %v1876
      %2289 = vmatprep.subr.mxu0 0.0
      %2290 = vmatpush1.msra.mxu0 %v1877
      %2291 = vmatprep.subr.mxu0 0.0
      %2292 = vmatpush1.msra.mxu0 %v1878
      %2293 = vmatprep.subr.mxu0 0.0
      %2294 = vmatpush1.msra.mxu0 %v1879
      %2295 = vmatprep.subr.mxu0 0.0
      %2296 = vmatpush1.msra.mxu0 %v1880
      %2297 = vmatprep.subr.mxu0 0.0
      %2298 = vmatpush1.msra.mxu0 %v1881
      %2299 = vmatprep.subr.mxu0 0.0
      %2300 = vmatpush1.msra.mxu0 %v1882
      %2301 = vmatprep.subr.mxu0 0.0
      %2302 = vmatpush1.msra.mxu0 %v1883
      %2303 = vmatprep.subr.mxu0 0.0
      %2304 = vmatpush1.msra.mxu0 %v1884
      %2305 = vmatprep.subr.mxu0 0.0
      %2306 = vmatpush1.msra.mxu0 %v1885
      %2307 = vmatprep.subr.mxu0 0.0
      %2308 = vmatpush1.msra.mxu0 %v1886
      %2309 = vmatprep.subr.mxu0 0.0
      %2310 = vmatpush1.msra.mxu0 %v1887
      %2311 = vmatprep.subr.mxu0 0.0
      %2312 = vmatpush1.msra.mxu0 %v1888
      %2313 = vmatprep.subr.mxu0 0.0
      %2314 = vmatpush1.msra.mxu0 %v1889
      %2315 = vmatprep.subr.mxu0 0.0
      %2316 = vmatpush1.msra.mxu0 %v1890
      %2317 = vmatprep.subr.mxu0 0.0
      %2318 = vmatpush1.msra.mxu0 %v1891
      %2319 = vmatprep.subr.mxu0 0.0
      %2320 = vmatpush1.msra.mxu0 %v1892
      %2321 = vmatprep.subr.mxu0 0.0
      %2322 = vmatpush1.msra.mxu0 %v1893
      %2323 = vmatprep.subr.mxu0 0.0
      %2324 = vmatpush1.msra.mxu0 %v1894
      %2325 = vmatprep.subr.mxu0 0.0
      %2326 = vmatpush1.msra.mxu0 %v1895
      %2327 = vmatprep.subr.mxu0 0.0
      %2328 = vmatpush1.msra.mxu0 %v1896
      %2329 = vmatprep.subr.mxu0 0.0
      %2330 = vmatpush1.msra.mxu0 %v1897
      %2331 = vmatprep.subr.mxu0 0.0
      %2332 = vmatpush1.msra.mxu0 %v1898
      %2333 = vmatprep.subr.mxu0 0.0
      %2334 = vmatpush1.msra.mxu0 %v1899
      %2335 = vmatprep.subr.mxu0 0.0
      %2336 = vmatpush1.msra.mxu0 %v1900
      %2337 = vmatprep.subr.mxu0 0.0
      %2338 = vmatpush1.msra.mxu0 %v1901
      %2339 = vmatprep.subr.mxu0 0.0
      %2340 = vmatpush1.msra.mxu0 %v1902
      %2341 = vmatprep.subr.mxu0 0.0
      %2342 = vmatpush1.msra.mxu0 %v1903
      %2343 = vmatprep.mubr.f32.mxu0 %v863
      %2344 = vmatmul.mubr.f32.gmra.mrb[0].mxu0 %v861
      %v2345 = vpop.f32.mrb[0].mxu0
      %v2346 = vadd.f32 %v2277, %v2345
      %v2347 = vpop.f32.mrb[0].mxu0
      %2348 = vmatprep.mubr.f32.mxu0 %v917
      %2349 = vmatmul.mubr.f32.gmra.mrb[0].mxu0 %v861
      %v2350 = vpop.f32.mrb[0].mxu0
      %v2351 = vadd.f32 %v2277, %v2350
      %v2352 = vpop.f32.mrb[0].mxu0
      %2353 = vmatprep.mubr.f32.mxu0 %v863
      %2354 = vmatmul.mubr.f32.gmra.mrb[0].mxu0 %v861
      %v2355 = vpop.f32.mrb[0].mxu0
      %v2356 = vadd.f32 %v2277, %v2355
      %v2357 = vpop.f32.mrb[0].mxu0
      %2358 = vmatprep.mubr.f32.mxu0 %v917
      %2359 = vmatmul.mubr.f32.gmra.mrb[0].mxu0 %v861
      %v2360 = vpop.f32.mrb[0].mxu0
      %v2361 = vadd.f32 %v2277, %v2360
      %v2362 = vpop.f32.mrb[0].mxu0
      %2363 = vmatprep.mubr.f32.mxu0 %v877
      %2364 = vmatmul.mubr.f32.gmra.mrb[0].mxu0 %v874
      %v2365 = vpop.f32.mrb[0].mxu0
      %v2366 = vadd.f32 %v2277, %v2365
      %v2367 = vpop.f32.mrb[0].mxu0
      %2368 = vmatprep.mubr.f32.mxu0 %v924
      %2369 = vmatmul.mubr.f32.gmra.mrb[0].mxu0 %v922
      %v2370 = vpop.f32.mrb[0].mxu0
      %v2371 = vadd.f32 %v2277, %v2370
      %v2372 = vpop.f32.mrb[0].mxu0
      %2373 = vmatprep.mubr.f32.mxu0 %v891
      %2374 = vmatmul.mubr.f32.gmra.mrb[0].mxu0 %v888
      %v2375 = vpop.f32.mrb[0].mxu0
      %v2376 = vadd.f32 %v2277, %v2375
      %v2377 = vpop.f32.mrb[0].mxu0
      %2378 = vmatprep.mubr.f32.mxu0 %v934
      %2379 = vmatmul.mubr.f32.gmra.mrb[0].mxu0 %v932
      %v2380 = vpop.f32.mrb[0].mxu0
      %v2381 = vadd.f32 %v2277, %v2380
      %v2382 = vpop.f32.mrb[0].mxu0
      %2383 = vmatprep.mubr.f32.mxu0 %v906
      %2384 = vmatmul.mubr.f32.gmra.mrb[0].mxu0 %v961
      %v2385 = vpop.f32.mrb[0].mxu0
      %v2386 = vadd.f32 %v2277, %v2385
      %v2387 = vpop.f32.mrb[0].mxu0
      %2388 = vmatprep.mubr.f32.mxu0 %v944
      %2389 = vmatmul.mubr.f32.gmra.mrb[0].mxu0 %v984
      %v2390 = vpop.f32.mrb[0].mxu0
      %v2391 = vadd.f32 %v2277, %v2390
      %v2392 = vpop.f32.mrb[0].mxu0
      %2393 = vmatprep.mubr.f32.mxu0 %v967
      %2394 = vmatmul.mubr.f32.gmra.mrb[0].mxu0 %v1005
      %v2395 = vpop.f32.mrb[0].mxu0
      %v2396 = vadd.f32 %v2277, %v2395
      %v2397 = vpop.f32.mrb[0].mxu0
      %2398 = vmatprep.mubr.f32.mxu0 %v988
      %2399 = vmatmul.mubr.f32.gmra.mrb[0].mxu0 %v1028
      %v2400 = vpop.f32.mrb[0].mxu0
      %v2401 = vadd.f32 %v2277, %v2400
      %v2402 = vpop.f32.mrb[0].mxu0
      %2403 = vmatprep.mubr.f32.mxu0 %v1011
      %2404 = vmatmul.mubr.f32.gmra.mrb[0].mxu0 %v1049
      %v2405 = vpop.f32.mrb[0].mxu0
      %v2406 = vadd.f32 %v2277, %v2405
      %v2407 = vpop.f32.mrb[0].mxu0
      %2408 = vmatprep.mubr.f32.mxu0 %v1032
      %2409 = vmatmul.mubr.f32.gmra.mrb[0].mxu0 %v1072
      %v2410 = vpop.f32.mrb[0].mxu0
      %v2411 = vadd.f32 %v2277, %v2410
      %v2412 = vpop.f32.mrb[0].mxu0
      %2413 = vmatprep.mubr.f32.mxu0 %v1055
      %2414 = vmatmul.mubr.f32.gmra.mrb[0].mxu0 %v1093
      %v2415 = vpop.f32.mrb[0].mxu0
      %v2416 = vadd.f32 %v2277, %v2415
      %v2417 = vpop.f32.mrb[0].mxu0
      %2418 = vmatprep.mubr.f32.mxu0 %v1076
      %2419 = vmatmul.mubr.f32.gmra.mrb[0].mxu0 %v1116
      %v2420 = vpop.f32.mrb[0].mxu0
      %v2421 = vadd.f32 %v2277, %v2420
      %v2422 = vpop.f32.mrb[0].mxu0
      %2423 = vmatprep.mubr.f32.mxu0 %v1099
      %2424 = vmatmul.mubr.f32.gmra.mrb[0].mxu0 %v1137
      %v2425 = vpop.f32.mrb[0].mxu0
      %v2426 = vadd.f32 %v2277, %v2425
      %v2427 = vpop.f32.mrb[0].mxu0
      %2428 = vmatprep.mubr.f32.mxu0 %v1120
      %2429 = vmatmul.mubr.f32.gmra.mrb[0].mxu0 %v1160
      %v2430 = vpop.f32.mrb[0].mxu0
      %v2431 = vadd.f32 %v2277, %v2430
      %v2432 = vpop.f32.mrb[0].mxu0
      %2433 = vmatprep.mubr.f32.mxu0 %v1143
      %2434 = vmatmul.mubr.f32.gmra.mrb[0].mxu0 %v1181
      %v2435 = vpop.f32.mrb[0].mxu0
      %v2436 = vadd.f32 %v2277, %v2435
      %v2437 = vpop.f32.mrb[0].mxu0
      %2438 = vmatprep.mubr.f32.mxu0 %v1164
      %2439 = vmatmul.mubr.f32.gmra.mrb[0].mxu0 %v1204
      %v2440 = vpop.f32.mrb[0].mxu0
      %v2441 = vadd.f32 %v2277, %v2440
      %v2442 = vpop.f32.mrb[0].mxu0
      %2443 = vmatprep.mubr.f32.mxu0 %v1187
      %2444 = vmatmul.mubr.f32.gmra.mrb[0].mxu0 %v1225
      %v2445 = vpop.f32.mrb[0].mxu0
      %v2446 = vadd.f32 %v2277, %v2445
      %v2447 = vpop.f32.mrb[0].mxu0
      %2448 = vmatprep.mubr.f32.mxu0 %v1208
      %2449 = vmatmul.mubr.f32.gmra.mrb[0].mxu0 %v1248
      %v2450 = vpop.f32.mrb[0].mxu0
      %v2451 = vadd.f32 %v2277, %v2450
      %v2452 = vpop.f32.mrb[0].mxu0
      %2453 = vmatprep.mubr.f32.mxu0 %v1231
      %2454 = vmatmul.mubr.f32.gmra.mrb[0].mxu0 %v1269
      %v2455 = vpop.f32.mrb[0].mxu0
      %v2456 = vadd.f32 %v2277, %v2455
      %v2457 = vpop.f32.mrb[0].mxu0
      %2458 = vmatprep.mubr.f32.mxu0 %v1252
      %2459 = vmatmul.mubr.f32.gmra.mrb[0].mxu0 %v1292
      %v2460 = vpop.f32.mrb[0].mxu0
      %v2461 = vadd.f32 %v2277, %v2460
      %v2462 = vpop.f32.mrb[0].mxu0
      %2463 = vmatprep.mubr.f32.mxu0 %v1275
      %2464 = vmatmul.mubr.f32.gmra.mrb[0].mxu0 %v1313
      %v2465 = vpop.f32.mrb[0].mxu0
      %v2466 = vadd.f32 %v2277, %v2465
      %v2467 = vpop.f32.mrb[0].mxu0
      %2468 = vmatprep.mubr.f32.mxu0 %v1296
      %2469 = vmatmul.mubr.f32.gmra.mrb[0].mxu0 %v1336
      %v2470 = vpop.f32.mrb[0].mxu0
      %v2471 = vadd.f32 %v2277, %v2470
      %v2472 = vpop.f32.mrb[0].mxu0
      %2473 = vmatprep.mubr.f32.mxu0 %v1319
      %2474 = vmatmul.mubr.f32.gmra.mrb[0].mxu0 %v1357
      %v2475 = vpop.f32.mrb[0].mxu0
      %v2476 = vadd.f32 %v2277, %v2475
      %v2477 = vpop.f32.mrb[0].mxu0
      %2478 = vmatprep.mubr.f32.mxu0 %v1340
      %2479 = vmatmul.mubr.f32.gmra.mrb[0].mxu0 %v1380
      %v2480 = vpop.f32.mrb[0].mxu0
      %v2481 = vadd.f32 %v2277, %v2480
      %v2482 = vpop.f32.mrb[0].mxu0
      %2483 = vmatprep.mubr.f32.mxu0 %v1363
      %2484 = vmatmul.mubr.f32.gmra.mrb[0].mxu0 %v1401
      %v2485 = vpop.f32.mrb[0].mxu0
      %v2486 = vadd.f32 %v2277, %v2485
      %v2487 = vpop.f32.mrb[0].mxu0
      %2488 = vmatprep.mubr.f32.mxu0 %v1384
      %2489 = vmatmul.mubr.f32.gmra.mrb[0].mxu0 %v1424
      %v2490 = vpop.f32.mrb[0].mxu0
      %v2491 = vadd.f32 %v2277, %v2490
      %v2492 = vpop.f32.mrb[0].mxu0
      %2493 = vmatprep.mubr.f32.mxu0 %v1407
      %2494 = vmatmul.mubr.f32.gmra.mrb[0].mxu0 %v1445
      %v2495 = vpop.f32.mrb[0].mxu0
      %v2496 = vadd.f32 %v2277, %v2495
      %v2497 = vpop.f32.mrb[0].mxu0
      %2498 = vmatprep.mubr.f32.mxu0 %v1428
      %2499 = vmatmul.mubr.f32.gmra.mrb[0].mxu0 %v1468
      %v2500 = vpop.f32.mrb[0].mxu0
      %v2501 = vadd.f32 %v2277, %v2500
      %v2502 = vpop.f32.mrb[0].mxu0
      %2503 = vdwg.mxu0
      %2504 = vmatprep.subr.mxu0 0.0
      %2505 = vmatpush1.msra.mxu0 %v1904
      %2506 = vmatprep.subr.mxu0 0.0
      %2507 = vmatpush1.msra.mxu0 %v1905
      %2508 = vmatprep.subr.mxu0 0.0
      %2509 = vmatpush1.msra.mxu0 %v1906
      %2510 = vmatprep.subr.mxu0 0.0
      %2511 = vmatpush1.msra.mxu0 %v1907
      %2512 = vmatprep.subr.mxu0 0.0
      %2513 = vmatpush1.msra.mxu0 %v1908
      %2514 = vmatprep.subr.mxu0 0.0
      %2515 = vmatpush1.msra.mxu0 %v1909
      %2516 = vmatprep.subr.mxu0 0.0
      %2517 = vmatpush1.msra.mxu0 %v1910
      %2518 = vmatprep.subr.mxu0 0.0
      %2519 = vmatpush1.msra.mxu0 %v1911
      %2520 = vmatprep.subr.mxu0 0.0
      %2521 = vmatpush1.msra.mxu0 %v1912
      %2522 = vmatprep.subr.mxu0 0.0
      %2523 = vmatpush1.msra.mxu0 %v1913
      %2524 = vmatprep.subr.mxu0 0.0
      %2525 = vmatpush1.msra.mxu0 %v1914
      %2526 = vmatprep.subr.mxu0 0.0
      %2527 = vmatpush1.msra.mxu0 %v1915
      %2528 = vmatprep.subr.mxu0 0.0
      %2529 = vmatpush1.msra.mxu0 %v1916
      %2530 = vmatprep.subr.mxu0 0.0
      %2531 = vmatpush1.msra.mxu0 %v1917
      %2532 = vmatprep.subr.mxu0 0.0
      %2533 = vmatpush1.msra.mxu0 %v1918
      %2534 = vmatprep.subr.mxu0 0.0
      %2535 = vmatpush1.msra.mxu0 %v1919
      %2536 = vmatprep.subr.mxu0 0.0
      %2537 = vmatpush1.msra.mxu0 %v1920
      %2538 = vmatprep.subr.mxu0 0.0
      %2539 = vmatpush1.msra.mxu0 %v1921
      %2540 = vmatprep.subr.mxu0 0.0
      %2541 = vmatpush1.msra.mxu0 %v1922
      %2542 = vmatprep.subr.mxu0 0.0
      %2543 = vmatpush1.msra.mxu0 %v1923
      %2544 = vmatprep.subr.mxu0 0.0
      %2545 = vmatpush1.msra.mxu0 %v1924
      %2546 = vmatprep.subr.mxu0 0.0
      %2547 = vmatpush1.msra.mxu0 %v1925
      %2548 = vmatprep.subr.mxu0 0.0
      %2549 = vmatpush1.msra.mxu0 %v1926
      %2550 = vmatprep.subr.mxu0 0.0
      %2551 = vmatpush1.msra.mxu0 %v1927
      %2552 = vmatprep.subr.mxu0 0.0
      %2553 = vmatpush1.msra.mxu0 %v1928
      %2554 = vmatprep.subr.mxu0 0.0
      %2555 = vmatpush1.msra.mxu0 %v1929
      %2556 = vmatprep.subr.mxu0 0.0
      %2557 = vmatpush1.msra.mxu0 %v1930
      %2558 = vmatprep.subr.mxu0 0.0
      %2559 = vmatpush1.msra.mxu0 %v1931
      %2560 = vmatprep.subr.mxu0 0.0
      %2561 = vmatpush1.msra.mxu0 %v1932
      %2562 = vmatprep.subr.mxu0 0.0
      %2563 = vmatpush1.msra.mxu0 %v1933
      %2564 = vmatprep.subr.mxu0 0.0
      %2565 = vmatpush1.msra.mxu0 %v1934
      %2566 = vmatprep.subr.mxu0 0.0
      %2567 = vmatpush1.msra.mxu0 %v1935
      %2568 = vmatprep.mubr.f32.mxu0 %v869
      %2569 = vmatmul.mubr.f32.gmra.mrb[0].mxu0 %v866
      %v2570 = vpop.f32.mrb[0].mxu0
      %v2571 = vadd.f32 %v2346, %v2570
      %v2572 = vpop.f32.mrb[0].mxu0
      %2573 = vmatprep.mubr.f32.mxu0 %v919
      %2574 = vmatmul.mubr.f32.gmra.mrb[0].mxu0 %v918
      %v2575 = vpop.f32.mrb[0].mxu0
      %v2576 = vadd.f32 %v2351, %v2575
      %v2577 = vpop.f32.mrb[0].mxu0
      %2578 = vmatprep.mubr.f32.mxu0 %v869
      %2579 = vmatmul.mubr.f32.gmra.mrb[0].mxu0 %v866
      %v2580 = vpop.f32.mrb[0].mxu0
      %v2581 = vadd.f32 %v2356, %v2580
      %v2582 = vpop.f32.mrb[0].mxu0
      %2583 = vmatprep.mubr.f32.mxu0 %v919
      %2584 = vmatmul.mubr.f32.gmra.mrb[0].mxu0 %v918
      %v2585 = vpop.f32.mrb[0].mxu0
      %v2586 = vadd.f32 %v2361, %v2585
      %v2587 = vpop.f32.mrb[0].mxu0
      %2588 = vmatprep.mubr.f32.mxu0 %v883
      %2589 = vmatmul.mubr.f32.gmra.mrb[0].mxu0 %v880
      %v2590 = vpop.f32.mrb[0].mxu0
      %v2591 = vadd.f32 %v2366, %v2590
      %v2592 = vpop.f32.mrb[0].mxu0
      %2593 = vmatprep.mubr.f32.mxu0 %v928
      %2594 = vmatmul.mubr.f32.gmra.mrb[0].mxu0 %v926
      %v2595 = vpop.f32.mrb[0].mxu0
      %v2596 = vadd.f32 %v2371, %v2595
      %v2597 = vpop.f32.mrb[0].mxu0
      %2598 = vmatprep.mubr.f32.mxu0 %v956
      %2599 = vmatmul.mubr.f32.gmra.mrb[0].mxu0 %v953
      %v2600 = vpop.f32.mrb[0].mxu0
      %v2601 = vadd.f32 %v2376, %v2600
      %v2602 = vpop.f32.mrb[0].mxu0
      %2603 = vmatprep.mubr.f32.mxu0 %v980
      %2604 = vmatmul.mubr.f32.gmra.mrb[0].mxu0 %v978
      %v2605 = vpop.f32.mrb[0].mxu0
      %v2606 = vadd.f32 %v2381, %v2605
      %v2607 = vpop.f32.mrb[0].mxu0
      %2608 = vmatprep.mubr.f32.mxu0 %v1000
      %2609 = vmatmul.mubr.f32.gmra.mrb[0].mxu0 %v997
      %v2610 = vpop.f32.mrb[0].mxu0
      %v2611 = vadd.f32 %v2386, %v2610
      %v2612 = vpop.f32.mrb[0].mxu0
      %2613 = vmatprep.mubr.f32.mxu0 %v1024
      %2614 = vmatmul.mubr.f32.gmra.mrb[0].mxu0 %v1022
      %v2615 = vpop.f32.mrb[0].mxu0
      %v2616 = vadd.f32 %v2391, %v2615
      %v2617 = vpop.f32.mrb[0].mxu0
      %2618 = vmatprep.mubr.f32.mxu0 %v1044
      %2619 = vmatmul.mubr.f32.gmra.mrb[0].mxu0 %v1041
      %v2620 = vpop.f32.mrb[0].mxu0
      %v2621 = vadd.f32 %v2396, %v2620
      %v2622 = vpop.f32.mrb[0].mxu0
      %2623 = vmatprep.mubr.f32.mxu0 %v1068
      %2624 = vmatmul.mubr.f32.gmra.mrb[0].mxu0 %v1066
      %v2625 = vpop.f32.mrb[0].mxu0
      %v2626 = vadd.f32 %v2401, %v2625
      %v2627 = vpop.f32.mrb[0].mxu0
      %2628 = vmatprep.mubr.f32.mxu0 %v1088
      %2629 = vmatmul.mubr.f32.gmra.mrb[0].mxu0 %v1085
      %v2630 = vpop.f32.mrb[0].mxu0
      %v2631 = vadd.f32 %v2406, %v2630
      %v2632 = vpop.f32.mrb[0].mxu0
      %2633 = vmatprep.mubr.f32.mxu0 %v1112
      %2634 = vmatmul.mubr.f32.gmra.mrb[0].mxu0 %v1110
      %v2635 = vpop.f32.mrb[0].mxu0
      %v2636 = vadd.f32 %v2411, %v2635
      %v2637 = vpop.f32.mrb[0].mxu0
      %2638 = vmatprep.mubr.f32.mxu0 %v1132
      %2639 = vmatmul.mubr.f32.gmra.mrb[0].mxu0 %v1129
      %v2640 = vpop.f32.mrb[0].mxu0
      %v2641 = vadd.f32 %v2416, %v2640
      %v2642 = vpop.f32.mrb[0].mxu0
      %2643 = vmatprep.mubr.f32.mxu0 %v1156
      %2644 = vmatmul.mubr.f32.gmra.mrb[0].mxu0 %v1154
      %v2645 = vpop.f32.mrb[0].mxu0
      %v2646 = vadd.f32 %v2421, %v2645
      %v2647 = vpop.f32.mrb[0].mxu0
      %2648 = vmatprep.mubr.f32.mxu0 %v1176
      %2649 = vmatmul.mubr.f32.gmra.mrb[0].mxu0 %v1173
      %v2650 = vpop.f32.mrb[0].mxu0
      %v2651 = vadd.f32 %v2426, %v2650
      %v2652 = vpop.f32.mrb[0].mxu0
      %2653 = vmatprep.mubr.f32.mxu0 %v1200
      %2654 = vmatmul.mubr.f32.gmra.mrb[0].mxu0 %v1198
      %v2655 = vpop.f32.mrb[0].mxu0
      %v2656 = vadd.f32 %v2431, %v2655
      %v2657 = vpop.f32.mrb[0].mxu0
      %2658 = vmatprep.mubr.f32.mxu0 %v1220
      %2659 = vmatmul.mubr.f32.gmra.mrb[0].mxu0 %v1217
      %v2660 = vpop.f32.mrb[0].mxu0
      %v2661 = vadd.f32 %v2436, %v2660
      %v2662 = vpop.f32.mrb[0].mxu0
      %2663 = vmatprep.mubr.f32.mxu0 %v1244
      %2664 = vmatmul.mubr.f32.gmra.mrb[0].mxu0 %v1242
      %v2665 = vpop.f32.mrb[0].mxu0
      %v2666 = vadd.f32 %v2441, %v2665
      %v2667 = vpop.f32.mrb[0].mxu0
      %2668 = vmatprep.mubr.f32.mxu0 %v1264
      %2669 = vmatmul.mubr.f32.gmra.mrb[0].mxu0 %v1261
      %v2670 = vpop.f32.mrb[0].mxu0
      %v2671 = vadd.f32 %v2446, %v2670
      %v2672 = vpop.f32.mrb[0].mxu0
      %2673 = vmatprep.mubr.f32.mxu0 %v1288
      %2674 = vmatmul.mubr.f32.gmra.mrb[0].mxu0 %v1286
      %v2675 = vpop.f32.mrb[0].mxu0
      %v2676 = vadd.f32 %v2451, %v2675
      %v2677 = vpop.f32.mrb[0].mxu0
      %2678 = vmatprep.mubr.f32.mxu0 %v1308
      %2679 = vmatmul.mubr.f32.gmra.mrb[0].mxu0 %v1305
      %v2680 = vpop.f32.mrb[0].mxu0
      %v2681 = vadd.f32 %v2456, %v2680
      %v2682 = vpop.f32.mrb[0].mxu0
      %2683 = vmatprep.mubr.f32.mxu0 %v1332
      %2684 = vmatmul.mubr.f32.gmra.mrb[0].mxu0 %v1330
      %v2685 = vpop.f32.mrb[0].mxu0
      %v2686 = vadd.f32 %v2461, %v2685
      %v2687 = vpop.f32.mrb[0].mxu0
      %2688 = vmatprep.mubr.f32.mxu0 %v1352
      %2689 = vmatmul.mubr.f32.gmra.mrb[0].mxu0 %v1349
      %v2690 = vpop.f32.mrb[0].mxu0
      %v2691 = vadd.f32 %v2466, %v2690
      %v2692 = vpop.f32.mrb[0].mxu0
      %2693 = vmatprep.mubr.f32.mxu0 %v1376
      %2694 = vmatmul.mubr.f32.gmra.mrb[0].mxu0 %v1374
      %v2695 = vpop.f32.mrb[0].mxu0
      %v2696 = vadd.f32 %v2471, %v2695
      %v2697 = vpop.f32.mrb[0].mxu0
      %2698 = vmatprep.mubr.f32.mxu0 %v1396
      %2699 = vmatmul.mubr.f32.gmra.mrb[0].mxu0 %v1393
      %v2700 = vpop.f32.mrb[0].mxu0
      %v2701 = vadd.f32 %v2476, %v2700
      %v2702 = vpop.f32.mrb[0].mxu0
      %2703 = vmatprep.mubr.f32.mxu0 %v1420
      %2704 = vmatmul.mubr.f32.gmra.mrb[0].mxu0 %v1418
      %v2705 = vpop.f32.mrb[0].mxu0
      %v2706 = vadd.f32 %v2481, %v2705
      %v2707 = vpop.f32.mrb[0].mxu0
      %2708 = vmatprep.mubr.f32.mxu0 %v1440
      %2709 = vmatmul.mubr.f32.gmra.mrb[0].mxu0 %v1437
      %v2710 = vpop.f32.mrb[0].mxu0
      %v2711 = vadd.f32 %v2486, %v2710
      %v2712 = vpop.f32.mrb[0].mxu0
      %2713 = vmatprep.mubr.f32.mxu0 %v1464
      %2714 = vmatmul.mubr.f32.gmra.mrb[0].mxu0 %v1462
      %v2715 = vpop.f32.mrb[0].mxu0
      %v2716 = vadd.f32 %v2491, %v2715
      %v2717 = vpop.f32.mrb[0].mxu0
      %2718 = vmatprep.mubr.f32.mxu0 %v1484
      %2719 = vmatmul.mubr.f32.gmra.mrb[0].mxu0 %v1481
      %v2720 = vpop.f32.mrb[0].mxu0
      %v2721 = vadd.f32 %v2496, %v2720
      %v2722 = vpop.f32.mrb[0].mxu0
      %2723 = vmatprep.mubr.f32.mxu0 %v1508
      %2724 = vmatmul.mubr.f32.gmra.mrb[0].mxu0 %v1506
      %v2725 = vpop.f32.mrb[0].mxu0
      %v2726 = vadd.f32 %v2501, %v2725
      %v2727 = vpop.f32.mrb[0].mxu0
      %2728 = vdwg.mxu0
      %2729 = vmatprep.subr.mxu0 0.0
      %2730 = vmatpush1.msra.mxu0 %v1936
      %2731 = vmatprep.subr.mxu0 0.0
      %2732 = vmatpush1.msra.mxu0 %v1937
      %2733 = vmatprep.subr.mxu0 0.0
      %2734 = vmatpush1.msra.mxu0 %v1938
      %2735 = vmatprep.subr.mxu0 0.0
      %2736 = vmatpush1.msra.mxu0 %v1939
      %2737 = vmatprep.subr.mxu0 0.0
      %2738 = vmatpush1.msra.mxu0 %v1940
      %2739 = vmatprep.subr.mxu0 0.0
      %2740 = vmatpush1.msra.mxu0 %v1941
      %2741 = vmatprep.subr.mxu0 0.0
      %2742 = vmatpush1.msra.mxu0 %v1942
      %2743 = vmatprep.subr.mxu0 0.0
      %2744 = vmatpush1.msra.mxu0 %v1943
      %2745 = vmatprep.subr.mxu0 0.0
      %2746 = vmatpush1.msra.mxu0 %v1944
      %2747 = vmatprep.subr.mxu0 0.0
      %2748 = vmatpush1.msra.mxu0 %v1945
      %2749 = vmatprep.subr.mxu0 0.0
      %2750 = vmatpush1.msra.mxu0 %v1946
      %2751 = vmatprep.subr.mxu0 0.0
      %2752 = vmatpush1.msra.mxu0 %v1947
      %2753 = vmatprep.subr.mxu0 0.0
      %2754 = vmatpush1.msra.mxu0 %v1948
      %2755 = vmatprep.subr.mxu0 0.0
      %2756 = vmatpush1.msra.mxu0 %v1949
      %2757 = vmatprep.subr.mxu0 0.0
      %2758 = vmatpush1.msra.mxu0 %v1950
      %2759 = vmatprep.subr.mxu0 0.0
      %2760 = vmatpush1.msra.mxu0 %v1951
      %2761 = vmatprep.subr.mxu0 0.0
      %2762 = vmatpush1.msra.mxu0 %v1952
      %2763 = vmatprep.subr.mxu0 0.0
      %2764 = vmatpush1.msra.mxu0 %v1953
      %2765 = vmatprep.subr.mxu0 0.0
      %2766 = vmatpush1.msra.mxu0 %v1954
      %2767 = vmatprep.subr.mxu0 0.0
      %2768 = vmatpush1.msra.mxu0 %v1955
      %2769 = vmatprep.subr.mxu0 0.0
      %2770 = vmatpush1.msra.mxu0 %v1956
      %2771 = vmatprep.subr.mxu0 0.0
      %2772 = vmatpush1.msra.mxu0 %v1957
      %2773 = vmatprep.subr.mxu0 0.0
      %2774 = vmatpush1.msra.mxu0 %v1958
      %2775 = vmatprep.subr.mxu0 0.0
      %2776 = vmatpush1.msra.mxu0 %v1959
      %2777 = vmatprep.subr.mxu0 0.0
      %2778 = vmatpush1.msra.mxu0 %v1960
      %2779 = vmatprep.subr.mxu0 0.0
      %2780 = vmatpush1.msra.mxu0 %v1961
      %2781 = vmatprep.subr.mxu0 0.0
      %2782 = vmatpush1.msra.mxu0 %v1962
      %2783 = vmatprep.subr.mxu0 0.0
      %2784 = vmatpush1.msra.mxu0 %v1963
      %2785 = vmatprep.subr.mxu0 0.0
      %2786 = vmatpush1.msra.mxu0 %v1964
      %2787 = vmatprep.subr.mxu0 0.0
      %2788 = vmatpush1.msra.mxu0 %v1965
      %2789 = vmatprep.subr.mxu0 0.0
      %2790 = vmatpush1.msra.mxu0 %v1966
      %2791 = vmatprep.subr.mxu0 0.0
      %2792 = vmatpush1.msra.mxu0 %v1967
      %2793 = vmatprep.mubr.f32.mxu0 %v861
      %2794 = vmatmul.mubr.f32.gmra.mrb[0].mxu0 %v872
      %v2795 = vpop.f32.mrb[0].mxu0
      %v2796 = vadd.f32 %v2571, %v2795
      %v2797 = vpop.f32.mrb[0].mxu0
      %2798 = vmatprep.mubr.f32.mxu0 %v861
      %2799 = vmatmul.mubr.f32.gmra.mrb[0].mxu0 %v920
      %v2800 = vpop.f32.mrb[0].mxu0
      %v2801 = vadd.f32 %v2576, %v2800
      %v2802 = vpop.f32.mrb[0].mxu0
      %2803 = vmatprep.mubr.f32.mxu0 %v874
      %2804 = vmatmul.mubr.f32.gmra.mrb[0].mxu0 %v872
      %v2805 = vpop.f32.mrb[0].mxu0
      %v2806 = vadd.f32 %v2581, %v2805
      %v2807 = vpop.f32.mrb[0].mxu0
      %2808 = vmatprep.mubr.f32.mxu0 %v922
      %2809 = vmatmul.mubr.f32.gmra.mrb[0].mxu0 %v920
      %v2810 = vpop.f32.mrb[0].mxu0
      %v2811 = vadd.f32 %v2586, %v2810
      %v2812 = vpop.f32.mrb[0].mxu0
      %2813 = vmatprep.mubr.f32.mxu0 %v888
      %2814 = vmatmul.mubr.f32.gmra.mrb[0].mxu0 %v886
      %v2815 = vpop.f32.mrb[0].mxu0
      %v2816 = vadd.f32 %v2591, %v2815
      %v2817 = vpop.f32.mrb[0].mxu0
      %2818 = vmatprep.mubr.f32.mxu0 %v932
      %2819 = vmatmul.mubr.f32.gmra.mrb[0].mxu0 %v930
      %v2820 = vpop.f32.mrb[0].mxu0
      %v2821 = vadd.f32 %v2596, %v2820
      %v2822 = vpop.f32.mrb[0].mxu0
      %2823 = vmatprep.mubr.f32.mxu0 %v961
      %2824 = vmatmul.mubr.f32.gmra.mrb[0].mxu0 %v959
      %v2825 = vpop.f32.mrb[0].mxu0
      %v2826 = vadd.f32 %v2601, %v2825
      %v2827 = vpop.f32.mrb[0].mxu0
      %2828 = vmatprep.mubr.f32.mxu0 %v984
      %2829 = vmatmul.mubr.f32.gmra.mrb[0].mxu0 %v982
      %v2830 = vpop.f32.mrb[0].mxu0
      %v2831 = vadd.f32 %v2606, %v2830
      %v2832 = vpop.f32.mrb[0].mxu0
      %2833 = vmatprep.mubr.f32.mxu0 %v1005
      %2834 = vmatmul.mubr.f32.gmra.mrb[0].mxu0 %v1003
      %v2835 = vpop.f32.mrb[0].mxu0
      %v2836 = vadd.f32 %v2611, %v2835
      %v2837 = vpop.f32.mrb[0].mxu0
      %2838 = vmatprep.mubr.f32.mxu0 %v1028
      %2839 = vmatmul.mubr.f32.gmra.mrb[0].mxu0 %v1026
      %v2840 = vpop.f32.mrb[0].mxu0
      %v2841 = vadd.f32 %v2616, %v2840
      %v2842 = vpop.f32.mrb[0].mxu0
      %2843 = vmatprep.mubr.f32.mxu0 %v1049
      %2844 = vmatmul.mubr.f32.gmra.mrb[0].mxu0 %v1047
      %v2845 = vpop.f32.mrb[0].mxu0
      %v2846 = vadd.f32 %v2621, %v2845
      %v2847 = vpop.f32.mrb[0].mxu0
      %2848 = vmatprep.mubr.f32.mxu0 %v1072
      %2849 = vmatmul.mubr.f32.gmra.mrb[0].mxu0 %v1070
      %v2850 = vpop.f32.mrb[0].mxu0
      %v2851 = vadd.f32 %v2626, %v2850
      %v2852 = vpop.f32.mrb[0].mxu0
      %2853 = vmatprep.mubr.f32.mxu0 %v1093
      %2854 = vmatmul.mubr.f32.gmra.mrb[0].mxu0 %v1091
      %v2855 = vpop.f32.mrb[0].mxu0
      %v2856 = vadd.f32 %v2631, %v2855
      %v2857 = vpop.f32.mrb[0].mxu0
      %2858 = vmatprep.mubr.f32.mxu0 %v1116
      %2859 = vmatmul.mubr.f32.gmra.mrb[0].mxu0 %v1114
      %v2860 = vpop.f32.mrb[0].mxu0
      %v2861 = vadd.f32 %v2636, %v2860
      %v2862 = vpop.f32.mrb[0].mxu0
      %2863 = vmatprep.mubr.f32.mxu0 %v1137
      %2864 = vmatmul.mubr.f32.gmra.mrb[0].mxu0 %v1135
      %v2865 = vpop.f32.mrb[0].mxu0
      %v2866 = vadd.f32 %v2641, %v2865
      %v2867 = vpop.f32.mrb[0].mxu0
      %2868 = vmatprep.mubr.f32.mxu0 %v1160
      %2869 = vmatmul.mubr.f32.gmra.mrb[0].mxu0 %v1158
      %v2870 = vpop.f32.mrb[0].mxu0
      %v2871 = vadd.f32 %v2646, %v2870
      %v2872 = vpop.f32.mrb[0].mxu0
      %2873 = vmatprep.mubr.f32.mxu0 %v1181
      %2874 = vmatmul.mubr.f32.gmra.mrb[0].mxu0 %v1179
      %v2875 = vpop.f32.mrb[0].mxu0
      %v2876 = vadd.f32 %v2651, %v2875
      %v2877 = vpop.f32.mrb[0].mxu0
      %2878 = vmatprep.mubr.f32.mxu0 %v1204
      %2879 = vmatmul.mubr.f32.gmra.mrb[0].mxu0 %v1202
      %v2880 = vpop.f32.mrb[0].mxu0
      %v2881 = vadd.f32 %v2656, %v2880
      %v2882 = vpop.f32.mrb[0].mxu0
      %2883 = vmatprep.mubr.f32.mxu0 %v1225
      %2884 = vmatmul.mubr.f32.gmra.mrb[0].mxu0 %v1223
      %v2885 = vpop.f32.mrb[0].mxu0
      %v2886 = vadd.f32 %v2661, %v2885
      %v2887 = vpop.f32.mrb[0].mxu0
      %2888 = vmatprep.mubr.f32.mxu0 %v1248
      %2889 = vmatmul.mubr.f32.gmra.mrb[0].mxu0 %v1246
      %v2890 = vpop.f32.mrb[0].mxu0
      %v2891 = vadd.f32 %v2666, %v2890
      %v2892 = vpop.f32.mrb[0].mxu0
      %2893 = vmatprep.mubr.f32.mxu0 %v1269
      %2894 = vmatmul.mubr.f32.gmra.mrb[0].mxu0 %v1267
      %v2895 = vpop.f32.mrb[0].mxu0
      %v2896 = vadd.f32 %v2671, %v2895
      %v2897 = vpop.f32.mrb[0].mxu0
      %2898 = vmatprep.mubr.f32.mxu0 %v1292
      %2899 = vmatmul.mubr.f32.gmra.mrb[0].mxu0 %v1290
      %v2900 = vpop.f32.mrb[0].mxu0
      %v2901 = vadd.f32 %v2676, %v2900
      %v2902 = vpop.f32.mrb[0].mxu0
      %2903 = vmatprep.mubr.f32.mxu0 %v1313
      %2904 = vmatmul.mubr.f32.gmra.mrb[0].mxu0 %v1311
      %v2905 = vpop.f32.mrb[0].mxu0
      %v2906 = vadd.f32 %v2681, %v2905
      %v2907 = vpop.f32.mrb[0].mxu0
      %2908 = vmatprep.mubr.f32.mxu0 %v1336
      %2909 = vmatmul.mubr.f32.gmra.mrb[0].mxu0 %v1334
      %v2910 = vpop.f32.mrb[0].mxu0
      %v2911 = vadd.f32 %v2686, %v2910
      %v2912 = vpop.f32.mrb[0].mxu0
      %2913 = vmatprep.mubr.f32.mxu0 %v1357
      %2914 = vmatmul.mubr.f32.gmra.mrb[0].mxu0 %v1355
      %v2915 = vpop.f32.mrb[0].mxu0
      %v2916 = vadd.f32 %v2691, %v2915
      %v2917 = vpop.f32.mrb[0].mxu0
      %2918 = vmatprep.mubr.f32.mxu0 %v1380
      %2919 = vmatmul.mubr.f32.gmra.mrb[0].mxu0 %v1378
      %v2920 = vpop.f32.mrb[0].mxu0
      %v2921 = vadd.f32 %v2696, %v2920
      %v2922 = vpop.f32.mrb[0].mxu0
      %2923 = vmatprep.mubr.f32.mxu0 %v1401
      %2924 = vmatmul.mubr.f32.gmra.mrb[0].mxu0 %v1399
      %v2925 = vpop.f32.mrb[0].mxu0
      %v2926 = vadd.f32 %v2701, %v2925
      %v2927 = vpop.f32.mrb[0].mxu0
      %2928 = vmatprep.mubr.f32.mxu0 %v1424
      %2929 = vmatmul.mubr.f32.gmra.mrb[0].mxu0 %v1422
      %v2930 = vpop.f32.mrb[0].mxu0
      %v2931 = vadd.f32 %v2706, %v2930
      %v2932 = vpop.f32.mrb[0].mxu0
      %2933 = vmatprep.mubr.f32.mxu0 %v1445
      %2934 = vmatmul.mubr.f32.gmra.mrb[0].mxu0 %v1443
      %v2935 = vpop.f32.mrb[0].mxu0
      %v2936 = vadd.f32 %v2711, %v2935
      %v2937 = vpop.f32.mrb[0].mxu0
      %2938 = vmatprep.mubr.f32.mxu0 %v1468
      %2939 = vmatmul.mubr.f32.gmra.mrb[0].mxu0 %v1466
      %v2940 = vpop.f32.mrb[0].mxu0
      %v2941 = vadd.f32 %v2716, %v2940
      %v2942 = vpop.f32.mrb[0].mxu0
      %2943 = vmatprep.mubr.f32.mxu0 %v1489
      %2944 = vmatmul.mubr.f32.gmra.mrb[0].mxu0 %v1487
      %v2945 = vpop.f32.mrb[0].mxu0
      %v2946 = vadd.f32 %v2721, %v2945
      %v2947 = vpop.f32.mrb[0].mxu0
      %2948 = vmatprep.mubr.f32.mxu0 %v1512
      %2949 = vmatmul.mubr.f32.gmra.mrb[0].mxu0 %v1510
      %v2950 = vpop.f32.mrb[0].mxu0
      %v2951 = vadd.f32 %v2726, %v2950
      %v2952 = vpop.f32.mrb[0].mxu0
      %2953 = vdwg.mxu0
      %2954 = vmatprep.subr.mxu0 0.0
      %2955 = vmatpush1.msra.mxu0 %v1968
      %2956 = vmatprep.subr.mxu0 0.0
      %2957 = vmatpush1.msra.mxu0 %v1969
      %2958 = vmatprep.subr.mxu0 0.0
      %2959 = vmatpush1.msra.mxu0 %v1970
      %2960 = vmatprep.subr.mxu0 0.0
      %2961 = vmatpush1.msra.mxu0 %v1971
      %2962 = vmatprep.subr.mxu0 0.0
      %2963 = vmatpush1.msra.mxu0 %v1972
      %2964 = vmatprep.subr.mxu0 0.0
      %2965 = vmatpush1.msra.mxu0 %v1973
      %2966 = vmatprep.subr.mxu0 0.0
      %2967 = vmatpush1.msra.mxu0 %v1974
      %2968 = vmatprep.subr.mxu0 0.0
      %2969 = vmatpush1.msra.mxu0 %v1975
      %2970 = vmatprep.subr.mxu0 0.0
      %2971 = vmatpush1.msra.mxu0 %v1976
      %2972 = vmatprep.subr.mxu0 0.0
      %2973 = vmatpush1.msra.mxu0 %v1977
      %2974 = vmatprep.subr.mxu0 0.0
      %2975 = vmatpush1.msra.mxu0 %v1978
      %2976 = vmatprep.subr.mxu0 0.0
      %2977 = vmatpush1.msra.mxu0 %v1979
      %2978 = vmatprep.subr.mxu0 0.0
      %2979 = vmatpush1.msra.mxu0 %v1980
      %2980 = vmatprep.subr.mxu0 0.0
      %2981 = vmatpush1.msra.mxu0 %v1981
      %2982 = vmatprep.subr.mxu0 0.0
      %2983 = vmatpush1.msra.mxu0 %v1982
      %2984 = vmatprep.subr.mxu0 0.0
      %2985 = vmatpush1.msra.mxu0 %v1983
      %2986 = vmatprep.subr.mxu0 0.0
      %2987 = vmatpush1.msra.mxu0 %v1984
      %2988 = vmatprep.subr.mxu0 0.0
      %2989 = vmatpush1.msra.mxu0 %v1985
      %2990 = vmatprep.subr.mxu0 0.0
      %2991 = vmatpush1.msra.mxu0 %v1986
      %2992 = vmatprep.subr.mxu0 0.0
      %2993 = vmatpush1.msra.mxu0 %v1987
      %2994 = vmatprep.subr.mxu0 0.0
      %2995 = vmatpush1.msra.mxu0 %v1988
      %2996 = vmatprep.subr.mxu0 0.0
      %2997 = vmatpush1.msra.mxu0 %v1989
      %2998 = vmatprep.subr.mxu0 0.0
      %2999 = vmatpush1.msra.mxu0 %v1990
      %3000 = vmatprep.subr.mxu0 0.0
      %3001 = vmatpush1.msra.mxu0 %v1991
      %3002 = vmatprep.subr.mxu0 0.0
      %3003 = vmatpush1.msra.mxu0 %v1992
      %3004 = vmatprep.subr.mxu0 0.0
      %3005 = vmatpush1.msra.mxu0 %v1993
      %3006 = vmatprep.subr.mxu0 0.0
      %3007 = vmatpush1.msra.mxu0 %v1994
      %3008 = vmatprep.subr.mxu0 0.0
      %3009 = vmatpush1.msra.mxu0 %v1995
      %3010 = vmatprep.subr.mxu0 0.0
      %3011 = vmatpush1.msra.mxu0 %v1996
      %3012 = vmatprep.subr.mxu0 0.0
      %3013 = vmatpush1.msra.mxu0 %v1997
      %3014 = vmatprep.subr.mxu0 0.0
      %3015 = vmatpush1.msra.mxu0 %v1998
      %3016 = vmatprep.subr.mxu0 0.0
      %3017 = vmatpush1.msra.mxu0 %v1999
      %3018 = vmatprep.mubr.f32.mxu0 %v866
      %3019 = vmatmul.mubr.f32.gmra.mrb[0].mxu0 %v863
      %v3020 = vpop.f32.mrb[0].mxu0
      %v3021 = vadd.f32 %v2796, %v3020
      %v3022 = vpop.f32.mrb[0].mxu0
      %3023 = vmatprep.mubr.f32.mxu0 %v918
      %3024 = vmatmul.mubr.f32.gmra.mrb[0].mxu0 %v917
      %v3025 = vpop.f32.mrb[0].mxu0
      %v3026 = vadd.f32 %v2801, %v3025
      %v3027 = vpop.f32.mrb[0].mxu0
      %3028 = vmatprep.mubr.f32.mxu0 %v880
      %3029 = vmatmul.mubr.f32.gmra.mrb[0].mxu0 %v877
      %v3030 = vpop.f32.mrb[0].mxu0
      %v3031 = vadd.f32 %v2806, %v3030
      %v3032 = vpop.f32.mrb[0].mxu0
      %3033 = vmatprep.mubr.f32.mxu0 %v926
      %3034 = vmatmul.mubr.f32.gmra.mrb[0].mxu0 %v924
      %v3035 = vpop.f32.mrb[0].mxu0
      %v3036 = vadd.f32 %v2811, %v3035
      %v3037 = vpop.f32.mrb[0].mxu0
      %3038 = vmatprep.mubr.f32.mxu0 %v953
      %3039 = vmatmul.mubr.f32.gmra.mrb[0].mxu0 %v891
      %v3040 = vpop.f32.mrb[0].mxu0
      %v3041 = vadd.f32 %v2816, %v3040
      %v3042 = vpop.f32.mrb[0].mxu0
      %3043 = vmatprep.mubr.f32.mxu0 %v978
      %3044 = vmatmul.mubr.f32.gmra.mrb[0].mxu0 %v934
      %v3045 = vpop.f32.mrb[0].mxu0
      %v3046 = vadd.f32 %v2821, %v3045
      %v3047 = vpop.f32.mrb[0].mxu0
      %3048 = vmatprep.mubr.f32.mxu0 %v997
      %3049 = vmatmul.mubr.f32.gmra.mrb[0].mxu0 %v906
      %v3050 = vpop.f32.mrb[0].mxu0
      %v3051 = vadd.f32 %v2826, %v3050
      %v3052 = vpop.f32.mrb[0].mxu0
      %3053 = vmatprep.mubr.f32.mxu0 %v1022
      %3054 = vmatmul.mubr.f32.gmra.mrb[0].mxu0 %v944
      %v3055 = vpop.f32.mrb[0].mxu0
      %v3056 = vadd.f32 %v2831, %v3055
      %v3057 = vpop.f32.mrb[0].mxu0
      %3058 = vmatprep.mubr.f32.mxu0 %v1041
      %3059 = vmatmul.mubr.f32.gmra.mrb[0].mxu0 %v967
      %v3060 = vpop.f32.mrb[0].mxu0
      %v3061 = vadd.f32 %v2836, %v3060
      %v3062 = vpop.f32.mrb[0].mxu0
      %3063 = vmatprep.mubr.f32.mxu0 %v1066
      %3064 = vmatmul.mubr.f32.gmra.mrb[0].mxu0 %v988
      %v3065 = vpop.f32.mrb[0].mxu0
      %v3066 = vadd.f32 %v2841, %v3065
      %v3067 = vpop.f32.mrb[0].mxu0
      %3068 = vmatprep.mubr.f32.mxu0 %v1085
      %3069 = vmatmul.mubr.f32.gmra.mrb[0].mxu0 %v1011
      %v3070 = vpop.f32.mrb[0].mxu0
      %v3071 = vadd.f32 %v2846, %v3070
      %v3072 = vpop.f32.mrb[0].mxu0
      %3073 = vmatprep.mubr.f32.mxu0 %v1110
      %3074 = vmatmul.mubr.f32.gmra.mrb[0].mxu0 %v1032
      %v3075 = vpop.f32.mrb[0].mxu0
      %v3076 = vadd.f32 %v2851, %v3075
      %v3077 = vpop.f32.mrb[0].mxu0
      %3078 = vmatprep.mubr.f32.mxu0 %v1129
      %3079 = vmatmul.mubr.f32.gmra.mrb[0].mxu0 %v1055
      %v3080 = vpop.f32.mrb[0].mxu0
      %v3081 = vadd.f32 %v2856, %v3080
      %v3082 = vpop.f32.mrb[0].mxu0
      %3083 = vmatprep.mubr.f32.mxu0 %v1154
      %3084 = vmatmul.mubr.f32.gmra.mrb[0].mxu0 %v1076
      %v3085 = vpop.f32.mrb[0].mxu0
      %v3086 = vadd.f32 %v2861, %v3085
      %v3087 = vpop.f32.mrb[0].mxu0
      %3088 = vmatprep.mubr.f32.mxu0 %v1173
      %3089 = vmatmul.mubr.f32.gmra.mrb[0].mxu0 %v1099
      %v3090 = vpop.f32.mrb[0].mxu0
      %v3091 = vadd.f32 %v2866, %v3090
      %v3092 = vpop.f32.mrb[0].mxu0
      %3093 = vmatprep.mubr.f32.mxu0 %v1198
      %3094 = vmatmul.mubr.f32.gmra.mrb[0].mxu0 %v1120
      %v3095 = vpop.f32.mrb[0].mxu0
      %v3096 = vadd.f32 %v2871, %v3095
      %v3097 = vpop.f32.mrb[0].mxu0
      %3098 = vmatprep.mubr.f32.mxu0 %v1217
      %3099 = vmatmul.mubr.f32.gmra.mrb[0].mxu0 %v1143
      %v3100 = vpop.f32.mrb[0].mxu0
      %v3101 = vadd.f32 %v2876, %v3100
      %v3102 = vpop.f32.mrb[0].mxu0
      %3103 = vmatprep.mubr.f32.mxu0 %v1242
      %3104 = vmatmul.mubr.f32.gmra.mrb[0].mxu0 %v1164
      %v3105 = vpop.f32.mrb[0].mxu0
      %v3106 = vadd.f32 %v2881, %v3105
      %v3107 = vpop.f32.mrb[0].mxu0
      %3108 = vmatprep.mubr.f32.mxu0 %v1261
      %3109 = vmatmul.mubr.f32.gmra.mrb[0].mxu0 %v1187
      %v3110 = vpop.f32.mrb[0].mxu0
      %v3111 = vadd.f32 %v2886, %v3110
      %v3112 = vpop.f32.mrb[0].mxu0
      %3113 = vmatprep.mubr.f32.mxu0 %v1286
      %3114 = vmatmul.mubr.f32.gmra.mrb[0].mxu0 %v1208
      %v3115 = vpop.f32.mrb[0].mxu0
      %v3116 = vadd.f32 %v2891, %v3115
      %v3117 = vpop.f32.mrb[0].mxu0
      %3118 = vmatprep.mubr.f32.mxu0 %v1305
      %3119 = vmatmul.mubr.f32.gmra.mrb[0].mxu0 %v1231
      %v3120 = vpop.f32.mrb[0].mxu0
      %v3121 = vadd.f32 %v2896, %v3120
      %v3122 = vpop.f32.mrb[0].mxu0
      %3123 = vmatprep.mubr.f32.mxu0 %v1330
      %3124 = vmatmul.mubr.f32.gmra.mrb[0].mxu0 %v1252
      %v3125 = vpop.f32.mrb[0].mxu0
      %v3126 = vadd.f32 %v2901, %v3125
      %v3127 = vpop.f32.mrb[0].mxu0
      %3128 = vmatprep.mubr.f32.mxu0 %v1349
      %3129 = vmatmul.mubr.f32.gmra.mrb[0].mxu0 %v1275
      %v3130 = vpop.f32.mrb[0].mxu0
      %v3131 = vadd.f32 %v2906, %v3130
      %v3132 = vpop.f32.mrb[0].mxu0
      %3133 = vmatprep.mubr.f32.mxu0 %v1374
      %3134 = vmatmul.mubr.f32.gmra.mrb[0].mxu0 %v1296
      %v3135 = vpop.f32.mrb[0].mxu0
      %v3136 = vadd.f32 %v2911, %v3135
      %v3137 = vpop.f32.mrb[0].mxu0
      %3138 = vmatprep.mubr.f32.mxu0 %v1393
      %3139 = vmatmul.mubr.f32.gmra.mrb[0].mxu0 %v1319
      %v3140 = vpop.f32.mrb[0].mxu0
      %v3141 = vadd.f32 %v2916, %v3140
      %v3142 = vpop.f32.mrb[0].mxu0
      %3143 = vmatprep.mubr.f32.mxu0 %v1418
      %3144 = vmatmul.mubr.f32.gmra.mrb[0].mxu0 %v1340
      %v3145 = vpop.f32.mrb[0].mxu0
      %v3146 = vadd.f32 %v2921, %v3145
      %v3147 = vpop.f32.mrb[0].mxu0
      %3148 = vmatprep.mubr.f32.mxu0 %v1437
      %3149 = vmatmul.mubr.f32.gmra.mrb[0].mxu0 %v1363
      %v3150 = vpop.f32.mrb[0].mxu0
      %v3151 = vadd.f32 %v2926, %v3150
      %v3152 = vpop.f32.mrb[0].mxu0
      %3153 = vmatprep.mubr.f32.mxu0 %v1462
      %3154 = vmatmul.mubr.f32.gmra.mrb[0].mxu0 %v1384
      %v3155 = vpop.f32.mrb[0].mxu0
      %v3156 = vadd.f32 %v2931, %v3155
      %v3157 = vpop.f32.mrb[0].mxu0
      %3158 = vmatprep.mubr.f32.mxu0 %v1481
      %3159 = vmatmul.mubr.f32.gmra.mrb[0].mxu0 %v1407
      %v3160 = vpop.f32.mrb[0].mxu0
      %v3161 = vadd.f32 %v2936, %v3160
      %v3162 = vpop.f32.mrb[0].mxu0
      %3163 = vmatprep.mubr.f32.mxu0 %v1506
      %3164 = vmatmul.mubr.f32.gmra.mrb[0].mxu0 %v1428
      %v3165 = vpop.f32.mrb[0].mxu0
      %v3166 = vadd.f32 %v2941, %v3165
      %v3167 = vpop.f32.mrb[0].mxu0
      %3168 = vmatprep.mubr.f32.mxu0 %v1525
      %3169 = vmatmul.mubr.f32.gmra.mrb[0].mxu0 %v1451
      %v3170 = vpop.f32.mrb[0].mxu0
      %v3171 = vadd.f32 %v2946, %v3170
      %v3172 = vpop.f32.mrb[0].mxu0
      %3173 = vmatprep.mubr.f32.mxu0 %v1547
      %3174 = vmatmul.mubr.f32.gmra.mrb[0].mxu0 %v1472
      %v3175 = vpop.f32.mrb[0].mxu0
      %v3176 = vadd.f32 %v2951, %v3175
      %v3177 = vpop.f32.mrb[0].mxu0
      %3178 = vdwg.mxu0
      %3179 = vmatprep.subr.mxu0 0.0
      %3180 = vmatpush1.msra.mxu0 %v2000
      %3181 = vmatprep.subr.mxu0 0.0
      %3182 = vmatpush1.msra.mxu0 %v2001
      %3183 = vmatprep.subr.mxu0 0.0
      %3184 = vmatpush1.msra.mxu0 %v2002
      %3185 = vmatprep.subr.mxu0 0.0
      %3186 = vmatpush1.msra.mxu0 %v2003
      %3187 = vmatprep.subr.mxu0 0.0
      %3188 = vmatpush1.msra.mxu0 %v2004
      %3189 = vmatprep.subr.mxu0 0.0
      %3190 = vmatpush1.msra.mxu0 %v2005
      %3191 = vmatprep.subr.mxu0 0.0
      %3192 = vmatpush1.msra.mxu0 %v2006
      %3193 = vmatprep.subr.mxu0 0.0
      %3194 = vmatpush1.msra.mxu0 %v2007
      %3195 = vmatprep.subr.mxu0 0.0
      %3196 = vmatpush1.msra.mxu0 %v2008
      %3197 = vmatprep.subr.mxu0 0.0
      %3198 = vmatpush1.msra.mxu0 %v2009
      %3199 = vmatprep.subr.mxu0 0.0
      %3200 = vmatpush1.msra.mxu0 %v2010
      %3201 = vmatprep.subr.mxu0 0.0
      %3202 = vmatpush1.msra.mxu0 %v2011
      %3203 = vmatprep.subr.mxu0 0.0
      %3204 = vmatpush1.msra.mxu0 %v2012
      %3205 = vmatprep.subr.mxu0 0.0
      %3206 = vmatpush1.msra.mxu0 %v2013
      %3207 = vmatprep.subr.mxu0 0.0
      %3208 = vmatpush1.msra.mxu0 %v2014
      %3209 = vmatprep.subr.mxu0 0.0
      %3210 = vmatpush1.msra.mxu0 %v2015
      %3211 = vmatprep.subr.mxu0 0.0
      %3212 = vmatpush1.msra.mxu0 %v2016
      %3213 = vmatprep.subr.mxu0 0.0
      %3214 = vmatpush1.msra.mxu0 %v2017
      %3215 = vmatprep.subr.mxu0 0.0
      %3216 = vmatpush1.msra.mxu0 %v2018
      %3217 = vmatprep.subr.mxu0 0.0
      %3218 = vmatpush1.msra.mxu0 %v2019
      %3219 = vmatprep.subr.mxu0 0.0
      %3220 = vmatpush1.msra.mxu0 %v2020
      %3221 = vmatprep.subr.mxu0 0.0
      %3222 = vmatpush1.msra.mxu0 %v2021
      %3223 = vmatprep.subr.mxu0 0.0
      %3224 = vmatpush1.msra.mxu0 %v2022
      %3225 = vmatprep.subr.mxu0 0.0
      %3226 = vmatpush1.msra.mxu0 %v2023
      %3227 = vmatprep.subr.mxu0 0.0
      %3228 = vmatpush1.msra.mxu0 %v2024
      %3229 = vmatprep.subr.mxu0 0.0
      %3230 = vmatpush1.msra.mxu0 %v2025
      %3231 = vmatprep.subr.mxu0 0.0
      %3232 = vmatpush1.msra.mxu0 %v2026
      %3233 = vmatprep.subr.mxu0 0.0
      %3234 = vmatpush1.msra.mxu0 %v2027
      %3235 = vmatprep.subr.mxu0 0.0
      %3236 = vmatpush1.msra.mxu0 %v2028
      %3237 = vmatprep.subr.mxu0 0.0
      %3238 = vmatpush1.msra.mxu0 %v2029
      %3239 = vmatprep.subr.mxu0 0.0
      %3240 = vmatpush1.msra.mxu0 %v2030
      %3241 = vmatprep.subr.mxu0 0.0
      %3242 = vmatpush1.msra.mxu0 %v2031
      %3243 = vmatprep.mubr.f32.mxu0 %v872
      %3244 = vmatmul.mubr.f32.gmra.mrb[0].mxu0 %v869
      %v3245 = vpop.f32.mrb[0].mxu0
      %v3246 = vadd.f32 %v3021, %v3245
      %v3247 = vpop.f32.mrb[0].mxu0
      %3248 = vmatprep.mubr.f32.mxu0 %v920
      %3249 = vmatmul.mubr.f32.gmra.mrb[0].mxu0 %v919
      %v3250 = vpop.f32.mrb[0].mxu0
      %v3251 = vadd.f32 %v3026, %v3250
      %v3252 = vpop.f32.mrb[0].mxu0
      %3253 = vmatprep.mubr.f32.mxu0 %v886
      %3254 = vmatmul.mubr.f32.gmra.mrb[0].mxu0 %v883
      %v3255 = vpop.f32.mrb[0].mxu0
      %v3256 = vadd.f32 %v3031, %v3255
      %v3257 = vpop.f32.mrb[0].mxu0
      %3258 = vmatprep.mubr.f32.mxu0 %v930
      %3259 = vmatmul.mubr.f32.gmra.mrb[0].mxu0 %v928
      %v3260 = vpop.f32.mrb[0].mxu0
      %v3261 = vadd.f32 %v3036, %v3260
      %v3262 = vpop.f32.mrb[0].mxu0
      %3263 = vmatprep.mubr.f32.mxu0 %v959
      %3264 = vmatmul.mubr.f32.gmra.mrb[0].mxu0 %v956
      %v3265 = vpop.f32.mrb[0].mxu0
      %v3266 = vadd.f32 %v3041, %v3265
      %v3267 = vpop.f32.mrb[0].mxu0
      %3268 = vmatprep.mubr.f32.mxu0 %v982
      %3269 = vmatmul.mubr.f32.gmra.mrb[0].mxu0 %v980
      %v3270 = vpop.f32.mrb[0].mxu0
      %v3271 = vadd.f32 %v3046, %v3270
      %v3272 = vpop.f32.mrb[0].mxu0
      %3273 = vmatprep.mubr.f32.mxu0 %v1003
      %3274 = vmatmul.mubr.f32.gmra.mrb[0].mxu0 %v1000
      %v3275 = vpop.f32.mrb[0].mxu0
      %v3276 = vadd.f32 %v3051, %v3275
      %v3277 = vpop.f32.mrb[0].mxu0
      %3278 = vmatprep.mubr.f32.mxu0 %v1026
      %3279 = vmatmul.mubr.f32.gmra.mrb[0].mxu0 %v1024
      %v3280 = vpop.f32.mrb[0].mxu0
      %v3281 = vadd.f32 %v3056, %v3280
      %v3282 = vpop.f32.mrb[0].mxu0
      %3283 = vmatprep.mubr.f32.mxu0 %v1047
      %3284 = vmatmul.mubr.f32.gmra.mrb[0].mxu0 %v1044
      %v3285 = vpop.f32.mrb[0].mxu0
      %v3286 = vadd.f32 %v3061, %v3285
      %v3287 = vpop.f32.mrb[0].mxu0
      %3288 = vmatprep.mubr.f32.mxu0 %v1070
      %3289 = vmatmul.mubr.f32.gmra.mrb[0].mxu0 %v1068
      %v3290 = vpop.f32.mrb[0].mxu0
      %v3291 = vadd.f32 %v3066, %v3290
      %v3292 = vpop.f32.mrb[0].mxu0
      %3293 = vmatprep.mubr.f32.mxu0 %v1091
      %3294 = vmatmul.mubr.f32.gmra.mrb[0].mxu0 %v1088
      %v3295 = vpop.f32.mrb[0].mxu0
      %v3296 = vadd.f32 %v3071, %v3295
      %v3297 = vpop.f32.mrb[0].mxu0
      %3298 = vmatprep.mubr.f32.mxu0 %v1114
      %3299 = vmatmul.mubr.f32.gmra.mrb[0].mxu0 %v1112
      %v3300 = vpop.f32.mrb[0].mxu0
      %v3301 = vadd.f32 %v3076, %v3300
      %v3302 = vpop.f32.mrb[0].mxu0
      %3303 = vmatprep.mubr.f32.mxu0 %v1135
      %3304 = vmatmul.mubr.f32.gmra.mrb[0].mxu0 %v1132
      %v3305 = vpop.f32.mrb[0].mxu0
      %v3306 = vadd.f32 %v3081, %v3305
      %v3307 = vpop.f32.mrb[0].mxu0
      %3308 = vmatprep.mubr.f32.mxu0 %v1158
      %3309 = vmatmul.mubr.f32.gmra.mrb[0].mxu0 %v1156
      %v3310 = vpop.f32.mrb[0].mxu0
      %v3311 = vadd.f32 %v3086, %v3310
      %v3312 = vpop.f32.mrb[0].mxu0
      %3313 = vmatprep.mubr.f32.mxu0 %v1179
      %3314 = vmatmul.mubr.f32.gmra.mrb[0].mxu0 %v1176
      %v3315 = vpop.f32.mrb[0].mxu0
      %v3316 = vadd.f32 %v3091, %v3315
      %v3317 = vpop.f32.mrb[0].mxu0
      %3318 = vmatprep.mubr.f32.mxu0 %v1202
      %3319 = vmatmul.mubr.f32.gmra.mrb[0].mxu0 %v1200
      %v3320 = vpop.f32.mrb[0].mxu0
      %v3321 = vadd.f32 %v3096, %v3320
      %v3322 = vpop.f32.mrb[0].mxu0
      %3323 = vmatprep.mubr.f32.mxu0 %v1223
      %3324 = vmatmul.mubr.f32.gmra.mrb[0].mxu0 %v1220
      %v3325 = vpop.f32.mrb[0].mxu0
      %v3326 = vadd.f32 %v3101, %v3325
      %v3327 = vpop.f32.mrb[0].mxu0
      %3328 = vmatprep.mubr.f32.mxu0 %v1246
      %3329 = vmatmul.mubr.f32.gmra.mrb[0].mxu0 %v1244
      %v3330 = vpop.f32.mrb[0].mxu0
      %v3331 = vadd.f32 %v3106, %v3330
      %v3332 = vpop.f32.mrb[0].mxu0
      %3333 = vmatprep.mubr.f32.mxu0 %v1267
      %3334 = vmatmul.mubr.f32.gmra.mrb[0].mxu0 %v1264
      %v3335 = vpop.f32.mrb[0].mxu0
      %v3336 = vadd.f32 %v3111, %v3335
      %v3337 = vpop.f32.mrb[0].mxu0
      %3338 = vmatprep.mubr.f32.mxu0 %v1290
      %3339 = vmatmul.mubr.f32.gmra.mrb[0].mxu0 %v1288
      %v3340 = vpop.f32.mrb[0].mxu0
      %v3341 = vadd.f32 %v3116, %v3340
      %v3342 = vpop.f32.mrb[0].mxu0
      %3343 = vmatprep.mubr.f32.mxu0 %v1311
      %3344 = vmatmul.mubr.f32.gmra.mrb[0].mxu0 %v1308
      %v3345 = vpop.f32.mrb[0].mxu0
      %v3346 = vadd.f32 %v3121, %v3345
      %v3347 = vpop.f32.mrb[0].mxu0
      %3348 = vmatprep.mubr.f32.mxu0 %v1334
      %3349 = vmatmul.mubr.f32.gmra.mrb[0].mxu0 %v1332
      %v3350 = vpop.f32.mrb[0].mxu0
      %v3351 = vadd.f32 %v3126, %v3350
      %v3352 = vpop.f32.mrb[0].mxu0
      %3353 = vmatprep.mubr.f32.mxu0 %v1355
      %3354 = vmatmul.mubr.f32.gmra.mrb[0].mxu0 %v1352
      %v3355 = vpop.f32.mrb[0].mxu0
      %v3356 = vadd.f32 %v3131, %v3355
      %v3357 = vpop.f32.mrb[0].mxu0
      %3358 = vmatprep.mubr.f32.mxu0 %v1378
      %3359 = vmatmul.mubr.f32.gmra.mrb[0].mxu0 %v1376
      %v3360 = vpop.f32.mrb[0].mxu0
      %v3361 = vadd.f32 %v3136, %v3360
      %v3362 = vpop.f32.mrb[0].mxu0
      %3363 = vmatprep.mubr.f32.mxu0 %v1399
      %3364 = vmatmul.mubr.f32.gmra.mrb[0].mxu0 %v1396
      %v3365 = vpop.f32.mrb[0].mxu0
      %v3366 = vadd.f32 %v3141, %v3365
      %v3367 = vpop.f32.mrb[0].mxu0
      %3368 = vmatprep.mubr.f32.mxu0 %v1422
      %3369 = vmatmul.mubr.f32.gmra.mrb[0].mxu0 %v1420
      %v3370 = vpop.f32.mrb[0].mxu0
      %v3371 = vadd.f32 %v3146, %v3370
      %v3372 = vpop.f32.mrb[0].mxu0
      %3373 = vmatprep.mubr.f32.mxu0 %v1443
      %3374 = vmatmul.mubr.f32.gmra.mrb[0].mxu0 %v1440
      %v3375 = vpop.f32.mrb[0].mxu0
      %v3376 = vadd.f32 %v3151, %v3375
      %v3377 = vpop.f32.mrb[0].mxu0
      %3378 = vmatprep.mubr.f32.mxu0 %v1466
      %3379 = vmatmul.mubr.f32.gmra.mrb[0].mxu0 %v1464
      %v3380 = vpop.f32.mrb[0].mxu0
      %v3381 = vadd.f32 %v3156, %v3380
      %v3382 = vpop.f32.mrb[0].mxu0
      %3383 = vmatprep.mubr.f32.mxu0 %v1487
      %3384 = vmatmul.mubr.f32.gmra.mrb[0].mxu0 %v1484
      %v3385 = vpop.f32.mrb[0].mxu0
      %v3386 = vadd.f32 %v3161, %v3385
      %v3387 = vpop.f32.mrb[0].mxu0
      %3388 = vmatprep.mubr.f32.mxu0 %v1510
      %3389 = vmatmul.mubr.f32.gmra.mrb[0].mxu0 %v1508
      %v3390 = vpop.f32.mrb[0].mxu0
      %v3391 = vadd.f32 %v3166, %v3390
      %v3392 = vpop.f32.mrb[0].mxu0
      %3393 = vmatprep.mubr.f32.mxu0 %v1531
      %3394 = vmatmul.mubr.f32.gmra.mrb[0].mxu0 %v1528
      %v3395 = vpop.f32.mrb[0].mxu0
      %v3396 = vadd.f32 %v3171, %v3395
      %v3397 = vpop.f32.mrb[0].mxu0
      %3398 = vmatprep.mubr.f32.mxu0 %v1551
      %3399 = vmatmul.mubr.f32.gmra.mrb[0].mxu0 %v1549
      %v3400 = vpop.f32.mrb[0].mxu0
      %v3401 = vadd.f32 %v3176, %v3400
      %v3402 = vpop.f32.mrb[0].mxu0
      %3403 = vdwg.mxu0
      %3404 = vmatprep.subr.mxu0 0.0
      %3405 = vmatpush1.msra.mxu0 %v2032
      %3406 = vmatprep.subr.mxu0 0.0
      %3407 = vmatpush1.msra.mxu0 %v2033
      %3408 = vmatprep.subr.mxu0 0.0
      %3409 = vmatpush1.msra.mxu0 %v2034
      %3410 = vmatprep.subr.mxu0 0.0
      %3411 = vmatpush1.msra.mxu0 %v2035
      %3412 = vmatprep.subr.mxu0 0.0
      %3413 = vmatpush1.msra.mxu0 %v2036
      %3414 = vmatprep.subr.mxu0 0.0
      %3415 = vmatpush1.msra.mxu0 %v2037
      %3416 = vmatprep.subr.mxu0 0.0
      %3417 = vmatpush1.msra.mxu0 %v2038
      %3418 = vmatprep.subr.mxu0 0.0
      %3419 = vmatpush1.msra.mxu0 %v2039
      %3420 = vmatprep.subr.mxu0 0.0
      %3421 = vmatpush1.msra.mxu0 %v2040
      %3422 = vmatprep.subr.mxu0 0.0
      %3423 = vmatpush1.msra.mxu0 %v2041
      %3424 = vmatprep.subr.mxu0 0.0
      %3425 = vmatpush1.msra.mxu0 %v2042
      %3426 = vmatprep.subr.mxu0 0.0
      %3427 = vmatpush1.msra.mxu0 %v2043
      %3428 = vmatprep.subr.mxu0 0.0
      %3429 = vmatpush1.msra.mxu0 %v2044
      %3430 = vmatprep.subr.mxu0 0.0
      %3431 = vmatpush1.msra.mxu0 %v2045
      %3432 = vmatprep.subr.mxu0 0.0
      %3433 = vmatpush1.msra.mxu0 %v2046
      %3434 = vmatprep.subr.mxu0 0.0
      %3435 = vmatpush1.msra.mxu0 %v2047
      %3436 = vmatprep.subr.mxu0 0.0
      %3437 = vmatpush1.msra.mxu0 %v2048
      %3438 = vmatprep.subr.mxu0 0.0
      %3439 = vmatpush1.msra.mxu0 %v2049
      %3440 = vmatprep.subr.mxu0 0.0
      %3441 = vmatpush1.msra.mxu0 %v2050
      %3442 = vmatprep.subr.mxu0 0.0
      %3443 = vmatpush1.msra.mxu0 %v2051
      %3444 = vmatprep.subr.mxu0 0.0
      %3445 = vmatpush1.msra.mxu0 %v2052
      %3446 = vmatprep.subr.mxu0 0.0
      %3447 = vmatpush1.msra.mxu0 %v2053
      %3448 = vmatprep.subr.mxu0 0.0
      %3449 = vmatpush1.msra.mxu0 %v2054
      %3450 = vmatprep.subr.mxu0 0.0
      %3451 = vmatpush1.msra.mxu0 %v2055
      %3452 = vmatprep.subr.mxu0 0.0
      %3453 = vmatpush1.msra.mxu0 %v2056
      %3454 = vmatprep.subr.mxu0 0.0
      %3455 = vmatpush1.msra.mxu0 %v2057
      %3456 = vmatprep.subr.mxu0 0.0
      %3457 = vmatpush1.msra.mxu0 %v2058
      %3458 = vmatprep.subr.mxu0 0.0
      %3459 = vmatpush1.msra.mxu0 %v2059
      %3460 = vmatprep.subr.mxu0 0.0
      %3461 = vmatpush1.msra.mxu0 %v2060
      %3462 = vmatprep.subr.mxu0 0.0
      %3463 = vmatpush1.msra.mxu0 %v2061
      %3464 = vmatprep.subr.mxu0 0.0
      %3465 = vmatpush1.msra.mxu0 %v2062
      %3466 = vmatprep.subr.mxu0 0.0
      %3467 = vmatpush1.msra.mxu0 %v2063
      %3468 = vmatprep.mubr.f32.mxu0 %v877
      %3469 = vmatmul.mubr.f32.gmra.mrb[0].mxu0 %v874
      %v3470 = vpop.f32.mrb[0].mxu0
      %v3471 = vadd.f32 %v3246, %v3470
      %v3472 = vpop.f32.mrb[0].mxu0
      %3473 = vmatprep.mubr.f32.mxu0 %v924
      %3474 = vmatmul.mubr.f32.gmra.mrb[0].mxu0 %v922
      %v3475 = vpop.f32.mrb[0].mxu0
      %v3476 = vadd.f32 %v3251, %v3475
      %v3477 = vpop.f32.mrb[0].mxu0
      %3478 = vmatprep.mubr.f32.mxu0 %v891
      %3479 = vmatmul.mubr.f32.gmra.mrb[0].mxu0 %v888
      %v3480 = vpop.f32.mrb[0].mxu0
      %v3481 = vadd.f32 %v3256, %v3480
      %v3482 = vpop.f32.mrb[0].mxu0
      %3483 = vmatprep.mubr.f32.mxu0 %v934
      %3484 = vmatmul.mubr.f32.gmra.mrb[0].mxu0 %v932
      %v3485 = vpop.f32.mrb[0].mxu0
      %v3486 = vadd.f32 %v3261, %v3485
      %v3487 = vpop.f32.mrb[0].mxu0
      %3488 = vmatprep.mubr.f32.mxu0 %v906
      %3489 = vmatmul.mubr.f32.gmra.mrb[0].mxu0 %v961
      %v3490 = vpop.f32.mrb[0].mxu0
      %v3491 = vadd.f32 %v3266, %v3490
      %v3492 = vpop.f32.mrb[0].mxu0
      %3493 = vmatprep.mubr.f32.mxu0 %v944
      %3494 = vmatmul.mubr.f32.gmra.mrb[0].mxu0 %v984
      %v3495 = vpop.f32.mrb[0].mxu0
      %v3496 = vadd.f32 %v3271, %v3495
      %v3497 = vpop.f32.mrb[0].mxu0
      %3498 = vmatprep.mubr.f32.mxu0 %v967
      %3499 = vmatmul.mubr.f32.gmra.mrb[0].mxu0 %v1005
      %v3500 = vpop.f32.mrb[0].mxu0
      %v3501 = vadd.f32 %v3276, %v3500
      %v3502 = vpop.f32.mrb[0].mxu0
      %3503 = vmatprep.mubr.f32.mxu0 %v988
      %3504 = vmatmul.mubr.f32.gmra.mrb[0].mxu0 %v1028
      %v3505 = vpop.f32.mrb[0].mxu0
      %v3506 = vadd.f32 %v3281, %v3505
      %v3507 = vpop.f32.mrb[0].mxu0
      %3508 = vmatprep.mubr.f32.mxu0 %v1011
      %3509 = vmatmul.mubr.f32.gmra.mrb[0].mxu0 %v1049
      %v3510 = vpop.f32.mrb[0].mxu0
      %v3511 = vadd.f32 %v3286, %v3510
      %v3512 = vpop.f32.mrb[0].mxu0
      %3513 = vmatprep.mubr.f32.mxu0 %v1032
      %3514 = vmatmul.mubr.f32.gmra.mrb[0].mxu0 %v1072
      %v3515 = vpop.f32.mrb[0].mxu0
      %v3516 = vadd.f32 %v3291, %v3515
      %v3517 = vpop.f32.mrb[0].mxu0
      %3518 = vmatprep.mubr.f32.mxu0 %v1055
      %3519 = vmatmul.mubr.f32.gmra.mrb[0].mxu0 %v1093
      %v3520 = vpop.f32.mrb[0].mxu0
      %v3521 = vadd.f32 %v3296, %v3520
      %v3522 = vpop.f32.mrb[0].mxu0
      %3523 = vmatprep.mubr.f32.mxu0 %v1076
      %3524 = vmatmul.mubr.f32.gmra.mrb[0].mxu0 %v1116
      %v3525 = vpop.f32.mrb[0].mxu0
      %v3526 = vadd.f32 %v3301, %v3525
      %v3527 = vpop.f32.mrb[0].mxu0
      %3528 = vmatprep.mubr.f32.mxu0 %v1099
      %3529 = vmatmul.mubr.f32.gmra.mrb[0].mxu0 %v1137
      %v3530 = vpop.f32.mrb[0].mxu0
      %v3531 = vadd.f32 %v3306, %v3530
      %v3532 = vpop.f32.mrb[0].mxu0
      %3533 = vmatprep.mubr.f32.mxu0 %v1120
      %3534 = vmatmul.mubr.f32.gmra.mrb[0].mxu0 %v1160
      %v3535 = vpop.f32.mrb[0].mxu0
      %v3536 = vadd.f32 %v3311, %v3535
      %v3537 = vpop.f32.mrb[0].mxu0
      %3538 = vmatprep.mubr.f32.mxu0 %v1143
      %3539 = vmatmul.mubr.f32.gmra.mrb[0].mxu0 %v1181
      %v3540 = vpop.f32.mrb[0].mxu0
      %v3541 = vadd.f32 %v3316, %v3540
      %v3542 = vpop.f32.mrb[0].mxu0
      %3543 = vmatprep.mubr.f32.mxu0 %v1164
      %3544 = vmatmul.mubr.f32.gmra.mrb[0].mxu0 %v1204
      %v3545 = vpop.f32.mrb[0].mxu0
      %v3546 = vadd.f32 %v3321, %v3545
      %v3547 = vpop.f32.mrb[0].mxu0
      %3548 = vmatprep.mubr.f32.mxu0 %v1187
      %3549 = vmatmul.mubr.f32.gmra.mrb[0].mxu0 %v1225
      %v3550 = vpop.f32.mrb[0].mxu0
      %v3551 = vadd.f32 %v3326, %v3550
      %v3552 = vpop.f32.mrb[0].mxu0
      %3553 = vmatprep.mubr.f32.mxu0 %v1208
      %3554 = vmatmul.mubr.f32.gmra.mrb[0].mxu0 %v1248
      %v3555 = vpop.f32.mrb[0].mxu0
      %v3556 = vadd.f32 %v3331, %v3555
      %v3557 = vpop.f32.mrb[0].mxu0
      %3558 = vmatprep.mubr.f32.mxu0 %v1231
      %3559 = vmatmul.mubr.f32.gmra.mrb[0].mxu0 %v1269
      %v3560 = vpop.f32.mrb[0].mxu0
      %v3561 = vadd.f32 %v3336, %v3560
      %v3562 = vpop.f32.mrb[0].mxu0
      %3563 = vmatprep.mubr.f32.mxu0 %v1252
      %3564 = vmatmul.mubr.f32.gmra.mrb[0].mxu0 %v1292
      %v3565 = vpop.f32.mrb[0].mxu0
      %v3566 = vadd.f32 %v3341, %v3565
      %v3567 = vpop.f32.mrb[0].mxu0
      %3568 = vmatprep.mubr.f32.mxu0 %v1275
      %3569 = vmatmul.mubr.f32.gmra.mrb[0].mxu0 %v1313
      %v3570 = vpop.f32.mrb[0].mxu0
      %v3571 = vadd.f32 %v3346, %v3570
      %v3572 = vpop.f32.mrb[0].mxu0
      %3573 = vmatprep.mubr.f32.mxu0 %v1296
      %3574 = vmatmul.mubr.f32.gmra.mrb[0].mxu0 %v1336
      %v3575 = vpop.f32.mrb[0].mxu0
      %v3576 = vadd.f32 %v3351, %v3575
      %v3577 = vpop.f32.mrb[0].mxu0
      %3578 = vmatprep.mubr.f32.mxu0 %v1319
      %3579 = vmatmul.mubr.f32.gmra.mrb[0].mxu0 %v1357
      %v3580 = vpop.f32.mrb[0].mxu0
      %v3581 = vadd.f32 %v3356, %v3580
      %v3582 = vpop.f32.mrb[0].mxu0
      %3583 = vmatprep.mubr.f32.mxu0 %v1340
      %3584 = vmatmul.mubr.f32.gmra.mrb[0].mxu0 %v1380
      %v3585 = vpop.f32.mrb[0].mxu0
      %v3586 = vadd.f32 %v3361, %v3585
      %v3587 = vpop.f32.mrb[0].mxu0
      %3588 = vmatprep.mubr.f32.mxu0 %v1363
      %3589 = vmatmul.mubr.f32.gmra.mrb[0].mxu0 %v1401
      %v3590 = vpop.f32.mrb[0].mxu0
      %v3591 = vadd.f32 %v3366, %v3590
      %v3592 = vpop.f32.mrb[0].mxu0
      %3593 = vmatprep.mubr.f32.mxu0 %v1384
      %3594 = vmatmul.mubr.f32.gmra.mrb[0].mxu0 %v1424
      %v3595 = vpop.f32.mrb[0].mxu0
      %v3596 = vadd.f32 %v3371, %v3595
      %v3597 = vpop.f32.mrb[0].mxu0
      %3598 = vmatprep.mubr.f32.mxu0 %v1407
      %3599 = vmatmul.mubr.f32.gmra.mrb[0].mxu0 %v1445
      %v3600 = vpop.f32.mrb[0].mxu0
      %v3601 = vadd.f32 %v3376, %v3600
      %v3602 = vpop.f32.mrb[0].mxu0
      %3603 = vmatprep.mubr.f32.mxu0 %v1428
      %3604 = vmatmul.mubr.f32.gmra.mrb[0].mxu0 %v1468
      %v3605 = vpop.f32.mrb[0].mxu0
      %v3606 = vadd.f32 %v3381, %v3605
      %v3607 = vpop.f32.mrb[0].mxu0
      %3608 = vmatprep.mubr.f32.mxu0 %v1451
      %3609 = vmatmul.mubr.f32.gmra.mrb[0].mxu0 %v1489
      %v3610 = vpop.f32.mrb[0].mxu0
      %v3611 = vadd.f32 %v3386, %v3610
      %v3612 = vpop.f32.mrb[0].mxu0
      %3613 = vmatprep.mubr.f32.mxu0 %v1472
      %3614 = vmatmul.mubr.f32.gmra.mrb[0].mxu0 %v1512
      %v3615 = vpop.f32.mrb[0].mxu0
      %v3616 = vadd.f32 %v3391, %v3615
      %v3617 = vpop.f32.mrb[0].mxu0
      %3618 = vmatprep.mubr.f32.mxu0 %v1495
      %3619 = vmatmul.mubr.f32.gmra.mrb[0].mxu0 %v1533
      %v3620 = vpop.f32.mrb[0].mxu0
      %v3621 = vadd.f32 %v3396, %v3620
      %v3622 = vpop.f32.mrb[0].mxu0
      %3623 = vmatprep.mubr.f32.mxu0 %v1516
      %3624 = vmatmul.mubr.f32.gmra.mrb[0].mxu0 %v1553
      %v3625 = vpop.f32.mrb[0].mxu0
      %v3626 = vadd.f32 %v3401, %v3625
      %v3627 = vpop.f32.mrb[0].mxu0
      %3628 = vdwg.mxu0
      %3629 = vmatprep.subr.mxu0 0.0
      %3630 = vmatpush1.msra.mxu0 %v2064
      %3631 = vmatprep.subr.mxu0 0.0
      %3632 = vmatpush1.msra.mxu0 %v2065
      %3633 = vmatprep.subr.mxu0 0.0
      %3634 = vmatpush1.msra.mxu0 %v2066
      %3635 = vmatprep.subr.mxu0 0.0
      %3636 = vmatpush1.msra.mxu0 %v2067
      %3637 = vmatprep.subr.mxu0 0.0
      %3638 = vmatpush1.msra.mxu0 %v2068
      %3639 = vmatprep.subr.mxu0 0.0
      %3640 = vmatpush1.msra.mxu0 %v2069
      %3641 = vmatprep.subr.mxu0 0.0
      %3642 = vmatpush1.msra.mxu0 %v2070
      %3643 = vmatprep.subr.mxu0 0.0
      %3644 = vmatpush1.msra.mxu0 %v2071
      %3645 = vmatprep.subr.mxu0 0.0
      %3646 = vmatpush1.msra.mxu0 %v2072
      %3647 = vmatprep.subr.mxu0 0.0
      %3648 = vmatpush1.msra.mxu0 %v2073
      %3649 = vmatprep.subr.mxu0 0.0
      %3650 = vmatpush1.msra.mxu0 %v2074
      %3651 = vmatprep.subr.mxu0 0.0
      %3652 = vmatpush1.msra.mxu0 %v2075
      %3653 = vmatprep.subr.mxu0 0.0
      %3654 = vmatpush1.msra.mxu0 %v2076
      %3655 = vmatprep.subr.mxu0 0.0
      %3656 = vmatpush1.msra.mxu0 %v2077
      %3657 = vmatprep.subr.mxu0 0.0
      %3658 = vmatpush1.msra.mxu0 %v2078
      %3659 = vmatprep.subr.mxu0 0.0
      %3660 = vmatpush1.msra.mxu0 %v2079
      %3661 = vmatprep.subr.mxu0 0.0
      %3662 = vmatpush1.msra.mxu0 %v2080
      %3663 = vmatprep.subr.mxu0 0.0
      %3664 = vmatpush1.msra.mxu0 %v2081
      %3665 = vmatprep.subr.mxu0 0.0
      %3666 = vmatpush1.msra.mxu0 %v2082
      %3667 = vmatprep.subr.mxu0 0.0
      %3668 = vmatpush1.msra.mxu0 %v2083
      %3669 = vmatprep.subr.mxu0 0.0
      %3670 = vmatpush1.msra.mxu0 %v2084
      %3671 = vmatprep.subr.mxu0 0.0
      %3672 = vmatpush1.msra.mxu0 %v2085
      %3673 = vmatprep.subr.mxu0 0.0
      %3674 = vmatpush1.msra.mxu0 %v2086
      %3675 = vmatprep.subr.mxu0 0.0
      %3676 = vmatpush1.msra.mxu0 %v2087
      %3677 = vmatprep.subr.mxu0 0.0
      %3678 = vmatpush1.msra.mxu0 %v2088
      %3679 = vmatprep.subr.mxu0 0.0
      %3680 = vmatpush1.msra.mxu0 %v2089
      %3681 = vmatprep.subr.mxu0 0.0
      %3682 = vmatpush1.msra.mxu0 %v2090
      %3683 = vmatprep.subr.mxu0 0.0
      %3684 = vmatpush1.msra.mxu0 %v2091
      %3685 = vmatprep.subr.mxu0 0.0
      %3686 = vmatpush1.msra.mxu0 %v2092
      %3687 = vmatprep.subr.mxu0 0.0
      %3688 = vmatpush1.msra.mxu0 %v2093
      %3689 = vmatprep.subr.mxu0 0.0
      %3690 = vmatpush1.msra.mxu0 %v2094
      %3691 = vmatprep.subr.mxu0 0.0
      %3692 = vmatpush1.msra.mxu0 %v2095
      %3693 = vmatprep.mubr.f32.mxu0 %v883
      %3694 = vmatmul.mubr.f32.gmra.mrb[0].mxu0 %v880
      %v3695 = vpop.f32.mrb[0].mxu0
      %v3696 = vadd.f32 %v3471, %v3695
      %v3697 = vpop.f32.mrb[0].mxu0
      %3698 = vmatprep.mubr.f32.mxu0 %v928
      %3699 = vmatmul.mubr.f32.gmra.mrb[0].mxu0 %v926
      %v3700 = vpop.f32.mrb[0].mxu0
      %v3701 = vadd.f32 %v3476, %v3700
      %v3702 = vpop.f32.mrb[0].mxu0
      %3703 = vmatprep.mubr.f32.mxu0 %v956
      %3704 = vmatmul.mubr.f32.gmra.mrb[0].mxu0 %v953
      %v3705 = vpop.f32.mrb[0].mxu0
      %v3706 = vadd.f32 %v3481, %v3705
      %v3707 = vpop.f32.mrb[0].mxu0
      %3708 = vmatprep.mubr.f32.mxu0 %v980
      %3709 = vmatmul.mubr.f32.gmra.mrb[0].mxu0 %v978
      %v3710 = vpop.f32.mrb[0].mxu0
      %v3711 = vadd.f32 %v3486, %v3710
      %v3712 = vpop.f32.mrb[0].mxu0
      %3713 = vmatprep.mubr.f32.mxu0 %v1000
      %3714 = vmatmul.mubr.f32.gmra.mrb[0].mxu0 %v997
      %v3715 = vpop.f32.mrb[0].mxu0
      %v3716 = vadd.f32 %v3491, %v3715
      %v3717 = vpop.f32.mrb[0].mxu0
      %3718 = vmatprep.mubr.f32.mxu0 %v1024
      %3719 = vmatmul.mubr.f32.gmra.mrb[0].mxu0 %v1022
      %v3720 = vpop.f32.mrb[0].mxu0
      %v3721 = vadd.f32 %v3496, %v3720
      %v3722 = vpop.f32.mrb[0].mxu0
      %3723 = vmatprep.mubr.f32.mxu0 %v1044
      %3724 = vmatmul.mubr.f32.gmra.mrb[0].mxu0 %v1041
      %v3725 = vpop.f32.mrb[0].mxu0
      %v3726 = vadd.f32 %v3501, %v3725
      %v3727 = vpop.f32.mrb[0].mxu0
      %3728 = vmatprep.mubr.f32.mxu0 %v1068
      %3729 = vmatmul.mubr.f32.gmra.mrb[0].mxu0 %v1066
      %v3730 = vpop.f32.mrb[0].mxu0
      %v3731 = vadd.f32 %v3506, %v3730
      %v3732 = vpop.f32.mrb[0].mxu0
      %3733 = vmatprep.mubr.f32.mxu0 %v1088
      %3734 = vmatmul.mubr.f32.gmra.mrb[0].mxu0 %v1085
      %v3735 = vpop.f32.mrb[0].mxu0
      %v3736 = vadd.f32 %v3511, %v3735
      %v3737 = vpop.f32.mrb[0].mxu0
      %3738 = vmatprep.mubr.f32.mxu0 %v1112
      %3739 = vmatmul.mubr.f32.gmra.mrb[0].mxu0 %v1110
      %v3740 = vpop.f32.mrb[0].mxu0
      %v3741 = vadd.f32 %v3516, %v3740
      %v3742 = vpop.f32.mrb[0].mxu0
      %3743 = vmatprep.mubr.f32.mxu0 %v1132
      %3744 = vmatmul.mubr.f32.gmra.mrb[0].mxu0 %v1129
      %v3745 = vpop.f32.mrb[0].mxu0
      %v3746 = vadd.f32 %v3521, %v3745
      %v3747 = vpop.f32.mrb[0].mxu0
      %3748 = vmatprep.mubr.f32.mxu0 %v1156
      %3749 = vmatmul.mubr.f32.gmra.mrb[0].mxu0 %v1154
      %v3750 = vpop.f32.mrb[0].mxu0
      %v3751 = vadd.f32 %v3526, %v3750
      %v3752 = vpop.f32.mrb[0].mxu0
      %3753 = vmatprep.mubr.f32.mxu0 %v1176
      %3754 = vmatmul.mubr.f32.gmra.mrb[0].mxu0 %v1173
      %v3755 = vpop.f32.mrb[0].mxu0
      %v3756 = vadd.f32 %v3531, %v3755
      %v3757 = vpop.f32.mrb[0].mxu0
      %3758 = vmatprep.mubr.f32.mxu0 %v1200
      %3759 = vmatmul.mubr.f32.gmra.mrb[0].mxu0 %v1198
      %v3760 = vpop.f32.mrb[0].mxu0
      %v3761 = vadd.f32 %v3536, %v3760
      %v3762 = vpop.f32.mrb[0].mxu0
      %3763 = vmatprep.mubr.f32.mxu0 %v1220
      %3764 = vmatmul.mubr.f32.gmra.mrb[0].mxu0 %v1217
      %v3765 = vpop.f32.mrb[0].mxu0
      %v3766 = vadd.f32 %v3541, %v3765
      %v3767 = vpop.f32.mrb[0].mxu0
      %3768 = vmatprep.mubr.f32.mxu0 %v1244
      %3769 = vmatmul.mubr.f32.gmra.mrb[0].mxu0 %v1242
      %v3770 = vpop.f32.mrb[0].mxu0
      %v3771 = vadd.f32 %v3546, %v3770
      %v3772 = vpop.f32.mrb[0].mxu0
      %3773 = vmatprep.mubr.f32.mxu0 %v1264
      %3774 = vmatmul.mubr.f32.gmra.mrb[0].mxu0 %v1261
      %v3775 = vpop.f32.mrb[0].mxu0
      %v3776 = vadd.f32 %v3551, %v3775
      %v3777 = vpop.f32.mrb[0].mxu0
      %3778 = vmatprep.mubr.f32.mxu0 %v1288
      %3779 = vmatmul.mubr.f32.gmra.mrb[0].mxu0 %v1286
      %v3780 = vpop.f32.mrb[0].mxu0
      %v3781 = vadd.f32 %v3556, %v3780
      %v3782 = vpop.f32.mrb[0].mxu0
      %3783 = vmatprep.mubr.f32.mxu0 %v1308
      %3784 = vmatmul.mubr.f32.gmra.mrb[0].mxu0 %v1305
      %v3785 = vpop.f32.mrb[0].mxu0
      %v3786 = vadd.f32 %v3561, %v3785
      %v3787 = vpop.f32.mrb[0].mxu0
      %3788 = vmatprep.mubr.f32.mxu0 %v1332
      %3789 = vmatmul.mubr.f32.gmra.mrb[0].mxu0 %v1330
      %v3790 = vpop.f32.mrb[0].mxu0
      %v3791 = vadd.f32 %v3566, %v3790
      %v3792 = vpop.f32.mrb[0].mxu0
      %3793 = vmatprep.mubr.f32.mxu0 %v1352
      %3794 = vmatmul.mubr.f32.gmra.mrb[0].mxu0 %v1349
      %v3795 = vpop.f32.mrb[0].mxu0
      %v3796 = vadd.f32 %v3571, %v3795
      %v3797 = vpop.f32.mrb[0].mxu0
      %3798 = vmatprep.mubr.f32.mxu0 %v1376
      %3799 = vmatmul.mubr.f32.gmra.mrb[0].mxu0 %v1374
      %v3800 = vpop.f32.mrb[0].mxu0
      %v3801 = vadd.f32 %v3576, %v3800
      %v3802 = vpop.f32.mrb[0].mxu0
      %3803 = vmatprep.mubr.f32.mxu0 %v1396
      %3804 = vmatmul.mubr.f32.gmra.mrb[0].mxu0 %v1393
      %v3805 = vpop.f32.mrb[0].mxu0
      %v3806 = vadd.f32 %v3581, %v3805
      %v3807 = vpop.f32.mrb[0].mxu0
      %3808 = vmatprep.mubr.f32.mxu0 %v1420
      %3809 = vmatmul.mubr.f32.gmra.mrb[0].mxu0 %v1418
      %v3810 = vpop.f32.mrb[0].mxu0
      %v3811 = vadd.f32 %v3586, %v3810
      %v3812 = vpop.f32.mrb[0].mxu0
      %3813 = vmatprep.mubr.f32.mxu0 %v1440
      %3814 = vmatmul.mubr.f32.gmra.mrb[0].mxu0 %v1437
      %v3815 = vpop.f32.mrb[0].mxu0
      %v3816 = vadd.f32 %v3591, %v3815
      %v3817 = vpop.f32.mrb[0].mxu0
      %3818 = vmatprep.mubr.f32.mxu0 %v1464
      %3819 = vmatmul.mubr.f32.gmra.mrb[0].mxu0 %v1462
      %v3820 = vpop.f32.mrb[0].mxu0
      %v3821 = vadd.f32 %v3596, %v3820
      %v3822 = vpop.f32.mrb[0].mxu0
      %3823 = vmatprep.mubr.f32.mxu0 %v1484
      %3824 = vmatmul.mubr.f32.gmra.mrb[0].mxu0 %v1481
      %v3825 = vpop.f32.mrb[0].mxu0
      %v3826 = vadd.f32 %v3601, %v3825
      %v3827 = vpop.f32.mrb[0].mxu0
      %3828 = vmatprep.mubr.f32.mxu0 %v1508
      %3829 = vmatmul.mubr.f32.gmra.mrb[0].mxu0 %v1506
      %v3830 = vpop.f32.mrb[0].mxu0
      %v3831 = vadd.f32 %v3606, %v3830
      %v3832 = vpop.f32.mrb[0].mxu0
      %3833 = vmatprep.mubr.f32.mxu0 %v1528
      %3834 = vmatmul.mubr.f32.gmra.mrb[0].mxu0 %v1525
      %v3835 = vpop.f32.mrb[0].mxu0
      %v3836 = vadd.f32 %v3611, %v3835
      %v3837 = vpop.f32.mrb[0].mxu0
      %3838 = vmatprep.mubr.f32.mxu0 %v1549
      %3839 = vmatmul.mubr.f32.gmra.mrb[0].mxu0 %v1547
      %v3840 = vpop.f32.mrb[0].mxu0
      %v3841 = vadd.f32 %v3616, %v3840
      %v3842 = vpop.f32.mrb[0].mxu0
      %3843 = vmatprep.mubr.f32.mxu0 %v1567
      %3844 = vmatmul.mubr.f32.gmra.mrb[0].mxu0 %v1564
      %v3845 = vpop.f32.mrb[0].mxu0
      %v3846 = vadd.f32 %v3621, %v3845
      %v3847 = vpop.f32.mrb[0].mxu0
      %3848 = vmatprep.mubr.f32.mxu0 %v1574
      %3849 = vmatmul.mubr.f32.gmra.mrb[0].mxu0 %v1572
      %v3850 = vpop.f32.mrb[0].mxu0
      %v3851 = vadd.f32 %v3626, %v3850
      %v3852 = vpop.f32.mrb[0].mxu0
      %3853 = vdwg.mxu0
      %3854 = vmatprep.subr.mxu0 0.0
      %3855 = vmatpush1.msra.mxu0 %v2096
      %3856 = vmatprep.subr.mxu0 0.0
      %3857 = vmatpush1.msra.mxu0 %v2097
      %3858 = vmatprep.subr.mxu0 0.0
      %3859 = vmatpush1.msra.mxu0 %v2098
      %3860 = vmatprep.subr.mxu0 0.0
      %3861 = vmatpush1.msra.mxu0 %v2099
      %3862 = vmatprep.subr.mxu0 0.0
      %3863 = vmatpush1.msra.mxu0 %v2100
      %3864 = vmatprep.subr.mxu0 0.0
      %3865 = vmatpush1.msra.mxu0 %v2101
      %3866 = vmatprep.subr.mxu0 0.0
      %3867 = vmatpush1.msra.mxu0 %v2102
      %3868 = vmatprep.subr.mxu0 0.0
      %3869 = vmatpush1.msra.mxu0 %v2103
      %3870 = vmatprep.subr.mxu0 0.0
      %3871 = vmatpush1.msra.mxu0 %v2104
      %3872 = vmatprep.subr.mxu0 0.0
      %3873 = vmatpush1.msra.mxu0 %v2105
      %3874 = vmatprep.subr.mxu0 0.0
      %3875 = vmatpush1.msra.mxu0 %v2106
      %3876 = vmatprep.subr.mxu0 0.0
      %3877 = vmatpush1.msra.mxu0 %v2107
      %3878 = vmatprep.subr.mxu0 0.0
      %3879 = vmatpush1.msra.mxu0 %v2108
      %3880 = vmatprep.subr.mxu0 0.0
      %3881 = vmatpush1.msra.mxu0 %v2109
      %3882 = vmatprep.subr.mxu0 0.0
      %3883 = vmatpush1.msra.mxu0 %v2110
      %3884 = vmatprep.subr.mxu0 0.0
      %3885 = vmatpush1.msra.mxu0 %v2111
      %3886 = vmatprep.subr.mxu0 0.0
      %3887 = vmatpush1.msra.mxu0 %v2112
      %3888 = vmatprep.subr.mxu0 0.0
      %3889 = vmatpush1.msra.mxu0 %v2113
      %3890 = vmatprep.subr.mxu0 0.0
      %3891 = vmatpush1.msra.mxu0 %v2114
      %3892 = vmatprep.subr.mxu0 0.0
      %3893 = vmatpush1.msra.mxu0 %v2115
      %3894 = vmatprep.subr.mxu0 0.0
      %3895 = vmatpush1.msra.mxu0 %v2116
      %3896 = vmatprep.subr.mxu0 0.0
      %3897 = vmatpush1.msra.mxu0 %v2117
      %3898 = vmatprep.subr.mxu0 0.0
      %3899 = vmatpush1.msra.mxu0 %v2118
      %3900 = vmatprep.subr.mxu0 0.0
      %3901 = vmatpush1.msra.mxu0 %v2119
      %3902 = vmatprep.subr.mxu0 0.0
      %3903 = vmatpush1.msra.mxu0 %v2120
      %3904 = vmatprep.subr.mxu0 0.0
      %3905 = vmatpush1.msra.mxu0 %v2121
      %3906 = vmatprep.subr.mxu0 0.0
      %3907 = vmatpush1.msra.mxu0 %v2122
      %3908 = vmatprep.subr.mxu0 0.0
      %3909 = vmatpush1.msra.mxu0 %v2123
      %3910 = vmatprep.subr.mxu0 0.0
      %3911 = vmatpush1.msra.mxu0 %v2124
      %3912 = vmatprep.subr.mxu0 0.0
      %3913 = vmatpush1.msra.mxu0 %v2125
      %3914 = vmatprep.subr.mxu0 0.0
      %3915 = vmatpush1.msra.mxu0 %v2126
      %3916 = vmatprep.subr.mxu0 0.0
      %3917 = vmatpush1.msra.mxu0 %v2127
      %3918 = vmatprep.mubr.f32.mxu0 %v888
      %3919 = vmatmul.mubr.f32.gmra.mrb[0].mxu0 %v886
      %v3920 = vpop.f32.mrb[0].mxu0
      %v3921 = vadd.f32 %v3696, %v3920
      %v3922 = vpop.f32.mrb[0].mxu0
      %3923 = vmatprep.mubr.f32.mxu0 %v932
      %3924 = vmatmul.mubr.f32.gmra.mrb[0].mxu0 %v930
      %v3925 = vpop.f32.mrb[0].mxu0
      %v3926 = vadd.f32 %v3701, %v3925
      %v3927 = vpop.f32.mrb[0].mxu0
      %3928 = vmatprep.mubr.f32.mxu0 %v961
      %3929 = vmatmul.mubr.f32.gmra.mrb[0].mxu0 %v959
      %v3930 = vpop.f32.mrb[0].mxu0
      %v3931 = vadd.f32 %v3706, %v3930
      %v3932 = vpop.f32.mrb[0].mxu0
      %3933 = vmatprep.mubr.f32.mxu0 %v984
      %3934 = vmatmul.mubr.f32.gmra.mrb[0].mxu0 %v982
      %v3935 = vpop.f32.mrb[0].mxu0
      %v3936 = vadd.f32 %v3711, %v3935
      %v3937 = vpop.f32.mrb[0].mxu0
      %3938 = vmatprep.mubr.f32.mxu0 %v1005
      %3939 = vmatmul.mubr.f32.gmra.mrb[0].mxu0 %v1003
      %v3940 = vpop.f32.mrb[0].mxu0
      %v3941 = vadd.f32 %v3716, %v3940
      %v3942 = vpop.f32.mrb[0].mxu0
      %3943 = vmatprep.mubr.f32.mxu0 %v1028
      %3944 = vmatmul.mubr.f32.gmra.mrb[0].mxu0 %v1026
      %v3945 = vpop.f32.mrb[0].mxu0
      %v3946 = vadd.f32 %v3721, %v3945
      %v3947 = vpop.f32.mrb[0].mxu0
      %3948 = vmatprep.mubr.f32.mxu0 %v1049
      %3949 = vmatmul.mubr.f32.gmra.mrb[0].mxu0 %v1047
      %v3950 = vpop.f32.mrb[0].mxu0
      %v3951 = vadd.f32 %v3726, %v3950
      %v3952 = vpop.f32.mrb[0].mxu0
      %3953 = vmatprep.mubr.f32.mxu0 %v1072
      %3954 = vmatmul.mubr.f32.gmra.mrb[0].mxu0 %v1070
      %v3955 = vpop.f32.mrb[0].mxu0
      %v3956 = vadd.f32 %v3731, %v3955
      %v3957 = vpop.f32.mrb[0].mxu0
      %3958 = vmatprep.mubr.f32.mxu0 %v1093
      %3959 = vmatmul.mubr.f32.gmra.mrb[0].mxu0 %v1091
      %v3960 = vpop.f32.mrb[0].mxu0
      %v3961 = vadd.f32 %v3736, %v3960
      %v3962 = vpop.f32.mrb[0].mxu0
      %3963 = vmatprep.mubr.f32.mxu0 %v1116
      %3964 = vmatmul.mubr.f32.gmra.mrb[0].mxu0 %v1114
      %v3965 = vpop.f32.mrb[0].mxu0
      %v3966 = vadd.f32 %v3741, %v3965
      %v3967 = vpop.f32.mrb[0].mxu0
      %3968 = vmatprep.mubr.f32.mxu0 %v1137
      %3969 = vmatmul.mubr.f32.gmra.mrb[0].mxu0 %v1135
      %v3970 = vpop.f32.mrb[0].mxu0
      %v3971 = vadd.f32 %v3746, %v3970
      %v3972 = vpop.f32.mrb[0].mxu0
      %3973 = vmatprep.mubr.f32.mxu0 %v1160
      %3974 = vmatmul.mubr.f32.gmra.mrb[0].mxu0 %v1158
      %v3975 = vpop.f32.mrb[0].mxu0
      %v3976 = vadd.f32 %v3751, %v3975
      %v3977 = vpop.f32.mrb[0].mxu0
      %3978 = vmatprep.mubr.f32.mxu0 %v1181
      %3979 = vmatmul.mubr.f32.gmra.mrb[0].mxu0 %v1179
      %v3980 = vpop.f32.mrb[0].mxu0
      %v3981 = vadd.f32 %v3756, %v3980
      %v3982 = vpop.f32.mrb[0].mxu0
      %3983 = vmatprep.mubr.f32.mxu0 %v1204
      %3984 = vmatmul.mubr.f32.gmra.mrb[0].mxu0 %v1202
      %v3985 = vpop.f32.mrb[0].mxu0
      %v3986 = vadd.f32 %v3761, %v3985
      %v3987 = vpop.f32.mrb[0].mxu0
      %3988 = vmatprep.mubr.f32.mxu0 %v1225
      %3989 = vmatmul.mubr.f32.gmra.mrb[0].mxu0 %v1223
      %v3990 = vpop.f32.mrb[0].mxu0
      %v3991 = vadd.f32 %v3766, %v3990
      %v3992 = vpop.f32.mrb[0].mxu0
      %3993 = vmatprep.mubr.f32.mxu0 %v1248
      %3994 = vmatmul.mubr.f32.gmra.mrb[0].mxu0 %v1246
      %v3995 = vpop.f32.mrb[0].mxu0
      %v3996 = vadd.f32 %v3771, %v3995
      %v3997 = vpop.f32.mrb[0].mxu0
      %3998 = vmatprep.mubr.f32.mxu0 %v1269
      %3999 = vmatmul.mubr.f32.gmra.mrb[0].mxu0 %v1267
      %v4000 = vpop.f32.mrb[0].mxu0
      %v4001 = vadd.f32 %v3776, %v4000
      %v4002 = vpop.f32.mrb[0].mxu0
      %4003 = vmatprep.mubr.f32.mxu0 %v1292
      %4004 = vmatmul.mubr.f32.gmra.mrb[0].mxu0 %v1290
      %v4005 = vpop.f32.mrb[0].mxu0
      %v4006 = vadd.f32 %v3781, %v4005
      %v4007 = vpop.f32.mrb[0].mxu0
      %4008 = vmatprep.mubr.f32.mxu0 %v1313
      %4009 = vmatmul.mubr.f32.gmra.mrb[0].mxu0 %v1311
      %v4010 = vpop.f32.mrb[0].mxu0
      %v4011 = vadd.f32 %v3786, %v4010
      %v4012 = vpop.f32.mrb[0].mxu0
      %4013 = vmatprep.mubr.f32.mxu0 %v1336
      %4014 = vmatmul.mubr.f32.gmra.mrb[0].mxu0 %v1334
      %v4015 = vpop.f32.mrb[0].mxu0
      %v4016 = vadd.f32 %v3791, %v4015
      %v4017 = vpop.f32.mrb[0].mxu0
      %4018 = vmatprep.mubr.f32.mxu0 %v1357
      %4019 = vmatmul.mubr.f32.gmra.mrb[0].mxu0 %v1355
      %v4020 = vpop.f32.mrb[0].mxu0
      %v4021 = vadd.f32 %v3796, %v4020
      %v4022 = vpop.f32.mrb[0].mxu0
      %4023 = vmatprep.mubr.f32.mxu0 %v1380
      %4024 = vmatmul.mubr.f32.gmra.mrb[0].mxu0 %v1378
      %v4025 = vpop.f32.mrb[0].mxu0
      %v4026 = vadd.f32 %v3801, %v4025
      %v4027 = vpop.f32.mrb[0].mxu0
      %4028 = vmatprep.mubr.f32.mxu0 %v1401
      %4029 = vmatmul.mubr.f32.gmra.mrb[0].mxu0 %v1399
      %v4030 = vpop.f32.mrb[0].mxu0
      %v4031 = vadd.f32 %v3806, %v4030
      %v4032 = vpop.f32.mrb[0].mxu0
      %4033 = vmatprep.mubr.f32.mxu0 %v1424
      %4034 = vmatmul.mubr.f32.gmra.mrb[0].mxu0 %v1422
      %v4035 = vpop.f32.mrb[0].mxu0
      %v4036 = vadd.f32 %v3811, %v4035
      %v4037 = vpop.f32.mrb[0].mxu0
      %4038 = vmatprep.mubr.f32.mxu0 %v1445
      %4039 = vmatmul.mubr.f32.gmra.mrb[0].mxu0 %v1443
      %v4040 = vpop.f32.mrb[0].mxu0
      %v4041 = vadd.f32 %v3816, %v4040
      %v4042 = vpop.f32.mrb[0].mxu0
      %4043 = vmatprep.mubr.f32.mxu0 %v1468
      %4044 = vmatmul.mubr.f32.gmra.mrb[0].mxu0 %v1466
      %v4045 = vpop.f32.mrb[0].mxu0
      %v4046 = vadd.f32 %v3821, %v4045
      %v4047 = vpop.f32.mrb[0].mxu0
      %4048 = vmatprep.mubr.f32.mxu0 %v1489
      %4049 = vmatmul.mubr.f32.gmra.mrb[0].mxu0 %v1487
      %v4050 = vpop.f32.mrb[0].mxu0
      %v4051 = vadd.f32 %v3826, %v4050
      %v4052 = vpop.f32.mrb[0].mxu0
      %4053 = vmatprep.mubr.f32.mxu0 %v1512
      %4054 = vmatmul.mubr.f32.gmra.mrb[0].mxu0 %v1510
      %v4055 = vpop.f32.mrb[0].mxu0
      %v4056 = vadd.f32 %v3831, %v4055
      %v4057 = vpop.f32.mrb[0].mxu0
      %4058 = vmatprep.mubr.f32.mxu0 %v1533
      %4059 = vmatmul.mubr.f32.gmra.mrb[0].mxu0 %v1531
      %v4060 = vpop.f32.mrb[0].mxu0
      %v4061 = vadd.f32 %v3836, %v4060
      %v4062 = vpop.f32.mrb[0].mxu0
      %4063 = vmatprep.mubr.f32.mxu0 %v1553
      %4064 = vmatmul.mubr.f32.gmra.mrb[0].mxu0 %v1551
      %v4065 = vpop.f32.mrb[0].mxu0
      %v4066 = vadd.f32 %v3841, %v4065
      %v4067 = vpop.f32.mrb[0].mxu0
      %4068 = vmatprep.mubr.f32.mxu0 %v861
      %4069 = vmatmul.mubr.f32.gmra.mrb[0].mxu0 %v1570
      %v4070 = vpop.f32.mrb[0].mxu0
      %v4071 = vadd.f32 %v3846, %v4070
      %v4072 = vpop.f32.mrb[0].mxu0
      %4073 = vmatprep.mubr.f32.mxu0 %v861
      %4074 = vmatmul.mubr.f32.gmra.mrb[0].mxu0 %v1576
      %v4075 = vpop.f32.mrb[0].mxu0
      %v4076 = vadd.f32 %v3851, %v4075
      %v4077 = vpop.f32.mrb[0].mxu0
      %4078 = vdwg.mxu0
      %4079 = vmatprep.subr.mxu0 0.0
      %4080 = vmatpush1.msra.mxu0 %v2128
      %4081 = vmatprep.subr.mxu0 0.0
      %4082 = vmatpush1.msra.mxu0 %v2129
      %4083 = vmatprep.subr.mxu0 0.0
      %4084 = vmatpush1.msra.mxu0 %v2130
      %4085 = vmatprep.subr.mxu0 0.0
      %4086 = vmatpush1.msra.mxu0 %v2131
      %4087 = vmatprep.subr.mxu0 0.0
      %4088 = vmatpush1.msra.mxu0 %v2132
      %4089 = vmatprep.subr.mxu0 0.0
      %4090 = vmatpush1.msra.mxu0 %v2133
      %4091 = vmatprep.subr.mxu0 0.0
      %4092 = vmatpush1.msra.mxu0 %v2134
      %4093 = vmatprep.subr.mxu0 0.0
      %4094 = vmatpush1.msra.mxu0 %v2135
      %4095 = vmatprep.subr.mxu0 0.0
      %4096 = vmatpush1.msra.mxu0 %v2136
      %4097 = vmatprep.subr.mxu0 0.0
      %4098 = vmatpush1.msra.mxu0 %v2137
      %4099 = vmatprep.subr.mxu0 0.0
      %4100 = vmatpush1.msra.mxu0 %v2138
      %4101 = vmatprep.subr.mxu0 0.0
      %4102 = vmatpush1.msra.mxu0 %v2139
      %4103 = vmatprep.subr.mxu0 0.0
      %4104 = vmatpush1.msra.mxu0 %v2140
      %4105 = vmatprep.subr.mxu0 0.0
      %4106 = vmatpush1.msra.mxu0 %v2141
      %4107 = vmatprep.subr.mxu0 0.0
      %4108 = vmatpush1.msra.mxu0 %v2142
      %4109 = vmatprep.subr.mxu0 0.0
      %4110 = vmatpush1.msra.mxu0 %v2143
      %4111 = vmatprep.subr.mxu0 0.0
      %4112 = vmatpush1.msra.mxu0 %v2144
      %4113 = vmatprep.subr.mxu0 0.0
      %4114 = vmatpush1.msra.mxu0 %v2145
      %4115 = vmatprep.subr.mxu0 0.0
      %4116 = vmatpush1.msra.mxu0 %v2146
      %4117 = vmatprep.subr.mxu0 0.0
      %4118 = vmatpush1.msra.mxu0 %v2147
      %4119 = vmatprep.subr.mxu0 0.0
      %4120 = vmatpush1.msra.mxu0 %v2148
      %4121 = vmatprep.subr.mxu0 0.0
      %4122 = vmatpush1.msra.mxu0 %v2149
      %4123 = vmatprep.subr.mxu0 0.0
      %4124 = vmatpush1.msra.mxu0 %v2150
      %4125 = vmatprep.subr.mxu0 0.0
      %4126 = vmatpush1.msra.mxu0 %v2151
      %4127 = vmatprep.subr.mxu0 0.0
      %4128 = vmatpush1.msra.mxu0 %v2152
      %4129 = vmatprep.subr.mxu0 0.0
      %4130 = vmatpush1.msra.mxu0 %v2153
      %4131 = vmatprep.subr.mxu0 0.0
      %4132 = vmatpush1.msra.mxu0 %v2154
      %4133 = vmatprep.subr.mxu0 0.0
      %4134 = vmatpush1.msra.mxu0 %v2155
      %4135 = vmatprep.subr.mxu0 0.0
      %4136 = vmatpush1.msra.mxu0 %v2156
      %4137 = vmatprep.subr.mxu0 0.0
      %4138 = vmatpush1.msra.mxu0 %v2157
      %4139 = vmatprep.subr.mxu0 0.0
      %4140 = vmatpush1.msra.mxu0 %v2158
      %4141 = vmatprep.subr.mxu0 0.0
      %4142 = vmatpush1.msra.mxu0 %v2159
      %4143 = vmatprep.mubr.f32.mxu0 %v894
      %4144 = vmatmul.mubr.f32.gmra.mrb[0].mxu0 %v891
      %v4145 = vpop.f32.mrb[0].mxu0
      %v4146 = vadd.f32 %v3921, %v4145
      %v4147 = vpop.f32.mrb[0].mxu0
      %4148 = vmatprep.mubr.f32.mxu0 %v936
      %4149 = vmatmul.mubr.f32.gmra.mrb[0].mxu0 %v934
      %v4150 = vpop.f32.mrb[0].mxu0
      %v4151 = vadd.f32 %v3926, %v4150
      %v4152 = vpop.f32.mrb[0].mxu0
      %4153 = vmatprep.mubr.f32.mxu0 %v909
      %4154 = vmatmul.mubr.f32.gmra.mrb[0].mxu0 %v906
      %v4155 = vpop.f32.mrb[0].mxu0
      %v4156 = vadd.f32 %v3931, %v4155
      %v4157 = vpop.f32.mrb[0].mxu0
      %4158 = vmatprep.mubr.f32.mxu0 %v946
      %4159 = vmatmul.mubr.f32.gmra.mrb[0].mxu0 %v944
      %v4160 = vpop.f32.mrb[0].mxu0
      %v4161 = vadd.f32 %v3936, %v4160
      %v4162 = vpop.f32.mrb[0].mxu0
      %4163 = vmatprep.mubr.f32.mxu0 %v970
      %4164 = vmatmul.mubr.f32.gmra.mrb[0].mxu0 %v967
      %v4165 = vpop.f32.mrb[0].mxu0
      %v4166 = vadd.f32 %v3941, %v4165
      %v4167 = vpop.f32.mrb[0].mxu0
      %4168 = vmatprep.mubr.f32.mxu0 %v990
      %4169 = vmatmul.mubr.f32.gmra.mrb[0].mxu0 %v988
      %v4170 = vpop.f32.mrb[0].mxu0
      %v4171 = vadd.f32 %v3946, %v4170
      %v4172 = vpop.f32.mrb[0].mxu0
      %4173 = vmatprep.mubr.f32.mxu0 %v1014
      %4174 = vmatmul.mubr.f32.gmra.mrb[0].mxu0 %v1011
      %v4175 = vpop.f32.mrb[0].mxu0
      %v4176 = vadd.f32 %v3951, %v4175
      %v4177 = vpop.f32.mrb[0].mxu0
      %4178 = vmatprep.mubr.f32.mxu0 %v1034
      %4179 = vmatmul.mubr.f32.gmra.mrb[0].mxu0 %v1032
      %v4180 = vpop.f32.mrb[0].mxu0
      %v4181 = vadd.f32 %v3956, %v4180
      %v4182 = vpop.f32.mrb[0].mxu0
      %4183 = vmatprep.mubr.f32.mxu0 %v1058
      %4184 = vmatmul.mubr.f32.gmra.mrb[0].mxu0 %v1055
      %v4185 = vpop.f32.mrb[0].mxu0
      %v4186 = vadd.f32 %v3961, %v4185
      %v4187 = vpop.f32.mrb[0].mxu0
      %4188 = vmatprep.mubr.f32.mxu0 %v1078
      %4189 = vmatmul.mubr.f32.gmra.mrb[0].mxu0 %v1076
      %v4190 = vpop.f32.mrb[0].mxu0
      %v4191 = vadd.f32 %v3966, %v4190
      %v4192 = vpop.f32.mrb[0].mxu0
      %4193 = vmatprep.mubr.f32.mxu0 %v1102
      %4194 = vmatmul.mubr.f32.gmra.mrb[0].mxu0 %v1099
      %v4195 = vpop.f32.mrb[0].mxu0
      %v4196 = vadd.f32 %v3971, %v4195
      %v4197 = vpop.f32.mrb[0].mxu0
      %4198 = vmatprep.mubr.f32.mxu0 %v1122
      %4199 = vmatmul.mubr.f32.gmra.mrb[0].mxu0 %v1120
      %v4200 = vpop.f32.mrb[0].mxu0
      %v4201 = vadd.f32 %v3976, %v4200
      %v4202 = vpop.f32.mrb[0].mxu0
      %4203 = vmatprep.mubr.f32.mxu0 %v1146
      %4204 = vmatmul.mubr.f32.gmra.mrb[0].mxu0 %v1143
      %v4205 = vpop.f32.mrb[0].mxu0
      %v4206 = vadd.f32 %v3981, %v4205
      %v4207 = vpop.f32.mrb[0].mxu0
      %4208 = vmatprep.mubr.f32.mxu0 %v1166
      %4209 = vmatmul.mubr.f32.gmra.mrb[0].mxu0 %v1164
      %v4210 = vpop.f32.mrb[0].mxu0
      %v4211 = vadd.f32 %v3986, %v4210
      %v4212 = vpop.f32.mrb[0].mxu0
      %4213 = vmatprep.mubr.f32.mxu0 %v1190
      %4214 = vmatmul.mubr.f32.gmra.mrb[0].mxu0 %v1187
      %v4215 = vpop.f32.mrb[0].mxu0
      %v4216 = vadd.f32 %v3991, %v4215
      %v4217 = vpop.f32.mrb[0].mxu0
      %4218 = vmatprep.mubr.f32.mxu0 %v1210
      %4219 = vmatmul.mubr.f32.gmra.mrb[0].mxu0 %v1208
      %v4220 = vpop.f32.mrb[0].mxu0
      %v4221 = vadd.f32 %v3996, %v4220
      %v4222 = vpop.f32.mrb[0].mxu0
      %4223 = vmatprep.mubr.f32.mxu0 %v1234
      %4224 = vmatmul.mubr.f32.gmra.mrb[0].mxu0 %v1231
      %v4225 = vpop.f32.mrb[0].mxu0
      %v4226 = vadd.f32 %v4001, %v4225
      %v4227 = vpop.f32.mrb[0].mxu0
      %4228 = vmatprep.mubr.f32.mxu0 %v1254
      %4229 = vmatmul.mubr.f32.gmra.mrb[0].mxu0 %v1252
      %v4230 = vpop.f32.mrb[0].mxu0
      %v4231 = vadd.f32 %v4006, %v4230
      %v4232 = vpop.f32.mrb[0].mxu0
      %4233 = vmatprep.mubr.f32.mxu0 %v1278
      %4234 = vmatmul.mubr.f32.gmra.mrb[0].mxu0 %v1275
      %v4235 = vpop.f32.mrb[0].mxu0
      %v4236 = vadd.f32 %v4011, %v4235
      %v4237 = vpop.f32.mrb[0].mxu0
      %4238 = vmatprep.mubr.f32.mxu0 %v1298
      %4239 = vmatmul.mubr.f32.gmra.mrb[0].mxu0 %v1296
      %v4240 = vpop.f32.mrb[0].mxu0
      %v4241 = vadd.f32 %v4016, %v4240
      %v4242 = vpop.f32.mrb[0].mxu0
      %4243 = vmatprep.mubr.f32.mxu0 %v1322
      %4244 = vmatmul.mubr.f32.gmra.mrb[0].mxu0 %v1319
      %v4245 = vpop.f32.mrb[0].mxu0
      %v4246 = vadd.f32 %v4021, %v4245
      %v4247 = vpop.f32.mrb[0].mxu0
      %4248 = vmatprep.mubr.f32.mxu0 %v1342
      %4249 = vmatmul.mubr.f32.gmra.mrb[0].mxu0 %v1340
      %v4250 = vpop.f32.mrb[0].mxu0
      %v4251 = vadd.f32 %v4026, %v4250
      %v4252 = vpop.f32.mrb[0].mxu0
      %4253 = vmatprep.mubr.f32.mxu0 %v1366
      %4254 = vmatmul.mubr.f32.gmra.mrb[0].mxu0 %v1363
      %v4255 = vpop.f32.mrb[0].mxu0
      %v4256 = vadd.f32 %v4031, %v4255
      %v4257 = vpop.f32.mrb[0].mxu0
      %4258 = vmatprep.mubr.f32.mxu0 %v1386
      %4259 = vmatmul.mubr.f32.gmra.mrb[0].mxu0 %v1384
      %v4260 = vpop.f32.mrb[0].mxu0
      %v4261 = vadd.f32 %v4036, %v4260
      %v4262 = vpop.f32.mrb[0].mxu0
      %4263 = vmatprep.mubr.f32.mxu0 %v1410
      %4264 = vmatmul.mubr.f32.gmra.mrb[0].mxu0 %v1407
      %v4265 = vpop.f32.mrb[0].mxu0
      %v4266 = vadd.f32 %v4041, %v4265
      %v4267 = vpop.f32.mrb[0].mxu0
      %4268 = vmatprep.mubr.f32.mxu0 %v1430
      %4269 = vmatmul.mubr.f32.gmra.mrb[0].mxu0 %v1428
      %v4270 = vpop.f32.mrb[0].mxu0
      %v4271 = vadd.f32 %v4046, %v4270
      %v4272 = vpop.f32.mrb[0].mxu0
      %4273 = vmatprep.mubr.f32.mxu0 %v1454
      %4274 = vmatmul.mubr.f32.gmra.mrb[0].mxu0 %v1451
      %v4275 = vpop.f32.mrb[0].mxu0
      %v4276 = vadd.f32 %v4051, %v4275
      %v4277 = vpop.f32.mrb[0].mxu0
      %4278 = vmatprep.mubr.f32.mxu0 %v1474
      %4279 = vmatmul.mubr.f32.gmra.mrb[0].mxu0 %v1472
      %v4280 = vpop.f32.mrb[0].mxu0
      %v4281 = vadd.f32 %v4056, %v4280
      %v4282 = vpop.f32.mrb[0].mxu0
      %4283 = vmatprep.mubr.f32.mxu0 %v1498
      %4284 = vmatmul.mubr.f32.gmra.mrb[0].mxu0 %v1495
      %v4285 = vpop.f32.mrb[0].mxu0
      %v4286 = vadd.f32 %v4061, %v4285
      %v4287 = vpop.f32.mrb[0].mxu0
      %4288 = vmatprep.mubr.f32.mxu0 %v1518
      %4289 = vmatmul.mubr.f32.gmra.mrb[0].mxu0 %v1516
      %v4290 = vpop.f32.mrb[0].mxu0
      %v4291 = vadd.f32 %v4066, %v4290
      %v4292 = vpop.f32.mrb[0].mxu0
      %4293 = vmatprep.mubr.f32.mxu0 %v1539
      %4294 = vmatmul.mubr.f32.gmra.mrb[0].mxu0 %v863
      %v4295 = vpop.f32.mrb[0].mxu0
      %v4296 = vadd.f32 %v4071, %v4295
      %v4297 = vpop.f32.mrb[0].mxu0
      %4298 = vmatprep.mubr.f32.mxu0 %v1557
      %4299 = vmatmul.mubr.f32.gmra.mrb[0].mxu0 %v917
      %v4300 = vpop.f32.mrb[0].mxu0
      %v4301 = vadd.f32 %v4076, %v4300
      %v4302 = vpop.f32.mrb[0].mxu0
      %4303 = vdwg.mxu0
      %4304 = vmatprep.subr.mxu0 0.0
      %4305 = vmatpush1.msra.mxu0 %v2160
      %4306 = vmatprep.subr.mxu0 0.0
      %4307 = vmatpush1.msra.mxu0 %v2161
      %4308 = vmatprep.subr.mxu0 0.0
      %4309 = vmatpush1.msra.mxu0 %v2162
      %4310 = vmatprep.subr.mxu0 0.0
      %4311 = vmatpush1.msra.mxu0 %v2163
      %4312 = vmatprep.subr.mxu0 0.0
      %4313 = vmatpush1.msra.mxu0 %v2164
      %4314 = vmatprep.subr.mxu0 0.0
      %4315 = vmatpush1.msra.mxu0 %v2165
      %4316 = vmatprep.subr.mxu0 0.0
      %4317 = vmatpush1.msra.mxu0 %v2166
      %4318 = vmatprep.subr.mxu0 0.0
      %4319 = vmatpush1.msra.mxu0 %v2167
      %4320 = vmatprep.subr.mxu0 0.0
      %4321 = vmatpush1.msra.mxu0 %v2168
      %4322 = vmatprep.subr.mxu0 0.0
      %4323 = vmatpush1.msra.mxu0 %v2169
      %4324 = vmatprep.subr.mxu0 0.0
      %4325 = vmatpush1.msra.mxu0 %v2170
      %4326 = vmatprep.subr.mxu0 0.0
      %4327 = vmatpush1.msra.mxu0 %v2171
      %4328 = vmatprep.subr.mxu0 0.0
      %4329 = vmatpush1.msra.mxu0 %v2172
      %4330 = vmatprep.subr.mxu0 0.0
      %4331 = vmatpush1.msra.mxu0 %v2173
      %4332 = vmatprep.subr.mxu0 0.0
      %4333 = vmatpush1.msra.mxu0 %v2174
      %4334 = vmatprep.subr.mxu0 0.0
      %4335 = vmatpush1.msra.mxu0 %v2175
      %4336 = vmatprep.subr.mxu0 0.0
      %4337 = vmatpush1.msra.mxu0 %v2176
      %4338 = vmatprep.subr.mxu0 0.0
      %4339 = vmatpush1.msra.mxu0 %v2177
      %4340 = vmatprep.subr.mxu0 0.0
      %4341 = vmatpush1.msra.mxu0 %v2178
      %4342 = vmatprep.subr.mxu0 0.0
      %4343 = vmatpush1.msra.mxu0 %v2179
      %4344 = vmatprep.subr.mxu0 0.0
      %4345 = vmatpush1.msra.mxu0 %v2180
      %4346 = vmatprep.subr.mxu0 0.0
      %4347 = vmatpush1.msra.mxu0 %v2181
      %4348 = vmatprep.subr.mxu0 0.0
      %4349 = vmatpush1.msra.mxu0 %v2182
      %4350 = vmatprep.subr.mxu0 0.0
      %4351 = vmatpush1.msra.mxu0 %v2183
      %4352 = vmatprep.subr.mxu0 0.0
      %4353 = vmatpush1.msra.mxu0 %v2184
      %4354 = vmatprep.subr.mxu0 0.0
      %4355 = vmatpush1.msra.mxu0 %v2185
      %4356 = vmatprep.subr.mxu0 0.0
      %4357 = vmatpush1.msra.mxu0 %v2186
      %4358 = vmatprep.subr.mxu0 0.0
      %4359 = vmatpush1.msra.mxu0 %v2187
      %4360 = vmatprep.subr.mxu0 0.0
      %4361 = vmatpush1.msra.mxu0 %v2188
      %4362 = vmatprep.subr.mxu0 0.0
      %4363 = vmatpush1.msra.mxu0 %v2189
      %4364 = vmatprep.subr.mxu0 0.0
      %4365 = vmatpush1.msra.mxu0 %v2190
      %4366 = vmatprep.subr.mxu0 0.0
      %4367 = vmatpush1.msra.mxu0 %v2191
      %4368 = vmatprep.mubr.f32.mxu0 %v900
      %4369 = vmatmul.mubr.f32.gmra.mrb[0].mxu0 %v897
      %v4370 = vpop.f32.mrb[0].mxu0
      %v4371 = vadd.f32 %v4146, %v4370
      %v4372 = vpop.f32.mrb[0].mxu0
      %4373 = vmatprep.mubr.f32.mxu0 %v940
      %4374 = vmatmul.mubr.f32.gmra.mrb[0].mxu0 %v938
      %v4375 = vpop.f32.mrb[0].mxu0
      %v4376 = vadd.f32 %v4151, %v4375
      %v4377 = vpop.f32.mrb[0].mxu0
      %4378 = vmatprep.mubr.f32.mxu0 %v915
      %4379 = vmatmul.mubr.f32.gmra.mrb[0].mxu0 %v912
      %v4380 = vpop.f32.mrb[0].mxu0
      %v4381 = vadd.f32 %v4156, %v4380
      %v4382 = vpop.f32.mrb[0].mxu0
      %4383 = vmatprep.mubr.f32.mxu0 %v950
      %4384 = vmatmul.mubr.f32.gmra.mrb[0].mxu0 %v948
      %v4385 = vpop.f32.mrb[0].mxu0
      %v4386 = vadd.f32 %v4161, %v4385
      %v4387 = vpop.f32.mrb[0].mxu0
      %4388 = vmatprep.mubr.f32.mxu0 %v976
      %4389 = vmatmul.mubr.f32.gmra.mrb[0].mxu0 %v973
      %v4390 = vpop.f32.mrb[0].mxu0
      %v4391 = vadd.f32 %v4166, %v4390
      %v4392 = vpop.f32.mrb[0].mxu0
      %4393 = vmatprep.mubr.f32.mxu0 %v994
      %4394 = vmatmul.mubr.f32.gmra.mrb[0].mxu0 %v992
      %v4395 = vpop.f32.mrb[0].mxu0
      %v4396 = vadd.f32 %v4171, %v4395
      %v4397 = vpop.f32.mrb[0].mxu0
      %4398 = vmatprep.mubr.f32.mxu0 %v1020
      %4399 = vmatmul.mubr.f32.gmra.mrb[0].mxu0 %v1017
      %v4400 = vpop.f32.mrb[0].mxu0
      %v4401 = vadd.f32 %v4176, %v4400
      %v4402 = vpop.f32.mrb[0].mxu0
      %4403 = vmatprep.mubr.f32.mxu0 %v1038
      %4404 = vmatmul.mubr.f32.gmra.mrb[0].mxu0 %v1036
      %v4405 = vpop.f32.mrb[0].mxu0
      %v4406 = vadd.f32 %v4181, %v4405
      %v4407 = vpop.f32.mrb[0].mxu0
      %4408 = vmatprep.mubr.f32.mxu0 %v1064
      %4409 = vmatmul.mubr.f32.gmra.mrb[0].mxu0 %v1061
      %v4410 = vpop.f32.mrb[0].mxu0
      %v4411 = vadd.f32 %v4186, %v4410
      %v4412 = vpop.f32.mrb[0].mxu0
      %4413 = vmatprep.mubr.f32.mxu0 %v1082
      %4414 = vmatmul.mubr.f32.gmra.mrb[0].mxu0 %v1080
      %v4415 = vpop.f32.mrb[0].mxu0
      %v4416 = vadd.f32 %v4191, %v4415
      %v4417 = vpop.f32.mrb[0].mxu0
      %4418 = vmatprep.mubr.f32.mxu0 %v1108
      %4419 = vmatmul.mubr.f32.gmra.mrb[0].mxu0 %v1105
      %v4420 = vpop.f32.mrb[0].mxu0
      %v4421 = vadd.f32 %v4196, %v4420
      %v4422 = vpop.f32.mrb[0].mxu0
      %4423 = vmatprep.mubr.f32.mxu0 %v1126
      %4424 = vmatmul.mubr.f32.gmra.mrb[0].mxu0 %v1124
      %v4425 = vpop.f32.mrb[0].mxu0
      %v4426 = vadd.f32 %v4201, %v4425
      %v4427 = vpop.f32.mrb[0].mxu0
      %4428 = vmatprep.mubr.f32.mxu0 %v1152
      %4429 = vmatmul.mubr.f32.gmra.mrb[0].mxu0 %v1149
      %v4430 = vpop.f32.mrb[0].mxu0
      %v4431 = vadd.f32 %v4206, %v4430
      %v4432 = vpop.f32.mrb[0].mxu0
      %4433 = vmatprep.mubr.f32.mxu0 %v1170
      %4434 = vmatmul.mubr.f32.gmra.mrb[0].mxu0 %v1168
      %v4435 = vpop.f32.mrb[0].mxu0
      %v4436 = vadd.f32 %v4211, %v4435
      %v4437 = vpop.f32.mrb[0].mxu0
      %4438 = vmatprep.mubr.f32.mxu0 %v1196
      %4439 = vmatmul.mubr.f32.gmra.mrb[0].mxu0 %v1193
      %v4440 = vpop.f32.mrb[0].mxu0
      %v4441 = vadd.f32 %v4216, %v4440
      %v4442 = vpop.f32.mrb[0].mxu0
      %4443 = vmatprep.mubr.f32.mxu0 %v1214
      %4444 = vmatmul.mubr.f32.gmra.mrb[0].mxu0 %v1212
      %v4445 = vpop.f32.mrb[0].mxu0
      %v4446 = vadd.f32 %v4221, %v4445
      %v4447 = vpop.f32.mrb[0].mxu0
      %4448 = vmatprep.mubr.f32.mxu0 %v1240
      %4449 = vmatmul.mubr.f32.gmra.mrb[0].mxu0 %v1237
      %v4450 = vpop.f32.mrb[0].mxu0
      %v4451 = vadd.f32 %v4226, %v4450
      %v4452 = vpop.f32.mrb[0].mxu0
      %4453 = vmatprep.mubr.f32.mxu0 %v1258
      %4454 = vmatmul.mubr.f32.gmra.mrb[0].mxu0 %v1256
      %v4455 = vpop.f32.mrb[0].mxu0
      %v4456 = vadd.f32 %v4231, %v4455
      %v4457 = vpop.f32.mrb[0].mxu0
      %4458 = vmatprep.mubr.f32.mxu0 %v1284
      %4459 = vmatmul.mubr.f32.gmra.mrb[0].mxu0 %v1281
      %v4460 = vpop.f32.mrb[0].mxu0
      %v4461 = vadd.f32 %v4236, %v4460
      %v4462 = vpop.f32.mrb[0].mxu0
      %4463 = vmatprep.mubr.f32.mxu0 %v1302
      %4464 = vmatmul.mubr.f32.gmra.mrb[0].mxu0 %v1300
      %v4465 = vpop.f32.mrb[0].mxu0
      %v4466 = vadd.f32 %v4241, %v4465
      %v4467 = vpop.f32.mrb[0].mxu0
      %4468 = vmatprep.mubr.f32.mxu0 %v1328
      %4469 = vmatmul.mubr.f32.gmra.mrb[0].mxu0 %v1325
      %v4470 = vpop.f32.mrb[0].mxu0
      %v4471 = vadd.f32 %v4246, %v4470
      %v4472 = vpop.f32.mrb[0].mxu0
      %4473 = vmatprep.mubr.f32.mxu0 %v1346
      %4474 = vmatmul.mubr.f32.gmra.mrb[0].mxu0 %v1344
      %v4475 = vpop.f32.mrb[0].mxu0
      %v4476 = vadd.f32 %v4251, %v4475
      %v4477 = vpop.f32.mrb[0].mxu0
      %4478 = vmatprep.mubr.f32.mxu0 %v1372
      %4479 = vmatmul.mubr.f32.gmra.mrb[0].mxu0 %v1369
      %v4480 = vpop.f32.mrb[0].mxu0
      %v4481 = vadd.f32 %v4256, %v4480
      %v4482 = vpop.f32.mrb[0].mxu0
      %4483 = vmatprep.mubr.f32.mxu0 %v1390
      %4484 = vmatmul.mubr.f32.gmra.mrb[0].mxu0 %v1388
      %v4485 = vpop.f32.mrb[0].mxu0
      %v4486 = vadd.f32 %v4261, %v4485
      %v4487 = vpop.f32.mrb[0].mxu0
      %4488 = vmatprep.mubr.f32.mxu0 %v1416
      %4489 = vmatmul.mubr.f32.gmra.mrb[0].mxu0 %v1413
      %v4490 = vpop.f32.mrb[0].mxu0
      %v4491 = vadd.f32 %v4266, %v4490
      %v4492 = vpop.f32.mrb[0].mxu0
      %4493 = vmatprep.mubr.f32.mxu0 %v1434
      %4494 = vmatmul.mubr.f32.gmra.mrb[0].mxu0 %v1432
      %v4495 = vpop.f32.mrb[0].mxu0
      %v4496 = vadd.f32 %v4271, %v4495
      %v4497 = vpop.f32.mrb[0].mxu0
      %4498 = vmatprep.mubr.f32.mxu0 %v1460
      %4499 = vmatmul.mubr.f32.gmra.mrb[0].mxu0 %v1457
      %v4500 = vpop.f32.mrb[0].mxu0
      %v4501 = vadd.f32 %v4276, %v4500
      %v4502 = vpop.f32.mrb[0].mxu0
      %4503 = vmatprep.mubr.f32.mxu0 %v1478
      %4504 = vmatmul.mubr.f32.gmra.mrb[0].mxu0 %v1476
      %v4505 = vpop.f32.mrb[0].mxu0
      %v4506 = vadd.f32 %v4281, %v4505
      %v4507 = vpop.f32.mrb[0].mxu0
      %4508 = vmatprep.mubr.f32.mxu0 %v1504
      %4509 = vmatmul.mubr.f32.gmra.mrb[0].mxu0 %v1501
      %v4510 = vpop.f32.mrb[0].mxu0
      %v4511 = vadd.f32 %v4286, %v4510
      %v4512 = vpop.f32.mrb[0].mxu0
      %4513 = vmatprep.mubr.f32.mxu0 %v1522
      %4514 = vmatmul.mubr.f32.gmra.mrb[0].mxu0 %v1520
      %v4515 = vpop.f32.mrb[0].mxu0
      %v4516 = vadd.f32 %v4291, %v4515
      %v4517 = vpop.f32.mrb[0].mxu0
      %4518 = vmatprep.mubr.f32.mxu0 %v1545
      %4519 = vmatmul.mubr.f32.gmra.mrb[0].mxu0 %v1542
      %v4520 = vpop.f32.mrb[0].mxu0
      %v4521 = vadd.f32 %v4296, %v4520
      %v4522 = vpop.f32.mrb[0].mxu0
      %4523 = vmatprep.mubr.f32.mxu0 %v1561
      %4524 = vmatmul.mubr.f32.gmra.mrb[0].mxu0 %v1559
      %v4525 = vpop.f32.mrb[0].mxu0
      %v4526 = vadd.f32 %v4301, %v4525
      %v4527 = vpop.f32.mrb[0].mxu0
      %4528 = vdwg.mxu0
      %4529 = vmatprep.subr.mxu0 0.0
      %4530 = vmatpush1.msra.mxu0 %v2192
      %4531 = vmatprep.subr.mxu0 0.0
      %4532 = vmatpush1.msra.mxu0 %v2193
      %4533 = vmatprep.subr.mxu0 0.0
      %4534 = vmatpush1.msra.mxu0 %v2194
      %4535 = vmatprep.subr.mxu0 0.0
      %4536 = vmatpush1.msra.mxu0 %v2195
      %4537 = vmatprep.subr.mxu0 0.0
      %4538 = vmatpush1.msra.mxu0 %v2196
      %4539 = vmatprep.subr.mxu0 0.0
      %4540 = vmatpush1.msra.mxu0 %v2197
      %4541 = vmatprep.subr.mxu0 0.0
      %4542 = vmatpush1.msra.mxu0 %v2198
      %4543 = vmatprep.subr.mxu0 0.0
      %4544 = vmatpush1.msra.mxu0 %v2199
      %4545 = vmatprep.subr.mxu0 0.0
      %4546 = vmatpush1.msra.mxu0 %v2200
      %4547 = vmatprep.subr.mxu0 0.0
      %4548 = vmatpush1.msra.mxu0 %v2201
      %4549 = vmatprep.subr.mxu0 0.0
      %4550 = vmatpush1.msra.mxu0 %v2202
      %4551 = vmatprep.subr.mxu0 0.0
      %4552 = vmatpush1.msra.mxu0 %v2203
      %4553 = vmatprep.subr.mxu0 0.0
      %4554 = vmatpush1.msra.mxu0 %v2204
      %4555 = vmatprep.subr.mxu0 0.0
      %4556 = vmatpush1.msra.mxu0 %v2205
      %4557 = vmatprep.subr.mxu0 0.0
      %4558 = vmatpush1.msra.mxu0 %v2206
      %4559 = vmatprep.subr.mxu0 0.0
      %4560 = vmatpush1.msra.mxu0 %v2207
      %4561 = vmatprep.subr.mxu0 0.0
      %4562 = vmatpush1.msra.mxu0 %v2208
      %4563 = vmatprep.subr.mxu0 0.0
      %4564 = vmatpush1.msra.mxu0 %v2209
      %4565 = vmatprep.subr.mxu0 0.0
      %4566 = vmatpush1.msra.mxu0 %v2210
      %4567 = vmatprep.subr.mxu0 0.0
      %4568 = vmatpush1.msra.mxu0 %v2211
      %4569 = vmatprep.subr.mxu0 0.0
      %4570 = vmatpush1.msra.mxu0 %v2212
      %4571 = vmatprep.subr.mxu0 0.0
      %4572 = vmatpush1.msra.mxu0 %v2213
      %4573 = vmatprep.subr.mxu0 0.0
      %4574 = vmatpush1.msra.mxu0 %v2214
      %4575 = vmatprep.subr.mxu0 0.0
      %4576 = vmatpush1.msra.mxu0 %v2215
      %4577 = vmatprep.subr.mxu0 0.0
      %4578 = vmatpush1.msra.mxu0 %v2216
      %4579 = vmatprep.subr.mxu0 0.0
      %4580 = vmatpush1.msra.mxu0 %v2217
      %4581 = vmatprep.subr.mxu0 0.0
      %4582 = vmatpush1.msra.mxu0 %v2218
      %4583 = vmatprep.subr.mxu0 0.0
      %4584 = vmatpush1.msra.mxu0 %v2219
      %4585 = vmatprep.subr.mxu0 0.0
      %4586 = vmatpush1.msra.mxu0 %v2220
      %4587 = vmatprep.subr.mxu0 0.0
      %4588 = vmatpush1.msra.mxu0 %v2221
      %4589 = vmatprep.subr.mxu0 0.0
      %4590 = vmatpush1.msra.mxu0 %v2222
      %4591 = vmatprep.subr.mxu0 0.0
      %4592 = vmatpush1.msra.mxu0 %v2223
      %4593 = vmatprep.mubr.f32.mxu0 %v906
      %4594 = vmatmul.mubr.f32.gmra.mrb[0].mxu0 %v903
      %v4595 = vpop.f32.mrb[0].mxu0
      %v4596 = vadd.f32 %v4371, %v4595
      %v4597 = vpop.f32.mrb[0].mxu0
      %4598 = vmatprep.mubr.f32.mxu0 %v944
      %4599 = vmatmul.mubr.f32.gmra.mrb[0].mxu0 %v942
      %v4600 = vpop.f32.mrb[0].mxu0
      %v4601 = vadd.f32 %v4376, %v4600
      %v4602 = vpop.f32.mrb[0].mxu0
      %4603 = vmatprep.mubr.f32.mxu0 %v967
      %4604 = vmatmul.mubr.f32.gmra.mrb[0].mxu0 %v964
      %v4605 = vpop.f32.mrb[0].mxu0
      %v4606 = vadd.f32 %v4381, %v4605
      %v4607 = vpop.f32.mrb[0].mxu0
      %4608 = vmatprep.mubr.f32.mxu0 %v988
      %4609 = vmatmul.mubr.f32.gmra.mrb[0].mxu0 %v986
      %v4610 = vpop.f32.mrb[0].mxu0
      %v4611 = vadd.f32 %v4386, %v4610
      %v4612 = vpop.f32.mrb[0].mxu0
      %4613 = vmatprep.mubr.f32.mxu0 %v1011
      %4614 = vmatmul.mubr.f32.gmra.mrb[0].mxu0 %v1008
      %v4615 = vpop.f32.mrb[0].mxu0
      %v4616 = vadd.f32 %v4391, %v4615
      %v4617 = vpop.f32.mrb[0].mxu0
      %4618 = vmatprep.mubr.f32.mxu0 %v1032
      %4619 = vmatmul.mubr.f32.gmra.mrb[0].mxu0 %v1030
      %v4620 = vpop.f32.mrb[0].mxu0
      %v4621 = vadd.f32 %v4396, %v4620
      %v4622 = vpop.f32.mrb[0].mxu0
      %4623 = vmatprep.mubr.f32.mxu0 %v1055
      %4624 = vmatmul.mubr.f32.gmra.mrb[0].mxu0 %v1052
      %v4625 = vpop.f32.mrb[0].mxu0
      %v4626 = vadd.f32 %v4401, %v4625
      %v4627 = vpop.f32.mrb[0].mxu0
      %4628 = vmatprep.mubr.f32.mxu0 %v1076
      %4629 = vmatmul.mubr.f32.gmra.mrb[0].mxu0 %v1074
      %v4630 = vpop.f32.mrb[0].mxu0
      %v4631 = vadd.f32 %v4406, %v4630
      %v4632 = vpop.f32.mrb[0].mxu0
      %4633 = vmatprep.mubr.f32.mxu0 %v1099
      %4634 = vmatmul.mubr.f32.gmra.mrb[0].mxu0 %v1096
      %v4635 = vpop.f32.mrb[0].mxu0
      %v4636 = vadd.f32 %v4411, %v4635
      %v4637 = vpop.f32.mrb[0].mxu0
      %4638 = vmatprep.mubr.f32.mxu0 %v1120
      %4639 = vmatmul.mubr.f32.gmra.mrb[0].mxu0 %v1118
      %v4640 = vpop.f32.mrb[0].mxu0
      %v4641 = vadd.f32 %v4416, %v4640
      %v4642 = vpop.f32.mrb[0].mxu0
      %4643 = vmatprep.mubr.f32.mxu0 %v1143
      %4644 = vmatmul.mubr.f32.gmra.mrb[0].mxu0 %v1140
      %v4645 = vpop.f32.mrb[0].mxu0
      %v4646 = vadd.f32 %v4421, %v4645
      %v4647 = vpop.f32.mrb[0].mxu0
      %4648 = vmatprep.mubr.f32.mxu0 %v1164
      %4649 = vmatmul.mubr.f32.gmra.mrb[0].mxu0 %v1162
      %v4650 = vpop.f32.mrb[0].mxu0
      %v4651 = vadd.f32 %v4426, %v4650
      %v4652 = vpop.f32.mrb[0].mxu0
      %4653 = vmatprep.mubr.f32.mxu0 %v1187
      %4654 = vmatmul.mubr.f32.gmra.mrb[0].mxu0 %v1184
      %v4655 = vpop.f32.mrb[0].mxu0
      %v4656 = vadd.f32 %v4431, %v4655
      %v4657 = vpop.f32.mrb[0].mxu0
      %4658 = vmatprep.mubr.f32.mxu0 %v1208
      %4659 = vmatmul.mubr.f32.gmra.mrb[0].mxu0 %v1206
      %v4660 = vpop.f32.mrb[0].mxu0
      %v4661 = vadd.f32 %v4436, %v4660
      %v4662 = vpop.f32.mrb[0].mxu0
      %4663 = vmatprep.mubr.f32.mxu0 %v1231
      %4664 = vmatmul.mubr.f32.gmra.mrb[0].mxu0 %v1228
      %v4665 = vpop.f32.mrb[0].mxu0
      %v4666 = vadd.f32 %v4441, %v4665
      %v4667 = vpop.f32.mrb[0].mxu0
      %4668 = vmatprep.mubr.f32.mxu0 %v1252
      %4669 = vmatmul.mubr.f32.gmra.mrb[0].mxu0 %v1250
      %v4670 = vpop.f32.mrb[0].mxu0
      %v4671 = vadd.f32 %v4446, %v4670
      %v4672 = vpop.f32.mrb[0].mxu0
      %4673 = vmatprep.mubr.f32.mxu0 %v1275
      %4674 = vmatmul.mubr.f32.gmra.mrb[0].mxu0 %v1272
      %v4675 = vpop.f32.mrb[0].mxu0
      %v4676 = vadd.f32 %v4451, %v4675
      %v4677 = vpop.f32.mrb[0].mxu0
      %4678 = vmatprep.mubr.f32.mxu0 %v1296
      %4679 = vmatmul.mubr.f32.gmra.mrb[0].mxu0 %v1294
      %v4680 = vpop.f32.mrb[0].mxu0
      %v4681 = vadd.f32 %v4456, %v4680
      %v4682 = vpop.f32.mrb[0].mxu0
      %4683 = vmatprep.mubr.f32.mxu0 %v1319
      %4684 = vmatmul.mubr.f32.gmra.mrb[0].mxu0 %v1316
      %v4685 = vpop.f32.mrb[0].mxu0
      %v4686 = vadd.f32 %v4461, %v4685
      %v4687 = vpop.f32.mrb[0].mxu0
      %4688 = vmatprep.mubr.f32.mxu0 %v1340
      %4689 = vmatmul.mubr.f32.gmra.mrb[0].mxu0 %v1338
      %v4690 = vpop.f32.mrb[0].mxu0
      %v4691 = vadd.f32 %v4466, %v4690
      %v4692 = vpop.f32.mrb[0].mxu0
      %4693 = vmatprep.mubr.f32.mxu0 %v1363
      %4694 = vmatmul.mubr.f32.gmra.mrb[0].mxu0 %v1360
      %v4695 = vpop.f32.mrb[0].mxu0
      %v4696 = vadd.f32 %v4471, %v4695
      %v4697 = vpop.f32.mrb[0].mxu0
      %4698 = vmatprep.mubr.f32.mxu0 %v1384
      %4699 = vmatmul.mubr.f32.gmra.mrb[0].mxu0 %v1382
      %v4700 = vpop.f32.mrb[0].mxu0
      %v4701 = vadd.f32 %v4476, %v4700
      %v4702 = vpop.f32.mrb[0].mxu0
      %4703 = vmatprep.mubr.f32.mxu0 %v1407
      %4704 = vmatmul.mubr.f32.gmra.mrb[0].mxu0 %v1404
      %v4705 = vpop.f32.mrb[0].mxu0
      %v4706 = vadd.f32 %v4481, %v4705
      %v4707 = vpop.f32.mrb[0].mxu0
      %4708 = vmatprep.mubr.f32.mxu0 %v1428
      %4709 = vmatmul.mubr.f32.gmra.mrb[0].mxu0 %v1426
      %v4710 = vpop.f32.mrb[0].mxu0
      %v4711 = vadd.f32 %v4486, %v4710
      %v4712 = vpop.f32.mrb[0].mxu0
      %4713 = vmatprep.mubr.f32.mxu0 %v1451
      %4714 = vmatmul.mubr.f32.gmra.mrb[0].mxu0 %v1448
      %v4715 = vpop.f32.mrb[0].mxu0
      %v4716 = vadd.f32 %v4491, %v4715
      %v4717 = vpop.f32.mrb[0].mxu0
      %4718 = vmatprep.mubr.f32.mxu0 %v1472
      %4719 = vmatmul.mubr.f32.gmra.mrb[0].mxu0 %v1470
      %v4720 = vpop.f32.mrb[0].mxu0
      %v4721 = vadd.f32 %v4496, %v4720
      %v4722 = vpop.f32.mrb[0].mxu0
      %4723 = vmatprep.mubr.f32.mxu0 %v1495
      %4724 = vmatmul.mubr.f32.gmra.mrb[0].mxu0 %v1492
      %v4725 = vpop.f32.mrb[0].mxu0
      %v4726 = vadd.f32 %v4501, %v4725
      %v4727 = vpop.f32.mrb[0].mxu0
      %4728 = vmatprep.mubr.f32.mxu0 %v1516
      %4729 = vmatmul.mubr.f32.gmra.mrb[0].mxu0 %v1514
      %v4730 = vpop.f32.mrb[0].mxu0
      %v4731 = vadd.f32 %v4506, %v4730
      %v4732 = vpop.f32.mrb[0].mxu0
      %4733 = vmatprep.mubr.f32.mxu0 %v863
      %4734 = vmatmul.mubr.f32.gmra.mrb[0].mxu0 %v1536
      %v4735 = vpop.f32.mrb[0].mxu0
      %v4736 = vadd.f32 %v4511, %v4735
      %v4737 = vpop.f32.mrb[0].mxu0
      %4738 = vmatprep.mubr.f32.mxu0 %v917
      %4739 = vmatmul.mubr.f32.gmra.mrb[0].mxu0 %v1555
      %v4740 = vpop.f32.mrb[0].mxu0
      %v4741 = vadd.f32 %v4516, %v4740
      %v4742 = vpop.f32.mrb[0].mxu0
      %4743 = vmatprep.mubr.f32.mxu0 %v863
      %4744 = vmatmul.mubr.f32.gmra.mrb[0].mxu0 %v1536
      %v4745 = vpop.f32.mrb[0].mxu0
      %v4746 = vadd.f32 %v4521, %v4745
      %v4747 = vpop.f32.mrb[0].mxu0
      %4748 = vmatprep.mubr.f32.mxu0 %v917
      %4749 = vmatmul.mubr.f32.gmra.mrb[0].mxu0 %v1555
      %v4750 = vpop.f32.mrb[0].mxu0
      %v4751 = vadd.f32 %v4526, %v4750
      %v4752 = vpop.f32.mrb[0].mxu0
      %4753 = vdwg.mxu0
      %4754 = vmatprep.subr.mxu0 0.0
      %4755 = vmatpush1.msra.mxu0 %v2224
      %4756 = vmatprep.subr.mxu0 0.0
      %4757 = vmatpush1.msra.mxu0 %v2225
      %4758 = vmatprep.subr.mxu0 0.0
      %4759 = vmatpush1.msra.mxu0 %v2226
      %4760 = vmatprep.subr.mxu0 0.0
      %4761 = vmatpush1.msra.mxu0 %v2227
      %4762 = vmatprep.subr.mxu0 0.0
      %4763 = vmatpush1.msra.mxu0 %v2228
      %4764 = vmatprep.subr.mxu0 0.0
      %4765 = vmatpush1.msra.mxu0 %v2229
      %4766 = vmatprep.subr.mxu0 0.0
      %4767 = vmatpush1.msra.mxu0 %v2230
      %4768 = vmatprep.subr.mxu0 0.0
      %4769 = vmatpush1.msra.mxu0 %v2231
      %4770 = vmatprep.subr.mxu0 0.0
      %4771 = vmatpush1.msra.mxu0 %v2232
      %4772 = vmatprep.subr.mxu0 0.0
      %4773 = vmatpush1.msra.mxu0 %v2233
      %4774 = vmatprep.subr.mxu0 0.0
      %4775 = vmatpush1.msra.mxu0 %v2234
      %4776 = vmatprep.subr.mxu0 0.0
      %4777 = vmatpush1.msra.mxu0 %v2235
      %4778 = vmatprep.subr.mxu0 0.0
      %4779 = vmatpush1.msra.mxu0 %v2236
      %4780 = vmatprep.subr.mxu0 0.0
      %4781 = vmatpush1.msra.mxu0 %v2237
      %4782 = vmatprep.subr.mxu0 0.0
      %4783 = vmatpush1.msra.mxu0 %v2238
      %4784 = vmatprep.subr.mxu0 0.0
      %4785 = vmatpush1.msra.mxu0 %v2239
      %4786 = vmatprep.subr.mxu0 0.0
      %4787 = vmatpush1.msra.mxu0 %v2240
      %4788 = vmatprep.subr.mxu0 0.0
      %4789 = vmatpush1.msra.mxu0 %v2241
      %4790 = vmatprep.subr.mxu0 0.0
      %4791 = vmatpush1.msra.mxu0 %v2242
      %4792 = vmatprep.subr.mxu0 0.0
      %4793 = vmatpush1.msra.mxu0 %v2243
      %4794 = vmatprep.subr.mxu0 0.0
      %4795 = vmatpush1.msra.mxu0 %v2244
      %4796 = vmatprep.subr.mxu0 0.0
      %4797 = vmatpush1.msra.mxu0 %v2245
      %4798 = vmatprep.subr.mxu0 0.0
      %4799 = vmatpush1.msra.mxu0 %v2246
      %4800 = vmatprep.subr.mxu0 0.0
      %4801 = vmatpush1.msra.mxu0 %v2247
      %4802 = vmatprep.subr.mxu0 0.0
      %4803 = vmatpush1.msra.mxu0 %v2248
      %4804 = vmatprep.subr.mxu0 0.0
      %4805 = vmatpush1.msra.mxu0 %v2249
      %4806 = vmatprep.subr.mxu0 0.0
      %4807 = vmatpush1.msra.mxu0 %v2250
      %4808 = vmatprep.subr.mxu0 0.0
      %4809 = vmatpush1.msra.mxu0 %v2251
      %4810 = vmatprep.subr.mxu0 0.0
      %4811 = vmatpush1.msra.mxu0 %v2252
      %4812 = vmatprep.subr.mxu0 0.0
      %4813 = vmatpush1.msra.mxu0 %v2253
      %4814 = vmatprep.subr.mxu0 0.0
      %4815 = vmatpush1.msra.mxu0 %v2254
      %4816 = vmatprep.subr.mxu0 0.0
      %4817 = vmatpush1.msra.mxu0 %v2255
      %4818 = vmatprep.mubr.f32.mxu0 %v912
      %4819 = vmatmul.mubr.f32.gmra.mrb[0].mxu0 %v909
      %v4820 = vpop.f32.mrb[0].mxu0
      %v4821 = vadd.f32 %v4596, %v4820
      %v4822 = vpop.f32.mrb[0].mxu0
      %4823 = vmatprep.mubr.f32.mxu0 %v948
      %4824 = vmatmul.mubr.f32.gmra.mrb[0].mxu0 %v946
      %v4825 = vpop.f32.mrb[0].mxu0
      %v4826 = vadd.f32 %v4601, %v4825
      %v4827 = vpop.f32.mrb[0].mxu0
      %4828 = vmatprep.mubr.f32.mxu0 %v973
      %4829 = vmatmul.mubr.f32.gmra.mrb[0].mxu0 %v970
      %v4830 = vpop.f32.mrb[0].mxu0
      %v4831 = vadd.f32 %v4606, %v4830
      %v4832 = vpop.f32.mrb[0].mxu0
      %4833 = vmatprep.mubr.f32.mxu0 %v992
      %4834 = vmatmul.mubr.f32.gmra.mrb[0].mxu0 %v990
      %v4835 = vpop.f32.mrb[0].mxu0
      %v4836 = vadd.f32 %v4611, %v4835
      %v4837 = vpop.f32.mrb[0].mxu0
      %4838 = vmatprep.mubr.f32.mxu0 %v1017
      %4839 = vmatmul.mubr.f32.gmra.mrb[0].mxu0 %v1014
      %v4840 = vpop.f32.mrb[0].mxu0
      %v4841 = vadd.f32 %v4616, %v4840
      %v4842 = vpop.f32.mrb[0].mxu0
      %4843 = vmatprep.mubr.f32.mxu0 %v1036
      %4844 = vmatmul.mubr.f32.gmra.mrb[0].mxu0 %v1034
      %v4845 = vpop.f32.mrb[0].mxu0
      %v4846 = vadd.f32 %v4621, %v4845
      %v4847 = vpop.f32.mrb[0].mxu0
      %4848 = vmatprep.mubr.f32.mxu0 %v1061
      %4849 = vmatmul.mubr.f32.gmra.mrb[0].mxu0 %v1058
      %v4850 = vpop.f32.mrb[0].mxu0
      %v4851 = vadd.f32 %v4626, %v4850
      %v4852 = vpop.f32.mrb[0].mxu0
      %4853 = vmatprep.mubr.f32.mxu0 %v1080
      %4854 = vmatmul.mubr.f32.gmra.mrb[0].mxu0 %v1078
      %v4855 = vpop.f32.mrb[0].mxu0
      %v4856 = vadd.f32 %v4631, %v4855
      %v4857 = vpop.f32.mrb[0].mxu0
      %4858 = vmatprep.mubr.f32.mxu0 %v1105
      %4859 = vmatmul.mubr.f32.gmra.mrb[0].mxu0 %v1102
      %v4860 = vpop.f32.mrb[0].mxu0
      %v4861 = vadd.f32 %v4636, %v4860
      %v4862 = vpop.f32.mrb[0].mxu0
      %4863 = vmatprep.mubr.f32.mxu0 %v1124
      %4864 = vmatmul.mubr.f32.gmra.mrb[0].mxu0 %v1122
      %v4865 = vpop.f32.mrb[0].mxu0
      %v4866 = vadd.f32 %v4641, %v4865
      %v4867 = vpop.f32.mrb[0].mxu0
      %4868 = vmatprep.mubr.f32.mxu0 %v1149
      %4869 = vmatmul.mubr.f32.gmra.mrb[0].mxu0 %v1146
      %v4870 = vpop.f32.mrb[0].mxu0
      %v4871 = vadd.f32 %v4646, %v4870
      %v4872 = vpop.f32.mrb[0].mxu0
      %4873 = vmatprep.mubr.f32.mxu0 %v1168
      %4874 = vmatmul.mubr.f32.gmra.mrb[0].mxu0 %v1166
      %v4875 = vpop.f32.mrb[0].mxu0
      %v4876 = vadd.f32 %v4651, %v4875
      %v4877 = vpop.f32.mrb[0].mxu0
      %4878 = vmatprep.mubr.f32.mxu0 %v1193
      %4879 = vmatmul.mubr.f32.gmra.mrb[0].mxu0 %v1190
      %v4880 = vpop.f32.mrb[0].mxu0
      %v4881 = vadd.f32 %v4656, %v4880
      %v4882 = vpop.f32.mrb[0].mxu0
      %4883 = vmatprep.mubr.f32.mxu0 %v1212
      %4884 = vmatmul.mubr.f32.gmra.mrb[0].mxu0 %v1210
      %v4885 = vpop.f32.mrb[0].mxu0
      %v4886 = vadd.f32 %v4661, %v4885
      %v4887 = vpop.f32.mrb[0].mxu0
      %4888 = vmatprep.mubr.f32.mxu0 %v1237
      %4889 = vmatmul.mubr.f32.gmra.mrb[0].mxu0 %v1234
      %v4890 = vpop.f32.mrb[0].mxu0
      %v4891 = vadd.f32 %v4666, %v4890
      %v4892 = vpop.f32.mrb[0].mxu0
      %4893 = vmatprep.mubr.f32.mxu0 %v1256
      %4894 = vmatmul.mubr.f32.gmra.mrb[0].mxu0 %v1254
      %v4895 = vpop.f32.mrb[0].mxu0
      %v4896 = vadd.f32 %v4671, %v4895
      %v4897 = vpop.f32.mrb[0].mxu0
      %4898 = vmatprep.mubr.f32.mxu0 %v1281
      %4899 = vmatmul.mubr.f32.gmra.mrb[0].mxu0 %v1278
      %v4900 = vpop.f32.mrb[0].mxu0
      %v4901 = vadd.f32 %v4676, %v4900
      %v4902 = vpop.f32.mrb[0].mxu0
      %4903 = vmatprep.mubr.f32.mxu0 %v1300
      %4904 = vmatmul.mubr.f32.gmra.mrb[0].mxu0 %v1298
      %v4905 = vpop.f32.mrb[0].mxu0
      %v4906 = vadd.f32 %v4681, %v4905
      %v4907 = vpop.f32.mrb[0].mxu0
      %4908 = vmatprep.mubr.f32.mxu0 %v1325
      %4909 = vmatmul.mubr.f32.gmra.mrb[0].mxu0 %v1322
      %v4910 = vpop.f32.mrb[0].mxu0
      %v4911 = vadd.f32 %v4686, %v4910
      %v4912 = vpop.f32.mrb[0].mxu0
      %4913 = vmatprep.mubr.f32.mxu0 %v1344
      %4914 = vmatmul.mubr.f32.gmra.mrb[0].mxu0 %v1342
      %v4915 = vpop.f32.mrb[0].mxu0
      %v4916 = vadd.f32 %v4691, %v4915
      %v4917 = vpop.f32.mrb[0].mxu0
      %4918 = vmatprep.mubr.f32.mxu0 %v1369
      %4919 = vmatmul.mubr.f32.gmra.mrb[0].mxu0 %v1366
      %v4920 = vpop.f32.mrb[0].mxu0
      %v4921 = vadd.f32 %v4696, %v4920
      %v4922 = vpop.f32.mrb[0].mxu0
      %4923 = vmatprep.mubr.f32.mxu0 %v1388
      %4924 = vmatmul.mubr.f32.gmra.mrb[0].mxu0 %v1386
      %v4925 = vpop.f32.mrb[0].mxu0
      %v4926 = vadd.f32 %v4701, %v4925
      %v4927 = vpop.f32.mrb[0].mxu0
      %4928 = vmatprep.mubr.f32.mxu0 %v1413
      %4929 = vmatmul.mubr.f32.gmra.mrb[0].mxu0 %v1410
      %v4930 = vpop.f32.mrb[0].mxu0
      %v4931 = vadd.f32 %v4706, %v4930
      %v4932 = vpop.f32.mrb[0].mxu0
      %4933 = vmatprep.mubr.f32.mxu0 %v1432
      %4934 = vmatmul.mubr.f32.gmra.mrb[0].mxu0 %v1430
      %v4935 = vpop.f32.mrb[0].mxu0
      %v4936 = vadd.f32 %v4711, %v4935
      %v4937 = vpop.f32.mrb[0].mxu0
      %4938 = vmatprep.mubr.f32.mxu0 %v1457
      %4939 = vmatmul.mubr.f32.gmra.mrb[0].mxu0 %v1454
      %v4940 = vpop.f32.mrb[0].mxu0
      %v4941 = vadd.f32 %v4716, %v4940
      %v4942 = vpop.f32.mrb[0].mxu0
      %4943 = vmatprep.mubr.f32.mxu0 %v1476
      %4944 = vmatmul.mubr.f32.gmra.mrb[0].mxu0 %v1474
      %v4945 = vpop.f32.mrb[0].mxu0
      %v4946 = vadd.f32 %v4721, %v4945
      %v4947 = vpop.f32.mrb[0].mxu0
      %4948 = vmatprep.mubr.f32.mxu0 %v1501
      %4949 = vmatmul.mubr.f32.gmra.mrb[0].mxu0 %v1498
      %v4950 = vpop.f32.mrb[0].mxu0
      %v4951 = vadd.f32 %v4726, %v4950
      %v4952 = vpop.f32.mrb[0].mxu0
      %4953 = vmatprep.mubr.f32.mxu0 %v1520
      %4954 = vmatmul.mubr.f32.gmra.mrb[0].mxu0 %v1518
      %v4955 = vpop.f32.mrb[0].mxu0
      %v4956 = vadd.f32 %v4731, %v4955
      %v4957 = vpop.f32.mrb[0].mxu0
      %4958 = vmatprep.mubr.f32.mxu0 %v1542
      %4959 = vmatmul.mubr.f32.gmra.mrb[0].mxu0 %v1539
      %v4960 = vpop.f32.mrb[0].mxu0
      %v4961 = vadd.f32 %v4736, %v4960
      %v4962 = vpop.f32.mrb[0].mxu0
      %4963 = vmatprep.mubr.f32.mxu0 %v1559
      %4964 = vmatmul.mubr.f32.gmra.mrb[0].mxu0 %v1557
      %v4965 = vpop.f32.mrb[0].mxu0
      %v4966 = vadd.f32 %v4741, %v4965
      %v4967 = vpop.f32.mrb[0].mxu0
      %4968 = vmatprep.mubr.f32.mxu0 %v1542
      %4969 = vmatmul.mubr.f32.gmra.mrb[0].mxu0 %v1539
      %v4970 = vpop.f32.mrb[0].mxu0
      %v4971 = vadd.f32 %v4746, %v4970
      %v4972 = vpop.f32.mrb[0].mxu0
      %4973 = vmatprep.mubr.f32.mxu0 %v1559
      %4974 = vmatmul.mubr.f32.gmra.mrb[0].mxu0 %v1557
      %v4975 = vpop.f32.mrb[0].mxu0
      %v4976 = vadd.f32 %v4751, %v4975
      %v4977 = vpop.f32.mrb[0].mxu0
      %4978 = vdwg.mxu0
      %4979 = vmatprep.subr.mxu0 0.0
      %4980 = vmatpush1.msra.mxu0 %v2256
      %4981 = vmatprep.subr.mxu0 0.0
      %4982 = vmatpush1.msra.mxu0 %v2257
      %4983 = vmatprep.subr.mxu0 0.0
      %4984 = vmatpush1.msra.mxu0 %v2258
      %4985 = vmatprep.subr.mxu0 0.0
      %4986 = vmatpush1.msra.mxu0 %v2259
      %4987 = vmatprep.subr.mxu0 0.0
      %4988 = vmatpush1.msra.mxu0 %v2260
      %4989 = vmatprep.subr.mxu0 0.0
      %4990 = vmatpush1.msra.mxu0 %v2261
      %4991 = vmatprep.subr.mxu0 0.0
      %4992 = vmatpush1.msra.mxu0 %v2262
      %4993 = vmatprep.subr.mxu0 0.0
      %4994 = vmatpush1.msra.mxu0 %v2263
      %4995 = vmatprep.subr.mxu0 0.0
      %4996 = vmatpush1.msra.mxu0 %v2264
      %4997 = vmatprep.subr.mxu0 0.0
      %4998 = vmatpush1.msra.mxu0 %v2265
      %4999 = vmatprep.subr.mxu0 0.0
      %5000 = vmatpush1.msra.mxu0 %v2266
      %5001 = vmatprep.subr.mxu0 0.0
      %5002 = vmatpush1.msra.mxu0 %v2267
      %5003 = vmatprep.subr.mxu0 0.0
      %5004 = vmatpush1.msra.mxu0 %v2268
      %5005 = vmatprep.subr.mxu0 0.0
      %5006 = vmatpush1.msra.mxu0 %v2269
      %5007 = vmatprep.subr.mxu0 0.0
      %5008 = vmatpush1.msra.mxu0 %v2270
      %5009 = vmatprep.subr.mxu0 0.0
      %5010 = vmatpush1.msra.mxu0 %v2271
      %5011 = vmatprep.subr.mxu0 0.0
      %5012 = vmatpush1.msra.mxu0 0.0
      %5013 = vmatprep.subr.mxu0 0.0
      %5014 = vmatpush1.msra.mxu0 0.0
      %5015 = vmatprep.subr.mxu0 0.0
      %5016 = vmatpush1.msra.mxu0 0.0
      %5017 = vmatprep.subr.mxu0 0.0
      %5018 = vmatpush1.msra.mxu0 0.0
      %5019 = vmatprep.subr.mxu0 0.0
      %5020 = vmatpush1.msra.mxu0 0.0
      %5021 = vmatprep.subr.mxu0 0.0
      %5022 = vmatpush1.msra.mxu0 0.0
      %5023 = vmatprep.subr.mxu0 0.0
      %5024 = vmatpush1.msra.mxu0 0.0
      %5025 = vmatprep.subr.mxu0 0.0
      %5026 = vmatpush1.msra.mxu0 0.0
      %5027 = vmatprep.subr.mxu0 0.0
      %5028 = vmatpush1.msra.mxu0 0.0
      %5029 = vmatprep.subr.mxu0 0.0
      %5030 = vmatpush1.msra.mxu0 0.0
      %5031 = vmatprep.subr.mxu0 0.0
      %5032 = vmatpush1.msra.mxu0 0.0
      %5033 = vmatprep.subr.mxu0 0.0
      %5034 = vmatpush1.msra.mxu0 0.0
      %5035 = vmatprep.subr.mxu0 0.0
      %5036 = vmatpush1.msra.mxu0 0.0
      %5037 = vmatprep.subr.mxu0 0.0
      %5038 = vmatpush1.msra.mxu0 0.0
      %5039 = vmatprep.subr.mxu0 0.0
      %5040 = vmatpush1.msra.mxu0 0.0
      %5041 = vmatprep.subr.mxu0 0.0
      %5042 = vmatpush1.msra.mxu0 0.0
      %5043 = vmatprep.mubr.f32.mxu0 0.0
      %5044 = vmatmul.mubr.f32.gmra.mrb[0].mxu0 %v915
      %v5045 = vpop.f32.mrb[0].mxu0
      %v5046 = vadd.f32 %v4821, %v5045
      %v5047 = vpop.f32.mrb[0].mxu0
      %5048 = vmatprep.mubr.f32.mxu0 0.0
      %5049 = vmatmul.mubr.f32.gmra.mrb[0].mxu0 %v950
      %v5050 = vpop.f32.mrb[0].mxu0
      %v5051 = vadd.f32 %v4826, %v5050
      %v5052 = vpop.f32.mrb[0].mxu0
      %5053 = vmatprep.mubr.f32.mxu0 0.0
      %5054 = vmatmul.mubr.f32.gmra.mrb[0].mxu0 %v976
      %v5055 = vpop.f32.mrb[0].mxu0
      %v5056 = vadd.f32 %v4831, %v5055
      %v5057 = vpop.f32.mrb[0].mxu0
      %5058 = vmatprep.mubr.f32.mxu0 0.0
      %5059 = vmatmul.mubr.f32.gmra.mrb[0].mxu0 %v994
      %v5060 = vpop.f32.mrb[0].mxu0
      %v5061 = vadd.f32 %v4836, %v5060
      %v5062 = vpop.f32.mrb[0].mxu0
      %5063 = vmatprep.mubr.f32.mxu0 0.0
      %5064 = vmatmul.mubr.f32.gmra.mrb[0].mxu0 %v1020
      %v5065 = vpop.f32.mrb[0].mxu0
      %v5066 = vadd.f32 %v4841, %v5065
      %v5067 = vpop.f32.mrb[0].mxu0
      %5068 = vmatprep.mubr.f32.mxu0 0.0
      %5069 = vmatmul.mubr.f32.gmra.mrb[0].mxu0 %v1038
      %v5070 = vpop.f32.mrb[0].mxu0
      %v5071 = vadd.f32 %v4846, %v5070
      %v5072 = vpop.f32.mrb[0].mxu0
      %5073 = vmatprep.mubr.f32.mxu0 0.0
      %5074 = vmatmul.mubr.f32.gmra.mrb[0].mxu0 %v1064
      %v5075 = vpop.f32.mrb[0].mxu0
      %v5076 = vadd.f32 %v4851, %v5075
      %v5077 = vpop.f32.mrb[0].mxu0
      %5078 = vmatprep.mubr.f32.mxu0 0.0
      %5079 = vmatmul.mubr.f32.gmra.mrb[0].mxu0 %v1082
      %v5080 = vpop.f32.mrb[0].mxu0
      %v5081 = vadd.f32 %v4856, %v5080
      %v5082 = vpop.f32.mrb[0].mxu0
      %5083 = vmatprep.mubr.f32.mxu0 0.0
      %5084 = vmatmul.mubr.f32.gmra.mrb[0].mxu0 %v1108
      %v5085 = vpop.f32.mrb[0].mxu0
      %v5086 = vadd.f32 %v4861, %v5085
      %v5087 = vpop.f32.mrb[0].mxu0
      %5088 = vmatprep.mubr.f32.mxu0 0.0
      %5089 = vmatmul.mubr.f32.gmra.mrb[0].mxu0 %v1126
      %v5090 = vpop.f32.mrb[0].mxu0
      %v5091 = vadd.f32 %v4866, %v5090
      %v5092 = vpop.f32.mrb[0].mxu0
      %5093 = vmatprep.mubr.f32.mxu0 0.0
      %5094 = vmatmul.mubr.f32.gmra.mrb[0].mxu0 %v1152
      %v5095 = vpop.f32.mrb[0].mxu0
      %v5096 = vadd.f32 %v4871, %v5095
      %v5097 = vpop.f32.mrb[0].mxu0
      %5098 = vmatprep.mubr.f32.mxu0 0.0
      %5099 = vmatmul.mubr.f32.gmra.mrb[0].mxu0 %v1170
      %v5100 = vpop.f32.mrb[0].mxu0
      %v5101 = vadd.f32 %v4876, %v5100
      %v5102 = vpop.f32.mrb[0].mxu0
      %5103 = vmatprep.mubr.f32.mxu0 0.0
      %5104 = vmatmul.mubr.f32.gmra.mrb[0].mxu0 %v1196
      %v5105 = vpop.f32.mrb[0].mxu0
      %v5106 = vadd.f32 %v4881, %v5105
      %v5107 = vpop.f32.mrb[0].mxu0
      %5108 = vmatprep.mubr.f32.mxu0 0.0
      %5109 = vmatmul.mubr.f32.gmra.mrb[0].mxu0 %v1214
      %v5110 = vpop.f32.mrb[0].mxu0
      %v5111 = vadd.f32 %v4886, %v5110
      %v5112 = vpop.f32.mrb[0].mxu0
      %5113 = vmatprep.mubr.f32.mxu0 0.0
      %5114 = vmatmul.mubr.f32.gmra.mrb[0].mxu0 %v1240
      %v5115 = vpop.f32.mrb[0].mxu0
      %v5116 = vadd.f32 %v4891, %v5115
      %v5117 = vpop.f32.mrb[0].mxu0
      %5118 = vmatprep.mubr.f32.mxu0 0.0
      %5119 = vmatmul.mubr.f32.gmra.mrb[0].mxu0 %v1258
      %v5120 = vpop.f32.mrb[0].mxu0
      %v5121 = vadd.f32 %v4896, %v5120
      %v5122 = vpop.f32.mrb[0].mxu0
      %5123 = vmatprep.mubr.f32.mxu0 0.0
      %5124 = vmatmul.mubr.f32.gmra.mrb[0].mxu0 %v1284
      %v5125 = vpop.f32.mrb[0].mxu0
      %v5126 = vadd.f32 %v4901, %v5125
      %v5127 = vpop.f32.mrb[0].mxu0
      %5128 = vmatprep.mubr.f32.mxu0 0.0
      %5129 = vmatmul.mubr.f32.gmra.mrb[0].mxu0 %v1302
      %v5130 = vpop.f32.mrb[0].mxu0
      %v5131 = vadd.f32 %v4906, %v5130
      %v5132 = vpop.f32.mrb[0].mxu0
      %5133 = vmatprep.mubr.f32.mxu0 0.0
      %5134 = vmatmul.mubr.f32.gmra.mrb[0].mxu0 %v1328
      %v5135 = vpop.f32.mrb[0].mxu0
      %v5136 = vadd.f32 %v4911, %v5135
      %v5137 = vpop.f32.mrb[0].mxu0
      %5138 = vmatprep.mubr.f32.mxu0 0.0
      %5139 = vmatmul.mubr.f32.gmra.mrb[0].mxu0 %v1346
      %v5140 = vpop.f32.mrb[0].mxu0
      %v5141 = vadd.f32 %v4916, %v5140
      %v5142 = vpop.f32.mrb[0].mxu0
      %5143 = vmatprep.mubr.f32.mxu0 0.0
      %5144 = vmatmul.mubr.f32.gmra.mrb[0].mxu0 %v1372
      %v5145 = vpop.f32.mrb[0].mxu0
      %v5146 = vadd.f32 %v4921, %v5145
      %v5147 = vpop.f32.mrb[0].mxu0
      %5148 = vmatprep.mubr.f32.mxu0 0.0
      %5149 = vmatmul.mubr.f32.gmra.mrb[0].mxu0 %v1390
      %v5150 = vpop.f32.mrb[0].mxu0
      %v5151 = vadd.f32 %v4926, %v5150
      %v5152 = vpop.f32.mrb[0].mxu0
      %5153 = vmatprep.mubr.f32.mxu0 0.0
      %5154 = vmatmul.mubr.f32.gmra.mrb[0].mxu0 %v1416
      %v5155 = vpop.f32.mrb[0].mxu0
      %v5156 = vadd.f32 %v4931, %v5155
      %v5157 = vpop.f32.mrb[0].mxu0
      %5158 = vmatprep.mubr.f32.mxu0 0.0
      %5159 = vmatmul.mubr.f32.gmra.mrb[0].mxu0 %v1434
      %v5160 = vpop.f32.mrb[0].mxu0
      %v5161 = vadd.f32 %v4936, %v5160
      %v5162 = vpop.f32.mrb[0].mxu0
      %5163 = vmatprep.mubr.f32.mxu0 0.0
      %5164 = vmatmul.mubr.f32.gmra.mrb[0].mxu0 %v1460
      %v5165 = vpop.f32.mrb[0].mxu0
      %v5166 = vadd.f32 %v4941, %v5165
      %v5167 = vpop.f32.mrb[0].mxu0
      %5168 = vmatprep.mubr.f32.mxu0 0.0
      %5169 = vmatmul.mubr.f32.gmra.mrb[0].mxu0 %v1478
      %v5170 = vpop.f32.mrb[0].mxu0
      %v5171 = vadd.f32 %v4946, %v5170
      %v5172 = vpop.f32.mrb[0].mxu0
      %5173 = vmatprep.mubr.f32.mxu0 0.0
      %5174 = vmatmul.mubr.f32.gmra.mrb[0].mxu0 %v1504
      %v5175 = vpop.f32.mrb[0].mxu0
      %v5176 = vadd.f32 %v4951, %v5175
      %v5177 = vpop.f32.mrb[0].mxu0
      %5178 = vmatprep.mubr.f32.mxu0 0.0
      %5179 = vmatmul.mubr.f32.gmra.mrb[0].mxu0 %v1522
      %v5180 = vpop.f32.mrb[0].mxu0
      %v5181 = vadd.f32 %v4956, %v5180
      %v5182 = vpop.f32.mrb[0].mxu0
      %5183 = vmatprep.mubr.f32.mxu0 0.0
      %5184 = vmatmul.mubr.f32.gmra.mrb[0].mxu0 %v1545
      %v5185 = vpop.f32.mrb[0].mxu0
      %v5186 = vadd.f32 %v4961, %v5185
      %v5187 = vpop.f32.mrb[0].mxu0
      %5188 = vmatprep.mubr.f32.mxu0 0.0
      %5189 = vmatmul.mubr.f32.gmra.mrb[0].mxu0 %v1561
      %v5190 = vpop.f32.mrb[0].mxu0
      %v5191 = vadd.f32 %v4966, %v5190
      %v5192 = vpop.f32.mrb[0].mxu0
      %5193 = vmatprep.mubr.f32.mxu0 0.0
      %5194 = vmatmul.mubr.f32.gmra.mrb[0].mxu0 %v1545
      %v5195 = vpop.f32.mrb[0].mxu0
      %v5196 = vadd.f32 %v4971, %v5195
      %v5197 = vpop.f32.mrb[0].mxu0
      %5198 = vmatprep.mubr.f32.mxu0 0.0
      %5199 = vmatmul.mubr.f32.gmra.mrb[0].mxu0 %v1561
      %v5200 = vpop.f32.mrb[0].mxu0
      %v5201 = vadd.f32 %v4976, %v5200
      %v5202 = vpop.f32.mrb[0].mxu0
      %5203 = vdwg.mxu0
      %v5204 = vmax.f32 %v5046, 0.0
      %v5205 = vmax.f32 %v5051, 0.0
      %v5206 = vmax.f32 %v5056, 0.0
      %v5207 = vmax.f32 %v5061, 0.0
      %v5208 = vmax.f32 %v5066, 0.0
      %v5209 = vmax.f32 %v5071, 0.0
      %v5210 = vmax.f32 %v5076, 0.0
      %v5211 = vmax.f32 %v5081, 0.0
      %v5212 = vmax.f32 %v5086, 0.0
      %v5213 = vmax.f32 %v5091, 0.0
      %v5214 = vmax.f32 %v5096, 0.0
      %v5215 = vmax.f32 %v5101, 0.0
      %v5216 = vmax.f32 %v5106, 0.0
      %v5217 = vmax.f32 %v5111, 0.0
      %v5218 = vmax.f32 %v5116, 0.0
      %v5219 = vmax.f32 %v5121, 0.0
      %v5220 = vmax.f32 %v5126, 0.0
      %v5221 = vmax.f32 %v5131, 0.0
      %v5222 = vmax.f32 %v5136, 0.0
      %v5223 = vmax.f32 %v5141, 0.0
      %v5224 = vmax.f32 %v5146, 0.0
      %v5225 = vmax.f32 %v5151, 0.0
      %v5226 = vmax.f32 %v5156, 0.0
      %v5227 = vmax.f32 %v5161, 0.0
      %v5228 = vmax.f32 %v5166, 0.0
      %v5229 = vmax.f32 %v5171, 0.0
      %v5230 = vmax.f32 %v5176, 0.0
      %v5231 = vmax.f32 %v5181, 0.0
      %v5232 = vmax.f32 %v5186, 0.0
      %v5233 = vmax.f32 %v5191, 0.0
      %v5234 = vmax.f32 %v5196, 0.0
      %v5235 = vmax.f32 %v5201, 0.0
      %5236 = vst [vmem:[%s170] sm:$0xff] %v5204
      %5237 = vst [vmem:[%s170 + $0x8] sm:$0xff] %v5205
      %5238 = vst [vmem:[%s170 + $0x10] sm:$0xff] %v5206
      %5239 = vst [vmem:[%s170 + $0x18] sm:$0xff] %v5207
      %5240 = vst [vmem:[%s170 + $0x20] sm:$0xff] %v5208
      %5241 = vst [vmem:[%s170 + $0x28] sm:$0xff] %v5209
      %5242 = vst [vmem:[%s170 + $0x30] sm:$0xff] %v5210
      %5243 = vst [vmem:[%s170 + $0x38] sm:$0xff] %v5211
      %5244 = vst [vmem:[%s170 + $0x40] sm:$0xff] %v5212
      %5245 = vst [vmem:[%s170 + $0x48] sm:$0xff] %v5213
      %5246 = vst [vmem:[%s170 + $0x50] sm:$0xff] %v5214
      %5247 = vst [vmem:[%s170 + $0x58] sm:$0xff] %v5215
      %5248 = vst [vmem:[%s170 + $0x60] sm:$0xff] %v5216
      %5249 = vst [vmem:[%s170 + $0x68] sm:$0xff] %v5217
      %5250 = vst [vmem:[%s170 + $0x70] sm:$0xff] %v5218
      %5251 = vst [vmem:[%s170 + $0x78] sm:$0xff] %v5219
      %5252 = vst [vmem:[%s170 + $0x80] sm:$0xff] %v5220
      %5253 = vst [vmem:[%s170 + $0x88] sm:$0xff] %v5221
      %5254 = vst [vmem:[%s170 + $0x90] sm:$0xff] %v5222
      %5255 = vst [vmem:[%s170 + $0x98] sm:$0xff] %v5223
      %5256 = vst [vmem:[%s170 + $0xa0] sm:$0xff] %v5224
      %5257 = vst [vmem:[%s170 + $0xa8] sm:$0xff] %v5225
      %5258 = vst [vmem:[%s170 + $0xb0] sm:$0xff] %v5226
      %5259 = vst [vmem:[%s170 + $0xb8] sm:$0xff] %v5227
      %5260 = vst [vmem:[%s170 + $0xc0] sm:$0xff] %v5228
      %5261 = vst [vmem:[%s170 + $0xc8] sm:$0xff] %v5229
      %5262 = vst [vmem:[%s170 + $0xd0] sm:$0xff] %v5230
      %5263 = vst [vmem:[%s170 + $0xd8] sm:$0xff] %v5231
      %5264 = vst [vmem:[%s170 + $0xe0] sm:$0xff] %v5232
      %5265 = vst [vmem:[%s170 + $0xe8] sm:$0xff] %v5233
      %5266 = vst [vmem:[%s170 + $0xf0] sm:$0xff] %v5234
      %5267 = vst [vmem:[%s170 + $0xf8] sm:$0xff] %v5235
      %p5268 = scmp.lt.s32.totalorder %s14, 1
      %s5269 = scalar_select %p5268, %s14, 1
      %s5270 = smul.addr %s5269, 32
      %s5271 = smul.addr %s5270, 8
      %s5272 = scalar_lea.vmem %s3, %s5271
      // Predicated region
      $region33: #{inception_v1_forward.6} parent=31 // pred_check
        %p5273 = pneg %p100
      $region34: #{inception_v1_forward.6} parent=31 // pred_check_branch
        %5275 = sbr.rel (%p5273) target = $region36
      $region35: #{inception_v1_forward.6} parent=31 // pred_region
        _
      $region36: #{inception_v1_forward.6} parent=31 // pred_fallthru
        _
    $region32: #{inception_v1_forward.6} parent=5 // pred_fallthru
      _
    %p5276 = scmp.le.s32.totalorder 2, %s9
    // Predicated region
    $region37: #{inception_v1_forward.6} parent=5 // pred_check
      %p5277 = pneg %p5276
    $region38: #{inception_v1_forward.6} parent=5 // pred_check_branch
      %5279 = sbr.rel (%p5277) target = $region40
    $region39: #{inception_v1_forward.6} parent=5 // pred_region
      %s5280 = ssub.s32 %s9, 2
      // Predicated region
      $region41: #{inception_v1_forward.6} parent=39 // pred_check
        %p5281 = pneg %p106
      $region42: #{inception_v1_forward.6} parent=39 // pred_check_branch
        %5283 = sbr.rel (%p5281) target = $region44
      $region43: #{inception_v1_forward.6} parent=39 // pred_region
        %p5284 = scmp.lt.s32.totalorder %s15, 1
        %s5285 = scalar_select %p5284, %s15, 1
        %s5286 = smul.addr %s5285, 32
        %s5287 = smul.addr %s5286, 8
        %s5288 = scalar_lea.vmem %s3, %s5287
      $region44: #{inception_v1_forward.6} parent=39 // pred_fallthru
        _
    $region40: #{inception_v1_forward.6} parent=5 // pred_fallthru
      _
  $region6: #{inception_v1_forward.6} parent=0 // loop_footer
    %s13 = sadd.s32 1, %s9
  $region7: #{inception_v1_forward.6} parent=0 // loop_footer_branch
    %8 = sbr.rel target = $region3
  $region8: #{inception_v1_forward.6} parent=0 // loop_exit
    _

</llo_original>
